<compile_context>
chip_gen: v6e
topology: v6e:2x2x1
jax: 0.10.0
libtpu: 0.0.40
codegen_flags: <defaults>
</compile_context>

<pallas_src>
import functools
import math

import jax
import jax.numpy as jnp
from jax import lax
from jax.experimental import pallas as pl
from jax.experimental.pallas import tpu as pltpu

_NEG = -1e30  # big-negative sentinel (avoids -inf - -inf = nan in online softmax)


# ----------------------------- Pallas kernels -----------------------------

def _gat_kernel(tmap_ref, idx_ref, ent_ref, qv_ref, out_ref, m_sc, l_sc, *,
                inv_sqrt_d):
    # tmap_ref: [T]      (SMEM, scalar-prefetch) edge-tile -> node-tile map
    # idx_ref : [1, tE]  int32 scatter-target node id per edge (-1 = padding)
    # ent_ref : [tN, Dp] bf16 node-tile features (entities rows of this group)
    # qv_ref  : [tE, Dp] bf16 gathered source features (both key and value)
    # out_ref : [tN, Dp] f32 output block, resident across this group's tiles
    # m_sc,l_sc: [tN, 1] online-softmax running max / denominator
    t = pl.program_id(0)
    nt = pl.num_programs(0)
    g = tmap_ref[t]
    first = jnp.logical_or(t == 0, tmap_ref[jnp.maximum(t - 1, 0)] != g)
    last = jnp.logical_or(t == nt - 1, tmap_ref[jnp.minimum(t + 1, nt - 1)] != g)

    @pl.when(first)
    def _init():
        m_sc[...] = jnp.full_like(m_sc, _NEG)
        l_sc[...] = jnp.zeros_like(l_sc)
        out_ref[...] = jnp.zeros_like(out_ref)

    tn = out_ref.shape[0]
    te = idx_ref.shape[1]
    # Mask built from a constant iota + a [1,tE] subtract (cheap VPU work).
    local = lax.broadcasted_iota(jnp.int32, (tn, te), 0)
    rel = idx_ref[...] - g * tn                                   # [1, tE]
    mask = local == rel                                           # [tN, tE]

    # s[n, e] = <entities[n], qv[e]> / sqrt(D); for idx[e] == n this equals the
    # reference alpha[e].  bf16 operands, f32 accumulation on the MXU.
    s = lax.dot_general(ent_ref[...], qv_ref[...],
                        dimension_numbers=(((1,), (1,)), ((), ())),
                        preferred_element_type=jnp.float32) * inv_sqrt_d
    s = jnp.where(mask, s, _NEG)                                  # [tN, tE]

    m_prev = m_sc[...]                                            # [tN, 1]
    m_new = jnp.maximum(m_prev, jnp.max(s, axis=1, keepdims=True))
    corr = jnp.exp(m_prev - m_new)                                # [tN, 1]
    p = jnp.where(mask, jnp.exp(s - m_new), 0.0)                  # [tN, tE]

    l_sc[...] = corr * l_sc[...] + jnp.sum(p, axis=1, keepdims=True)
    out_ref[...] = corr * out_ref[...] + lax.dot_general(
        p.astype(jnp.bfloat16), qv_ref[...],
        dimension_numbers=(((1,), (0,)), ((), ())),
        preferred_element_type=jnp.float32)
    m_sc[...] = m_new

    @pl.when(last)
    def _finalize():
        # Nodes with no incoming edge: l == 0 and acc == 0 -> output 0.
        out_ref[...] = out_ref[...] / jnp.maximum(l_sc[...], 1e-30)


def _gcn_kernel(tmap_ref, idx_ref, ent_ref, out_ref, cnt_sc):
    # tmap_ref: [T]      edge-tile -> node-tile map (scalar prefetch, SMEM)
    # idx_ref : [1, tE]  int32 scatter-target node id per edge (-1 = padding)
    # ent_ref : [tE, Dp] bf16 gathered source features
    # out_ref : [tN, Dp] f32 output block, resident across this group's tiles
    # cnt_sc  : [tN, 1]  per-node edge counts (f32: exact up to 2^24 edges/node)
    t = pl.program_id(0)
    nt = pl.num_programs(0)
    g = tmap_ref[t]
    first = jnp.logical_or(t == 0, tmap_ref[jnp.maximum(t - 1, 0)] != g)
    last = jnp.logical_or(t == nt - 1, tmap_ref[jnp.minimum(t + 1, nt - 1)] != g)

    @pl.when(first)
    def _init():
        out_ref[...] = jnp.zeros_like(out_ref)
        cnt_sc[...] = jnp.zeros_like(cnt_sc)

    tn = out_ref.shape[0]
    te = idx_ref.shape[1]
    local = lax.broadcasted_iota(jnp.int32, (tn, te), 0)
    rel = idx_ref[...] - g * tn
    maskb = local == rel                                          # [tN, tE]

    # Scatter-add on the MXU (contract over edges); mask is exact in bf16.
    out_ref[...] += lax.dot_general(maskb.astype(jnp.bfloat16), ent_ref[...],
                                    dimension_numbers=(((1,), (0,)), ((), ())),
                                    preferred_element_type=jnp.float32)
    cnt_sc[...] += jnp.sum(maskb.astype(jnp.float32), axis=1, keepdims=True)

    @pl.when(last)
    def _finalize():
        out_ref[...] = out_ref[...] / jnp.maximum(cnt_sc[...], 1.0)


# ------------------------------ JAX wrapper --------------------------------

def _round_up(x, m):
    return ((x + m - 1) // m) * m


def _default_tiles():
    kind = ""
    try:
        kind = jax.devices()[0].device_kind.lower()
    except Exception:
        pass
    if "v5" in kind:          # v5e: 128-wide MXU -> keep tn=128, smaller te
        return 128, 512
    return 256, 1024          # v6e / v7x: 256x256 MXU, deep edge contraction


def dgnn_layer_forward(entities, relations, edge_index, gnn_type="GAT",
                       is_head_rel=True, *, tn=None, te=None):
    """Forward of DGNNLayer. `relations` is unused by the reference forward."""
    del relations
    if tn is None or te is None:
        d_tn, d_te = _default_tiles()
        tn = tn or d_tn
        te = te or d_te

    n, d = entities.shape
    e = edge_index.shape[1]

    pos = 0 if is_head_rel else 2          # Calculate_Entity gather position
    ent_pos = 2 if is_head_rel else 0      # scatter / ent_ori position

    idx = edge_index[ent_pos].astype(jnp.int32)   # [E] scatter targets
    src = edge_index[pos].astype(jnp.int32)       # [E] gather sources

    dp = max(128, _round_up(d, 128))       # lane-dense feature dim
    n_pad = _round_up(n, tn)
    num_groups = n_pad // tn               # node tiles

    # ---- sort & bucket edges by destination node tile (the big win) --------
    order = jnp.argsort(idx)
    sorted_idx = idx[order]
    sorted_src = src[order]
    g_sorted = sorted_idx // tn                                  # group per edge

    counts = jnp.zeros((num_groups,), jnp.int32).at[g_sorted].add(1)
    tiles_g = jnp.maximum(1, (counts + te - 1) // te)            # >=1 tile/group
    tile_off = jnp.concatenate([jnp.zeros((1,), jnp.int32),
                                jnp.cumsum(tiles_g)[:-1]])       # excl. cumsum
    edge_off = jnp.concatenate([jnp.zeros((1,), jnp.int32),
                                jnp.cumsum(counts)[:-1]])
    rank = jnp.arange(e, dtype=jnp.int32) - edge_off[g_sorted]
    slot = tile_off[g_sorted] * te + rank                        # target slot

    t_max = (e + te - 1) // te + num_groups     # static upper bound on #tiles
    s_pad = t_max * te

    idx_slots = jnp.full((s_pad,), -1, jnp.int32).at[slot].set(sorted_idx)
    src_slots = jnp.zeros((s_pad,), jnp.int32).at[slot].set(sorted_src)

    # edge-tile -> node-tile map; trailing padding tiles map to the last group.
    marks = jnp.zeros((t_max,), jnp.int32).at[tile_off[1:]].add(1)
    tile_to_node = jnp.cumsum(marks).astype(jnp.int32)

    # ---- padded bf16 feature tables (half the streamed bytes) --------------
    ent_pad = jnp.pad(entities.astype(jnp.float32),
                      ((0, n_pad - n), (0, dp - d))).astype(jnp.bfloat16)
    ent_ins_p = jnp.take(ent_pad, src_slots, axis=0)             # [s_pad, Dp]
    idx_slots = idx_slots.reshape(1, s_pad)

    # ---- specs (data-dependent index_maps via scalar prefetch) -------------
    idx_spec = pl.BlockSpec((1, te), lambda t, tm: (0, t))
    edge_spec = pl.BlockSpec((te, dp), lambda t, tm: (t, 0))
    node_spec = pl.BlockSpec((tn, dp), lambda t, tm: (tm[t], 0))
    out_spec = pl.BlockSpec((tn, dp), lambda t, tm: (tm[t], 0))
    out_shape = jax.ShapeDtypeStruct((n_pad, dp), jnp.float32)

    # VMEM budget: double-buffered streams + double-buffered f32 out block +
    # ~3x [tN,tE] f32 temporaries (s / p / mask) kept in VMEM by Mosaic.
    dbl_in = 2 * (te * 4 + te * dp * 2) + (2 * tn * dp * 2 if gnn_type == "GAT" else 0)
    est = dbl_in + 2 * tn * dp * 4 + 3 * tn * te * 4 + 2 * tn * 4
    vmem_limit = int(min(48 << 20, max(32 << 20, 2 * est)))      # v7x-safe cap
    cparams = pltpu.CompilerParams(
        dimension_semantics=("arbitrary",),    # output blocks revisit -> serial
        vmem_limit_bytes=vmem_limit)

    if gnn_type == "GAT":
        grid_spec = pltpu.PrefetchScalarGridSpec(
            num_scalar_prefetch=1, grid=(t_max,),
            in_specs=[idx_spec, node_spec, edge_spec],
            out_specs=out_spec,
            scratch_shapes=[pltpu.VMEM((tn, 1), jnp.float32),    # running max
                            pltpu.VMEM((tn, 1), jnp.float32)])   # running denom
        out = pl.pallas_call(
            functools.partial(_gat_kernel, inv_sqrt_d=1.0 / math.sqrt(d)),
            out_shape=out_shape, grid_spec=grid_spec, compiler_params=cparams,
        )(tile_to_node, idx_slots, ent_pad, ent_ins_p)
    elif gnn_type == "GCN":
        grid_spec = pltpu.PrefetchScalarGridSpec(
            num_scalar_prefetch=1, grid=(t_max,),
            in_specs=[idx_spec, edge_spec],
            out_specs=out_spec,
            scratch_shapes=[pltpu.VMEM((tn, 1), jnp.float32)])   # counts
        out = pl.pallas_call(
            _gcn_kernel, out_shape=out_shape, grid_spec=grid_spec,
            compiler_params=cparams,
        )(tile_to_node, idx_slots, ent_ins_p)
    else:
        raise NotImplementedError("Not implementation")

    return out[:n, :d]


# ------------------------- pure-JAX reference check -------------------------

def _ref_forward(entities, edge_index, gnn_type="GAT", is_head_rel=True):
    n, d = entities.shape
    pos = 0 if is_head_rel else 2
    ent_pos = 2 if is_head_rel else 0
    ent_ins = entities[edge_index[pos]]
    idx = edge_index[ent_pos]
    if gnn_type == "GAT":
        k = entities[idx]
        alpha = jnp.sum(k * ent_ins, axis=-1) / math.sqrt(d)
        seg_max = jax.ops.segment_max(alpha, idx, num_segments=n)
        exp_a = jnp.exp(alpha - seg_max[idx])
        denom = jax.ops.segment_sum(exp_a, idx, num_segments=n)
        w = exp_a / denom[idx]
        return jax.ops.segment_sum(w[:, None] * ent_ins, idx, num_segments=n)
    else:
        sums = jax.ops.segment_sum(ent_ins, idx, num_segments=n)
        counts = jax.ops.segment_sum(jnp.ones((idx.shape[0],)), idx, num_segments=n)
        return sums / jnp.maximum(counts, 1.0)[:, None]


# ----------------------------------- main -----------------------------------

if __name__ == "__main__":
    key = jax.random.PRNGKey(0)
    k_ent, k_rel, k_h, k_r, k_t = jax.random.split(key, 5)

    # Small but multi-group: N pads to >=2 node tiles, D=96 pads to lane-dense
    # 128, and the 1000 edges spread over all node-tile groups so the
    # init / accumulate / finalize group transitions all exercise.
    N, D, E, R = 300, 96, 1000, 11
    entities = jax.random.normal(k_ent, (N, D), dtype=jnp.float32)
    relations = jax.random.normal(k_rel, (R, D), dtype=jnp.float32)  # unused by forward
    edge_index = jnp.stack([
        jax.random.randint(k_h, (E,), 0, N, dtype=jnp.int32),   # head
        jax.random.randint(k_r, (E,), 0, R, dtype=jnp.int32),   # relation
        jax.random.randint(k_t, (E,), 0, N, dtype=jnp.int32),   # tail
    ])

    # bf16 MXU operands (f32 accumulation) -> looser tolerance vs f32 reference
    # (exp amplifies bf16 score rounding for GAT; GCN only rounds the values).
    tol = {"GAT": 8e-2, "GCN": 3e-2}
    for gnn_type in ("GAT", "GCN"):
        for is_head_rel in (True, False):
            out = dgnn_layer_forward(entities, relations, edge_index,
                                     gnn_type=gnn_type, is_head_rel=is_head_rel)
            out = jax.block_until_ready(out)
            ref = _ref_forward(entities, edge_index, gnn_type, is_head_rel)
            assert out.shape == (N, D)
            err = float(jnp.max(jnp.abs(out - ref)))
            assert jnp.allclose(out, ref, atol=tol[gnn_type], rtol=tol[gnn_type]), \
                (gnn_type, is_head_rel, err)

    print("KERNEL_OK")
</pallas_src>

<mosaic_0001>
module attributes {stable_mosaic.version = 11 : i64} {
  func.func @_gat_kernel(%arg0: i32, %arg1: memref<3xi32, #tpu.memory_space<smem>>, %arg2: memref<1x1024xi32, #tpu.memory_space<vmem>>, %arg3: memref<256x128xbf16, #tpu.memory_space<vmem>>, %arg4: memref<1024x128xbf16, #tpu.memory_space<vmem>>, %arg5: memref<256x128xf32, #tpu.memory_space<vmem>>, %arg6: memref<256x1xf32, #tpu.memory_space<vmem>>, %arg7: memref<256x1xf32, #tpu.memory_space<vmem>>) attributes {dimension_semantics = [#tpu.dimension_semantics<arbitrary>], iteration_bounds = array<i64: 3>, scalar_prefetch = 1 : i64, scratch_operands = 2 : i64, tpu.core_type = #tpu.core_type<tc>, window_params = [{transform_indices = @transform_0, window_bounds = array<i64: 1, 1024>}, {transform_indices = @transform_1, window_bounds = array<i64: 256, 128>}, {transform_indices = @transform_2, window_bounds = array<i64: 1024, 128>}, {transform_indices = @transform_3, window_bounds = array<i64: 256, 128>}]} {
    %0 = arith.index_cast %arg0 : i32 to index
    %1 = memref.load %arg1[%0] : memref<3xi32, #tpu.memory_space<smem>>
    %c0_i32 = arith.constant 0 : i32
    %2 = arith.cmpi eq, %arg0, %c0_i32 : i32
    %c1_i32 = arith.constant 1 : i32
    %3 = arith.subi %arg0, %c1_i32 : i32
    %c0_i32_0 = arith.constant 0 : i32
    %4 = arith.maxsi %3, %c0_i32_0 : i32
    %5 = arith.index_cast %4 : i32 to index
    %6 = memref.load %arg1[%5] : memref<3xi32, #tpu.memory_space<smem>>
    %7 = arith.cmpi ne, %6, %1 : i32
    %8 = arith.ori %2, %7 : i1
    %c2_i32 = arith.constant 2 : i32
    %9 = arith.cmpi eq, %arg0, %c2_i32 : i32
    %c1_i32_1 = arith.constant 1 : i32
    %10 = arith.addi %arg0, %c1_i32_1 : i32
    %c2_i32_2 = arith.constant 2 : i32
    %11 = arith.minsi %10, %c2_i32_2 : i32
    %12 = arith.index_cast %11 : i32 to index
    %13 = memref.load %arg1[%12] : memref<3xi32, #tpu.memory_space<smem>>
    %14 = arith.cmpi ne, %13, %1 : i32
    %15 = arith.ori %9, %14 : i1
    %16 = arith.extui %8 : i1 to i32
    %c0_i32_3 = arith.constant 0 : i32
    %17 = arith.cmpi ne, %16, %c0_i32_3 : i32
    scf.if %17 {
      %cst_30 = arith.constant -1.000000e+30 : f32
      %60 = vector.broadcast %cst_30 : f32 to vector<256x1xf32>
      %c0_31 = arith.constant 0 : index
      %c0_32 = arith.constant 0 : index
      %61 = vector.load %arg6[%c0_31, %c0_32] : memref<256x1xf32, #tpu.memory_space<vmem>>, vector<256x1xf32>
      tpu.vector_store %arg6[%c0_31, %c0_32], %60 {strides = array<i32>} : memref<256x1xf32, #tpu.memory_space<vmem>>, vector<256x1xf32>,
      %cst_33 = arith.constant 0.000000e+00 : f32
      %62 = vector.broadcast %cst_33 : f32 to vector<256x1xf32>
      %c0_34 = arith.constant 0 : index
      %c0_35 = arith.constant 0 : index
      %63 = vector.load %arg7[%c0_34, %c0_35] : memref<256x1xf32, #tpu.memory_space<vmem>>, vector<256x1xf32>
      tpu.vector_store %arg7[%c0_34, %c0_35], %62 {strides = array<i32>} : memref<256x1xf32, #tpu.memory_space<vmem>>, vector<256x1xf32>,
      %cst_36 = arith.constant 0.000000e+00 : f32
      %64 = vector.broadcast %cst_36 : f32 to vector<256x128xf32>
      %c0_37 = arith.constant 0 : index
      %c0_38 = arith.constant 0 : index
      %65 = vector.load %arg5[%c0_37, %c0_38] : memref<256x128xf32, #tpu.memory_space<vmem>>, vector<256x128xf32>
      tpu.vector_store %arg5[%c0_37, %c0_38], %64 {strides = array<i32>} : memref<256x128xf32, #tpu.memory_space<vmem>>, vector<256x128xf32>,
    } else {
    }
    %18 = tpu.iota {dimensions = array<i32: 0>} : vector<256x1024xi32>
    %c0 = arith.constant 0 : index
    %c0_4 = arith.constant 0 : index
    %19 = vector.load %arg2[%c0, %c0_4] : memref<1x1024xi32, #tpu.memory_space<vmem>>, vector<1x1024xi32>
    %c256_i32 = arith.constant 256 : i32
    %20 = arith.muli %1, %c256_i32 : i32
    %21 = vector.broadcast %20 : i32 to vector<1x1024xi32>
    %22 = arith.subi %19, %21 : vector<1x1024xi32>
    %23 = vector.broadcast %22 : vector<1x1024xi32> to vector<256x1024xi32>
    %24 = arith.cmpi eq, %18, %23 : vector<256x1024xi32>
    %c0_5 = arith.constant 0 : index
    %c0_6 = arith.constant 0 : index
    %25 = vector.load %arg3[%c0_5, %c0_6] : memref<256x128xbf16, #tpu.memory_space<vmem>>, vector<256x128xbf16>
    %c0_7 = arith.constant 0 : index
    %c0_8 = arith.constant 0 : index
    %26 = vector.load %arg4[%c0_7, %c0_8] : memref<1024x128xbf16, #tpu.memory_space<vmem>>, vector<1024x128xbf16>
    %cst = arith.constant dense<0.000000e+00> : vector<256x1024xf32>
    %27 = tpu.matmul %25, %26, %cst {dimension_numbers = #tpu.dot_dimension_numbers<[1], [1], [0], [0], [0, 0, 1, 0], [], []>} : vector<256x128xbf16>, vector<1024x128xbf16>, vector<256x1024xf32> -> vector<256x1024xf32>
    %cst_9 = arith.constant 0.102062076 : f32
    %28 = vector.broadcast %cst_9 : f32 to vector<256x1024xf32>
    %29 = arith.mulf %27, %28 : vector<256x1024xf32>
    %cst_10 = arith.constant -1.000000e+30 : f32
    %30 = vector.broadcast %cst_10 : f32 to vector<256x1024xf32>
    %31 = arith.select %24, %29, %30 : vector<256x1024xi1>, vector<256x1024xf32>
    %c0_11 = arith.constant 0 : index
    %c0_12 = arith.constant 0 : index
    %32 = vector.load %arg6[%c0_11, %c0_12] : memref<256x1xf32, #tpu.memory_space<vmem>>, vector<256x1xf32>
    %cst_13 = arith.constant dense<0xFF800000> : vector<256xf32>
    %33 = vector.multi_reduction <maximumf>, %31, %cst_13 [1] : vector<256x1024xf32> to vector<256xf32>
    %34 = vector.shape_cast %33 : vector<256xf32> to vector<256x1xf32>
    %35 = arith.maximumf %32, %34 : vector<256x1xf32>
    %36 = arith.subf %32, %35 : vector<256x1xf32>
    %37 = math.exp %36 : vector<256x1xf32>
    %38 = vector.broadcast %35 : vector<256x1xf32> to vector<256x1024xf32>
    %39 = arith.subf %31, %38 : vector<256x1024xf32>
    %40 = math.exp %39 : vector<256x1024xf32>
    %cst_14 = arith.constant 0.000000e+00 : f32
    %41 = vector.broadcast %cst_14 : f32 to vector<256x1024xf32>
    %42 = arith.select %24, %40, %41 : vector<256x1024xi1>, vector<256x1024xf32>
    %c0_15 = arith.constant 0 : index
    %c0_16 = arith.constant 0 : index
    %43 = vector.load %arg7[%c0_15, %c0_16] : memref<256x1xf32, #tpu.memory_space<vmem>>, vector<256x1xf32>
    %44 = arith.mulf %37, %43 : vector<256x1xf32>
    %cst_17 = arith.constant dense<0.000000e+00> : vector<256xf32>
    %45 = vector.multi_reduction <add>, %42, %cst_17 [1] : vector<256x1024xf32> to vector<256xf32>
    %46 = vector.shape_cast %45 : vector<256xf32> to vector<256x1xf32>
    %47 = arith.addf %44, %46 : vector<256x1xf32>
    %c0_18 = arith.constant 0 : index
    %c0_19 = arith.constant 0 : index
    %48 = vector.load %arg7[%c0_18, %c0_19] : memref<256x1xf32, #tpu.memory_space<vmem>>, vector<256x1xf32>
    tpu.vector_store %arg7[%c0_18, %c0_19], %47 {strides = array<i32>} : memref<256x1xf32, #tpu.memory_space<vmem>>, vector<256x1xf32>,
    %c0_20 = arith.constant 0 : index
    %c0_21 = arith.constant 0 : index
    %49 = vector.load %arg5[%c0_20, %c0_21] : memref<256x128xf32, #tpu.memory_space<vmem>>, vector<256x128xf32>
    %50 = vector.broadcast %37 : vector<256x1xf32> to vector<256x128xf32>
    %51 = arith.mulf %50, %49 : vector<256x128xf32>
    %52 = arith.truncf %42 : vector<256x1024xf32> to vector<256x1024xbf16>
    %c0_22 = arith.constant 0 : index
    %c0_23 = arith.constant 0 : index
    %53 = vector.load %arg4[%c0_22, %c0_23] : memref<1024x128xbf16, #tpu.memory_space<vmem>>, vector<1024x128xbf16>
    %cst_24 = arith.constant dense<0.000000e+00> : vector<256x128xf32>
    %54 = tpu.matmul %52, %53, %cst_24 {dimension_numbers = #tpu.dot_dimension_numbers<[1], [0], [0], [1], [0, 0, 1, 1], [], []>} : vector<256x1024xbf16>, vector<1024x128xbf16>, vector<256x128xf32> -> vector<256x128xf32>
    %55 = arith.addf %51, %54 : vector<256x128xf32>
    %c0_25 = arith.constant 0 : index
    %c0_26 = arith.constant 0 : index
    %56 = vector.load %arg5[%c0_25, %c0_26] : memref<256x128xf32, #tpu.memory_space<vmem>>, vector<256x128xf32>
    tpu.vector_store %arg5[%c0_25, %c0_26], %55 {strides = array<i32>} : memref<256x128xf32, #tpu.memory_space<vmem>>, vector<256x128xf32>,
    %c0_27 = arith.constant 0 : index
    %c0_28 = arith.constant 0 : index
    %57 = vector.load %arg6[%c0_27, %c0_28] : memref<256x1xf32, #tpu.memory_space<vmem>>, vector<256x1xf32>
    tpu.vector_store %arg6[%c0_27, %c0_28], %35 {strides = array<i32>} : memref<256x1xf32, #tpu.memory_space<vmem>>, vector<256x1xf32>,
    %58 = arith.extui %15 : i1 to i32
    %c0_i32_29 = arith.constant 0 : i32
    %59 = arith.cmpi ne, %58, %c0_i32_29 : i32
    scf.if %59 {
      %c0_30 = arith.constant 0 : index
      %c0_31 = arith.constant 0 : index
      %60 = vector.load %arg5[%c0_30, %c0_31] : memref<256x128xf32, #tpu.memory_space<vmem>>, vector<256x128xf32>
      %c0_32 = arith.constant 0 : index
      %c0_33 = arith.constant 0 : index
      %61 = vector.load %arg7[%c0_32, %c0_33] : memref<256x1xf32, #tpu.memory_space<vmem>>, vector<256x1xf32>
      %cst_34 = arith.constant 1.000000e-30 : f32
      %62 = vector.broadcast %cst_34 : f32 to vector<256x1xf32>
      %63 = arith.maximumf %61, %62 : vector<256x1xf32>
      %64 = vector.broadcast %63 : vector<256x1xf32> to vector<256x128xf32>
      %65 = arith.divf %60, %64 : vector<256x128xf32>
      %c0_35 = arith.constant 0 : index
      %c0_36 = arith.constant 0 : index
      %66 = vector.load %arg5[%c0_35, %c0_36] : memref<256x128xf32, #tpu.memory_space<vmem>>, vector<256x128xf32>
      tpu.vector_store %arg5[%c0_35, %c0_36], %65 {strides = array<i32>} : memref<256x128xf32, #tpu.memory_space<vmem>>, vector<256x128xf32>,
    } else {
    }
    return
  }
  func.func @transform_0(%arg0: i32, %arg1: memref<3xi32, #tpu.memory_space<smem>>) -> (i32, i32) {
    %c0_i32 = arith.constant 0 : i32
    %c0_i32_0 = arith.constant 0 : i32
    return %c0_i32, %arg0 : i32, i32
  }
  func.func @transform_1(%arg0: i32, %arg1: memref<3xi32, #tpu.memory_space<smem>>) -> (i32, i32) {
    %0 = arith.index_cast %arg0 : i32 to index
    %1 = memref.load %arg1[%0] : memref<3xi32, #tpu.memory_space<smem>>
    %c0_i32 = arith.constant 0 : i32
    %c0_i32_0 = arith.constant 0 : i32
    return %1, %c0_i32 : i32, i32
  }
  func.func @transform_2(%arg0: i32, %arg1: memref<3xi32, #tpu.memory_space<smem>>) -> (i32, i32) {
    %c0_i32 = arith.constant 0 : i32
    %c0_i32_0 = arith.constant 0 : i32
    return %arg0, %c0_i32 : i32, i32
  }
  func.func @transform_3(%arg0: i32, %arg1: memref<3xi32, #tpu.memory_space<smem>>) -> (i32, i32) {
    %0 = arith.index_cast %arg0 : i32 to index
    %1 = memref.load %arg1[%0] : memref<3xi32, #tpu.memory_space<smem>>
    %c0_i32 = arith.constant 0 : i32
    %c0_i32_0 = arith.constant 0 : i32
    return %1, %c0_i32 : i32, i32
  }
}

</mosaic_0001>

<llo_original>
// kernel: tpu_custom_call.1
$region0: #{tpu_custom_call.1}
  #allocation0 [shape = 'u32[]', space=smem, size = 0x4, offset = 0x4, fixed_abs, tag = 'smem constant byte address 0x4 - core index']
  #allocation1 [shape = 'u32[144,128]{1,0:T(1,128)}', space=vmem, size = 0x12000, scoped, tag = 'internal scratch']
  #allocation2 [shape = 'f32[256,1]{1,0:T(8,128)}', space=vmem, size = 0x20000, scoped, tag = 'scratch operand']
  #allocation3 [shape = 'f32[256,1]{1,0:T(8,128)}', space=vmem, size = 0x20000, scoped, tag = 'scratch operand']
  #allocation4 [shape = 's32[1]{0}', space=sflag, size = 0x4, scoped, tag = 'scoped memory for tpu_custom_call.1']
  #allocation5 [shape = 'u8[512]{0}', space=smem, size = 0x200, scoped, tag = 'prefetched SMEM operand 0']
  %s0 = inlined_call_operand.hbm [shape: s32[3], index: 0, kind: input, shape index: {}]
  %s1 = inlined_call_operand.hbm [shape: s32[1,3072], index: 1, kind: input, shape index: {}]
  %s2 = inlined_call_operand.hbm [shape: bf16[512,128], index: 2, kind: input, shape index: {}]
  %s3 = inlined_call_operand.hbm [shape: bf16[3072,128], index: 3, kind: input, shape index: {}]
  %s4 = inlined_call_operand.hbm [shape: f32[512,128], index: 4, kind: output, shape index: {}]
  %s5 = sld [smem:[#allocation0]]
  $region65: #{tpu_custom_call.1} parent=0
    _
  %s7 = ssub.s32 1, %s5
  %s8 = scalar_select 0, %s7, %s5
  %10 = dma.hbm_to_smem %s0, 16, [#allocation5], [#allocation4]
  %11 = dma.done [#allocation4], 16
  %12 = sfence
  $region1: #{tpu_custom_call.1} parent=0
    #allocation6 [shape = 'u8[8192]{0}', space=vmem, size = 0x2000, scoped, tag = 'input window, operand 1']
    #allocation7 [shape = 's32[2]{0}', space=sflag, size = 0x8, scoped, tag = 'scoped memory for tpu_custom_call.1']
    #allocation8 [shape = 's32[2]{0}', space=sflag, size = 0x8, scoped, tag = 'scoped memory for tpu_custom_call.1']
    #allocation9 [shape = 'u8[131072]{0}', space=vmem, size = 0x20000, scoped, tag = 'input window, operand 2']
    #allocation10 [shape = 's32[2]{0}', space=sflag, size = 0x8, scoped, tag = 'scoped memory for tpu_custom_call.1']
    #allocation11 [shape = 'u8[524288]{0}', space=vmem, size = 0x80000, scoped, tag = 'input window, operand 3']
    #allocation12 [shape = 'u8[262144]{0}', space=vmem, size = 0x40000, scoped, tag = 'output window, operand 0']
    %13 = vsyncpa [#allocation7], 0
    %s14 = scalar_lea.sflag [#allocation7], 1
    %15 = vsyncpa %s14, 0
    %16 = vsyncpa [#allocation10], 0
    %s17 = scalar_lea.sflag [#allocation10], 1
    %18 = vsyncpa %s17, 0
    %19 = vsyncpa [#allocation8], 0
    %s20 = scalar_lea.sflag [#allocation8], 1
    %21 = vsyncpa %s20, 0
    loop: start=0, step=1, limit=5
    $region2: #{tpu_custom_call.1} parent=1 // loop_pre_header
      _
    $region3: #{tpu_custom_call.1} parent=1 // loop_header
      %s23 = sphi 0, %s27
      %p24 = scmp.ge.s32.totalorder %s23, 5
      %s33 = sphi 0, %s35
      %s36 = sphi 0, %s33
      %s37 = sphi 0, %s36
      %s53 = sphi 0, %s37
      %s61 = sphi 0, %s63
      %s64 = sphi 0, %s61
      %s65 = sphi 0, %s64
      %s81 = sphi 0, %s65
      %s87 = sphi 0, %s89
      %s90 = sphi 0, %s87
      %s91 = sphi 0, %s90
      %s107 = sphi 0, %s91
      %s115 = sphi 0, %s117
      %s118 = sphi 0, %s115
      %s119 = sphi 0, %s118
      %s135 = sphi 0, %s119
    $region4: #{tpu_custom_call.1} parent=1 // loop_header_branch
      %26 = sbr.rel (%p24) target = $region8
    $region5: #{tpu_custom_call.1} parent=1 // loop_body
      %s28 = ssub.s32 %s23, 1
      %s29 = ssub.s32 %s23, 2
      %s30 = sadd.s32 %s23, 1
      %s31 = ssub.s32 %s23, %s30
      %p32 = scmp.eq.s32.totalorder %s31, 0
      %s34 = sadd.s32 %s33, 1
      %s35 = scalar_select %p32, %s33, %s34
      %p38 = pneg %p32
      %p39 = scmp.eq.s32.totalorder %s23, 2
      %p40 = por %p38, %p39
      %p41 = scmp.ne.s32.totalorder %s33, %s36
      %p42 = scmp.eq.s32.totalorder %s23, 0
      %p43 = por %p41, %p42
      %p44 = scmp.ne.s32.totalorder %s33, %s36
      %p45 = scmp.eq.s32.totalorder %s28, 2
      %p46 = por %p44, %p45
      %p47 = scmp.ne.s32.totalorder %s36, %s37
      %p48 = scmp.eq.s32.totalorder %s28, 0
      %p49 = por %p47, %p48
      %p50 = scmp.ne.s32.totalorder %s36, %s37
      %p51 = scmp.eq.s32.totalorder %s29, 2
      %p52 = por %p50, %p51
      %p54 = scmp.ne.s32.totalorder %s37, %s53
      %p55 = scmp.eq.s32.totalorder %s29, 0
      %p56 = por %p54, %p55
      %s57 = sld [smem:[#allocation5 + %s23]]
      %s58 = sld [smem:[#allocation5 + %s30]]
      %s59 = ssub.s32 %s57, %s58
      %p60 = scmp.eq.s32.totalorder %s59, 0
      %s62 = sadd.s32 %s61, 1
      %s63 = scalar_select %p60, %s61, %s62
      %p66 = pneg %p60
      %p67 = scmp.eq.s32.totalorder %s23, 2
      %p68 = por %p66, %p67
      %p69 = scmp.ne.s32.totalorder %s61, %s64
      %p70 = scmp.eq.s32.totalorder %s23, 0
      %p71 = por %p69, %p70
      %p72 = scmp.ne.s32.totalorder %s61, %s64
      %p73 = scmp.eq.s32.totalorder %s28, 2
      %p74 = por %p72, %p73
      %p75 = scmp.ne.s32.totalorder %s64, %s65
      %p76 = scmp.eq.s32.totalorder %s28, 0
      %p77 = por %p75, %p76
      %p78 = scmp.ne.s32.totalorder %s64, %s65
      %p79 = scmp.eq.s32.totalorder %s29, 2
      %p80 = por %p78, %p79
      %p82 = scmp.ne.s32.totalorder %s65, %s81
      %p83 = scmp.eq.s32.totalorder %s29, 0
      %p84 = por %p82, %p83
      %s85 = ssub.s32 %s23, %s30
      %p86 = scmp.eq.s32.totalorder %s85, 0
      %s88 = sadd.s32 %s87, 1
      %s89 = scalar_select %p86, %s87, %s88
      %p92 = pneg %p86
      %p93 = scmp.eq.s32.totalorder %s23, 2
      %p94 = por %p92, %p93
      %p95 = scmp.ne.s32.totalorder %s87, %s90
      %p96 = scmp.eq.s32.totalorder %s23, 0
      %p97 = por %p95, %p96
      %p98 = scmp.ne.s32.totalorder %s87, %s90
      %p99 = scmp.eq.s32.totalorder %s28, 2
      %p100 = por %p98, %p99
      %p101 = scmp.ne.s32.totalorder %s90, %s91
      %p102 = scmp.eq.s32.totalorder %s28, 0
      %p103 = por %p101, %p102
      %p104 = scmp.ne.s32.totalorder %s90, %s91
      %p105 = scmp.eq.s32.totalorder %s29, 2
      %p106 = por %p104, %p105
      %p108 = scmp.ne.s32.totalorder %s91, %s107
      %p109 = scmp.eq.s32.totalorder %s29, 0
      %p110 = por %p108, %p109
      %s111 = sld [smem:[#allocation5 + %s23]]
      %s112 = sld [smem:[#allocation5 + %s30]]
      %s113 = ssub.s32 %s111, %s112
      %p114 = scmp.eq.s32.totalorder %s113, 0
      %s116 = sadd.s32 %s115, 1
      %s117 = scalar_select %p114, %s115, %s116
      %p120 = pneg %p114
      %p121 = scmp.eq.s32.totalorder %s23, 2
      %p122 = por %p120, %p121
      %p123 = scmp.ne.s32.totalorder %s115, %s118
      %p124 = scmp.eq.s32.totalorder %s23, 0
      %p125 = por %p123, %p124
      %p126 = scmp.ne.s32.totalorder %s115, %s118
      %p127 = scmp.eq.s32.totalorder %s28, 2
      %p128 = por %p126, %p127
      %p129 = scmp.ne.s32.totalorder %s118, %s119
      %p130 = scmp.eq.s32.totalorder %s28, 0
      %p131 = por %p129, %p130
      %p132 = scmp.ne.s32.totalorder %s118, %s119
      %p133 = scmp.eq.s32.totalorder %s29, 2
      %p134 = por %p132, %p133
      %p136 = scmp.ne.s32.totalorder %s119, %s135
      %p137 = scmp.eq.s32.totalorder %s29, 0
      %p138 = por %p136, %p137
      %p139 = scmp.le.s32.totalorder 1, %s23
      %p140 = scmp.lt.s32.totalorder %s23, 4
      %p141 = pnand %p139, %p140
      %p142 = pneg %p141
      // Predicated region
      $region9: #{tpu_custom_call.1} parent=5 // pred_check
        _
      $region10: #{tpu_custom_call.1} parent=5 // pred_check_branch
        %144 = sbr.rel (%p141) target = $region12
      $region11: #{tpu_custom_call.1} parent=5 // pred_region
        %s145 = ssub.s32 %s23, 1
      $region12: #{tpu_custom_call.1} parent=5 // pred_fallthru
        _
      %p146 = scmp.lt.s32.totalorder %s23, 3
      // Predicated region
      $region13: #{tpu_custom_call.1} parent=5 // pred_check
        %p147 = pneg %p146
      $region14: #{tpu_custom_call.1} parent=5 // pred_check_branch
        %149 = sbr.rel (%p147) target = $region16
      $region15: #{tpu_custom_call.1} parent=5 // pred_region
        // Predicated region
        $region17: #{tpu_custom_call.1} parent=15 // pred_check
          %p150 = pneg %p43
        $region18: #{tpu_custom_call.1} parent=15 // pred_check_branch
          %152 = sbr.rel (%p150) target = $region20
        $region19: #{tpu_custom_call.1} parent=15 // pred_region
          %s153 = sand.u32 %s33, 1
          %s154 = scalar_lea.sflag [#allocation7], %s153
          %s155 = sand.u32 %s33, 1
          %s156 = smul.addr %s155, 8
          %s157 = scalar_lea.vmem [#allocation6], %s156
          %s158 = smul.u32 8, %s23
          %s160 = ssub.s32 128, 128
          %161 = vsyncadd %s154, %s160
          %s162 = smul.addr %s158, 16
          %s163 = scalar_lea.hbm %s1, %s162
          %s165 = sshll.u32 %s157, 4
          %s166 = int_to_ptr.vmem [resolvable:$true] %s165
          %168 = dma.hbm_to_vmem [thread:$0]  %s163, 128, %s166, %s154
        $region20: #{tpu_custom_call.1} parent=15 // pred_fallthru
          _
        // Predicated region
        $region21: #{tpu_custom_call.1} parent=15 // pred_check
          %p169 = pneg %p71
        $region22: #{tpu_custom_call.1} parent=15 // pred_check_branch
          %171 = sbr.rel (%p169) target = $region24
        $region23: #{tpu_custom_call.1} parent=15 // pred_region
          %s172 = sand.u32 %s23, 1
          %s173 = scalar_lea.sflag [#allocation10], %s172
          %s174 = sand.u32 %s61, 1
          %s175 = smul.addr %s174, 128
          %s176 = scalar_lea.vmem [#allocation9], %s175
          %s177 = sld [smem:[#allocation5 + %s23]]
          %s178 = smul.u32 32, %s177
          %s180 = ssub.s32 2048, 2048
          %181 = vsyncadd %s173, %s180
          %s182 = smul.addr %s178, 64
          %s183 = scalar_lea.hbm %s2, %s182
          %s184 = sshll.u32 %s176, 4
          %s185 = int_to_ptr.vmem [resolvable:$true] %s184
          %190 = dma.hbm_to_vmem [thread:$0]  %s183, 2048, %s185, %s173, 64, 64, 4
        $region24: #{tpu_custom_call.1} parent=15 // pred_fallthru
          _
        // Predicated region
        $region25: #{tpu_custom_call.1} parent=15 // pred_check
          %p191 = pneg %p97
        $region26: #{tpu_custom_call.1} parent=15 // pred_check_branch
          %193 = sbr.rel (%p191) target = $region28
        $region27: #{tpu_custom_call.1} parent=15 // pred_region
          %s194 = sand.u32 %s23, 1
          %s195 = scalar_lea.sflag [#allocation10], %s194
          %s196 = sand.u32 %s87, 1
          %s197 = smul.addr %s196, 512
          %s198 = scalar_lea.vmem [#allocation11], %s197
          %s199 = smul.u32 128, %s23
          %s201 = ssub.s32 8192, 8192
          %202 = vsyncadd %s195, %s201
          %s203 = smul.addr %s199, 64
          %s204 = scalar_lea.hbm %s3, %s203
          %s205 = sshll.u32 %s198, 4
          %s206 = int_to_ptr.vmem [resolvable:$true] %s205
          %211 = dma.hbm_to_vmem [thread:$0]  %s204, 8192, %s206, %s195, 64, 64, 4
        $region28: #{tpu_custom_call.1} parent=15 // pred_fallthru
          _
      $region16: #{tpu_custom_call.1} parent=5 // pred_fallthru
        _
      %p212 = scmp.le.s32.totalorder 1, %s23
      %p213 = scmp.lt.s32.totalorder %s23, 4
      %p214 = pnand %p212, %p213
      %p215 = pneg %p214
      // Predicated region
      $region29: #{tpu_custom_call.1} parent=5 // pred_check
        _
      $region30: #{tpu_custom_call.1} parent=5 // pred_check_branch
        %217 = sbr.rel (%p214) target = $region32
      $region31: #{tpu_custom_call.1} parent=5 // pred_region
        %s218 = ssub.s32 %s23, 1
        %s219 = sand.u32 %s36, 1
        %s220 = scalar_lea.sflag [#allocation7], %s219
        %s221 = sand.u32 %s36, 1
        %s222 = smul.addr %s221, 8
        %s223 = scalar_lea.vmem [#allocation6], %s222
        // Predicated region
        $region33: #{tpu_custom_call.1} parent=31 // pred_check
          %p224 = pneg %p49
        $region34: #{tpu_custom_call.1} parent=31 // pred_check_branch
          %226 = sbr.rel (%p224) target = $region36
        $region35: #{tpu_custom_call.1} parent=31 // pred_region
          %227 = dma.done %s220, 128
        $region36: #{tpu_custom_call.1} parent=31 // pred_fallthru
          _
        %s228 = sand.u32 %s28, 1
        %s229 = scalar_lea.sflag [#allocation10], %s228
        %s230 = sand.u32 %s64, 1
        %s231 = smul.addr %s230, 128
        %s232 = scalar_lea.vmem [#allocation9], %s231
        // Predicated region
        $region37: #{tpu_custom_call.1} parent=31 // pred_check
          %p233 = pneg %p77
        $region38: #{tpu_custom_call.1} parent=31 // pred_check_branch
          %235 = sbr.rel (%p233) target = $region40
        $region39: #{tpu_custom_call.1} parent=31 // pred_region
          %236 = dma.done %s229, 2048
        $region40: #{tpu_custom_call.1} parent=31 // pred_fallthru
          _
        %s237 = sand.u32 %s28, 1
        %s238 = scalar_lea.sflag [#allocation10], %s237
        %s239 = sand.u32 %s90, 1
        %s240 = smul.addr %s239, 512
        %s241 = scalar_lea.vmem [#allocation11], %s240
        // Predicated region
        $region41: #{tpu_custom_call.1} parent=31 // pred_check
          %p242 = pneg %p103
        $region42: #{tpu_custom_call.1} parent=31 // pred_check_branch
          %244 = sbr.rel (%p242) target = $region44
        $region43: #{tpu_custom_call.1} parent=31 // pred_region
          %245 = dma.done %s238, 8192
        $region44: #{tpu_custom_call.1} parent=31 // pred_fallthru
          _
        %s246 = sand.u32 %s36, 1
        %s247 = scalar_lea.sflag [#allocation7], %s246
        %s248 = sand.u32 %s36, 1
        %s249 = smul.addr %s248, 8
        %s250 = scalar_lea.vmem [#allocation6], %s249
        %p251 = pneg %p49
        %p252 = pneg %p46
        %s253 = sand.u32 %s28, 1
        %s254 = scalar_lea.sflag [#allocation10], %s253
        %s255 = sand.u32 %s64, 1
        %s256 = smul.addr %s255, 128
        %s257 = scalar_lea.vmem [#allocation9], %s256
        %p258 = pneg %p77
        %p259 = pneg %p74
        %s260 = sand.u32 %s28, 1
        %s261 = scalar_lea.sflag [#allocation10], %s260
        %s262 = sand.u32 %s90, 1
        %s263 = smul.addr %s262, 512
        %s264 = scalar_lea.vmem [#allocation11], %s263
        %p265 = pneg %p103
        %p266 = pneg %p100
        %p267 = pneg %p131
        %p268 = pneg %p128
        %s269 = sand.u32 %s118, 1
        %s270 = scalar_lea.sflag [#allocation8], %s269
        %s271 = sand.u32 %s118, 1
        %s272 = smul.addr %s271, 256
        %s273 = scalar_lea.vmem [#allocation12], %s272
        %s274 = smul.u32 8, %s28
        %s275 = sld [smem:[#allocation5 + %s28]]
        %s276 = smul.u32 32, %s275
        %s277 = smul.u32 128, %s28
        %s278 = sld [smem:[#allocation5 + %s28]]
        %s279 = smul.u32 32, %s278
        %s281 = sld [smem:[#allocation5 + %s28]]
        %p282 = scmp.eq.s32.totalorder %s28, 0
        %s283 = ssub.s32 %s28, 1
        %p284 = scmp.gt.s32.totalorder %s283, 0
        %s285 = scalar_select %p284, %s283, 0
        %s286 = sld [smem:[#allocation5 + %s285]]
        %p287 = scmp.ne.s32.totalorder %s286, %s281
        %p288 = por %p282, %p287
        %p289 = scmp.eq.s32.totalorder %s28, 2
        %s290 = sadd.s32 %s28, 1
        %p291 = scmp.lt.s32.totalorder %s290, 2
        %s292 = scalar_select %p291, %s290, 2
        %s293 = sld [smem:[#allocation5 + %s292]]
        %p294 = scmp.ne.s32.totalorder %s293, %s281
        %p295 = por %p289, %p294
        // Predicated region
        $region45: #{tpu_custom_call.1} parent=31 // pred_check
          %p296 = pneg %p288
        $region46: #{tpu_custom_call.1} parent=31 // pred_check_branch
          %298 = sbr.rel (%p296) target = $region48
        $region47: #{tpu_custom_call.1} parent=31 // pred_region
          %vm299 = vcmask 7168
          %300 = vst.msk [vmem:[#allocation2] sm:$0xff] %vm299, -1e+30
          %301 = vst.msk [vmem:[#allocation2 + $0x8] sm:$0xff] %vm299, -1e+30
          %302 = vst.msk [vmem:[#allocation2 + $0x10] sm:$0xff] %vm299, -1e+30
          %303 = vst.msk [vmem:[#allocation2 + $0x18] sm:$0xff] %vm299, -1e+30
          %304 = vst.msk [vmem:[#allocation2 + $0x20] sm:$0xff] %vm299, -1e+30
          %305 = vst.msk [vmem:[#allocation2 + $0x28] sm:$0xff] %vm299, -1e+30
          %306 = vst.msk [vmem:[#allocation2 + $0x30] sm:$0xff] %vm299, -1e+30
          %307 = vst.msk [vmem:[#allocation2 + $0x38] sm:$0xff] %vm299, -1e+30
          %308 = vst.msk [vmem:[#allocation2 + $0x40] sm:$0xff] %vm299, -1e+30
          %309 = vst.msk [vmem:[#allocation2 + $0x48] sm:$0xff] %vm299, -1e+30
          %310 = vst.msk [vmem:[#allocation2 + $0x50] sm:$0xff] %vm299, -1e+30
          %311 = vst.msk [vmem:[#allocation2 + $0x58] sm:$0xff] %vm299, -1e+30
          %312 = vst.msk [vmem:[#allocation2 + $0x60] sm:$0xff] %vm299, -1e+30
          %313 = vst.msk [vmem:[#allocation2 + $0x68] sm:$0xff] %vm299, -1e+30
          %314 = vst.msk [vmem:[#allocation2 + $0x70] sm:$0xff] %vm299, -1e+30
          %315 = vst.msk [vmem:[#allocation2 + $0x78] sm:$0xff] %vm299, -1e+30
          %316 = vst.msk [vmem:[#allocation2 + $0x80] sm:$0xff] %vm299, -1e+30
          %317 = vst.msk [vmem:[#allocation2 + $0x88] sm:$0xff] %vm299, -1e+30
          %318 = vst.msk [vmem:[#allocation2 + $0x90] sm:$0xff] %vm299, -1e+30
          %319 = vst.msk [vmem:[#allocation2 + $0x98] sm:$0xff] %vm299, -1e+30
          %320 = vst.msk [vmem:[#allocation2 + $0xa0] sm:$0xff] %vm299, -1e+30
          %321 = vst.msk [vmem:[#allocation2 + $0xa8] sm:$0xff] %vm299, -1e+30
          %322 = vst.msk [vmem:[#allocation2 + $0xb0] sm:$0xff] %vm299, -1e+30
          %323 = vst.msk [vmem:[#allocation2 + $0xb8] sm:$0xff] %vm299, -1e+30
          %324 = vst.msk [vmem:[#allocation2 + $0xc0] sm:$0xff] %vm299, -1e+30
          %325 = vst.msk [vmem:[#allocation2 + $0xc8] sm:$0xff] %vm299, -1e+30
          %326 = vst.msk [vmem:[#allocation2 + $0xd0] sm:$0xff] %vm299, -1e+30
          %327 = vst.msk [vmem:[#allocation2 + $0xd8] sm:$0xff] %vm299, -1e+30
          %328 = vst.msk [vmem:[#allocation2 + $0xe0] sm:$0xff] %vm299, -1e+30
          %329 = vst.msk [vmem:[#allocation2 + $0xe8] sm:$0xff] %vm299, -1e+30
          %330 = vst.msk [vmem:[#allocation2 + $0xf0] sm:$0xff] %vm299, -1e+30
          %331 = vst.msk [vmem:[#allocation2 + $0xf8] sm:$0xff] %vm299, -1e+30
          %332 = vst.msk [vmem:[#allocation3] sm:$0xff] %vm299, 0.0
          %333 = vst.msk [vmem:[#allocation3 + $0x8] sm:$0xff] %vm299, 0.0
          %334 = vst.msk [vmem:[#allocation3 + $0x10] sm:$0xff] %vm299, 0.0
          %335 = vst.msk [vmem:[#allocation3 + $0x18] sm:$0xff] %vm299, 0.0
          %336 = vst.msk [vmem:[#allocation3 + $0x20] sm:$0xff] %vm299, 0.0
          %337 = vst.msk [vmem:[#allocation3 + $0x28] sm:$0xff] %vm299, 0.0
          %338 = vst.msk [vmem:[#allocation3 + $0x30] sm:$0xff] %vm299, 0.0
          %339 = vst.msk [vmem:[#allocation3 + $0x38] sm:$0xff] %vm299, 0.0
          %340 = vst.msk [vmem:[#allocation3 + $0x40] sm:$0xff] %vm299, 0.0
          %341 = vst.msk [vmem:[#allocation3 + $0x48] sm:$0xff] %vm299, 0.0
          %342 = vst.msk [vmem:[#allocation3 + $0x50] sm:$0xff] %vm299, 0.0
          %343 = vst.msk [vmem:[#allocation3 + $0x58] sm:$0xff] %vm299, 0.0
          %344 = vst.msk [vmem:[#allocation3 + $0x60] sm:$0xff] %vm299, 0.0
          %345 = vst.msk [vmem:[#allocation3 + $0x68] sm:$0xff] %vm299, 0.0
          %346 = vst.msk [vmem:[#allocation3 + $0x70] sm:$0xff] %vm299, 0.0
          %347 = vst.msk [vmem:[#allocation3 + $0x78] sm:$0xff] %vm299, 0.0
          %348 = vst.msk [vmem:[#allocation3 + $0x80] sm:$0xff] %vm299, 0.0
          %349 = vst.msk [vmem:[#allocation3 + $0x88] sm:$0xff] %vm299, 0.0
          %350 = vst.msk [vmem:[#allocation3 + $0x90] sm:$0xff] %vm299, 0.0
          %351 = vst.msk [vmem:[#allocation3 + $0x98] sm:$0xff] %vm299, 0.0
          %352 = vst.msk [vmem:[#allocation3 + $0xa0] sm:$0xff] %vm299, 0.0
          %353 = vst.msk [vmem:[#allocation3 + $0xa8] sm:$0xff] %vm299, 0.0
          %354 = vst.msk [vmem:[#allocation3 + $0xb0] sm:$0xff] %vm299, 0.0
          %355 = vst.msk [vmem:[#allocation3 + $0xb8] sm:$0xff] %vm299, 0.0
          %356 = vst.msk [vmem:[#allocation3 + $0xc0] sm:$0xff] %vm299, 0.0
          %357 = vst.msk [vmem:[#allocation3 + $0xc8] sm:$0xff] %vm299, 0.0
          %358 = vst.msk [vmem:[#allocation3 + $0xd0] sm:$0xff] %vm299, 0.0
          %359 = vst.msk [vmem:[#allocation3 + $0xd8] sm:$0xff] %vm299, 0.0
          %360 = vst.msk [vmem:[#allocation3 + $0xe0] sm:$0xff] %vm299, 0.0
          %361 = vst.msk [vmem:[#allocation3 + $0xe8] sm:$0xff] %vm299, 0.0
          %362 = vst.msk [vmem:[#allocation3 + $0xf0] sm:$0xff] %vm299, 0.0
          %363 = vst.msk [vmem:[#allocation3 + $0xf8] sm:$0xff] %vm299, 0.0
          %364 = vst [vmem:[%s273] sm:$0xff] 0.0
          %365 = vst [vmem:[%s273 + $0x8] sm:$0xff] 0.0
          %366 = vst [vmem:[%s273 + $0x10] sm:$0xff] 0.0
          %367 = vst [vmem:[%s273 + $0x18] sm:$0xff] 0.0
          %368 = vst [vmem:[%s273 + $0x20] sm:$0xff] 0.0
          %369 = vst [vmem:[%s273 + $0x28] sm:$0xff] 0.0
          %370 = vst [vmem:[%s273 + $0x30] sm:$0xff] 0.0
          %371 = vst [vmem:[%s273 + $0x38] sm:$0xff] 0.0
          %372 = vst [vmem:[%s273 + $0x40] sm:$0xff] 0.0
          %373 = vst [vmem:[%s273 + $0x48] sm:$0xff] 0.0
          %374 = vst [vmem:[%s273 + $0x50] sm:$0xff] 0.0
          %375 = vst [vmem:[%s273 + $0x58] sm:$0xff] 0.0
          %376 = vst [vmem:[%s273 + $0x60] sm:$0xff] 0.0
          %377 = vst [vmem:[%s273 + $0x68] sm:$0xff] 0.0
          %378 = vst [vmem:[%s273 + $0x70] sm:$0xff] 0.0
          %379 = vst [vmem:[%s273 + $0x78] sm:$0xff] 0.0
          %380 = vst [vmem:[%s273 + $0x80] sm:$0xff] 0.0
          %381 = vst [vmem:[%s273 + $0x88] sm:$0xff] 0.0
          %382 = vst [vmem:[%s273 + $0x90] sm:$0xff] 0.0
          %383 = vst [vmem:[%s273 + $0x98] sm:$0xff] 0.0
          %384 = vst [vmem:[%s273 + $0xa0] sm:$0xff] 0.0
          %385 = vst [vmem:[%s273 + $0xa8] sm:$0xff] 0.0
          %386 = vst [vmem:[%s273 + $0xb0] sm:$0xff] 0.0
          %387 = vst [vmem:[%s273 + $0xb8] sm:$0xff] 0.0
          %388 = vst [vmem:[%s273 + $0xc0] sm:$0xff] 0.0
          %389 = vst [vmem:[%s273 + $0xc8] sm:$0xff] 0.0
          %390 = vst [vmem:[%s273 + $0xd0] sm:$0xff] 0.0
          %391 = vst [vmem:[%s273 + $0xd8] sm:$0xff] 0.0
          %392 = vst [vmem:[%s273 + $0xe0] sm:$0xff] 0.0
          %393 = vst [vmem:[%s273 + $0xe8] sm:$0xff] 0.0
          %394 = vst [vmem:[%s273 + $0xf0] sm:$0xff] 0.0
          %395 = vst [vmem:[%s273 + $0xf8] sm:$0xff] 0.0
        $region48: #{tpu_custom_call.1} parent=31 // pred_fallthru
          _
        %v396 = vlaneseq
        %v397 = vshrl.u32 %v396, 7
        %v398 = vadd.s32 %v397, 8
        %v399 = vadd.s32 %v397, 16
        %v400 = vadd.s32 %v397, 24
        %v401 = vadd.s32 %v397, 32
        %v402 = vadd.s32 %v397, 40
        %v403 = vadd.s32 %v397, 48
        %v404 = vadd.s32 %v397, 56
        %v405 = vadd.s32 %v397, 64
        %v406 = vadd.s32 %v397, 72
        %v407 = vadd.s32 %v397, 80
        %v408 = vadd.s32 %v397, 88
        %v409 = vadd.s32 %v397, 96
        %v410 = vadd.s32 %v397, 104
        %v411 = vadd.s32 %v397, 112
        %v412 = vadd.s32 %v397, 120
        %v413 = vadd.s32 %v397, 128
        %v414 = vadd.s32 %v397, 136
        %v415 = vadd.s32 %v397, 144
        %v416 = vadd.s32 %v397, 152
        %v417 = vadd.s32 %v397, 160
        %v418 = vadd.s32 %v397, 168
        %v419 = vadd.s32 %v397, 176
        %v420 = vadd.s32 %v397, 184
        %v421 = vadd.s32 %v397, 192
        %v422 = vadd.s32 %v397, 200
        %v423 = vadd.s32 %v397, 208
        %v424 = vadd.s32 %v397, 216
        %v425 = vadd.s32 %v397, 224
        %v426 = vadd.s32 %v397, 232
        %v427 = vadd.s32 %v397, 240
        %v428 = vadd.s32 %v397, 248
        %v429 = vld [vmem:[%s223] sm:$0xff]
        %s430 = smul.u32 %s281, 256
        %v431 = vstv %s430
        %v432 = vsub.s32 %v429, %v431
        %v433 = vlaneseq
        %v434 = vshrl.u32 %v433, 7
        %v435 = vsub.s32 0, %v434
        %v436 = vrot.slane %v432, %v435
        %v437 = vlaneseq
        %v438 = vshrl.u32 %v437, 7
        %v439 = vsub.s32 1, %v438
        %v440 = vrot.slane %v432, %v439
        %v441 = vlaneseq
        %v442 = vshrl.u32 %v441, 7
        %v443 = vsub.s32 2, %v442
        %v444 = vrot.slane %v432, %v443
        %v445 = vlaneseq
        %v446 = vshrl.u32 %v445, 7
        %v447 = vsub.s32 3, %v446
        %v448 = vrot.slane %v432, %v447
        %v449 = vlaneseq
        %v450 = vshrl.u32 %v449, 7
        %v451 = vsub.s32 4, %v450
        %v452 = vrot.slane %v432, %v451
        %v453 = vlaneseq
        %v454 = vshrl.u32 %v453, 7
        %v455 = vsub.s32 5, %v454
        %v456 = vrot.slane %v432, %v455
        %v457 = vlaneseq
        %v458 = vshrl.u32 %v457, 7
        %v459 = vsub.s32 6, %v458
        %v460 = vrot.slane %v432, %v459
        %v461 = vlaneseq
        %v462 = vshrl.u32 %v461, 7
        %v463 = vsub.s32 7, %v462
        %v464 = vrot.slane %v432, %v463
        %vm465 = vcmp.eq.s32.totalorder %v397, %v436
        %vm466 = vcmp.eq.s32.totalorder %v397, %v440
        %vm467 = vcmp.eq.s32.totalorder %v397, %v444
        %vm468 = vcmp.eq.s32.totalorder %v397, %v448
        %vm469 = vcmp.eq.s32.totalorder %v397, %v452
        %vm470 = vcmp.eq.s32.totalorder %v397, %v456
        %vm471 = vcmp.eq.s32.totalorder %v397, %v460
        %vm472 = vcmp.eq.s32.totalorder %v397, %v464
        %vm473 = vcmp.eq.s32.totalorder %v398, %v436
        %vm474 = vcmp.eq.s32.totalorder %v398, %v440
        %vm475 = vcmp.eq.s32.totalorder %v398, %v444
        %vm476 = vcmp.eq.s32.totalorder %v398, %v448
        %vm477 = vcmp.eq.s32.totalorder %v398, %v452
        %vm478 = vcmp.eq.s32.totalorder %v398, %v456
        %vm479 = vcmp.eq.s32.totalorder %v398, %v460
        %vm480 = vcmp.eq.s32.totalorder %v398, %v464
        %vm481 = vcmp.eq.s32.totalorder %v399, %v436
        %vm482 = vcmp.eq.s32.totalorder %v399, %v440
        %vm483 = vcmp.eq.s32.totalorder %v399, %v444
        %vm484 = vcmp.eq.s32.totalorder %v399, %v448
        %vm485 = vcmp.eq.s32.totalorder %v399, %v452
        %vm486 = vcmp.eq.s32.totalorder %v399, %v456
        %vm487 = vcmp.eq.s32.totalorder %v399, %v460
        %vm488 = vcmp.eq.s32.totalorder %v399, %v464
        %vm489 = vcmp.eq.s32.totalorder %v400, %v436
        %vm490 = vcmp.eq.s32.totalorder %v400, %v440
        %vm491 = vcmp.eq.s32.totalorder %v400, %v444
        %vm492 = vcmp.eq.s32.totalorder %v400, %v448
        %vm493 = vcmp.eq.s32.totalorder %v400, %v452
        %vm494 = vcmp.eq.s32.totalorder %v400, %v456
        %vm495 = vcmp.eq.s32.totalorder %v400, %v460
        %vm496 = vcmp.eq.s32.totalorder %v400, %v464
        %vm497 = vcmp.eq.s32.totalorder %v401, %v436
        %vm498 = vcmp.eq.s32.totalorder %v401, %v440
        %vm499 = vcmp.eq.s32.totalorder %v401, %v444
        %vm500 = vcmp.eq.s32.totalorder %v401, %v448
        %vm501 = vcmp.eq.s32.totalorder %v401, %v452
        %vm502 = vcmp.eq.s32.totalorder %v401, %v456
        %vm503 = vcmp.eq.s32.totalorder %v401, %v460
        %vm504 = vcmp.eq.s32.totalorder %v401, %v464
        %vm505 = vcmp.eq.s32.totalorder %v402, %v436
        %vm506 = vcmp.eq.s32.totalorder %v402, %v440
        %vm507 = vcmp.eq.s32.totalorder %v402, %v444
        %vm508 = vcmp.eq.s32.totalorder %v402, %v448
        %vm509 = vcmp.eq.s32.totalorder %v402, %v452
        %vm510 = vcmp.eq.s32.totalorder %v402, %v456
        %vm511 = vcmp.eq.s32.totalorder %v402, %v460
        %vm512 = vcmp.eq.s32.totalorder %v402, %v464
        %vm513 = vcmp.eq.s32.totalorder %v403, %v436
        %vm514 = vcmp.eq.s32.totalorder %v403, %v440
        %vm515 = vcmp.eq.s32.totalorder %v403, %v444
        %vm516 = vcmp.eq.s32.totalorder %v403, %v448
        %vm517 = vcmp.eq.s32.totalorder %v403, %v452
        %vm518 = vcmp.eq.s32.totalorder %v403, %v456
        %vm519 = vcmp.eq.s32.totalorder %v403, %v460
        %vm520 = vcmp.eq.s32.totalorder %v403, %v464
        %vm521 = vcmp.eq.s32.totalorder %v404, %v436
        %vm522 = vcmp.eq.s32.totalorder %v404, %v440
        %vm523 = vcmp.eq.s32.totalorder %v404, %v444
        %vm524 = vcmp.eq.s32.totalorder %v404, %v448
        %vm525 = vcmp.eq.s32.totalorder %v404, %v452
        %vm526 = vcmp.eq.s32.totalorder %v404, %v456
        %vm527 = vcmp.eq.s32.totalorder %v404, %v460
        %vm528 = vcmp.eq.s32.totalorder %v404, %v464
        %vm529 = vcmp.eq.s32.totalorder %v405, %v436
        %vm530 = vcmp.eq.s32.totalorder %v405, %v440
        %vm531 = vcmp.eq.s32.totalorder %v405, %v444
        %vm532 = vcmp.eq.s32.totalorder %v405, %v448
        %vm533 = vcmp.eq.s32.totalorder %v405, %v452
        %vm534 = vcmp.eq.s32.totalorder %v405, %v456
        %vm535 = vcmp.eq.s32.totalorder %v405, %v460
        %vm536 = vcmp.eq.s32.totalorder %v405, %v464
        %vm537 = vcmp.eq.s32.totalorder %v406, %v436
        %vm538 = vcmp.eq.s32.totalorder %v406, %v440
        %vm539 = vcmp.eq.s32.totalorder %v406, %v444
        %vm540 = vcmp.eq.s32.totalorder %v406, %v448
        %vm541 = vcmp.eq.s32.totalorder %v406, %v452
        %vm542 = vcmp.eq.s32.totalorder %v406, %v456
        %vm543 = vcmp.eq.s32.totalorder %v406, %v460
        %vm544 = vcmp.eq.s32.totalorder %v406, %v464
        %vm545 = vcmp.eq.s32.totalorder %v407, %v436
        %vm546 = vcmp.eq.s32.totalorder %v407, %v440
        %vm547 = vcmp.eq.s32.totalorder %v407, %v444
        %vm548 = vcmp.eq.s32.totalorder %v407, %v448
        %vm549 = vcmp.eq.s32.totalorder %v407, %v452
        %vm550 = vcmp.eq.s32.totalorder %v407, %v456
        %vm551 = vcmp.eq.s32.totalorder %v407, %v460
        %vm552 = vcmp.eq.s32.totalorder %v407, %v464
        %vm553 = vcmp.eq.s32.totalorder %v408, %v436
        %vm554 = vcmp.eq.s32.totalorder %v408, %v440
        %vm555 = vcmp.eq.s32.totalorder %v408, %v444
        %vm556 = vcmp.eq.s32.totalorder %v408, %v448
        %vm557 = vcmp.eq.s32.totalorder %v408, %v452
        %vm558 = vcmp.eq.s32.totalorder %v408, %v456
        %vm559 = vcmp.eq.s32.totalorder %v408, %v460
        %vm560 = vcmp.eq.s32.totalorder %v408, %v464
        %vm561 = vcmp.eq.s32.totalorder %v409, %v436
        %vm562 = vcmp.eq.s32.totalorder %v409, %v440
        %vm563 = vcmp.eq.s32.totalorder %v409, %v444
        %vm564 = vcmp.eq.s32.totalorder %v409, %v448
        %vm565 = vcmp.eq.s32.totalorder %v409, %v452
        %vm566 = vcmp.eq.s32.totalorder %v409, %v456
        %vm567 = vcmp.eq.s32.totalorder %v409, %v460
        %vm568 = vcmp.eq.s32.totalorder %v409, %v464
        %vm569 = vcmp.eq.s32.totalorder %v410, %v436
        %vm570 = vcmp.eq.s32.totalorder %v410, %v440
        %vm571 = vcmp.eq.s32.totalorder %v410, %v444
        %vm572 = vcmp.eq.s32.totalorder %v410, %v448
        %vm573 = vcmp.eq.s32.totalorder %v410, %v452
        %vm574 = vcmp.eq.s32.totalorder %v410, %v456
        %vm575 = vcmp.eq.s32.totalorder %v410, %v460
        %vm576 = vcmp.eq.s32.totalorder %v410, %v464
        %vm577 = vcmp.eq.s32.totalorder %v411, %v436
        %vm578 = vcmp.eq.s32.totalorder %v411, %v440
        %vm579 = vcmp.eq.s32.totalorder %v411, %v444
        %vm580 = vcmp.eq.s32.totalorder %v411, %v448
        %vm581 = vcmp.eq.s32.totalorder %v411, %v452
        %vm582 = vcmp.eq.s32.totalorder %v411, %v456
        %vm583 = vcmp.eq.s32.totalorder %v411, %v460
        %vm584 = vcmp.eq.s32.totalorder %v411, %v464
        %vm585 = vcmp.eq.s32.totalorder %v412, %v436
        %vm586 = vcmp.eq.s32.totalorder %v412, %v440
        %vm587 = vcmp.eq.s32.totalorder %v412, %v444
        %vm588 = vcmp.eq.s32.totalorder %v412, %v448
        %vm589 = vcmp.eq.s32.totalorder %v412, %v452
        %vm590 = vcmp.eq.s32.totalorder %v412, %v456
        %vm591 = vcmp.eq.s32.totalorder %v412, %v460
        %vm592 = vcmp.eq.s32.totalorder %v412, %v464
        %vm593 = vcmp.eq.s32.totalorder %v413, %v436
        %vm594 = vcmp.eq.s32.totalorder %v413, %v440
        %vm595 = vcmp.eq.s32.totalorder %v413, %v444
        %vm596 = vcmp.eq.s32.totalorder %v413, %v448
        %vm597 = vcmp.eq.s32.totalorder %v413, %v452
        %vm598 = vcmp.eq.s32.totalorder %v413, %v456
        %vm599 = vcmp.eq.s32.totalorder %v413, %v460
        %vm600 = vcmp.eq.s32.totalorder %v413, %v464
        %vm601 = vcmp.eq.s32.totalorder %v414, %v436
        %vm602 = vcmp.eq.s32.totalorder %v414, %v440
        %vm603 = vcmp.eq.s32.totalorder %v414, %v444
        %vm604 = vcmp.eq.s32.totalorder %v414, %v448
        %vm605 = vcmp.eq.s32.totalorder %v414, %v452
        %vm606 = vcmp.eq.s32.totalorder %v414, %v456
        %vm607 = vcmp.eq.s32.totalorder %v414, %v460
        %vm608 = vcmp.eq.s32.totalorder %v414, %v464
        %vm609 = vcmp.eq.s32.totalorder %v415, %v436
        %vm610 = vcmp.eq.s32.totalorder %v415, %v440
        %vm611 = vcmp.eq.s32.totalorder %v415, %v444
        %vm612 = vcmp.eq.s32.totalorder %v415, %v448
        %vm613 = vcmp.eq.s32.totalorder %v415, %v452
        %vm614 = vcmp.eq.s32.totalorder %v415, %v456
        %vm615 = vcmp.eq.s32.totalorder %v415, %v460
        %vm616 = vcmp.eq.s32.totalorder %v415, %v464
        %vm617 = vcmp.eq.s32.totalorder %v416, %v436
        %vm618 = vcmp.eq.s32.totalorder %v416, %v440
        %vm619 = vcmp.eq.s32.totalorder %v416, %v444
        %vm620 = vcmp.eq.s32.totalorder %v416, %v448
        %vm621 = vcmp.eq.s32.totalorder %v416, %v452
        %vm622 = vcmp.eq.s32.totalorder %v416, %v456
        %vm623 = vcmp.eq.s32.totalorder %v416, %v460
        %vm624 = vcmp.eq.s32.totalorder %v416, %v464
        %vm625 = vcmp.eq.s32.totalorder %v417, %v436
        %vm626 = vcmp.eq.s32.totalorder %v417, %v440
        %vm627 = vcmp.eq.s32.totalorder %v417, %v444
        %vm628 = vcmp.eq.s32.totalorder %v417, %v448
        %vm629 = vcmp.eq.s32.totalorder %v417, %v452
        %vm630 = vcmp.eq.s32.totalorder %v417, %v456
        %vm631 = vcmp.eq.s32.totalorder %v417, %v460
        %vm632 = vcmp.eq.s32.totalorder %v417, %v464
        %vm633 = vcmp.eq.s32.totalorder %v418, %v436
        %vm634 = vcmp.eq.s32.totalorder %v418, %v440
        %vm635 = vcmp.eq.s32.totalorder %v418, %v444
        %vm636 = vcmp.eq.s32.totalorder %v418, %v448
        %vm637 = vcmp.eq.s32.totalorder %v418, %v452
        %vm638 = vcmp.eq.s32.totalorder %v418, %v456
        %vm639 = vcmp.eq.s32.totalorder %v418, %v460
        %vm640 = vcmp.eq.s32.totalorder %v418, %v464
        %vm641 = vcmp.eq.s32.totalorder %v419, %v436
        %vm642 = vcmp.eq.s32.totalorder %v419, %v440
        %vm643 = vcmp.eq.s32.totalorder %v419, %v444
        %vm644 = vcmp.eq.s32.totalorder %v419, %v448
        %vm645 = vcmp.eq.s32.totalorder %v419, %v452
        %vm646 = vcmp.eq.s32.totalorder %v419, %v456
        %vm647 = vcmp.eq.s32.totalorder %v419, %v460
        %vm648 = vcmp.eq.s32.totalorder %v419, %v464
        %vm649 = vcmp.eq.s32.totalorder %v420, %v436
        %vm650 = vcmp.eq.s32.totalorder %v420, %v440
        %vm651 = vcmp.eq.s32.totalorder %v420, %v444
        %vm652 = vcmp.eq.s32.totalorder %v420, %v448
        %vm653 = vcmp.eq.s32.totalorder %v420, %v452
        %vm654 = vcmp.eq.s32.totalorder %v420, %v456
        %vm655 = vcmp.eq.s32.totalorder %v420, %v460
        %vm656 = vcmp.eq.s32.totalorder %v420, %v464
        %vm657 = vcmp.eq.s32.totalorder %v421, %v436
        %vm658 = vcmp.eq.s32.totalorder %v421, %v440
        %vm659 = vcmp.eq.s32.totalorder %v421, %v444
        %vm660 = vcmp.eq.s32.totalorder %v421, %v448
        %vm661 = vcmp.eq.s32.totalorder %v421, %v452
        %vm662 = vcmp.eq.s32.totalorder %v421, %v456
        %vm663 = vcmp.eq.s32.totalorder %v421, %v460
        %vm664 = vcmp.eq.s32.totalorder %v421, %v464
        %vm665 = vcmp.eq.s32.totalorder %v422, %v436
        %vm666 = vcmp.eq.s32.totalorder %v422, %v440
        %vm667 = vcmp.eq.s32.totalorder %v422, %v444
        %vm668 = vcmp.eq.s32.totalorder %v422, %v448
        %vm669 = vcmp.eq.s32.totalorder %v422, %v452
        %vm670 = vcmp.eq.s32.totalorder %v422, %v456
        %vm671 = vcmp.eq.s32.totalorder %v422, %v460
        %vm672 = vcmp.eq.s32.totalorder %v422, %v464
        %vm673 = vcmp.eq.s32.totalorder %v423, %v436
        %vm674 = vcmp.eq.s32.totalorder %v423, %v440
        %vm675 = vcmp.eq.s32.totalorder %v423, %v444
        %vm676 = vcmp.eq.s32.totalorder %v423, %v448
        %vm677 = vcmp.eq.s32.totalorder %v423, %v452
        %vm678 = vcmp.eq.s32.totalorder %v423, %v456
        %vm679 = vcmp.eq.s32.totalorder %v423, %v460
        %vm680 = vcmp.eq.s32.totalorder %v423, %v464
        %vm681 = vcmp.eq.s32.totalorder %v424, %v436
        %vm682 = vcmp.eq.s32.totalorder %v424, %v440
        %vm683 = vcmp.eq.s32.totalorder %v424, %v444
        %vm684 = vcmp.eq.s32.totalorder %v424, %v448
        %vm685 = vcmp.eq.s32.totalorder %v424, %v452
        %vm686 = vcmp.eq.s32.totalorder %v424, %v456
        %vm687 = vcmp.eq.s32.totalorder %v424, %v460
        %vm688 = vcmp.eq.s32.totalorder %v424, %v464
        %vm689 = vcmp.eq.s32.totalorder %v425, %v436
        %vm690 = vcmp.eq.s32.totalorder %v425, %v440
        %vm691 = vcmp.eq.s32.totalorder %v425, %v444
        %vm692 = vcmp.eq.s32.totalorder %v425, %v448
        %vm693 = vcmp.eq.s32.totalorder %v425, %v452
        %vm694 = vcmp.eq.s32.totalorder %v425, %v456
        %vm695 = vcmp.eq.s32.totalorder %v425, %v460
        %vm696 = vcmp.eq.s32.totalorder %v425, %v464
        %vm697 = vcmp.eq.s32.totalorder %v426, %v436
        %vm698 = vcmp.eq.s32.totalorder %v426, %v440
        %vm699 = vcmp.eq.s32.totalorder %v426, %v444
        %vm700 = vcmp.eq.s32.totalorder %v426, %v448
        %vm701 = vcmp.eq.s32.totalorder %v426, %v452
        %vm702 = vcmp.eq.s32.totalorder %v426, %v456
        %vm703 = vcmp.eq.s32.totalorder %v426, %v460
        %vm704 = vcmp.eq.s32.totalorder %v426, %v464
        %vm705 = vcmp.eq.s32.totalorder %v427, %v436
        %vm706 = vcmp.eq.s32.totalorder %v427, %v440
        %vm707 = vcmp.eq.s32.totalorder %v427, %v444
        %vm708 = vcmp.eq.s32.totalorder %v427, %v448
        %vm709 = vcmp.eq.s32.totalorder %v427, %v452
        %vm710 = vcmp.eq.s32.totalorder %v427, %v456
        %vm711 = vcmp.eq.s32.totalorder %v427, %v460
        %vm712 = vcmp.eq.s32.totalorder %v427, %v464
        %vm713 = vcmp.eq.s32.totalorder %v428, %v436
        %vm714 = vcmp.eq.s32.totalorder %v428, %v440
        %vm715 = vcmp.eq.s32.totalorder %v428, %v444
        %vm716 = vcmp.eq.s32.totalorder %v428, %v448
        %vm717 = vcmp.eq.s32.totalorder %v428, %v452
        %vm718 = vcmp.eq.s32.totalorder %v428, %v456
        %vm719 = vcmp.eq.s32.totalorder %v428, %v460
        %vm720 = vcmp.eq.s32.totalorder %v428, %v464
        %v721 = vld [vmem:[%s232] sm:$0xf]
        %v722 = vld [vmem:[%s232 + $0x4] sm:$0xf]
        %v723 = vld [vmem:[%s232 + $0x8] sm:$0xf]
        %v724 = vld [vmem:[%s232 + $0xc] sm:$0xf]
        %v725 = vld [vmem:[%s232 + $0x10] sm:$0xf]
        %v726 = vld [vmem:[%s232 + $0x14] sm:$0xf]
        %v727 = vld [vmem:[%s232 + $0x18] sm:$0xf]
        %v728 = vld [vmem:[%s232 + $0x1c] sm:$0xf]
        %v729 = vld [vmem:[%s232 + $0x20] sm:$0xf]
        %v730 = vld [vmem:[%s232 + $0x24] sm:$0xf]
        %v731 = vld [vmem:[%s232 + $0x28] sm:$0xf]
        %v732 = vld [vmem:[%s232 + $0x2c] sm:$0xf]
        %v733 = vld [vmem:[%s232 + $0x30] sm:$0xf]
        %v734 = vld [vmem:[%s232 + $0x34] sm:$0xf]
        %v735 = vld [vmem:[%s232 + $0x38] sm:$0xf]
        %v736 = vld [vmem:[%s232 + $0x3c] sm:$0xf]
        %v737 = vld [vmem:[%s232 + $0x40] sm:$0xf]
        %v738 = vld [vmem:[%s232 + $0x44] sm:$0xf]
        %v739 = vld [vmem:[%s232 + $0x48] sm:$0xf]
        %v740 = vld [vmem:[%s232 + $0x4c] sm:$0xf]
        %v741 = vld [vmem:[%s232 + $0x50] sm:$0xf]
        %v742 = vld [vmem:[%s232 + $0x54] sm:$0xf]
        %v743 = vld [vmem:[%s232 + $0x58] sm:$0xf]
        %v744 = vld [vmem:[%s232 + $0x5c] sm:$0xf]
        %v745 = vld [vmem:[%s232 + $0x60] sm:$0xf]
        %v746 = vld [vmem:[%s232 + $0x64] sm:$0xf]
        %v747 = vld [vmem:[%s232 + $0x68] sm:$0xf]
        %v748 = vld [vmem:[%s232 + $0x6c] sm:$0xf]
        %v749 = vld [vmem:[%s232 + $0x70] sm:$0xf]
        %v750 = vld [vmem:[%s232 + $0x74] sm:$0xf]
        %v751 = vld [vmem:[%s232 + $0x78] sm:$0xf]
        %v752 = vld [vmem:[%s232 + $0x7c] sm:$0xf]
        %v753 = vld [vmem:[%s241] sm:$0xf]
        %v754 = vld [vmem:[%s241 + $0x4] sm:$0xf]
        %v755 = vld [vmem:[%s241 + $0x8] sm:$0xf]
        %v756 = vld [vmem:[%s241 + $0xc] sm:$0xf]
        %v757 = vld [vmem:[%s241 + $0x10] sm:$0xf]
        %v758 = vld [vmem:[%s241 + $0x14] sm:$0xf]
        %v759 = vld [vmem:[%s241 + $0x18] sm:$0xf]
        %v760 = vld [vmem:[%s241 + $0x1c] sm:$0xf]
        %v761 = vld [vmem:[%s241 + $0x20] sm:$0xf]
        %v762 = vld [vmem:[%s241 + $0x24] sm:$0xf]
        %v763 = vld [vmem:[%s241 + $0x28] sm:$0xf]
        %v764 = vld [vmem:[%s241 + $0x2c] sm:$0xf]
        %v765 = vld [vmem:[%s241 + $0x30] sm:$0xf]
        %v766 = vld [vmem:[%s241 + $0x34] sm:$0xf]
        %v767 = vld [vmem:[%s241 + $0x38] sm:$0xf]
        %v768 = vld [vmem:[%s241 + $0x3c] sm:$0xf]
        %v769 = vld [vmem:[%s241 + $0x40] sm:$0xf]
        %v770 = vld [vmem:[%s241 + $0x44] sm:$0xf]
        %v771 = vld [vmem:[%s241 + $0x48] sm:$0xf]
        %v772 = vld [vmem:[%s241 + $0x4c] sm:$0xf]
        %v773 = vld [vmem:[%s241 + $0x50] sm:$0xf]
        %v774 = vld [vmem:[%s241 + $0x54] sm:$0xf]
        %v775 = vld [vmem:[%s241 + $0x58] sm:$0xf]
        %v776 = vld [vmem:[%s241 + $0x5c] sm:$0xf]
        %v777 = vld [vmem:[%s241 + $0x60] sm:$0xf]
        %v778 = vld [vmem:[%s241 + $0x64] sm:$0xf]
        %v779 = vld [vmem:[%s241 + $0x68] sm:$0xf]
        %v780 = vld [vmem:[%s241 + $0x6c] sm:$0xf]
        %v781 = vld [vmem:[%s241 + $0x70] sm:$0xf]
        %v782 = vld [vmem:[%s241 + $0x74] sm:$0xf]
        %v783 = vld [vmem:[%s241 + $0x78] sm:$0xf]
        %v784 = vld [vmem:[%s241 + $0x7c] sm:$0xf]
        %v785 = vld [vmem:[%s241 + $0x80] sm:$0xf]
        %v786 = vld [vmem:[%s241 + $0x84] sm:$0xf]
        %v787 = vld [vmem:[%s241 + $0x88] sm:$0xf]
        %v788 = vld [vmem:[%s241 + $0x8c] sm:$0xf]
        %v789 = vld [vmem:[%s241 + $0x90] sm:$0xf]
        %v790 = vld [vmem:[%s241 + $0x94] sm:$0xf]
        %v791 = vld [vmem:[%s241 + $0x98] sm:$0xf]
        %v792 = vld [vmem:[%s241 + $0x9c] sm:$0xf]
        %v793 = vld [vmem:[%s241 + $0xa0] sm:$0xf]
        %v794 = vld [vmem:[%s241 + $0xa4] sm:$0xf]
        %v795 = vld [vmem:[%s241 + $0xa8] sm:$0xf]
        %v796 = vld [vmem:[%s241 + $0xac] sm:$0xf]
        %v797 = vld [vmem:[%s241 + $0xb0] sm:$0xf]
        %v798 = vld [vmem:[%s241 + $0xb4] sm:$0xf]
        %v799 = vld [vmem:[%s241 + $0xb8] sm:$0xf]
        %v800 = vld [vmem:[%s241 + $0xbc] sm:$0xf]
        %v801 = vld [vmem:[%s241 + $0xc0] sm:$0xf]
        %v802 = vld [vmem:[%s241 + $0xc4] sm:$0xf]
        %v803 = vld [vmem:[%s241 + $0xc8] sm:$0xf]
        %v804 = vld [vmem:[%s241 + $0xcc] sm:$0xf]
        %v805 = vld [vmem:[%s241 + $0xd0] sm:$0xf]
        %v806 = vld [vmem:[%s241 + $0xd4] sm:$0xf]
        %v807 = vld [vmem:[%s241 + $0xd8] sm:$0xf]
        %v808 = vld [vmem:[%s241 + $0xdc] sm:$0xf]
        %v809 = vld [vmem:[%s241 + $0xe0] sm:$0xf]
        %v810 = vld [vmem:[%s241 + $0xe4] sm:$0xf]
        %v811 = vld [vmem:[%s241 + $0xe8] sm:$0xf]
        %v812 = vld [vmem:[%s241 + $0xec] sm:$0xf]
        %v813 = vld [vmem:[%s241 + $0xf0] sm:$0xf]
        %v814 = vld [vmem:[%s241 + $0xf4] sm:$0xf]
        %v815 = vld [vmem:[%s241 + $0xf8] sm:$0xf]
        %v816 = vld [vmem:[%s241 + $0xfc] sm:$0xf]
        %v817 = vld [vmem:[%s241 + $0x100] sm:$0xf]
        %v818 = vld [vmem:[%s241 + $0x104] sm:$0xf]
        %v819 = vld [vmem:[%s241 + $0x108] sm:$0xf]
        %v820 = vld [vmem:[%s241 + $0x10c] sm:$0xf]
        %v821 = vld [vmem:[%s241 + $0x110] sm:$0xf]
        %v822 = vld [vmem:[%s241 + $0x114] sm:$0xf]
        %v823 = vld [vmem:[%s241 + $0x118] sm:$0xf]
        %v824 = vld [vmem:[%s241 + $0x11c] sm:$0xf]
        %v825 = vld [vmem:[%s241 + $0x120] sm:$0xf]
        %v826 = vld [vmem:[%s241 + $0x124] sm:$0xf]
        %v827 = vld [vmem:[%s241 + $0x128] sm:$0xf]
        %v828 = vld [vmem:[%s241 + $0x12c] sm:$0xf]
        %v829 = vld [vmem:[%s241 + $0x130] sm:$0xf]
        %v830 = vld [vmem:[%s241 + $0x134] sm:$0xf]
        %v831 = vld [vmem:[%s241 + $0x138] sm:$0xf]
        %v832 = vld [vmem:[%s241 + $0x13c] sm:$0xf]
        %v833 = vld [vmem:[%s241 + $0x140] sm:$0xf]
        %v834 = vld [vmem:[%s241 + $0x144] sm:$0xf]
        %v835 = vld [vmem:[%s241 + $0x148] sm:$0xf]
        %v836 = vld [vmem:[%s241 + $0x14c] sm:$0xf]
        %v837 = vld [vmem:[%s241 + $0x150] sm:$0xf]
        %v838 = vld [vmem:[%s241 + $0x154] sm:$0xf]
        %v839 = vld [vmem:[%s241 + $0x158] sm:$0xf]
        %v840 = vld [vmem:[%s241 + $0x15c] sm:$0xf]
        %v841 = vld [vmem:[%s241 + $0x160] sm:$0xf]
        %v842 = vld [vmem:[%s241 + $0x164] sm:$0xf]
        %v843 = vld [vmem:[%s241 + $0x168] sm:$0xf]
        %v844 = vld [vmem:[%s241 + $0x16c] sm:$0xf]
        %v845 = vld [vmem:[%s241 + $0x170] sm:$0xf]
        %v846 = vld [vmem:[%s241 + $0x174] sm:$0xf]
        %v847 = vld [vmem:[%s241 + $0x178] sm:$0xf]
        %v848 = vld [vmem:[%s241 + $0x17c] sm:$0xf]
        %v849 = vld [vmem:[%s241 + $0x180] sm:$0xf]
        %v850 = vld [vmem:[%s241 + $0x184] sm:$0xf]
        %v851 = vld [vmem:[%s241 + $0x188] sm:$0xf]
        %v852 = vld [vmem:[%s241 + $0x18c] sm:$0xf]
        %v853 = vld [vmem:[%s241 + $0x190] sm:$0xf]
        %v854 = vld [vmem:[%s241 + $0x194] sm:$0xf]
        %v855 = vld [vmem:[%s241 + $0x198] sm:$0xf]
        %v856 = vld [vmem:[%s241 + $0x19c] sm:$0xf]
        %v857 = vld [vmem:[%s241 + $0x1a0] sm:$0xf]
        %v858 = vld [vmem:[%s241 + $0x1a4] sm:$0xf]
        %v859 = vld [vmem:[%s241 + $0x1a8] sm:$0xf]
        %v860 = vld [vmem:[%s241 + $0x1ac] sm:$0xf]
        %v861 = vld [vmem:[%s241 + $0x1b0] sm:$0xf]
        %v862 = vld [vmem:[%s241 + $0x1b4] sm:$0xf]
        %v863 = vld [vmem:[%s241 + $0x1b8] sm:$0xf]
        %v864 = vld [vmem:[%s241 + $0x1bc] sm:$0xf]
        %v865 = vld [vmem:[%s241 + $0x1c0] sm:$0xf]
        %v866 = vld [vmem:[%s241 + $0x1c4] sm:$0xf]
        %v867 = vld [vmem:[%s241 + $0x1c8] sm:$0xf]
        %v868 = vld [vmem:[%s241 + $0x1cc] sm:$0xf]
        %v869 = vld [vmem:[%s241 + $0x1d0] sm:$0xf]
        %v870 = vld [vmem:[%s241 + $0x1d4] sm:$0xf]
        %v871 = vld [vmem:[%s241 + $0x1d8] sm:$0xf]
        %v872 = vld [vmem:[%s241 + $0x1dc] sm:$0xf]
        %v873 = vld [vmem:[%s241 + $0x1e0] sm:$0xf]
        %v874 = vld [vmem:[%s241 + $0x1e4] sm:$0xf]
        %v875 = vld [vmem:[%s241 + $0x1e8] sm:$0xf]
        %v876 = vld [vmem:[%s241 + $0x1ec] sm:$0xf]
        %v877 = vld [vmem:[%s241 + $0x1f0] sm:$0xf]
        %v878 = vld [vmem:[%s241 + $0x1f4] sm:$0xf]
        %v879 = vld [vmem:[%s241 + $0x1f8] sm:$0xf]
        %v880 = vld [vmem:[%s241 + $0x1fc] sm:$0xf]
        %v913 = vunpack.c.l.b16 %v721
        %v914 = vunpack.c.l.b16 %v722
        %v915 = vunpack.c.l.b16 %v723
        %v916 = vunpack.c.l.b16 %v724
        %v917 = vunpack.c.l.b16 %v725
        %v918 = vunpack.c.l.b16 %v726
        %v919 = vunpack.c.l.b16 %v727
        %v920 = vunpack.c.l.b16 %v728
        %v921 = vunpack.c.l.b16 %v729
        %v922 = vunpack.c.l.b16 %v730
        %v923 = vunpack.c.l.b16 %v731
        %v924 = vunpack.c.l.b16 %v732
        %v925 = vunpack.c.l.b16 %v733
        %v926 = vunpack.c.l.b16 %v734
        %v927 = vunpack.c.l.b16 %v735
        %v928 = vunpack.c.l.b16 %v736
        %v929 = vunpack.c.l.b16 %v737
        %v930 = vunpack.c.l.b16 %v738
        %v931 = vunpack.c.l.b16 %v739
        %v932 = vunpack.c.l.b16 %v740
        %v933 = vunpack.c.l.b16 %v741
        %v934 = vunpack.c.l.b16 %v742
        %v935 = vunpack.c.l.b16 %v743
        %v936 = vunpack.c.l.b16 %v744
        %v937 = vunpack.c.l.b16 %v745
        %v938 = vunpack.c.l.b16 %v746
        %v939 = vunpack.c.l.b16 %v747
        %v940 = vunpack.c.l.b16 %v748
        %v941 = vunpack.c.l.b16 %v749
        %v942 = vunpack.c.l.b16 %v750
        %v943 = vunpack.c.l.b16 %v751
        %v944 = vunpack.c.l.b16 %v752
        %v945 = vpack.c.b16 %v914, %v913
        %v946 = vpack.c.b16 %v916, %v915
        %v947 = vpack.c.b16 %v918, %v917
        %v948 = vpack.c.b16 %v920, %v919
        %v949 = vpack.c.b16 %v922, %v921
        %v950 = vpack.c.b16 %v924, %v923
        %v951 = vpack.c.b16 %v926, %v925
        %v952 = vpack.c.b16 %v928, %v927
        %v953 = vpack.c.b16 %v930, %v929
        %v954 = vpack.c.b16 %v932, %v931
        %v955 = vpack.c.b16 %v934, %v933
        %v956 = vpack.c.b16 %v936, %v935
        %v957 = vpack.c.b16 %v938, %v937
        %v958 = vpack.c.b16 %v940, %v939
        %v959 = vpack.c.b16 %v942, %v941
        %v960 = vpack.c.b16 %v944, %v943
        %v1105 = vunpack.c.l.b16 %v753
        %v1106 = vunpack.c.l.b16 %v754
        %v1107 = vunpack.c.l.b16 %v755
        %v1108 = vunpack.c.l.b16 %v756
        %v1109 = vunpack.c.l.b16 %v757
        %v1110 = vunpack.c.l.b16 %v758
        %v1111 = vunpack.c.l.b16 %v759
        %v1112 = vunpack.c.l.b16 %v760
        %v1113 = vunpack.c.l.b16 %v761
        %v1114 = vunpack.c.l.b16 %v762
        %v1115 = vunpack.c.l.b16 %v763
        %v1116 = vunpack.c.l.b16 %v764
        %v1117 = vunpack.c.l.b16 %v765
        %v1118 = vunpack.c.l.b16 %v766
        %v1119 = vunpack.c.l.b16 %v767
        %v1120 = vunpack.c.l.b16 %v768
        %v1121 = vunpack.c.l.b16 %v769
        %v1122 = vunpack.c.l.b16 %v770
        %v1123 = vunpack.c.l.b16 %v771
        %v1124 = vunpack.c.l.b16 %v772
        %v1125 = vunpack.c.l.b16 %v773
        %v1126 = vunpack.c.l.b16 %v774
        %v1127 = vunpack.c.l.b16 %v775
        %v1128 = vunpack.c.l.b16 %v776
        %v1129 = vunpack.c.l.b16 %v777
        %v1130 = vunpack.c.l.b16 %v778
        %v1131 = vunpack.c.l.b16 %v779
        %v1132 = vunpack.c.l.b16 %v780
        %v1133 = vunpack.c.l.b16 %v781
        %v1134 = vunpack.c.l.b16 %v782
        %v1135 = vunpack.c.l.b16 %v783
        %v1136 = vunpack.c.l.b16 %v784
        %v1137 = vunpack.c.l.b16 %v785
        %v1138 = vunpack.c.l.b16 %v786
        %v1139 = vunpack.c.l.b16 %v787
        %v1140 = vunpack.c.l.b16 %v788
        %v1141 = vunpack.c.l.b16 %v789
        %v1142 = vunpack.c.l.b16 %v790
        %v1143 = vunpack.c.l.b16 %v791
        %v1144 = vunpack.c.l.b16 %v792
        %v1145 = vunpack.c.l.b16 %v793
        %v1146 = vunpack.c.l.b16 %v794
        %v1147 = vunpack.c.l.b16 %v795
        %v1148 = vunpack.c.l.b16 %v796
        %v1149 = vunpack.c.l.b16 %v797
        %v1150 = vunpack.c.l.b16 %v798
        %v1151 = vunpack.c.l.b16 %v799
        %v1152 = vunpack.c.l.b16 %v800
        %v1153 = vunpack.c.l.b16 %v801
        %v1154 = vunpack.c.l.b16 %v802
        %v1155 = vunpack.c.l.b16 %v803
        %v1156 = vunpack.c.l.b16 %v804
        %v1157 = vunpack.c.l.b16 %v805
        %v1158 = vunpack.c.l.b16 %v806
        %v1159 = vunpack.c.l.b16 %v807
        %v1160 = vunpack.c.l.b16 %v808
        %v1161 = vunpack.c.l.b16 %v809
        %v1162 = vunpack.c.l.b16 %v810
        %v1163 = vunpack.c.l.b16 %v811
        %v1164 = vunpack.c.l.b16 %v812
        %v1165 = vunpack.c.l.b16 %v813
        %v1166 = vunpack.c.l.b16 %v814
        %v1167 = vunpack.c.l.b16 %v815
        %v1168 = vunpack.c.l.b16 %v816
        %v1169 = vunpack.c.l.b16 %v817
        %v1170 = vunpack.c.l.b16 %v818
        %v1171 = vunpack.c.l.b16 %v819
        %v1172 = vunpack.c.l.b16 %v820
        %v1173 = vunpack.c.l.b16 %v821
        %v1174 = vunpack.c.l.b16 %v822
        %v1175 = vunpack.c.l.b16 %v823
        %v1176 = vunpack.c.l.b16 %v824
        %v1177 = vunpack.c.l.b16 %v825
        %v1178 = vunpack.c.l.b16 %v826
        %v1179 = vunpack.c.l.b16 %v827
        %v1180 = vunpack.c.l.b16 %v828
        %v1181 = vunpack.c.l.b16 %v829
        %v1182 = vunpack.c.l.b16 %v830
        %v1183 = vunpack.c.l.b16 %v831
        %v1184 = vunpack.c.l.b16 %v832
        %v1185 = vunpack.c.l.b16 %v833
        %v1186 = vunpack.c.l.b16 %v834
        %v1187 = vunpack.c.l.b16 %v835
        %v1188 = vunpack.c.l.b16 %v836
        %v1189 = vunpack.c.l.b16 %v837
        %v1190 = vunpack.c.l.b16 %v838
        %v1191 = vunpack.c.l.b16 %v839
        %v1192 = vunpack.c.l.b16 %v840
        %v1193 = vunpack.c.l.b16 %v841
        %v1194 = vunpack.c.l.b16 %v842
        %v1195 = vunpack.c.l.b16 %v843
        %v1196 = vunpack.c.l.b16 %v844
        %v1197 = vunpack.c.l.b16 %v845
        %v1198 = vunpack.c.l.b16 %v846
        %v1199 = vunpack.c.l.b16 %v847
        %v1200 = vunpack.c.l.b16 %v848
        %v1201 = vunpack.c.l.b16 %v849
        %v1202 = vunpack.c.l.b16 %v850
        %v1203 = vunpack.c.l.b16 %v851
        %v1204 = vunpack.c.l.b16 %v852
        %v1205 = vunpack.c.l.b16 %v853
        %v1206 = vunpack.c.l.b16 %v854
        %v1207 = vunpack.c.l.b16 %v855
        %v1208 = vunpack.c.l.b16 %v856
        %v1209 = vunpack.c.l.b16 %v857
        %v1210 = vunpack.c.l.b16 %v858
        %v1211 = vunpack.c.l.b16 %v859
        %v1212 = vunpack.c.l.b16 %v860
        %v1213 = vunpack.c.l.b16 %v861
        %v1214 = vunpack.c.l.b16 %v862
        %v1215 = vunpack.c.l.b16 %v863
        %v1216 = vunpack.c.l.b16 %v864
        %v1217 = vunpack.c.l.b16 %v865
        %v1218 = vunpack.c.l.b16 %v866
        %v1219 = vunpack.c.l.b16 %v867
        %v1220 = vunpack.c.l.b16 %v868
        %v1221 = vunpack.c.l.b16 %v869
        %v1222 = vunpack.c.l.b16 %v870
        %v1223 = vunpack.c.l.b16 %v871
        %v1224 = vunpack.c.l.b16 %v872
        %v1225 = vunpack.c.l.b16 %v873
        %v1226 = vunpack.c.l.b16 %v874
        %v1227 = vunpack.c.l.b16 %v875
        %v1228 = vunpack.c.l.b16 %v876
        %v1229 = vunpack.c.l.b16 %v877
        %v1230 = vunpack.c.l.b16 %v878
        %v1231 = vunpack.c.l.b16 %v879
        %v1232 = vunpack.c.l.b16 %v880
        %v1233 = vpack.c.b16 %v1106, %v1105
        %v1234 = vpack.c.b16 %v1108, %v1107
        %v1235 = vpack.c.b16 %v1110, %v1109
        %v1236 = vpack.c.b16 %v1112, %v1111
        %v1237 = vpack.c.b16 %v1114, %v1113
        %v1238 = vpack.c.b16 %v1116, %v1115
        %v1239 = vpack.c.b16 %v1118, %v1117
        %v1240 = vpack.c.b16 %v1120, %v1119
        %v1241 = vpack.c.b16 %v1122, %v1121
        %v1242 = vpack.c.b16 %v1124, %v1123
        %v1243 = vpack.c.b16 %v1126, %v1125
        %v1244 = vpack.c.b16 %v1128, %v1127
        %v1245 = vpack.c.b16 %v1130, %v1129
        %v1246 = vpack.c.b16 %v1132, %v1131
        %v1247 = vpack.c.b16 %v1134, %v1133
        %v1248 = vpack.c.b16 %v1136, %v1135
        %v1249 = vpack.c.b16 %v1138, %v1137
        %v1250 = vpack.c.b16 %v1140, %v1139
        %v1251 = vpack.c.b16 %v1142, %v1141
        %v1252 = vpack.c.b16 %v1144, %v1143
        %v1253 = vpack.c.b16 %v1146, %v1145
        %v1254 = vpack.c.b16 %v1148, %v1147
        %v1255 = vpack.c.b16 %v1150, %v1149
        %v1256 = vpack.c.b16 %v1152, %v1151
        %v1257 = vpack.c.b16 %v1154, %v1153
        %v1258 = vpack.c.b16 %v1156, %v1155
        %v1259 = vpack.c.b16 %v1158, %v1157
        %v1260 = vpack.c.b16 %v1160, %v1159
        %v1261 = vpack.c.b16 %v1162, %v1161
        %v1262 = vpack.c.b16 %v1164, %v1163
        %v1263 = vpack.c.b16 %v1166, %v1165
        %v1264 = vpack.c.b16 %v1168, %v1167
        %v1265 = vpack.c.b16 %v1170, %v1169
        %v1266 = vpack.c.b16 %v1172, %v1171
        %v1267 = vpack.c.b16 %v1174, %v1173
        %v1268 = vpack.c.b16 %v1176, %v1175
        %v1269 = vpack.c.b16 %v1178, %v1177
        %v1270 = vpack.c.b16 %v1180, %v1179
        %v1271 = vpack.c.b16 %v1182, %v1181
        %v1272 = vpack.c.b16 %v1184, %v1183
        %v1273 = vpack.c.b16 %v1186, %v1185
        %v1274 = vpack.c.b16 %v1188, %v1187
        %v1275 = vpack.c.b16 %v1190, %v1189
        %v1276 = vpack.c.b16 %v1192, %v1191
        %v1277 = vpack.c.b16 %v1194, %v1193
        %v1278 = vpack.c.b16 %v1196, %v1195
        %v1279 = vpack.c.b16 %v1198, %v1197
        %v1280 = vpack.c.b16 %v1200, %v1199
        %v1281 = vpack.c.b16 %v1202, %v1201
        %v1282 = vpack.c.b16 %v1204, %v1203
        %v1283 = vpack.c.b16 %v1206, %v1205
        %v1284 = vpack.c.b16 %v1208, %v1207
        %v1285 = vpack.c.b16 %v1210, %v1209
        %v1286 = vpack.c.b16 %v1212, %v1211
        %v1287 = vpack.c.b16 %v1214, %v1213
        %v1288 = vpack.c.b16 %v1216, %v1215
        %v1289 = vpack.c.b16 %v1218, %v1217
        %v1290 = vpack.c.b16 %v1220, %v1219
        %v1291 = vpack.c.b16 %v1222, %v1221
        %v1292 = vpack.c.b16 %v1224, %v1223
        %v1293 = vpack.c.b16 %v1226, %v1225
        %v1294 = vpack.c.b16 %v1228, %v1227
        %v1295 = vpack.c.b16 %v1230, %v1229
        %v1296 = vpack.c.b16 %v1232, %v1231
        %1361 = vmatprep.subr.bf16.mxu0 0
        %1362 = vmatpush1.bf16.xpose.msra.mxu0 %v1240
        %1363 = vmatprep.subr.bf16.mxu0 0
        %1364 = vmatpush1.bf16.xpose.msra.mxu0 %v1239
        %1365 = vmatprep.subr.bf16.mxu0 0
        %1366 = vmatpush1.bf16.xpose.msra.mxu0 %v1238
        %1367 = vmatprep.subr.bf16.mxu0 0
        %1368 = vmatpush1.bf16.xpose.msra.mxu0 %v1237
        %1369 = vmatprep.subr.bf16.mxu0 0
        %1370 = vmatpush1.bf16.xpose.msra.mxu0 %v1236
        %1371 = vmatprep.subr.bf16.mxu0 0
        %1372 = vmatpush1.bf16.xpose.msra.mxu0 %v1235
        %1373 = vmatprep.subr.bf16.mxu0 0
        %1374 = vmatpush1.bf16.xpose.msra.mxu0 %v1234
        %1375 = vmatprep.subr.bf16.mxu0 0
        %1376 = vmatpush1.bf16.xpose.msra.mxu0 %v1233
        %1377 = vmatprep.subr.bf16.mxu0 0
        %1378 = vmatpush2.bf16.xpose.msra.mxu0 %v1248
        %1379 = vmatprep.subr.bf16.mxu0 0
        %1380 = vmatpush2.bf16.xpose.msra.mxu0 %v1247
        %1381 = vmatprep.subr.bf16.mxu0 0
        %1382 = vmatpush2.bf16.xpose.msra.mxu0 %v1246
        %1383 = vmatprep.subr.bf16.mxu0 0
        %1384 = vmatpush2.bf16.xpose.msra.mxu0 %v1245
        %1385 = vmatprep.subr.bf16.mxu0 0
        %1386 = vmatpush2.bf16.xpose.msra.mxu0 %v1244
        %1387 = vmatprep.subr.bf16.mxu0 0
        %1388 = vmatpush2.bf16.xpose.msra.mxu0 %v1243
        %1389 = vmatprep.subr.bf16.mxu0 0
        %1390 = vmatpush2.bf16.xpose.msra.mxu0 %v1242
        %1391 = vmatprep.subr.bf16.mxu0 0
        %1392 = vmatpush2.bf16.xpose.msra.mxu0 %v1241
        %1393 = vmatprep.mubr.bf16.mxu0 0
        %1394 = vmatmul.mubr.bf16.gmra.mxu0 %v945
        %v1395 = vpop.f32.mrf.mxu0
        %v1396 = vadd.f32 0.0, %v1395
        %v1397 = vpop.f32.mrf.mxu0
        %v1398 = vadd.f32 0.0, %v1397
        %v1399 = vpop.f32.mrf.mxu0
        %v1400 = vadd.f32 0.0, %v1399
        %v1401 = vpop.f32.mrf.mxu0
        %v1402 = vadd.f32 0.0, %v1401
        %1403 = vmatprep.mubr.bf16.mxu0 0
        %1404 = vmatmul.mubr.bf16.gmra.mxu0 %v946
        %v1405 = vpop.f32.mrf.mxu0
        %v1406 = vadd.f32 0.0, %v1405
        %v1407 = vpop.f32.mrf.mxu0
        %v1408 = vadd.f32 0.0, %v1407
        %v1409 = vpop.f32.mrf.mxu0
        %v1410 = vadd.f32 0.0, %v1409
        %v1411 = vpop.f32.mrf.mxu0
        %v1412 = vadd.f32 0.0, %v1411
        %1413 = vmatprep.mubr.bf16.mxu0 0
        %1414 = vmatmul.mubr.bf16.gmra.mxu0 %v947
        %v1415 = vpop.f32.mrf.mxu0
        %v1416 = vadd.f32 0.0, %v1415
        %v1417 = vpop.f32.mrf.mxu0
        %v1418 = vadd.f32 0.0, %v1417
        %v1419 = vpop.f32.mrf.mxu0
        %v1420 = vadd.f32 0.0, %v1419
        %v1421 = vpop.f32.mrf.mxu0
        %v1422 = vadd.f32 0.0, %v1421
        %1423 = vmatprep.mubr.bf16.mxu0 0
        %1424 = vmatmul.mubr.bf16.gmra.mxu0 %v948
        %v1425 = vpop.f32.mrf.mxu0
        %v1426 = vadd.f32 0.0, %v1425
        %v1427 = vpop.f32.mrf.mxu0
        %v1428 = vadd.f32 0.0, %v1427
        %v1429 = vpop.f32.mrf.mxu0
        %v1430 = vadd.f32 0.0, %v1429
        %v1431 = vpop.f32.mrf.mxu0
        %v1432 = vadd.f32 0.0, %v1431
        %1433 = vmatprep.mubr.bf16.mxu0 0
        %1434 = vmatmul.mubr.bf16.gmra.mxu0 %v949
        %v1435 = vpop.f32.mrf.mxu0
        %v1436 = vadd.f32 0.0, %v1435
        %v1437 = vpop.f32.mrf.mxu0
        %v1438 = vadd.f32 0.0, %v1437
        %v1439 = vpop.f32.mrf.mxu0
        %v1440 = vadd.f32 0.0, %v1439
        %v1441 = vpop.f32.mrf.mxu0
        %v1442 = vadd.f32 0.0, %v1441
        %1443 = vmatprep.mubr.bf16.mxu0 0
        %1444 = vmatmul.mubr.bf16.gmra.mxu0 %v950
        %v1445 = vpop.f32.mrf.mxu0
        %v1446 = vadd.f32 0.0, %v1445
        %v1447 = vpop.f32.mrf.mxu0
        %v1448 = vadd.f32 0.0, %v1447
        %v1449 = vpop.f32.mrf.mxu0
        %v1450 = vadd.f32 0.0, %v1449
        %v1451 = vpop.f32.mrf.mxu0
        %v1452 = vadd.f32 0.0, %v1451
        %1453 = vmatprep.mubr.bf16.mxu0 0
        %1454 = vmatmul.mubr.bf16.gmra.mxu0 %v951
        %v1455 = vpop.f32.mrf.mxu0
        %v1456 = vadd.f32 0.0, %v1455
        %v1457 = vpop.f32.mrf.mxu0
        %v1458 = vadd.f32 0.0, %v1457
        %v1459 = vpop.f32.mrf.mxu0
        %v1460 = vadd.f32 0.0, %v1459
        %v1461 = vpop.f32.mrf.mxu0
        %v1462 = vadd.f32 0.0, %v1461
        %1463 = vmatprep.mubr.bf16.mxu0 0
        %1464 = vmatmul.mubr.bf16.gmra.mxu0 %v952
        %v1465 = vpop.f32.mrf.mxu0
        %v1466 = vadd.f32 0.0, %v1465
        %v1467 = vpop.f32.mrf.mxu0
        %v1468 = vadd.f32 0.0, %v1467
        %v1469 = vpop.f32.mrf.mxu0
        %v1470 = vadd.f32 0.0, %v1469
        %v1471 = vpop.f32.mrf.mxu0
        %v1472 = vadd.f32 0.0, %v1471
        %1473 = vmatprep.mubr.bf16.mxu0 0
        %1474 = vmatmul.mubr.bf16.gmra.mxu0 %v953
        %v1475 = vpop.f32.mrf.mxu0
        %v1476 = vadd.f32 0.0, %v1475
        %v1477 = vpop.f32.mrf.mxu0
        %v1478 = vadd.f32 0.0, %v1477
        %v1479 = vpop.f32.mrf.mxu0
        %v1480 = vadd.f32 0.0, %v1479
        %v1481 = vpop.f32.mrf.mxu0
        %v1482 = vadd.f32 0.0, %v1481
        %1483 = vmatprep.mubr.bf16.mxu0 0
        %1484 = vmatmul.mubr.bf16.gmra.mxu0 %v954
        %v1485 = vpop.f32.mrf.mxu0
        %v1486 = vadd.f32 0.0, %v1485
        %v1487 = vpop.f32.mrf.mxu0
        %v1488 = vadd.f32 0.0, %v1487
        %v1489 = vpop.f32.mrf.mxu0
        %v1490 = vadd.f32 0.0, %v1489
        %v1491 = vpop.f32.mrf.mxu0
        %v1492 = vadd.f32 0.0, %v1491
        %1493 = vmatprep.mubr.bf16.mxu0 0
        %1494 = vmatmul.mubr.bf16.gmra.mxu0 %v955
        %v1495 = vpop.f32.mrf.mxu0
        %v1496 = vadd.f32 0.0, %v1495
        %v1497 = vpop.f32.mrf.mxu0
        %v1498 = vadd.f32 0.0, %v1497
        %v1499 = vpop.f32.mrf.mxu0
        %v1500 = vadd.f32 0.0, %v1499
        %v1501 = vpop.f32.mrf.mxu0
        %v1502 = vadd.f32 0.0, %v1501
        %1503 = vmatprep.mubr.bf16.mxu0 0
        %1504 = vmatmul.mubr.bf16.gmra.mxu0 %v956
        %v1505 = vpop.f32.mrf.mxu0
        %v1506 = vadd.f32 0.0, %v1505
        %v1507 = vpop.f32.mrf.mxu0
        %v1508 = vadd.f32 0.0, %v1507
        %v1509 = vpop.f32.mrf.mxu0
        %v1510 = vadd.f32 0.0, %v1509
        %v1511 = vpop.f32.mrf.mxu0
        %v1512 = vadd.f32 0.0, %v1511
        %1513 = vmatprep.mubr.bf16.mxu0 0
        %1514 = vmatmul.mubr.bf16.gmra.mxu0 %v957
        %v1515 = vpop.f32.mrf.mxu0
        %v1516 = vadd.f32 0.0, %v1515
        %v1517 = vpop.f32.mrf.mxu0
        %v1518 = vadd.f32 0.0, %v1517
        %v1519 = vpop.f32.mrf.mxu0
        %v1520 = vadd.f32 0.0, %v1519
        %v1521 = vpop.f32.mrf.mxu0
        %v1522 = vadd.f32 0.0, %v1521
        %1523 = vmatprep.mubr.bf16.mxu0 0
        %1524 = vmatmul.mubr.bf16.gmra.mxu0 %v958
        %v1525 = vpop.f32.mrf.mxu0
        %v1526 = vadd.f32 0.0, %v1525
        %v1527 = vpop.f32.mrf.mxu0
        %v1528 = vadd.f32 0.0, %v1527
        %v1529 = vpop.f32.mrf.mxu0
        %v1530 = vadd.f32 0.0, %v1529
        %v1531 = vpop.f32.mrf.mxu0
        %v1532 = vadd.f32 0.0, %v1531
        %1533 = vmatprep.mubr.bf16.mxu0 0
        %1534 = vmatmul.mubr.bf16.gmra.mxu0 %v959
        %v1535 = vpop.f32.mrf.mxu0
        %v1536 = vadd.f32 0.0, %v1535
        %v1537 = vpop.f32.mrf.mxu0
        %v1538 = vadd.f32 0.0, %v1537
        %v1539 = vpop.f32.mrf.mxu0
        %v1540 = vadd.f32 0.0, %v1539
        %v1541 = vpop.f32.mrf.mxu0
        %v1542 = vadd.f32 0.0, %v1541
        %1543 = vmatprep.mubr.bf16.mxu0 0
        %1544 = vmatmul.mubr.bf16.gmra.mxu0 %v960
        %v1545 = vpop.f32.mrf.mxu0
        %v1546 = vadd.f32 0.0, %v1545
        %v1547 = vpop.f32.mrf.mxu0
        %v1548 = vadd.f32 0.0, %v1547
        %v1549 = vpop.f32.mrf.mxu0
        %v1550 = vadd.f32 0.0, %v1549
        %v1551 = vpop.f32.mrf.mxu0
        %v1552 = vadd.f32 0.0, %v1551
        %1553 = vdwg.mxu0
        %1554 = vmatprep.subr.bf16.mxu0 0
        %1555 = vmatpush1.bf16.xpose.msra.mxu0 %v1256
        %1556 = vmatprep.subr.bf16.mxu0 0
        %1557 = vmatpush1.bf16.xpose.msra.mxu0 %v1255
        %1558 = vmatprep.subr.bf16.mxu0 0
        %1559 = vmatpush1.bf16.xpose.msra.mxu0 %v1254
        %1560 = vmatprep.subr.bf16.mxu0 0
        %1561 = vmatpush1.bf16.xpose.msra.mxu0 %v1253
        %1562 = vmatprep.subr.bf16.mxu0 0
        %1563 = vmatpush1.bf16.xpose.msra.mxu0 %v1252
        %1564 = vmatprep.subr.bf16.mxu0 0
        %1565 = vmatpush1.bf16.xpose.msra.mxu0 %v1251
        %1566 = vmatprep.subr.bf16.mxu0 0
        %1567 = vmatpush1.bf16.xpose.msra.mxu0 %v1250
        %1568 = vmatprep.subr.bf16.mxu0 0
        %1569 = vmatpush1.bf16.xpose.msra.mxu0 %v1249
        %1570 = vmatprep.subr.bf16.mxu0 0
        %1571 = vmatpush2.bf16.xpose.msra.mxu0 %v1264
        %1572 = vmatprep.subr.bf16.mxu0 0
        %1573 = vmatpush2.bf16.xpose.msra.mxu0 %v1263
        %1574 = vmatprep.subr.bf16.mxu0 0
        %1575 = vmatpush2.bf16.xpose.msra.mxu0 %v1262
        %1576 = vmatprep.subr.bf16.mxu0 0
        %1577 = vmatpush2.bf16.xpose.msra.mxu0 %v1261
        %1578 = vmatprep.subr.bf16.mxu0 0
        %1579 = vmatpush2.bf16.xpose.msra.mxu0 %v1260
        %1580 = vmatprep.subr.bf16.mxu0 0
        %1581 = vmatpush2.bf16.xpose.msra.mxu0 %v1259
        %1582 = vmatprep.subr.bf16.mxu0 0
        %1583 = vmatpush2.bf16.xpose.msra.mxu0 %v1258
        %1584 = vmatprep.subr.bf16.mxu0 0
        %1585 = vmatpush2.bf16.xpose.msra.mxu0 %v1257
        %1586 = vmatprep.mubr.bf16.mxu0 0
        %1587 = vmatmul.mubr.bf16.gmra.mxu0 %v945
        %v1588 = vpop.f32.mrf.mxu0
        %v1589 = vadd.f32 0.0, %v1588
        %v1590 = vpop.f32.mrf.mxu0
        %v1591 = vadd.f32 0.0, %v1590
        %v1592 = vpop.f32.mrf.mxu0
        %v1593 = vadd.f32 0.0, %v1592
        %v1594 = vpop.f32.mrf.mxu0
        %v1595 = vadd.f32 0.0, %v1594
        %1596 = vmatprep.mubr.bf16.mxu0 0
        %1597 = vmatmul.mubr.bf16.gmra.mxu0 %v946
        %v1598 = vpop.f32.mrf.mxu0
        %v1599 = vadd.f32 0.0, %v1598
        %v1600 = vpop.f32.mrf.mxu0
        %v1601 = vadd.f32 0.0, %v1600
        %v1602 = vpop.f32.mrf.mxu0
        %v1603 = vadd.f32 0.0, %v1602
        %v1604 = vpop.f32.mrf.mxu0
        %v1605 = vadd.f32 0.0, %v1604
        %1606 = vmatprep.mubr.bf16.mxu0 0
        %1607 = vmatmul.mubr.bf16.gmra.mxu0 %v947
        %v1608 = vpop.f32.mrf.mxu0
        %v1609 = vadd.f32 0.0, %v1608
        %v1610 = vpop.f32.mrf.mxu0
        %v1611 = vadd.f32 0.0, %v1610
        %v1612 = vpop.f32.mrf.mxu0
        %v1613 = vadd.f32 0.0, %v1612
        %v1614 = vpop.f32.mrf.mxu0
        %v1615 = vadd.f32 0.0, %v1614
        %1616 = vmatprep.mubr.bf16.mxu0 0
        %1617 = vmatmul.mubr.bf16.gmra.mxu0 %v948
        %v1618 = vpop.f32.mrf.mxu0
        %v1619 = vadd.f32 0.0, %v1618
        %v1620 = vpop.f32.mrf.mxu0
        %v1621 = vadd.f32 0.0, %v1620
        %v1622 = vpop.f32.mrf.mxu0
        %v1623 = vadd.f32 0.0, %v1622
        %v1624 = vpop.f32.mrf.mxu0
        %v1625 = vadd.f32 0.0, %v1624
        %1626 = vmatprep.mubr.bf16.mxu0 0
        %1627 = vmatmul.mubr.bf16.gmra.mxu0 %v949
        %v1628 = vpop.f32.mrf.mxu0
        %v1629 = vadd.f32 0.0, %v1628
        %v1630 = vpop.f32.mrf.mxu0
        %v1631 = vadd.f32 0.0, %v1630
        %v1632 = vpop.f32.mrf.mxu0
        %v1633 = vadd.f32 0.0, %v1632
        %v1634 = vpop.f32.mrf.mxu0
        %v1635 = vadd.f32 0.0, %v1634
        %1636 = vmatprep.mubr.bf16.mxu0 0
        %1637 = vmatmul.mubr.bf16.gmra.mxu0 %v950
        %v1638 = vpop.f32.mrf.mxu0
        %v1639 = vadd.f32 0.0, %v1638
        %v1640 = vpop.f32.mrf.mxu0
        %v1641 = vadd.f32 0.0, %v1640
        %v1642 = vpop.f32.mrf.mxu0
        %v1643 = vadd.f32 0.0, %v1642
        %v1644 = vpop.f32.mrf.mxu0
        %v1645 = vadd.f32 0.0, %v1644
        %1646 = vmatprep.mubr.bf16.mxu0 0
        %1647 = vmatmul.mubr.bf16.gmra.mxu0 %v951
        %v1648 = vpop.f32.mrf.mxu0
        %v1649 = vadd.f32 0.0, %v1648
        %v1650 = vpop.f32.mrf.mxu0
        %v1651 = vadd.f32 0.0, %v1650
        %v1652 = vpop.f32.mrf.mxu0
        %v1653 = vadd.f32 0.0, %v1652
        %v1654 = vpop.f32.mrf.mxu0
        %v1655 = vadd.f32 0.0, %v1654
        %1656 = vmatprep.mubr.bf16.mxu0 0
        %1657 = vmatmul.mubr.bf16.gmra.mxu0 %v952
        %v1658 = vpop.f32.mrf.mxu0
        %v1659 = vadd.f32 0.0, %v1658
        %v1660 = vpop.f32.mrf.mxu0
        %v1661 = vadd.f32 0.0, %v1660
        %v1662 = vpop.f32.mrf.mxu0
        %v1663 = vadd.f32 0.0, %v1662
        %v1664 = vpop.f32.mrf.mxu0
        %v1665 = vadd.f32 0.0, %v1664
        %1666 = vmatprep.mubr.bf16.mxu0 0
        %1667 = vmatmul.mubr.bf16.gmra.mxu0 %v953
        %v1668 = vpop.f32.mrf.mxu0
        %v1669 = vadd.f32 0.0, %v1668
        %v1670 = vpop.f32.mrf.mxu0
        %v1671 = vadd.f32 0.0, %v1670
        %v1672 = vpop.f32.mrf.mxu0
        %v1673 = vadd.f32 0.0, %v1672
        %v1674 = vpop.f32.mrf.mxu0
        %v1675 = vadd.f32 0.0, %v1674
        %1676 = vmatprep.mubr.bf16.mxu0 0
        %1677 = vmatmul.mubr.bf16.gmra.mxu0 %v954
        %v1678 = vpop.f32.mrf.mxu0
        %v1679 = vadd.f32 0.0, %v1678
        %v1680 = vpop.f32.mrf.mxu0
        %v1681 = vadd.f32 0.0, %v1680
        %v1682 = vpop.f32.mrf.mxu0
        %v1683 = vadd.f32 0.0, %v1682
        %v1684 = vpop.f32.mrf.mxu0
        %v1685 = vadd.f32 0.0, %v1684
        %1686 = vmatprep.mubr.bf16.mxu0 0
        %1687 = vmatmul.mubr.bf16.gmra.mxu0 %v955
        %v1688 = vpop.f32.mrf.mxu0
        %v1689 = vadd.f32 0.0, %v1688
        %v1690 = vpop.f32.mrf.mxu0
        %v1691 = vadd.f32 0.0, %v1690
        %v1692 = vpop.f32.mrf.mxu0
        %v1693 = vadd.f32 0.0, %v1692
        %v1694 = vpop.f32.mrf.mxu0
        %v1695 = vadd.f32 0.0, %v1694
        %1696 = vmatprep.mubr.bf16.mxu0 0
        %1697 = vmatmul.mubr.bf16.gmra.mxu0 %v956
        %v1698 = vpop.f32.mrf.mxu0
        %v1699 = vadd.f32 0.0, %v1698
        %v1700 = vpop.f32.mrf.mxu0
        %v1701 = vadd.f32 0.0, %v1700
        %v1702 = vpop.f32.mrf.mxu0
        %v1703 = vadd.f32 0.0, %v1702
        %v1704 = vpop.f32.mrf.mxu0
        %v1705 = vadd.f32 0.0, %v1704
        %1706 = vmatprep.mubr.bf16.mxu0 0
        %1707 = vmatmul.mubr.bf16.gmra.mxu0 %v957
        %v1708 = vpop.f32.mrf.mxu0
        %v1709 = vadd.f32 0.0, %v1708
        %v1710 = vpop.f32.mrf.mxu0
        %v1711 = vadd.f32 0.0, %v1710
        %v1712 = vpop.f32.mrf.mxu0
        %v1713 = vadd.f32 0.0, %v1712
        %v1714 = vpop.f32.mrf.mxu0
        %v1715 = vadd.f32 0.0, %v1714
        %1716 = vmatprep.mubr.bf16.mxu0 0
        %1717 = vmatmul.mubr.bf16.gmra.mxu0 %v958
        %v1718 = vpop.f32.mrf.mxu0
        %v1719 = vadd.f32 0.0, %v1718
        %v1720 = vpop.f32.mrf.mxu0
        %v1721 = vadd.f32 0.0, %v1720
        %v1722 = vpop.f32.mrf.mxu0
        %v1723 = vadd.f32 0.0, %v1722
        %v1724 = vpop.f32.mrf.mxu0
        %v1725 = vadd.f32 0.0, %v1724
        %1726 = vmatprep.mubr.bf16.mxu0 0
        %1727 = vmatmul.mubr.bf16.gmra.mxu0 %v959
        %v1728 = vpop.f32.mrf.mxu0
        %v1729 = vadd.f32 0.0, %v1728
        %v1730 = vpop.f32.mrf.mxu0
        %v1731 = vadd.f32 0.0, %v1730
        %v1732 = vpop.f32.mrf.mxu0
        %v1733 = vadd.f32 0.0, %v1732
        %v1734 = vpop.f32.mrf.mxu0
        %v1735 = vadd.f32 0.0, %v1734
        %1736 = vmatprep.mubr.bf16.mxu0 0
        %1737 = vmatmul.mubr.bf16.gmra.mxu0 %v960
        %v1738 = vpop.f32.mrf.mxu0
        %v1739 = vadd.f32 0.0, %v1738
        %v1740 = vpop.f32.mrf.mxu0
        %v1741 = vadd.f32 0.0, %v1740
        %v1742 = vpop.f32.mrf.mxu0
        %v1743 = vadd.f32 0.0, %v1742
        %v1744 = vpop.f32.mrf.mxu0
        %v1745 = vadd.f32 0.0, %v1744
        %1746 = vdwg.mxu0
        %1747 = vmatprep.subr.bf16.mxu0 0
        %1748 = vmatpush1.bf16.xpose.msra.mxu0 %v1272
        %1749 = vmatprep.subr.bf16.mxu0 0
        %1750 = vmatpush1.bf16.xpose.msra.mxu0 %v1271
        %1751 = vmatprep.subr.bf16.mxu0 0
        %1752 = vmatpush1.bf16.xpose.msra.mxu0 %v1270
        %1753 = vmatprep.subr.bf16.mxu0 0
        %1754 = vmatpush1.bf16.xpose.msra.mxu0 %v1269
        %1755 = vmatprep.subr.bf16.mxu0 0
        %1756 = vmatpush1.bf16.xpose.msra.mxu0 %v1268
        %1757 = vmatprep.subr.bf16.mxu0 0
        %1758 = vmatpush1.bf16.xpose.msra.mxu0 %v1267
        %1759 = vmatprep.subr.bf16.mxu0 0
        %1760 = vmatpush1.bf16.xpose.msra.mxu0 %v1266
        %1761 = vmatprep.subr.bf16.mxu0 0
        %1762 = vmatpush1.bf16.xpose.msra.mxu0 %v1265
        %1763 = vmatprep.subr.bf16.mxu0 0
        %1764 = vmatpush2.bf16.xpose.msra.mxu0 %v1280
        %1765 = vmatprep.subr.bf16.mxu0 0
        %1766 = vmatpush2.bf16.xpose.msra.mxu0 %v1279
        %1767 = vmatprep.subr.bf16.mxu0 0
        %1768 = vmatpush2.bf16.xpose.msra.mxu0 %v1278
        %1769 = vmatprep.subr.bf16.mxu0 0
        %1770 = vmatpush2.bf16.xpose.msra.mxu0 %v1277
        %1771 = vmatprep.subr.bf16.mxu0 0
        %1772 = vmatpush2.bf16.xpose.msra.mxu0 %v1276
        %1773 = vmatprep.subr.bf16.mxu0 0
        %1774 = vmatpush2.bf16.xpose.msra.mxu0 %v1275
        %1775 = vmatprep.subr.bf16.mxu0 0
        %1776 = vmatpush2.bf16.xpose.msra.mxu0 %v1274
        %1777 = vmatprep.subr.bf16.mxu0 0
        %1778 = vmatpush2.bf16.xpose.msra.mxu0 %v1273
        %1779 = vmatprep.mubr.bf16.mxu0 0
        %1780 = vmatmul.mubr.bf16.gmra.mxu0 %v945
        %v1781 = vpop.f32.mrf.mxu0
        %v1782 = vadd.f32 0.0, %v1781
        %v1783 = vpop.f32.mrf.mxu0
        %v1784 = vadd.f32 0.0, %v1783
        %v1785 = vpop.f32.mrf.mxu0
        %v1786 = vadd.f32 0.0, %v1785
        %v1787 = vpop.f32.mrf.mxu0
        %v1788 = vadd.f32 0.0, %v1787
        %1789 = vmatprep.mubr.bf16.mxu0 0
        %1790 = vmatmul.mubr.bf16.gmra.mxu0 %v946
        %v1791 = vpop.f32.mrf.mxu0
        %v1792 = vadd.f32 0.0, %v1791
        %v1793 = vpop.f32.mrf.mxu0
        %v1794 = vadd.f32 0.0, %v1793
        %v1795 = vpop.f32.mrf.mxu0
        %v1796 = vadd.f32 0.0, %v1795
        %v1797 = vpop.f32.mrf.mxu0
        %v1798 = vadd.f32 0.0, %v1797
        %1799 = vmatprep.mubr.bf16.mxu0 0
        %1800 = vmatmul.mubr.bf16.gmra.mxu0 %v947
        %v1801 = vpop.f32.mrf.mxu0
        %v1802 = vadd.f32 0.0, %v1801
        %v1803 = vpop.f32.mrf.mxu0
        %v1804 = vadd.f32 0.0, %v1803
        %v1805 = vpop.f32.mrf.mxu0
        %v1806 = vadd.f32 0.0, %v1805
        %v1807 = vpop.f32.mrf.mxu0
        %v1808 = vadd.f32 0.0, %v1807
        %1809 = vmatprep.mubr.bf16.mxu0 0
        %1810 = vmatmul.mubr.bf16.gmra.mxu0 %v948
        %v1811 = vpop.f32.mrf.mxu0
        %v1812 = vadd.f32 0.0, %v1811
        %v1813 = vpop.f32.mrf.mxu0
        %v1814 = vadd.f32 0.0, %v1813
        %v1815 = vpop.f32.mrf.mxu0
        %v1816 = vadd.f32 0.0, %v1815
        %v1817 = vpop.f32.mrf.mxu0
        %v1818 = vadd.f32 0.0, %v1817
        %1819 = vmatprep.mubr.bf16.mxu0 0
        %1820 = vmatmul.mubr.bf16.gmra.mxu0 %v949
        %v1821 = vpop.f32.mrf.mxu0
        %v1822 = vadd.f32 0.0, %v1821
        %v1823 = vpop.f32.mrf.mxu0
        %v1824 = vadd.f32 0.0, %v1823
        %v1825 = vpop.f32.mrf.mxu0
        %v1826 = vadd.f32 0.0, %v1825
        %v1827 = vpop.f32.mrf.mxu0
        %v1828 = vadd.f32 0.0, %v1827
        %1829 = vmatprep.mubr.bf16.mxu0 0
        %1830 = vmatmul.mubr.bf16.gmra.mxu0 %v950
        %v1831 = vpop.f32.mrf.mxu0
        %v1832 = vadd.f32 0.0, %v1831
        %v1833 = vpop.f32.mrf.mxu0
        %v1834 = vadd.f32 0.0, %v1833
        %v1835 = vpop.f32.mrf.mxu0
        %v1836 = vadd.f32 0.0, %v1835
        %v1837 = vpop.f32.mrf.mxu0
        %v1838 = vadd.f32 0.0, %v1837
        %1839 = vmatprep.mubr.bf16.mxu0 0
        %1840 = vmatmul.mubr.bf16.gmra.mxu0 %v951
        %v1841 = vpop.f32.mrf.mxu0
        %v1842 = vadd.f32 0.0, %v1841
        %v1843 = vpop.f32.mrf.mxu0
        %v1844 = vadd.f32 0.0, %v1843
        %v1845 = vpop.f32.mrf.mxu0
        %v1846 = vadd.f32 0.0, %v1845
        %v1847 = vpop.f32.mrf.mxu0
        %v1848 = vadd.f32 0.0, %v1847
        %1849 = vmatprep.mubr.bf16.mxu0 0
        %1850 = vmatmul.mubr.bf16.gmra.mxu0 %v952
        %v1851 = vpop.f32.mrf.mxu0
        %v1852 = vadd.f32 0.0, %v1851
        %v1853 = vpop.f32.mrf.mxu0
        %v1854 = vadd.f32 0.0, %v1853
        %v1855 = vpop.f32.mrf.mxu0
        %v1856 = vadd.f32 0.0, %v1855
        %v1857 = vpop.f32.mrf.mxu0
        %v1858 = vadd.f32 0.0, %v1857
        %1859 = vmatprep.mubr.bf16.mxu0 0
        %1860 = vmatmul.mubr.bf16.gmra.mxu0 %v953
        %v1861 = vpop.f32.mrf.mxu0
        %v1862 = vadd.f32 0.0, %v1861
        %v1863 = vpop.f32.mrf.mxu0
        %v1864 = vadd.f32 0.0, %v1863
        %v1865 = vpop.f32.mrf.mxu0
        %v1866 = vadd.f32 0.0, %v1865
        %v1867 = vpop.f32.mrf.mxu0
        %v1868 = vadd.f32 0.0, %v1867
        %1869 = vmatprep.mubr.bf16.mxu0 0
        %1870 = vmatmul.mubr.bf16.gmra.mxu0 %v954
        %v1871 = vpop.f32.mrf.mxu0
        %v1872 = vadd.f32 0.0, %v1871
        %v1873 = vpop.f32.mrf.mxu0
        %v1874 = vadd.f32 0.0, %v1873
        %v1875 = vpop.f32.mrf.mxu0
        %v1876 = vadd.f32 0.0, %v1875
        %v1877 = vpop.f32.mrf.mxu0
        %v1878 = vadd.f32 0.0, %v1877
        %1879 = vmatprep.mubr.bf16.mxu0 0
        %1880 = vmatmul.mubr.bf16.gmra.mxu0 %v955
        %v1881 = vpop.f32.mrf.mxu0
        %v1882 = vadd.f32 0.0, %v1881
        %v1883 = vpop.f32.mrf.mxu0
        %v1884 = vadd.f32 0.0, %v1883
        %v1885 = vpop.f32.mrf.mxu0
        %v1886 = vadd.f32 0.0, %v1885
        %v1887 = vpop.f32.mrf.mxu0
        %v1888 = vadd.f32 0.0, %v1887
        %1889 = vmatprep.mubr.bf16.mxu0 0
        %1890 = vmatmul.mubr.bf16.gmra.mxu0 %v956
        %v1891 = vpop.f32.mrf.mxu0
        %v1892 = vadd.f32 0.0, %v1891
        %v1893 = vpop.f32.mrf.mxu0
        %v1894 = vadd.f32 0.0, %v1893
        %v1895 = vpop.f32.mrf.mxu0
        %v1896 = vadd.f32 0.0, %v1895
        %v1897 = vpop.f32.mrf.mxu0
        %v1898 = vadd.f32 0.0, %v1897
        %1899 = vmatprep.mubr.bf16.mxu0 0
        %1900 = vmatmul.mubr.bf16.gmra.mxu0 %v957
        %v1901 = vpop.f32.mrf.mxu0
        %v1902 = vadd.f32 0.0, %v1901
        %v1903 = vpop.f32.mrf.mxu0
        %v1904 = vadd.f32 0.0, %v1903
        %v1905 = vpop.f32.mrf.mxu0
        %v1906 = vadd.f32 0.0, %v1905
        %v1907 = vpop.f32.mrf.mxu0
        %v1908 = vadd.f32 0.0, %v1907
        %1909 = vmatprep.mubr.bf16.mxu0 0
        %1910 = vmatmul.mubr.bf16.gmra.mxu0 %v958
        %v1911 = vpop.f32.mrf.mxu0
        %v1912 = vadd.f32 0.0, %v1911
        %v1913 = vpop.f32.mrf.mxu0
        %v1914 = vadd.f32 0.0, %v1913
        %v1915 = vpop.f32.mrf.mxu0
        %v1916 = vadd.f32 0.0, %v1915
        %v1917 = vpop.f32.mrf.mxu0
        %v1918 = vadd.f32 0.0, %v1917
        %1919 = vmatprep.mubr.bf16.mxu0 0
        %1920 = vmatmul.mubr.bf16.gmra.mxu0 %v959
        %v1921 = vpop.f32.mrf.mxu0
        %v1922 = vadd.f32 0.0, %v1921
        %v1923 = vpop.f32.mrf.mxu0
        %v1924 = vadd.f32 0.0, %v1923
        %v1925 = vpop.f32.mrf.mxu0
        %v1926 = vadd.f32 0.0, %v1925
        %v1927 = vpop.f32.mrf.mxu0
        %v1928 = vadd.f32 0.0, %v1927
        %1929 = vmatprep.mubr.bf16.mxu0 0
        %1930 = vmatmul.mubr.bf16.gmra.mxu0 %v960
        %v1931 = vpop.f32.mrf.mxu0
        %v1932 = vadd.f32 0.0, %v1931
        %v1933 = vpop.f32.mrf.mxu0
        %v1934 = vadd.f32 0.0, %v1933
        %v1935 = vpop.f32.mrf.mxu0
        %v1936 = vadd.f32 0.0, %v1935
        %v1937 = vpop.f32.mrf.mxu0
        %v1938 = vadd.f32 0.0, %v1937
        %1939 = vdwg.mxu0
        %1940 = vmatprep.subr.bf16.mxu0 0
        %1941 = vmatpush1.bf16.xpose.msra.mxu0 %v1288
        %1942 = vmatprep.subr.bf16.mxu0 0
        %1943 = vmatpush1.bf16.xpose.msra.mxu0 %v1287
        %1944 = vmatprep.subr.bf16.mxu0 0
        %1945 = vmatpush1.bf16.xpose.msra.mxu0 %v1286
        %1946 = vmatprep.subr.bf16.mxu0 0
        %1947 = vmatpush1.bf16.xpose.msra.mxu0 %v1285
        %1948 = vmatprep.subr.bf16.mxu0 0
        %1949 = vmatpush1.bf16.xpose.msra.mxu0 %v1284
        %1950 = vmatprep.subr.bf16.mxu0 0
        %1951 = vmatpush1.bf16.xpose.msra.mxu0 %v1283
        %1952 = vmatprep.subr.bf16.mxu0 0
        %1953 = vmatpush1.bf16.xpose.msra.mxu0 %v1282
        %1954 = vmatprep.subr.bf16.mxu0 0
        %1955 = vmatpush1.bf16.xpose.msra.mxu0 %v1281
        %1956 = vmatprep.subr.bf16.mxu0 0
        %1957 = vmatpush2.bf16.xpose.msra.mxu0 %v1296
        %1958 = vmatprep.subr.bf16.mxu0 0
        %1959 = vmatpush2.bf16.xpose.msra.mxu0 %v1295
        %1960 = vmatprep.subr.bf16.mxu0 0
        %1961 = vmatpush2.bf16.xpose.msra.mxu0 %v1294
        %1962 = vmatprep.subr.bf16.mxu0 0
        %1963 = vmatpush2.bf16.xpose.msra.mxu0 %v1293
        %1964 = vmatprep.subr.bf16.mxu0 0
        %1965 = vmatpush2.bf16.xpose.msra.mxu0 %v1292
        %1966 = vmatprep.subr.bf16.mxu0 0
        %1967 = vmatpush2.bf16.xpose.msra.mxu0 %v1291
        %1968 = vmatprep.subr.bf16.mxu0 0
        %1969 = vmatpush2.bf16.xpose.msra.mxu0 %v1290
        %1970 = vmatprep.subr.bf16.mxu0 0
        %1971 = vmatpush2.bf16.xpose.msra.mxu0 %v1289
        %1972 = vmatprep.mubr.bf16.mxu0 0
        %1973 = vmatmul.mubr.bf16.gmra.mxu0 %v945
        %v1974 = vpop.f32.mrf.mxu0
        %v1975 = vadd.f32 0.0, %v1974
        %v1976 = vpop.f32.mrf.mxu0
        %v1977 = vadd.f32 0.0, %v1976
        %v1978 = vpop.f32.mrf.mxu0
        %v1979 = vadd.f32 0.0, %v1978
        %v1980 = vpop.f32.mrf.mxu0
        %v1981 = vadd.f32 0.0, %v1980
        %1982 = vmatprep.mubr.bf16.mxu0 0
        %1983 = vmatmul.mubr.bf16.gmra.mxu0 %v946
        %v1984 = vpop.f32.mrf.mxu0
        %v1985 = vadd.f32 0.0, %v1984
        %v1986 = vpop.f32.mrf.mxu0
        %v1987 = vadd.f32 0.0, %v1986
        %v1988 = vpop.f32.mrf.mxu0
        %v1989 = vadd.f32 0.0, %v1988
        %v1990 = vpop.f32.mrf.mxu0
        %v1991 = vadd.f32 0.0, %v1990
        %1992 = vmatprep.mubr.bf16.mxu0 0
        %1993 = vmatmul.mubr.bf16.gmra.mxu0 %v947
        %v1994 = vpop.f32.mrf.mxu0
        %v1995 = vadd.f32 0.0, %v1994
        %v1996 = vpop.f32.mrf.mxu0
        %v1997 = vadd.f32 0.0, %v1996
        %v1998 = vpop.f32.mrf.mxu0
        %v1999 = vadd.f32 0.0, %v1998
        %v2000 = vpop.f32.mrf.mxu0
        %v2001 = vadd.f32 0.0, %v2000
        %2002 = vmatprep.mubr.bf16.mxu0 0
        %2003 = vmatmul.mubr.bf16.gmra.mxu0 %v948
        %v2004 = vpop.f32.mrf.mxu0
        %v2005 = vadd.f32 0.0, %v2004
        %v2006 = vpop.f32.mrf.mxu0
        %v2007 = vadd.f32 0.0, %v2006
        %v2008 = vpop.f32.mrf.mxu0
        %v2009 = vadd.f32 0.0, %v2008
        %v2010 = vpop.f32.mrf.mxu0
        %v2011 = vadd.f32 0.0, %v2010
        %2012 = vmatprep.mubr.bf16.mxu0 0
        %2013 = vmatmul.mubr.bf16.gmra.mxu0 %v949
        %v2014 = vpop.f32.mrf.mxu0
        %v2015 = vadd.f32 0.0, %v2014
        %v2016 = vpop.f32.mrf.mxu0
        %v2017 = vadd.f32 0.0, %v2016
        %v2018 = vpop.f32.mrf.mxu0
        %v2019 = vadd.f32 0.0, %v2018
        %v2020 = vpop.f32.mrf.mxu0
        %v2021 = vadd.f32 0.0, %v2020
        %2022 = vmatprep.mubr.bf16.mxu0 0
        %2023 = vmatmul.mubr.bf16.gmra.mxu0 %v950
        %v2024 = vpop.f32.mrf.mxu0
        %v2025 = vadd.f32 0.0, %v2024
        %v2026 = vpop.f32.mrf.mxu0
        %v2027 = vadd.f32 0.0, %v2026
        %v2028 = vpop.f32.mrf.mxu0
        %v2029 = vadd.f32 0.0, %v2028
        %v2030 = vpop.f32.mrf.mxu0
        %v2031 = vadd.f32 0.0, %v2030
        %2032 = vmatprep.mubr.bf16.mxu0 0
        %2033 = vmatmul.mubr.bf16.gmra.mxu0 %v951
        %v2034 = vpop.f32.mrf.mxu0
        %v2035 = vadd.f32 0.0, %v2034
        %v2036 = vpop.f32.mrf.mxu0
        %v2037 = vadd.f32 0.0, %v2036
        %v2038 = vpop.f32.mrf.mxu0
        %v2039 = vadd.f32 0.0, %v2038
        %v2040 = vpop.f32.mrf.mxu0
        %v2041 = vadd.f32 0.0, %v2040
        %2042 = vmatprep.mubr.bf16.mxu0 0
        %2043 = vmatmul.mubr.bf16.gmra.mxu0 %v952
        %v2044 = vpop.f32.mrf.mxu0
        %v2045 = vadd.f32 0.0, %v2044
        %v2046 = vpop.f32.mrf.mxu0
        %v2047 = vadd.f32 0.0, %v2046
        %v2048 = vpop.f32.mrf.mxu0
        %v2049 = vadd.f32 0.0, %v2048
        %v2050 = vpop.f32.mrf.mxu0
        %v2051 = vadd.f32 0.0, %v2050
        %2052 = vmatprep.mubr.bf16.mxu0 0
        %2053 = vmatmul.mubr.bf16.gmra.mxu0 %v953
        %v2054 = vpop.f32.mrf.mxu0
        %v2055 = vadd.f32 0.0, %v2054
        %v2056 = vpop.f32.mrf.mxu0
        %v2057 = vadd.f32 0.0, %v2056
        %v2058 = vpop.f32.mrf.mxu0
        %v2059 = vadd.f32 0.0, %v2058
        %v2060 = vpop.f32.mrf.mxu0
        %v2061 = vadd.f32 0.0, %v2060
        %2062 = vmatprep.mubr.bf16.mxu0 0
        %2063 = vmatmul.mubr.bf16.gmra.mxu0 %v954
        %v2064 = vpop.f32.mrf.mxu0
        %v2065 = vadd.f32 0.0, %v2064
        %v2066 = vpop.f32.mrf.mxu0
        %v2067 = vadd.f32 0.0, %v2066
        %v2068 = vpop.f32.mrf.mxu0
        %v2069 = vadd.f32 0.0, %v2068
        %v2070 = vpop.f32.mrf.mxu0
        %v2071 = vadd.f32 0.0, %v2070
        %2072 = vmatprep.mubr.bf16.mxu0 0
        %2073 = vmatmul.mubr.bf16.gmra.mxu0 %v955
        %v2074 = vpop.f32.mrf.mxu0
        %v2075 = vadd.f32 0.0, %v2074
        %v2076 = vpop.f32.mrf.mxu0
        %v2077 = vadd.f32 0.0, %v2076
        %v2078 = vpop.f32.mrf.mxu0
        %v2079 = vadd.f32 0.0, %v2078
        %v2080 = vpop.f32.mrf.mxu0
        %v2081 = vadd.f32 0.0, %v2080
        %2082 = vmatprep.mubr.bf16.mxu0 0
        %2083 = vmatmul.mubr.bf16.gmra.mxu0 %v956
        %v2084 = vpop.f32.mrf.mxu0
        %v2085 = vadd.f32 0.0, %v2084
        %v2086 = vpop.f32.mrf.mxu0
        %v2087 = vadd.f32 0.0, %v2086
        %v2088 = vpop.f32.mrf.mxu0
        %v2089 = vadd.f32 0.0, %v2088
        %v2090 = vpop.f32.mrf.mxu0
        %v2091 = vadd.f32 0.0, %v2090
        %2092 = vmatprep.mubr.bf16.mxu0 0
        %2093 = vmatmul.mubr.bf16.gmra.mxu0 %v957
        %v2094 = vpop.f32.mrf.mxu0
        %v2095 = vadd.f32 0.0, %v2094
        %v2096 = vpop.f32.mrf.mxu0
        %v2097 = vadd.f32 0.0, %v2096
        %v2098 = vpop.f32.mrf.mxu0
        %v2099 = vadd.f32 0.0, %v2098
        %v2100 = vpop.f32.mrf.mxu0
        %v2101 = vadd.f32 0.0, %v2100
        %2102 = vmatprep.mubr.bf16.mxu0 0
        %2103 = vmatmul.mubr.bf16.gmra.mxu0 %v958
        %v2104 = vpop.f32.mrf.mxu0
        %v2105 = vadd.f32 0.0, %v2104
        %v2106 = vpop.f32.mrf.mxu0
        %v2107 = vadd.f32 0.0, %v2106
        %v2108 = vpop.f32.mrf.mxu0
        %v2109 = vadd.f32 0.0, %v2108
        %v2110 = vpop.f32.mrf.mxu0
        %v2111 = vadd.f32 0.0, %v2110
        %2112 = vmatprep.mubr.bf16.mxu0 0
        %2113 = vmatmul.mubr.bf16.gmra.mxu0 %v959
        %v2114 = vpop.f32.mrf.mxu0
        %v2115 = vadd.f32 0.0, %v2114
        %v2116 = vpop.f32.mrf.mxu0
        %v2117 = vadd.f32 0.0, %v2116
        %v2118 = vpop.f32.mrf.mxu0
        %v2119 = vadd.f32 0.0, %v2118
        %v2120 = vpop.f32.mrf.mxu0
        %v2121 = vadd.f32 0.0, %v2120
        %2122 = vmatprep.mubr.bf16.mxu0 0
        %2123 = vmatmul.mubr.bf16.gmra.mxu0 %v960
        %v2124 = vpop.f32.mrf.mxu0
        %v2125 = vadd.f32 0.0, %v2124
        %v2126 = vpop.f32.mrf.mxu0
        %v2127 = vadd.f32 0.0, %v2126
        %v2128 = vpop.f32.mrf.mxu0
        %v2129 = vadd.f32 0.0, %v2128
        %v2130 = vpop.f32.mrf.mxu0
        %v2131 = vadd.f32 0.0, %v2130
        %2132 = vdwg.mxu0
        %v2133 = vmul.f32 %v1396, 0.10206208
        %v2134 = vmul.f32 %v1398, 0.10206208
        %v2135 = vmul.f32 %v1589, 0.10206208
        %v2136 = vmul.f32 %v1591, 0.10206208
        %v2137 = vmul.f32 %v1782, 0.10206208
        %v2138 = vmul.f32 %v1784, 0.10206208
        %v2139 = vmul.f32 %v1975, 0.10206208
        %v2140 = vmul.f32 %v1977, 0.10206208
        %v2141 = vmul.f32 %v1400, 0.10206208
        %v2142 = vmul.f32 %v1402, 0.10206208
        %v2143 = vmul.f32 %v1593, 0.10206208
        %v2144 = vmul.f32 %v1595, 0.10206208
        %v2145 = vmul.f32 %v1786, 0.10206208
        %v2146 = vmul.f32 %v1788, 0.10206208
        %v2147 = vmul.f32 %v1979, 0.10206208
        %v2148 = vmul.f32 %v1981, 0.10206208
        %v2149 = vmul.f32 %v1406, 0.10206208
        %v2150 = vmul.f32 %v1408, 0.10206208
        %v2151 = vmul.f32 %v1599, 0.10206208
        %v2152 = vmul.f32 %v1601, 0.10206208
        %v2153 = vmul.f32 %v1792, 0.10206208
        %v2154 = vmul.f32 %v1794, 0.10206208
        %v2155 = vmul.f32 %v1985, 0.10206208
        %v2156 = vmul.f32 %v1987, 0.10206208
        %v2157 = vmul.f32 %v1410, 0.10206208
        %v2158 = vmul.f32 %v1412, 0.10206208
        %v2159 = vmul.f32 %v1603, 0.10206208
        %v2160 = vmul.f32 %v1605, 0.10206208
        %v2161 = vmul.f32 %v1796, 0.10206208
        %v2162 = vmul.f32 %v1798, 0.10206208
        %v2163 = vmul.f32 %v1989, 0.10206208
        %v2164 = vmul.f32 %v1991, 0.10206208
        %v2165 = vmul.f32 %v1416, 0.10206208
        %v2166 = vmul.f32 %v1418, 0.10206208
        %v2167 = vmul.f32 %v1609, 0.10206208
        %v2168 = vmul.f32 %v1611, 0.10206208
        %v2169 = vmul.f32 %v1802, 0.10206208
        %v2170 = vmul.f32 %v1804, 0.10206208
        %v2171 = vmul.f32 %v1995, 0.10206208
        %v2172 = vmul.f32 %v1997, 0.10206208
        %v2173 = vmul.f32 %v1420, 0.10206208
        %v2174 = vmul.f32 %v1422, 0.10206208
        %v2175 = vmul.f32 %v1613, 0.10206208
        %v2176 = vmul.f32 %v1615, 0.10206208
        %v2177 = vmul.f32 %v1806, 0.10206208
        %v2178 = vmul.f32 %v1808, 0.10206208
        %v2179 = vmul.f32 %v1999, 0.10206208
        %v2180 = vmul.f32 %v2001, 0.10206208
        %v2181 = vmul.f32 %v1426, 0.10206208
        %v2182 = vmul.f32 %v1428, 0.10206208
        %v2183 = vmul.f32 %v1619, 0.10206208
        %v2184 = vmul.f32 %v1621, 0.10206208
        %v2185 = vmul.f32 %v1812, 0.10206208
        %v2186 = vmul.f32 %v1814, 0.10206208
        %v2187 = vmul.f32 %v2005, 0.10206208
        %v2188 = vmul.f32 %v2007, 0.10206208
        %v2189 = vmul.f32 %v1430, 0.10206208
        %v2190 = vmul.f32 %v1432, 0.10206208
        %v2191 = vmul.f32 %v1623, 0.10206208
        %v2192 = vmul.f32 %v1625, 0.10206208
        %v2193 = vmul.f32 %v1816, 0.10206208
        %v2194 = vmul.f32 %v1818, 0.10206208
        %v2195 = vmul.f32 %v2009, 0.10206208
        %v2196 = vmul.f32 %v2011, 0.10206208
        %v2197 = vmul.f32 %v1436, 0.10206208
        %v2198 = vmul.f32 %v1438, 0.10206208
        %v2199 = vmul.f32 %v1629, 0.10206208
        %v2200 = vmul.f32 %v1631, 0.10206208
        %v2201 = vmul.f32 %v1822, 0.10206208
        %v2202 = vmul.f32 %v1824, 0.10206208
        %v2203 = vmul.f32 %v2015, 0.10206208
        %v2204 = vmul.f32 %v2017, 0.10206208
        %v2205 = vmul.f32 %v1440, 0.10206208
        %v2206 = vmul.f32 %v1442, 0.10206208
        %v2207 = vmul.f32 %v1633, 0.10206208
        %v2208 = vmul.f32 %v1635, 0.10206208
        %v2209 = vmul.f32 %v1826, 0.10206208
        %v2210 = vmul.f32 %v1828, 0.10206208
        %v2211 = vmul.f32 %v2019, 0.10206208
        %v2212 = vmul.f32 %v2021, 0.10206208
        %v2213 = vmul.f32 %v1446, 0.10206208
        %v2214 = vmul.f32 %v1448, 0.10206208
        %v2215 = vmul.f32 %v1639, 0.10206208
        %v2216 = vmul.f32 %v1641, 0.10206208
        %v2217 = vmul.f32 %v1832, 0.10206208
        %v2218 = vmul.f32 %v1834, 0.10206208
        %v2219 = vmul.f32 %v2025, 0.10206208
        %v2220 = vmul.f32 %v2027, 0.10206208
        %v2221 = vmul.f32 %v1450, 0.10206208
        %v2222 = vmul.f32 %v1452, 0.10206208
        %v2223 = vmul.f32 %v1643, 0.10206208
        %v2224 = vmul.f32 %v1645, 0.10206208
        %v2225 = vmul.f32 %v1836, 0.10206208
        %v2226 = vmul.f32 %v1838, 0.10206208
        %v2227 = vmul.f32 %v2029, 0.10206208
        %v2228 = vmul.f32 %v2031, 0.10206208
        %v2229 = vmul.f32 %v1456, 0.10206208
        %v2230 = vmul.f32 %v1458, 0.10206208
        %v2231 = vmul.f32 %v1649, 0.10206208
        %v2232 = vmul.f32 %v1651, 0.10206208
        %v2233 = vmul.f32 %v1842, 0.10206208
        %v2234 = vmul.f32 %v1844, 0.10206208
        %v2235 = vmul.f32 %v2035, 0.10206208
        %v2236 = vmul.f32 %v2037, 0.10206208
        %v2237 = vmul.f32 %v1460, 0.10206208
        %v2238 = vmul.f32 %v1462, 0.10206208
        %v2239 = vmul.f32 %v1653, 0.10206208
        %v2240 = vmul.f32 %v1655, 0.10206208
        %v2241 = vmul.f32 %v1846, 0.10206208
        %v2242 = vmul.f32 %v1848, 0.10206208
        %v2243 = vmul.f32 %v2039, 0.10206208
        %v2244 = vmul.f32 %v2041, 0.10206208
        %v2245 = vmul.f32 %v1466, 0.10206208
        %v2246 = vmul.f32 %v1468, 0.10206208
        %v2247 = vmul.f32 %v1659, 0.10206208
        %v2248 = vmul.f32 %v1661, 0.10206208
        %v2249 = vmul.f32 %v1852, 0.10206208
        %v2250 = vmul.f32 %v1854, 0.10206208
        %v2251 = vmul.f32 %v2045, 0.10206208
        %v2252 = vmul.f32 %v2047, 0.10206208
        %v2253 = vmul.f32 %v1470, 0.10206208
        %v2254 = vmul.f32 %v1472, 0.10206208
        %v2255 = vmul.f32 %v1663, 0.10206208
        %v2256 = vmul.f32 %v1665, 0.10206208
        %v2257 = vmul.f32 %v1856, 0.10206208
        %v2258 = vmul.f32 %v1858, 0.10206208
        %v2259 = vmul.f32 %v2049, 0.10206208
        %v2260 = vmul.f32 %v2051, 0.10206208
        %v2261 = vmul.f32 %v1476, 0.10206208
        %v2262 = vmul.f32 %v1478, 0.10206208
        %v2263 = vmul.f32 %v1669, 0.10206208
        %v2264 = vmul.f32 %v1671, 0.10206208
        %v2265 = vmul.f32 %v1862, 0.10206208
        %v2266 = vmul.f32 %v1864, 0.10206208
        %v2267 = vmul.f32 %v2055, 0.10206208
        %v2268 = vmul.f32 %v2057, 0.10206208
        %v2269 = vmul.f32 %v1480, 0.10206208
        %v2270 = vmul.f32 %v1482, 0.10206208
        %v2271 = vmul.f32 %v1673, 0.10206208
        %v2272 = vmul.f32 %v1675, 0.10206208
        %v2273 = vmul.f32 %v1866, 0.10206208
        %v2274 = vmul.f32 %v1868, 0.10206208
        %v2275 = vmul.f32 %v2059, 0.10206208
        %v2276 = vmul.f32 %v2061, 0.10206208
        %v2277 = vmul.f32 %v1486, 0.10206208
        %v2278 = vmul.f32 %v1488, 0.10206208
        %v2279 = vmul.f32 %v1679, 0.10206208
        %v2280 = vmul.f32 %v1681, 0.10206208
        %v2281 = vmul.f32 %v1872, 0.10206208
        %v2282 = vmul.f32 %v1874, 0.10206208
        %v2283 = vmul.f32 %v2065, 0.10206208
        %v2284 = vmul.f32 %v2067, 0.10206208
        %v2285 = vmul.f32 %v1490, 0.10206208
        %v2286 = vmul.f32 %v1492, 0.10206208
        %v2287 = vmul.f32 %v1683, 0.10206208
        %v2288 = vmul.f32 %v1685, 0.10206208
        %v2289 = vmul.f32 %v1876, 0.10206208
        %v2290 = vmul.f32 %v1878, 0.10206208
        %v2291 = vmul.f32 %v2069, 0.10206208
        %v2292 = vmul.f32 %v2071, 0.10206208
        %v2293 = vmul.f32 %v1496, 0.10206208
        %v2294 = vmul.f32 %v1498, 0.10206208
        %v2295 = vmul.f32 %v1689, 0.10206208
        %v2296 = vmul.f32 %v1691, 0.10206208
        %v2297 = vmul.f32 %v1882, 0.10206208
        %v2298 = vmul.f32 %v1884, 0.10206208
        %v2299 = vmul.f32 %v2075, 0.10206208
        %v2300 = vmul.f32 %v2077, 0.10206208
        %v2301 = vmul.f32 %v1500, 0.10206208
        %v2302 = vmul.f32 %v1502, 0.10206208
        %v2303 = vmul.f32 %v1693, 0.10206208
        %v2304 = vmul.f32 %v1695, 0.10206208
        %v2305 = vmul.f32 %v1886, 0.10206208
        %v2306 = vmul.f32 %v1888, 0.10206208
        %v2307 = vmul.f32 %v2079, 0.10206208
        %v2308 = vmul.f32 %v2081, 0.10206208
        %v2309 = vmul.f32 %v1506, 0.10206208
        %v2310 = vmul.f32 %v1508, 0.10206208
        %v2311 = vmul.f32 %v1699, 0.10206208
        %v2312 = vmul.f32 %v1701, 0.10206208
        %v2313 = vmul.f32 %v1892, 0.10206208
        %v2314 = vmul.f32 %v1894, 0.10206208
        %v2315 = vmul.f32 %v2085, 0.10206208
        %v2316 = vmul.f32 %v2087, 0.10206208
        %v2317 = vmul.f32 %v1510, 0.10206208
        %v2318 = vmul.f32 %v1512, 0.10206208
        %v2319 = vmul.f32 %v1703, 0.10206208
        %v2320 = vmul.f32 %v1705, 0.10206208
        %v2321 = vmul.f32 %v1896, 0.10206208
        %v2322 = vmul.f32 %v1898, 0.10206208
        %v2323 = vmul.f32 %v2089, 0.10206208
        %v2324 = vmul.f32 %v2091, 0.10206208
        %v2325 = vmul.f32 %v1516, 0.10206208
        %v2326 = vmul.f32 %v1518, 0.10206208
        %v2327 = vmul.f32 %v1709, 0.10206208
        %v2328 = vmul.f32 %v1711, 0.10206208
        %v2329 = vmul.f32 %v1902, 0.10206208
        %v2330 = vmul.f32 %v1904, 0.10206208
        %v2331 = vmul.f32 %v2095, 0.10206208
        %v2332 = vmul.f32 %v2097, 0.10206208
        %v2333 = vmul.f32 %v1520, 0.10206208
        %v2334 = vmul.f32 %v1522, 0.10206208
        %v2335 = vmul.f32 %v1713, 0.10206208
        %v2336 = vmul.f32 %v1715, 0.10206208
        %v2337 = vmul.f32 %v1906, 0.10206208
        %v2338 = vmul.f32 %v1908, 0.10206208
        %v2339 = vmul.f32 %v2099, 0.10206208
        %v2340 = vmul.f32 %v2101, 0.10206208
        %v2341 = vmul.f32 %v1526, 0.10206208
        %v2342 = vmul.f32 %v1528, 0.10206208
        %v2343 = vmul.f32 %v1719, 0.10206208
        %v2344 = vmul.f32 %v1721, 0.10206208
        %v2345 = vmul.f32 %v1912, 0.10206208
        %v2346 = vmul.f32 %v1914, 0.10206208
        %v2347 = vmul.f32 %v2105, 0.10206208
        %v2348 = vmul.f32 %v2107, 0.10206208
        %v2349 = vmul.f32 %v1530, 0.10206208
        %v2350 = vmul.f32 %v1532, 0.10206208
        %v2351 = vmul.f32 %v1723, 0.10206208
        %v2352 = vmul.f32 %v1725, 0.10206208
        %v2353 = vmul.f32 %v1916, 0.10206208
        %v2354 = vmul.f32 %v1918, 0.10206208
        %v2355 = vmul.f32 %v2109, 0.10206208
        %v2356 = vmul.f32 %v2111, 0.10206208
        %v2357 = vmul.f32 %v1536, 0.10206208
        %v2358 = vmul.f32 %v1538, 0.10206208
        %v2359 = vmul.f32 %v1729, 0.10206208
        %v2360 = vmul.f32 %v1731, 0.10206208
        %v2361 = vmul.f32 %v1922, 0.10206208
        %v2362 = vmul.f32 %v1924, 0.10206208
        %v2363 = vmul.f32 %v2115, 0.10206208
        %v2364 = vmul.f32 %v2117, 0.10206208
        %v2365 = vmul.f32 %v1540, 0.10206208
        %v2366 = vmul.f32 %v1542, 0.10206208
        %v2367 = vmul.f32 %v1733, 0.10206208
        %v2368 = vmul.f32 %v1735, 0.10206208
        %v2369 = vmul.f32 %v1926, 0.10206208
        %v2370 = vmul.f32 %v1928, 0.10206208
        %v2371 = vmul.f32 %v2119, 0.10206208
        %v2372 = vmul.f32 %v2121, 0.10206208
        %v2373 = vmul.f32 %v1546, 0.10206208
        %v2374 = vmul.f32 %v1548, 0.10206208
        %v2375 = vmul.f32 %v1739, 0.10206208
        %v2376 = vmul.f32 %v1741, 0.10206208
        %v2377 = vmul.f32 %v1932, 0.10206208
        %v2378 = vmul.f32 %v1934, 0.10206208
        %v2379 = vmul.f32 %v2125, 0.10206208
        %v2380 = vmul.f32 %v2127, 0.10206208
        %v2381 = vmul.f32 %v1550, 0.10206208
        %v2382 = vmul.f32 %v1552, 0.10206208
        %v2383 = vmul.f32 %v1743, 0.10206208
        %v2384 = vmul.f32 %v1745, 0.10206208
        %v2385 = vmul.f32 %v1936, 0.10206208
        %v2386 = vmul.f32 %v1938, 0.10206208
        %v2387 = vmul.f32 %v2129, 0.10206208
        %v2388 = vmul.f32 %v2131, 0.10206208
        %v2389 = vsel %vm465, %v2133, -1e+30
        %v2390 = vsel %vm466, %v2134, -1e+30
        %v2391 = vsel %vm467, %v2135, -1e+30
        %v2392 = vsel %vm468, %v2136, -1e+30
        %v2393 = vsel %vm469, %v2137, -1e+30
        %v2394 = vsel %vm470, %v2138, -1e+30
        %v2395 = vsel %vm471, %v2139, -1e+30
        %v2396 = vsel %vm472, %v2140, -1e+30
        %v2397 = vsel %vm473, %v2141, -1e+30
        %v2398 = vsel %vm474, %v2142, -1e+30
        %v2399 = vsel %vm475, %v2143, -1e+30
        %v2400 = vsel %vm476, %v2144, -1e+30
        %v2401 = vsel %vm477, %v2145, -1e+30
        %v2402 = vsel %vm478, %v2146, -1e+30
        %v2403 = vsel %vm479, %v2147, -1e+30
        %v2404 = vsel %vm480, %v2148, -1e+30
        %v2405 = vsel %vm481, %v2149, -1e+30
        %v2406 = vsel %vm482, %v2150, -1e+30
        %v2407 = vsel %vm483, %v2151, -1e+30
        %v2408 = vsel %vm484, %v2152, -1e+30
        %v2409 = vsel %vm485, %v2153, -1e+30
        %v2410 = vsel %vm486, %v2154, -1e+30
        %v2411 = vsel %vm487, %v2155, -1e+30
        %v2412 = vsel %vm488, %v2156, -1e+30
        %v2413 = vsel %vm489, %v2157, -1e+30
        %v2414 = vsel %vm490, %v2158, -1e+30
        %v2415 = vsel %vm491, %v2159, -1e+30
        %v2416 = vsel %vm492, %v2160, -1e+30
        %v2417 = vsel %vm493, %v2161, -1e+30
        %v2418 = vsel %vm494, %v2162, -1e+30
        %v2419 = vsel %vm495, %v2163, -1e+30
        %v2420 = vsel %vm496, %v2164, -1e+30
        %v2421 = vsel %vm497, %v2165, -1e+30
        %v2422 = vsel %vm498, %v2166, -1e+30
        %v2423 = vsel %vm499, %v2167, -1e+30
        %v2424 = vsel %vm500, %v2168, -1e+30
        %v2425 = vsel %vm501, %v2169, -1e+30
        %v2426 = vsel %vm502, %v2170, -1e+30
        %v2427 = vsel %vm503, %v2171, -1e+30
        %v2428 = vsel %vm504, %v2172, -1e+30
        %v2429 = vsel %vm505, %v2173, -1e+30
        %v2430 = vsel %vm506, %v2174, -1e+30
        %v2431 = vsel %vm507, %v2175, -1e+30
        %v2432 = vsel %vm508, %v2176, -1e+30
        %v2433 = vsel %vm509, %v2177, -1e+30
        %v2434 = vsel %vm510, %v2178, -1e+30
        %v2435 = vsel %vm511, %v2179, -1e+30
        %v2436 = vsel %vm512, %v2180, -1e+30
        %v2437 = vsel %vm513, %v2181, -1e+30
        %v2438 = vsel %vm514, %v2182, -1e+30
        %v2439 = vsel %vm515, %v2183, -1e+30
        %v2440 = vsel %vm516, %v2184, -1e+30
        %v2441 = vsel %vm517, %v2185, -1e+30
        %v2442 = vsel %vm518, %v2186, -1e+30
        %v2443 = vsel %vm519, %v2187, -1e+30
        %v2444 = vsel %vm520, %v2188, -1e+30
        %v2445 = vsel %vm521, %v2189, -1e+30
        %v2446 = vsel %vm522, %v2190, -1e+30
        %v2447 = vsel %vm523, %v2191, -1e+30
        %v2448 = vsel %vm524, %v2192, -1e+30
        %v2449 = vsel %vm525, %v2193, -1e+30
        %v2450 = vsel %vm526, %v2194, -1e+30
        %v2451 = vsel %vm527, %v2195, -1e+30
        %v2452 = vsel %vm528, %v2196, -1e+30
        %v2453 = vsel %vm529, %v2197, -1e+30
        %v2454 = vsel %vm530, %v2198, -1e+30
        %v2455 = vsel %vm531, %v2199, -1e+30
        %v2456 = vsel %vm532, %v2200, -1e+30
        %v2457 = vsel %vm533, %v2201, -1e+30
        %v2458 = vsel %vm534, %v2202, -1e+30
        %v2459 = vsel %vm535, %v2203, -1e+30
        %v2460 = vsel %vm536, %v2204, -1e+30
        %v2461 = vsel %vm537, %v2205, -1e+30
        %v2462 = vsel %vm538, %v2206, -1e+30
        %v2463 = vsel %vm539, %v2207, -1e+30
        %v2464 = vsel %vm540, %v2208, -1e+30
        %v2465 = vsel %vm541, %v2209, -1e+30
        %v2466 = vsel %vm542, %v2210, -1e+30
        %v2467 = vsel %vm543, %v2211, -1e+30
        %v2468 = vsel %vm544, %v2212, -1e+30
        %v2469 = vsel %vm545, %v2213, -1e+30
        %v2470 = vsel %vm546, %v2214, -1e+30
        %v2471 = vsel %vm547, %v2215, -1e+30
        %v2472 = vsel %vm548, %v2216, -1e+30
        %v2473 = vsel %vm549, %v2217, -1e+30
        %v2474 = vsel %vm550, %v2218, -1e+30
        %v2475 = vsel %vm551, %v2219, -1e+30
        %v2476 = vsel %vm552, %v2220, -1e+30
        %v2477 = vsel %vm553, %v2221, -1e+30
        %v2478 = vsel %vm554, %v2222, -1e+30
        %v2479 = vsel %vm555, %v2223, -1e+30
        %v2480 = vsel %vm556, %v2224, -1e+30
        %v2481 = vsel %vm557, %v2225, -1e+30
        %v2482 = vsel %vm558, %v2226, -1e+30
        %v2483 = vsel %vm559, %v2227, -1e+30
        %v2484 = vsel %vm560, %v2228, -1e+30
        %v2485 = vsel %vm561, %v2229, -1e+30
        %v2486 = vsel %vm562, %v2230, -1e+30
        %v2487 = vsel %vm563, %v2231, -1e+30
        %v2488 = vsel %vm564, %v2232, -1e+30
        %v2489 = vsel %vm565, %v2233, -1e+30
        %v2490 = vsel %vm566, %v2234, -1e+30
        %v2491 = vsel %vm567, %v2235, -1e+30
        %v2492 = vsel %vm568, %v2236, -1e+30
        %v2493 = vsel %vm569, %v2237, -1e+30
        %v2494 = vsel %vm570, %v2238, -1e+30
        %v2495 = vsel %vm571, %v2239, -1e+30
        %v2496 = vsel %vm572, %v2240, -1e+30
        %v2497 = vsel %vm573, %v2241, -1e+30
        %v2498 = vsel %vm574, %v2242, -1e+30
        %v2499 = vsel %vm575, %v2243, -1e+30
        %v2500 = vsel %vm576, %v2244, -1e+30
        %v2501 = vsel %vm577, %v2245, -1e+30
        %v2502 = vsel %vm578, %v2246, -1e+30
        %v2503 = vsel %vm579, %v2247, -1e+30
        %v2504 = vsel %vm580, %v2248, -1e+30
        %v2505 = vsel %vm581, %v2249, -1e+30
        %v2506 = vsel %vm582, %v2250, -1e+30
        %v2507 = vsel %vm583, %v2251, -1e+30
        %v2508 = vsel %vm584, %v2252, -1e+30
        %v2509 = vsel %vm585, %v2253, -1e+30
        %v2510 = vsel %vm586, %v2254, -1e+30
        %v2511 = vsel %vm587, %v2255, -1e+30
        %v2512 = vsel %vm588, %v2256, -1e+30
        %v2513 = vsel %vm589, %v2257, -1e+30
        %v2514 = vsel %vm590, %v2258, -1e+30
        %v2515 = vsel %vm591, %v2259, -1e+30
        %v2516 = vsel %vm592, %v2260, -1e+30
        %v2517 = vsel %vm593, %v2261, -1e+30
        %v2518 = vsel %vm594, %v2262, -1e+30
        %v2519 = vsel %vm595, %v2263, -1e+30
        %v2520 = vsel %vm596, %v2264, -1e+30
        %v2521 = vsel %vm597, %v2265, -1e+30
        %v2522 = vsel %vm598, %v2266, -1e+30
        %v2523 = vsel %vm599, %v2267, -1e+30
        %v2524 = vsel %vm600, %v2268, -1e+30
        %v2525 = vsel %vm601, %v2269, -1e+30
        %v2526 = vsel %vm602, %v2270, -1e+30
        %v2527 = vsel %vm603, %v2271, -1e+30
        %v2528 = vsel %vm604, %v2272, -1e+30
        %v2529 = vsel %vm605, %v2273, -1e+30
        %v2530 = vsel %vm606, %v2274, -1e+30
        %v2531 = vsel %vm607, %v2275, -1e+30
        %v2532 = vsel %vm608, %v2276, -1e+30
        %v2533 = vsel %vm609, %v2277, -1e+30
        %v2534 = vsel %vm610, %v2278, -1e+30
        %v2535 = vsel %vm611, %v2279, -1e+30
        %v2536 = vsel %vm612, %v2280, -1e+30
        %v2537 = vsel %vm613, %v2281, -1e+30
        %v2538 = vsel %vm614, %v2282, -1e+30
        %v2539 = vsel %vm615, %v2283, -1e+30
        %v2540 = vsel %vm616, %v2284, -1e+30
        %v2541 = vsel %vm617, %v2285, -1e+30
        %v2542 = vsel %vm618, %v2286, -1e+30
        %v2543 = vsel %vm619, %v2287, -1e+30
        %v2544 = vsel %vm620, %v2288, -1e+30
        %v2545 = vsel %vm621, %v2289, -1e+30
        %v2546 = vsel %vm622, %v2290, -1e+30
        %v2547 = vsel %vm623, %v2291, -1e+30
        %v2548 = vsel %vm624, %v2292, -1e+30
        %v2549 = vsel %vm625, %v2293, -1e+30
        %v2550 = vsel %vm626, %v2294, -1e+30
        %v2551 = vsel %vm627, %v2295, -1e+30
        %v2552 = vsel %vm628, %v2296, -1e+30
        %v2553 = vsel %vm629, %v2297, -1e+30
        %v2554 = vsel %vm630, %v2298, -1e+30
        %v2555 = vsel %vm631, %v2299, -1e+30
        %v2556 = vsel %vm632, %v2300, -1e+30
        %v2557 = vsel %vm633, %v2301, -1e+30
        %v2558 = vsel %vm634, %v2302, -1e+30
        %v2559 = vsel %vm635, %v2303, -1e+30
        %v2560 = vsel %vm636, %v2304, -1e+30
        %v2561 = vsel %vm637, %v2305, -1e+30
        %v2562 = vsel %vm638, %v2306, -1e+30
        %v2563 = vsel %vm639, %v2307, -1e+30
        %v2564 = vsel %vm640, %v2308, -1e+30
        %v2565 = vsel %vm641, %v2309, -1e+30
        %v2566 = vsel %vm642, %v2310, -1e+30
        %v2567 = vsel %vm643, %v2311, -1e+30
        %v2568 = vsel %vm644, %v2312, -1e+30
        %v2569 = vsel %vm645, %v2313, -1e+30
        %v2570 = vsel %vm646, %v2314, -1e+30
        %v2571 = vsel %vm647, %v2315, -1e+30
        %v2572 = vsel %vm648, %v2316, -1e+30
        %v2573 = vsel %vm649, %v2317, -1e+30
        %v2574 = vsel %vm650, %v2318, -1e+30
        %v2575 = vsel %vm651, %v2319, -1e+30
        %v2576 = vsel %vm652, %v2320, -1e+30
        %v2577 = vsel %vm653, %v2321, -1e+30
        %v2578 = vsel %vm654, %v2322, -1e+30
        %v2579 = vsel %vm655, %v2323, -1e+30
        %v2580 = vsel %vm656, %v2324, -1e+30
        %v2581 = vsel %vm657, %v2325, -1e+30
        %v2582 = vsel %vm658, %v2326, -1e+30
        %v2583 = vsel %vm659, %v2327, -1e+30
        %v2584 = vsel %vm660, %v2328, -1e+30
        %v2585 = vsel %vm661, %v2329, -1e+30
        %v2586 = vsel %vm662, %v2330, -1e+30
        %v2587 = vsel %vm663, %v2331, -1e+30
        %v2588 = vsel %vm664, %v2332, -1e+30
        %v2589 = vsel %vm665, %v2333, -1e+30
        %v2590 = vsel %vm666, %v2334, -1e+30
        %v2591 = vsel %vm667, %v2335, -1e+30
        %v2592 = vsel %vm668, %v2336, -1e+30
        %v2593 = vsel %vm669, %v2337, -1e+30
        %v2594 = vsel %vm670, %v2338, -1e+30
        %v2595 = vsel %vm671, %v2339, -1e+30
        %v2596 = vsel %vm672, %v2340, -1e+30
        %v2597 = vsel %vm673, %v2341, -1e+30
        %v2598 = vsel %vm674, %v2342, -1e+30
        %v2599 = vsel %vm675, %v2343, -1e+30
        %v2600 = vsel %vm676, %v2344, -1e+30
        %v2601 = vsel %vm677, %v2345, -1e+30
        %v2602 = vsel %vm678, %v2346, -1e+30
        %v2603 = vsel %vm679, %v2347, -1e+30
        %v2604 = vsel %vm680, %v2348, -1e+30
        %v2605 = vsel %vm681, %v2349, -1e+30
        %v2606 = vsel %vm682, %v2350, -1e+30
        %v2607 = vsel %vm683, %v2351, -1e+30
        %v2608 = vsel %vm684, %v2352, -1e+30
        %v2609 = vsel %vm685, %v2353, -1e+30
        %v2610 = vsel %vm686, %v2354, -1e+30
        %v2611 = vsel %vm687, %v2355, -1e+30
        %v2612 = vsel %vm688, %v2356, -1e+30
        %v2613 = vsel %vm689, %v2357, -1e+30
        %v2614 = vsel %vm690, %v2358, -1e+30
        %v2615 = vsel %vm691, %v2359, -1e+30
        %v2616 = vsel %vm692, %v2360, -1e+30
        %v2617 = vsel %vm693, %v2361, -1e+30
        %v2618 = vsel %vm694, %v2362, -1e+30
        %v2619 = vsel %vm695, %v2363, -1e+30
        %v2620 = vsel %vm696, %v2364, -1e+30
        %v2621 = vsel %vm697, %v2365, -1e+30
        %v2622 = vsel %vm698, %v2366, -1e+30
        %v2623 = vsel %vm699, %v2367, -1e+30
        %v2624 = vsel %vm700, %v2368, -1e+30
        %v2625 = vsel %vm701, %v2369, -1e+30
        %v2626 = vsel %vm702, %v2370, -1e+30
        %v2627 = vsel %vm703, %v2371, -1e+30
        %v2628 = vsel %vm704, %v2372, -1e+30
        %v2629 = vsel %vm705, %v2373, -1e+30
        %v2630 = vsel %vm706, %v2374, -1e+30
        %v2631 = vsel %vm707, %v2375, -1e+30
        %v2632 = vsel %vm708, %v2376, -1e+30
        %v2633 = vsel %vm709, %v2377, -1e+30
        %v2634 = vsel %vm710, %v2378, -1e+30
        %v2635 = vsel %vm711, %v2379, -1e+30
        %v2636 = vsel %vm712, %v2380, -1e+30
        %v2637 = vsel %vm713, %v2381, -1e+30
        %v2638 = vsel %vm714, %v2382, -1e+30
        %v2639 = vsel %vm715, %v2383, -1e+30
        %v2640 = vsel %vm716, %v2384, -1e+30
        %v2641 = vsel %vm717, %v2385, -1e+30
        %v2642 = vsel %vm718, %v2386, -1e+30
        %v2643 = vsel %vm719, %v2387, -1e+30
        %v2644 = vsel %vm720, %v2388, -1e+30
        %v2645 = vld [vmem:[#allocation2] sm:$0xff]
        %v2646 = vld [vmem:[#allocation2 + $0x8] sm:$0xff]
        %v2647 = vld [vmem:[#allocation2 + $0x10] sm:$0xff]
        %v2648 = vld [vmem:[#allocation2 + $0x18] sm:$0xff]
        %v2649 = vld [vmem:[#allocation2 + $0x20] sm:$0xff]
        %v2650 = vld [vmem:[#allocation2 + $0x28] sm:$0xff]
        %v2651 = vld [vmem:[#allocation2 + $0x30] sm:$0xff]
        %v2652 = vld [vmem:[#allocation2 + $0x38] sm:$0xff]
        %v2653 = vld [vmem:[#allocation2 + $0x40] sm:$0xff]
        %v2654 = vld [vmem:[#allocation2 + $0x48] sm:$0xff]
        %v2655 = vld [vmem:[#allocation2 + $0x50] sm:$0xff]
        %v2656 = vld [vmem:[#allocation2 + $0x58] sm:$0xff]
        %v2657 = vld [vmem:[#allocation2 + $0x60] sm:$0xff]
        %v2658 = vld [vmem:[#allocation2 + $0x68] sm:$0xff]
        %v2659 = vld [vmem:[#allocation2 + $0x70] sm:$0xff]
        %v2660 = vld [vmem:[#allocation2 + $0x78] sm:$0xff]
        %v2661 = vld [vmem:[#allocation2 + $0x80] sm:$0xff]
        %v2662 = vld [vmem:[#allocation2 + $0x88] sm:$0xff]
        %v2663 = vld [vmem:[#allocation2 + $0x90] sm:$0xff]
        %v2664 = vld [vmem:[#allocation2 + $0x98] sm:$0xff]
        %v2665 = vld [vmem:[#allocation2 + $0xa0] sm:$0xff]
        %v2666 = vld [vmem:[#allocation2 + $0xa8] sm:$0xff]
        %v2667 = vld [vmem:[#allocation2 + $0xb0] sm:$0xff]
        %v2668 = vld [vmem:[#allocation2 + $0xb8] sm:$0xff]
        %v2669 = vld [vmem:[#allocation2 + $0xc0] sm:$0xff]
        %v2670 = vld [vmem:[#allocation2 + $0xc8] sm:$0xff]
        %v2671 = vld [vmem:[#allocation2 + $0xd0] sm:$0xff]
        %v2672 = vld [vmem:[#allocation2 + $0xd8] sm:$0xff]
        %v2673 = vld [vmem:[#allocation2 + $0xe0] sm:$0xff]
        %v2674 = vld [vmem:[#allocation2 + $0xe8] sm:$0xff]
        %v2675 = vld [vmem:[#allocation2 + $0xf0] sm:$0xff]
        %v2676 = vld [vmem:[#allocation2 + $0xf8] sm:$0xff]
        %v2677 = vmax.f32 %v2389, %v2390
        %v2678 = vmax.f32 %v2677, %v2391
        %v2679 = vmax.f32 %v2678, %v2392
        %v2680 = vmax.f32 %v2679, %v2393
        %v2681 = vmax.f32 %v2680, %v2394
        %v2682 = vmax.f32 %v2681, %v2395
        %v2683 = vmax.f32 %v2682, %v2396
        %2684 = vmax.xlane.f32.xlu0 %v2683
        %v2685 = vpop.xlane.xlu0 %2684
        %v2686 = vmax.f32 %v2397, %v2398
        %v2687 = vmax.f32 %v2686, %v2399
        %v2688 = vmax.f32 %v2687, %v2400
        %v2689 = vmax.f32 %v2688, %v2401
        %v2690 = vmax.f32 %v2689, %v2402
        %v2691 = vmax.f32 %v2690, %v2403
        %v2692 = vmax.f32 %v2691, %v2404
        %2693 = vmax.xlane.f32.xlu0 %v2692
        %v2694 = vpop.xlane.xlu0 %2693
        %v2695 = vmax.f32 %v2405, %v2406
        %v2696 = vmax.f32 %v2695, %v2407
        %v2697 = vmax.f32 %v2696, %v2408
        %v2698 = vmax.f32 %v2697, %v2409
        %v2699 = vmax.f32 %v2698, %v2410
        %v2700 = vmax.f32 %v2699, %v2411
        %v2701 = vmax.f32 %v2700, %v2412
        %2702 = vmax.xlane.f32.xlu0 %v2701
        %v2703 = vpop.xlane.xlu0 %2702
        %v2704 = vmax.f32 %v2413, %v2414
        %v2705 = vmax.f32 %v2704, %v2415
        %v2706 = vmax.f32 %v2705, %v2416
        %v2707 = vmax.f32 %v2706, %v2417
        %v2708 = vmax.f32 %v2707, %v2418
        %v2709 = vmax.f32 %v2708, %v2419
        %v2710 = vmax.f32 %v2709, %v2420
        %2711 = vmax.xlane.f32.xlu0 %v2710
        %v2712 = vpop.xlane.xlu0 %2711
        %v2713 = vmax.f32 %v2421, %v2422
        %v2714 = vmax.f32 %v2713, %v2423
        %v2715 = vmax.f32 %v2714, %v2424
        %v2716 = vmax.f32 %v2715, %v2425
        %v2717 = vmax.f32 %v2716, %v2426
        %v2718 = vmax.f32 %v2717, %v2427
        %v2719 = vmax.f32 %v2718, %v2428
        %2720 = vmax.xlane.f32.xlu0 %v2719
        %v2721 = vpop.xlane.xlu0 %2720
        %v2722 = vmax.f32 %v2429, %v2430
        %v2723 = vmax.f32 %v2722, %v2431
        %v2724 = vmax.f32 %v2723, %v2432
        %v2725 = vmax.f32 %v2724, %v2433
        %v2726 = vmax.f32 %v2725, %v2434
        %v2727 = vmax.f32 %v2726, %v2435
        %v2728 = vmax.f32 %v2727, %v2436
        %2729 = vmax.xlane.f32.xlu0 %v2728
        %v2730 = vpop.xlane.xlu0 %2729
        %v2731 = vmax.f32 %v2437, %v2438
        %v2732 = vmax.f32 %v2731, %v2439
        %v2733 = vmax.f32 %v2732, %v2440
        %v2734 = vmax.f32 %v2733, %v2441
        %v2735 = vmax.f32 %v2734, %v2442
        %v2736 = vmax.f32 %v2735, %v2443
        %v2737 = vmax.f32 %v2736, %v2444
        %2738 = vmax.xlane.f32.xlu0 %v2737
        %v2739 = vpop.xlane.xlu0 %2738
        %v2740 = vmax.f32 %v2445, %v2446
        %v2741 = vmax.f32 %v2740, %v2447
        %v2742 = vmax.f32 %v2741, %v2448
        %v2743 = vmax.f32 %v2742, %v2449
        %v2744 = vmax.f32 %v2743, %v2450
        %v2745 = vmax.f32 %v2744, %v2451
        %v2746 = vmax.f32 %v2745, %v2452
        %2747 = vmax.xlane.f32.xlu0 %v2746
        %v2748 = vpop.xlane.xlu0 %2747
        %v2749 = vmax.f32 %v2453, %v2454
        %v2750 = vmax.f32 %v2749, %v2455
        %v2751 = vmax.f32 %v2750, %v2456
        %v2752 = vmax.f32 %v2751, %v2457
        %v2753 = vmax.f32 %v2752, %v2458
        %v2754 = vmax.f32 %v2753, %v2459
        %v2755 = vmax.f32 %v2754, %v2460
        %2756 = vmax.xlane.f32.xlu0 %v2755
        %v2757 = vpop.xlane.xlu0 %2756
        %v2758 = vmax.f32 %v2461, %v2462
        %v2759 = vmax.f32 %v2758, %v2463
        %v2760 = vmax.f32 %v2759, %v2464
        %v2761 = vmax.f32 %v2760, %v2465
        %v2762 = vmax.f32 %v2761, %v2466
        %v2763 = vmax.f32 %v2762, %v2467
        %v2764 = vmax.f32 %v2763, %v2468
        %2765 = vmax.xlane.f32.xlu0 %v2764
        %v2766 = vpop.xlane.xlu0 %2765
        %v2767 = vmax.f32 %v2469, %v2470
        %v2768 = vmax.f32 %v2767, %v2471
        %v2769 = vmax.f32 %v2768, %v2472
        %v2770 = vmax.f32 %v2769, %v2473
        %v2771 = vmax.f32 %v2770, %v2474
        %v2772 = vmax.f32 %v2771, %v2475
        %v2773 = vmax.f32 %v2772, %v2476
        %2774 = vmax.xlane.f32.xlu0 %v2773
        %v2775 = vpop.xlane.xlu0 %2774
        %v2776 = vmax.f32 %v2477, %v2478
        %v2777 = vmax.f32 %v2776, %v2479
        %v2778 = vmax.f32 %v2777, %v2480
        %v2779 = vmax.f32 %v2778, %v2481
        %v2780 = vmax.f32 %v2779, %v2482
        %v2781 = vmax.f32 %v2780, %v2483
        %v2782 = vmax.f32 %v2781, %v2484
        %2783 = vmax.xlane.f32.xlu0 %v2782
        %v2784 = vpop.xlane.xlu0 %2783
        %v2785 = vmax.f32 %v2485, %v2486
        %v2786 = vmax.f32 %v2785, %v2487
        %v2787 = vmax.f32 %v2786, %v2488
        %v2788 = vmax.f32 %v2787, %v2489
        %v2789 = vmax.f32 %v2788, %v2490
        %v2790 = vmax.f32 %v2789, %v2491
        %v2791 = vmax.f32 %v2790, %v2492
        %2792 = vmax.xlane.f32.xlu0 %v2791
        %v2793 = vpop.xlane.xlu0 %2792
        %v2794 = vmax.f32 %v2493, %v2494
        %v2795 = vmax.f32 %v2794, %v2495
        %v2796 = vmax.f32 %v2795, %v2496
        %v2797 = vmax.f32 %v2796, %v2497
        %v2798 = vmax.f32 %v2797, %v2498
        %v2799 = vmax.f32 %v2798, %v2499
        %v2800 = vmax.f32 %v2799, %v2500
        %2801 = vmax.xlane.f32.xlu0 %v2800
        %v2802 = vpop.xlane.xlu0 %2801
        %v2803 = vmax.f32 %v2501, %v2502
        %v2804 = vmax.f32 %v2803, %v2503
        %v2805 = vmax.f32 %v2804, %v2504
        %v2806 = vmax.f32 %v2805, %v2505
        %v2807 = vmax.f32 %v2806, %v2506
        %v2808 = vmax.f32 %v2807, %v2507
        %v2809 = vmax.f32 %v2808, %v2508
        %2810 = vmax.xlane.f32.xlu0 %v2809
        %v2811 = vpop.xlane.xlu0 %2810
        %v2812 = vmax.f32 %v2509, %v2510
        %v2813 = vmax.f32 %v2812, %v2511
        %v2814 = vmax.f32 %v2813, %v2512
        %v2815 = vmax.f32 %v2814, %v2513
        %v2816 = vmax.f32 %v2815, %v2514
        %v2817 = vmax.f32 %v2816, %v2515
        %v2818 = vmax.f32 %v2817, %v2516
        %2819 = vmax.xlane.f32.xlu0 %v2818
        %v2820 = vpop.xlane.xlu0 %2819
        %v2821 = vmax.f32 %v2517, %v2518
        %v2822 = vmax.f32 %v2821, %v2519
        %v2823 = vmax.f32 %v2822, %v2520
        %v2824 = vmax.f32 %v2823, %v2521
        %v2825 = vmax.f32 %v2824, %v2522
        %v2826 = vmax.f32 %v2825, %v2523
        %v2827 = vmax.f32 %v2826, %v2524
        %2828 = vmax.xlane.f32.xlu0 %v2827
        %v2829 = vpop.xlane.xlu0 %2828
        %v2830 = vmax.f32 %v2525, %v2526
        %v2831 = vmax.f32 %v2830, %v2527
        %v2832 = vmax.f32 %v2831, %v2528
        %v2833 = vmax.f32 %v2832, %v2529
        %v2834 = vmax.f32 %v2833, %v2530
        %v2835 = vmax.f32 %v2834, %v2531
        %v2836 = vmax.f32 %v2835, %v2532
        %2837 = vmax.xlane.f32.xlu0 %v2836
        %v2838 = vpop.xlane.xlu0 %2837
        %v2839 = vmax.f32 %v2533, %v2534
        %v2840 = vmax.f32 %v2839, %v2535
        %v2841 = vmax.f32 %v2840, %v2536
        %v2842 = vmax.f32 %v2841, %v2537
        %v2843 = vmax.f32 %v2842, %v2538
        %v2844 = vmax.f32 %v2843, %v2539
        %v2845 = vmax.f32 %v2844, %v2540
        %2846 = vmax.xlane.f32.xlu0 %v2845
        %v2847 = vpop.xlane.xlu0 %2846
        %v2848 = vmax.f32 %v2541, %v2542
        %v2849 = vmax.f32 %v2848, %v2543
        %v2850 = vmax.f32 %v2849, %v2544
        %v2851 = vmax.f32 %v2850, %v2545
        %v2852 = vmax.f32 %v2851, %v2546
        %v2853 = vmax.f32 %v2852, %v2547
        %v2854 = vmax.f32 %v2853, %v2548
        %2855 = vmax.xlane.f32.xlu0 %v2854
        %v2856 = vpop.xlane.xlu0 %2855
        %v2857 = vmax.f32 %v2549, %v2550
        %v2858 = vmax.f32 %v2857, %v2551
        %v2859 = vmax.f32 %v2858, %v2552
        %v2860 = vmax.f32 %v2859, %v2553
        %v2861 = vmax.f32 %v2860, %v2554
        %v2862 = vmax.f32 %v2861, %v2555
        %v2863 = vmax.f32 %v2862, %v2556
        %2864 = vmax.xlane.f32.xlu0 %v2863
        %v2865 = vpop.xlane.xlu0 %2864
        %v2866 = vmax.f32 %v2557, %v2558
        %v2867 = vmax.f32 %v2866, %v2559
        %v2868 = vmax.f32 %v2867, %v2560
        %v2869 = vmax.f32 %v2868, %v2561
        %v2870 = vmax.f32 %v2869, %v2562
        %v2871 = vmax.f32 %v2870, %v2563
        %v2872 = vmax.f32 %v2871, %v2564
        %2873 = vmax.xlane.f32.xlu0 %v2872
        %v2874 = vpop.xlane.xlu0 %2873
        %v2875 = vmax.f32 %v2565, %v2566
        %v2876 = vmax.f32 %v2875, %v2567
        %v2877 = vmax.f32 %v2876, %v2568
        %v2878 = vmax.f32 %v2877, %v2569
        %v2879 = vmax.f32 %v2878, %v2570
        %v2880 = vmax.f32 %v2879, %v2571
        %v2881 = vmax.f32 %v2880, %v2572
        %2882 = vmax.xlane.f32.xlu0 %v2881
        %v2883 = vpop.xlane.xlu0 %2882
        %v2884 = vmax.f32 %v2573, %v2574
        %v2885 = vmax.f32 %v2884, %v2575
        %v2886 = vmax.f32 %v2885, %v2576
        %v2887 = vmax.f32 %v2886, %v2577
        %v2888 = vmax.f32 %v2887, %v2578
        %v2889 = vmax.f32 %v2888, %v2579
        %v2890 = vmax.f32 %v2889, %v2580
        %2891 = vmax.xlane.f32.xlu0 %v2890
        %v2892 = vpop.xlane.xlu0 %2891
        %v2893 = vmax.f32 %v2581, %v2582
        %v2894 = vmax.f32 %v2893, %v2583
        %v2895 = vmax.f32 %v2894, %v2584
        %v2896 = vmax.f32 %v2895, %v2585
        %v2897 = vmax.f32 %v2896, %v2586
        %v2898 = vmax.f32 %v2897, %v2587
        %v2899 = vmax.f32 %v2898, %v2588
        %2900 = vmax.xlane.f32.xlu0 %v2899
        %v2901 = vpop.xlane.xlu0 %2900
        %v2902 = vmax.f32 %v2589, %v2590
        %v2903 = vmax.f32 %v2902, %v2591
        %v2904 = vmax.f32 %v2903, %v2592
        %v2905 = vmax.f32 %v2904, %v2593
        %v2906 = vmax.f32 %v2905, %v2594
        %v2907 = vmax.f32 %v2906, %v2595
        %v2908 = vmax.f32 %v2907, %v2596
        %2909 = vmax.xlane.f32.xlu0 %v2908
        %v2910 = vpop.xlane.xlu0 %2909
        %v2911 = vmax.f32 %v2597, %v2598
        %v2912 = vmax.f32 %v2911, %v2599
        %v2913 = vmax.f32 %v2912, %v2600
        %v2914 = vmax.f32 %v2913, %v2601
        %v2915 = vmax.f32 %v2914, %v2602
        %v2916 = vmax.f32 %v2915, %v2603
        %v2917 = vmax.f32 %v2916, %v2604
        %2918 = vmax.xlane.f32.xlu0 %v2917
        %v2919 = vpop.xlane.xlu0 %2918
        %v2920 = vmax.f32 %v2605, %v2606
        %v2921 = vmax.f32 %v2920, %v2607
        %v2922 = vmax.f32 %v2921, %v2608
        %v2923 = vmax.f32 %v2922, %v2609
        %v2924 = vmax.f32 %v2923, %v2610
        %v2925 = vmax.f32 %v2924, %v2611
        %v2926 = vmax.f32 %v2925, %v2612
        %2927 = vmax.xlane.f32.xlu0 %v2926
        %v2928 = vpop.xlane.xlu0 %2927
        %v2929 = vmax.f32 %v2613, %v2614
        %v2930 = vmax.f32 %v2929, %v2615
        %v2931 = vmax.f32 %v2930, %v2616
        %v2932 = vmax.f32 %v2931, %v2617
        %v2933 = vmax.f32 %v2932, %v2618
        %v2934 = vmax.f32 %v2933, %v2619
        %v2935 = vmax.f32 %v2934, %v2620
        %2936 = vmax.xlane.f32.xlu0 %v2935
        %v2937 = vpop.xlane.xlu0 %2936
        %v2938 = vmax.f32 %v2621, %v2622
        %v2939 = vmax.f32 %v2938, %v2623
        %v2940 = vmax.f32 %v2939, %v2624
        %v2941 = vmax.f32 %v2940, %v2625
        %v2942 = vmax.f32 %v2941, %v2626
        %v2943 = vmax.f32 %v2942, %v2627
        %v2944 = vmax.f32 %v2943, %v2628
        %2945 = vmax.xlane.f32.xlu0 %v2944
        %v2946 = vpop.xlane.xlu0 %2945
        %v2947 = vmax.f32 %v2629, %v2630
        %v2948 = vmax.f32 %v2947, %v2631
        %v2949 = vmax.f32 %v2948, %v2632
        %v2950 = vmax.f32 %v2949, %v2633
        %v2951 = vmax.f32 %v2950, %v2634
        %v2952 = vmax.f32 %v2951, %v2635
        %v2953 = vmax.f32 %v2952, %v2636
        %2954 = vmax.xlane.f32.xlu0 %v2953
        %v2955 = vpop.xlane.xlu0 %2954
        %v2956 = vmax.f32 %v2637, %v2638
        %v2957 = vmax.f32 %v2956, %v2639
        %v2958 = vmax.f32 %v2957, %v2640
        %v2959 = vmax.f32 %v2958, %v2641
        %v2960 = vmax.f32 %v2959, %v2642
        %v2961 = vmax.f32 %v2960, %v2643
        %v2962 = vmax.f32 %v2961, %v2644
        %2963 = vmax.xlane.f32.xlu0 %v2962
        %v2964 = vpop.xlane.xlu0 %2963
        %v2965 = vmax.f32 %v2645, %v2685
        %v2966 = vmax.f32 %v2646, %v2694
        %v2967 = vmax.f32 %v2647, %v2703
        %v2968 = vmax.f32 %v2648, %v2712
        %v2969 = vmax.f32 %v2649, %v2721
        %v2970 = vmax.f32 %v2650, %v2730
        %v2971 = vmax.f32 %v2651, %v2739
        %v2972 = vmax.f32 %v2652, %v2748
        %v2973 = vmax.f32 %v2653, %v2757
        %v2974 = vmax.f32 %v2654, %v2766
        %v2975 = vmax.f32 %v2655, %v2775
        %v2976 = vmax.f32 %v2656, %v2784
        %v2977 = vmax.f32 %v2657, %v2793
        %v2978 = vmax.f32 %v2658, %v2802
        %v2979 = vmax.f32 %v2659, %v2811
        %v2980 = vmax.f32 %v2660, %v2820
        %v2981 = vmax.f32 %v2661, %v2829
        %v2982 = vmax.f32 %v2662, %v2838
        %v2983 = vmax.f32 %v2663, %v2847
        %v2984 = vmax.f32 %v2664, %v2856
        %v2985 = vmax.f32 %v2665, %v2865
        %v2986 = vmax.f32 %v2666, %v2874
        %v2987 = vmax.f32 %v2667, %v2883
        %v2988 = vmax.f32 %v2668, %v2892
        %v2989 = vmax.f32 %v2669, %v2901
        %v2990 = vmax.f32 %v2670, %v2910
        %v2991 = vmax.f32 %v2671, %v2919
        %v2992 = vmax.f32 %v2672, %v2928
        %v2993 = vmax.f32 %v2673, %v2937
        %v2994 = vmax.f32 %v2674, %v2946
        %v2995 = vmax.f32 %v2675, %v2955
        %v2996 = vmax.f32 %v2676, %v2964
        %v2997 = vsub.f32 %v2645, %v2965
        %v2998 = vsub.f32 %v2646, %v2966
        %v2999 = vsub.f32 %v2647, %v2967
        %v3000 = vsub.f32 %v2648, %v2968
        %v3001 = vsub.f32 %v2649, %v2969
        %v3002 = vsub.f32 %v2650, %v2970
        %v3003 = vsub.f32 %v2651, %v2971
        %v3004 = vsub.f32 %v2652, %v2972
        %v3005 = vsub.f32 %v2653, %v2973
        %v3006 = vsub.f32 %v2654, %v2974
        %v3007 = vsub.f32 %v2655, %v2975
        %v3008 = vsub.f32 %v2656, %v2976
        %v3009 = vsub.f32 %v2657, %v2977
        %v3010 = vsub.f32 %v2658, %v2978
        %v3011 = vsub.f32 %v2659, %v2979
        %v3012 = vsub.f32 %v2660, %v2980
        %v3013 = vsub.f32 %v2661, %v2981
        %v3014 = vsub.f32 %v2662, %v2982
        %v3015 = vsub.f32 %v2663, %v2983
        %v3016 = vsub.f32 %v2664, %v2984
        %v3017 = vsub.f32 %v2665, %v2985
        %v3018 = vsub.f32 %v2666, %v2986
        %v3019 = vsub.f32 %v2667, %v2987
        %v3020 = vsub.f32 %v2668, %v2988
        %v3021 = vsub.f32 %v2669, %v2989
        %v3022 = vsub.f32 %v2670, %v2990
        %v3023 = vsub.f32 %v2671, %v2991
        %v3024 = vsub.f32 %v2672, %v2992
        %v3025 = vsub.f32 %v2673, %v2993
        %v3026 = vsub.f32 %v2674, %v2994
        %v3027 = vsub.f32 %v2675, %v2995
        %v3028 = vsub.f32 %v2676, %v2996
        %v3029 = vmul.f32 %v2997, 1.442695
        %v3030 = vpow.pop %v3029
        %v3031 = vmul.f32 %v2998, 1.442695
        %v3032 = vpow.pop %v3031
        %v3033 = vmul.f32 %v2999, 1.442695
        %v3034 = vpow.pop %v3033
        %v3035 = vmul.f32 %v3000, 1.442695
        %v3036 = vpow.pop %v3035
        %v3037 = vmul.f32 %v3001, 1.442695
        %v3038 = vpow.pop %v3037
        %v3039 = vmul.f32 %v3002, 1.442695
        %v3040 = vpow.pop %v3039
        %v3041 = vmul.f32 %v3003, 1.442695
        %v3042 = vpow.pop %v3041
        %v3043 = vmul.f32 %v3004, 1.442695
        %v3044 = vpow.pop %v3043
        %v3045 = vmul.f32 %v3005, 1.442695
        %v3046 = vpow.pop %v3045
        %v3047 = vmul.f32 %v3006, 1.442695
        %v3048 = vpow.pop %v3047
        %v3049 = vmul.f32 %v3007, 1.442695
        %v3050 = vpow.pop %v3049
        %v3051 = vmul.f32 %v3008, 1.442695
        %v3052 = vpow.pop %v3051
        %v3053 = vmul.f32 %v3009, 1.442695
        %v3054 = vpow.pop %v3053
        %v3055 = vmul.f32 %v3010, 1.442695
        %v3056 = vpow.pop %v3055
        %v3057 = vmul.f32 %v3011, 1.442695
        %v3058 = vpow.pop %v3057
        %v3059 = vmul.f32 %v3012, 1.442695
        %v3060 = vpow.pop %v3059
        %v3061 = vmul.f32 %v3013, 1.442695
        %v3062 = vpow.pop %v3061
        %v3063 = vmul.f32 %v3014, 1.442695
        %v3064 = vpow.pop %v3063
        %v3065 = vmul.f32 %v3015, 1.442695
        %v3066 = vpow.pop %v3065
        %v3067 = vmul.f32 %v3016, 1.442695
        %v3068 = vpow.pop %v3067
        %v3069 = vmul.f32 %v3017, 1.442695
        %v3070 = vpow.pop %v3069
        %v3071 = vmul.f32 %v3018, 1.442695
        %v3072 = vpow.pop %v3071
        %v3073 = vmul.f32 %v3019, 1.442695
        %v3074 = vpow.pop %v3073
        %v3075 = vmul.f32 %v3020, 1.442695
        %v3076 = vpow.pop %v3075
        %v3077 = vmul.f32 %v3021, 1.442695
        %v3078 = vpow.pop %v3077
        %v3079 = vmul.f32 %v3022, 1.442695
        %v3080 = vpow.pop %v3079
        %v3081 = vmul.f32 %v3023, 1.442695
        %v3082 = vpow.pop %v3081
        %v3083 = vmul.f32 %v3024, 1.442695
        %v3084 = vpow.pop %v3083
        %v3085 = vmul.f32 %v3025, 1.442695
        %v3086 = vpow.pop %v3085
        %v3087 = vmul.f32 %v3026, 1.442695
        %v3088 = vpow.pop %v3087
        %v3089 = vmul.f32 %v3027, 1.442695
        %v3090 = vpow.pop %v3089
        %v3091 = vmul.f32 %v3028, 1.442695
        %v3092 = vpow.pop %v3091
        %3094 = vset.pattern.permute.xlu0 0
        %3095 = vperm.xlu0 %3094, %v2965
        %v3096 = vpop.permute.xlu0 %3095
        %3099 = vset.pattern.permute.xlu0 0
        %3100 = vperm.xlu0 %3099, %v2966
        %v3101 = vpop.permute.xlu0 %3100
        %3104 = vset.pattern.permute.xlu0 0
        %3105 = vperm.xlu0 %3104, %v2967
        %v3106 = vpop.permute.xlu0 %3105
        %3109 = vset.pattern.permute.xlu0 0
        %3110 = vperm.xlu0 %3109, %v2968
        %v3111 = vpop.permute.xlu0 %3110
        %3114 = vset.pattern.permute.xlu0 0
        %3115 = vperm.xlu0 %3114, %v2969
        %v3116 = vpop.permute.xlu0 %3115
        %3119 = vset.pattern.permute.xlu0 0
        %3120 = vperm.xlu0 %3119, %v2970
        %v3121 = vpop.permute.xlu0 %3120
        %3124 = vset.pattern.permute.xlu0 0
        %3125 = vperm.xlu0 %3124, %v2971
        %v3126 = vpop.permute.xlu0 %3125
        %3129 = vset.pattern.permute.xlu0 0
        %3130 = vperm.xlu0 %3129, %v2972
        %v3131 = vpop.permute.xlu0 %3130
        %3134 = vset.pattern.permute.xlu0 0
        %3135 = vperm.xlu0 %3134, %v2973
        %v3136 = vpop.permute.xlu0 %3135
        %3139 = vset.pattern.permute.xlu0 0
        %3140 = vperm.xlu0 %3139, %v2974
        %v3141 = vpop.permute.xlu0 %3140
        %3144 = vset.pattern.permute.xlu0 0
        %3145 = vperm.xlu0 %3144, %v2975
        %v3146 = vpop.permute.xlu0 %3145
        %3149 = vset.pattern.permute.xlu0 0
        %3150 = vperm.xlu0 %3149, %v2976
        %v3151 = vpop.permute.xlu0 %3150
        %3154 = vset.pattern.permute.xlu0 0
        %3155 = vperm.xlu0 %3154, %v2977
        %v3156 = vpop.permute.xlu0 %3155
        %3159 = vset.pattern.permute.xlu0 0
        %3160 = vperm.xlu0 %3159, %v2978
        %v3161 = vpop.permute.xlu0 %3160
        %3164 = vset.pattern.permute.xlu0 0
        %3165 = vperm.xlu0 %3164, %v2979
        %v3166 = vpop.permute.xlu0 %3165
        %3169 = vset.pattern.permute.xlu0 0
        %3170 = vperm.xlu0 %3169, %v2980
        %v3171 = vpop.permute.xlu0 %3170
        %3174 = vset.pattern.permute.xlu0 0
        %3175 = vperm.xlu0 %3174, %v2981
        %v3176 = vpop.permute.xlu0 %3175
        %3179 = vset.pattern.permute.xlu0 0
        %3180 = vperm.xlu0 %3179, %v2982
        %v3181 = vpop.permute.xlu0 %3180
        %3184 = vset.pattern.permute.xlu0 0
        %3185 = vperm.xlu0 %3184, %v2983
        %v3186 = vpop.permute.xlu0 %3185
        %3189 = vset.pattern.permute.xlu0 0
        %3190 = vperm.xlu0 %3189, %v2984
        %v3191 = vpop.permute.xlu0 %3190
        %3194 = vset.pattern.permute.xlu0 0
        %3195 = vperm.xlu0 %3194, %v2985
        %v3196 = vpop.permute.xlu0 %3195
        %3199 = vset.pattern.permute.xlu0 0
        %3200 = vperm.xlu0 %3199, %v2986
        %v3201 = vpop.permute.xlu0 %3200
        %3204 = vset.pattern.permute.xlu0 0
        %3205 = vperm.xlu0 %3204, %v2987
        %v3206 = vpop.permute.xlu0 %3205
        %3209 = vset.pattern.permute.xlu0 0
        %3210 = vperm.xlu0 %3209, %v2988
        %v3211 = vpop.permute.xlu0 %3210
        %3214 = vset.pattern.permute.xlu0 0
        %3215 = vperm.xlu0 %3214, %v2989
        %v3216 = vpop.permute.xlu0 %3215
        %3219 = vset.pattern.permute.xlu0 0
        %3220 = vperm.xlu0 %3219, %v2990
        %v3221 = vpop.permute.xlu0 %3220
        %3224 = vset.pattern.permute.xlu0 0
        %3225 = vperm.xlu0 %3224, %v2991
        %v3226 = vpop.permute.xlu0 %3225
        %3229 = vset.pattern.permute.xlu0 0
        %3230 = vperm.xlu0 %3229, %v2992
        %v3231 = vpop.permute.xlu0 %3230
        %3234 = vset.pattern.permute.xlu0 0
        %3235 = vperm.xlu0 %3234, %v2993
        %v3236 = vpop.permute.xlu0 %3235
        %3239 = vset.pattern.permute.xlu0 0
        %3240 = vperm.xlu0 %3239, %v2994
        %v3241 = vpop.permute.xlu0 %3240
        %3244 = vset.pattern.permute.xlu0 0
        %3245 = vperm.xlu0 %3244, %v2995
        %v3246 = vpop.permute.xlu0 %3245
        %3249 = vset.pattern.permute.xlu0 0
        %3250 = vperm.xlu0 %3249, %v2996
        %v3251 = vpop.permute.xlu0 %3250
        %v3253 = vsub.f32 %v2389, %v3096
        %v3254 = vsub.f32 %v2390, %v3096
        %v3255 = vsub.f32 %v2391, %v3096
        %v3256 = vsub.f32 %v2392, %v3096
        %v3257 = vsub.f32 %v2393, %v3096
        %v3258 = vsub.f32 %v2394, %v3096
        %v3259 = vsub.f32 %v2395, %v3096
        %v3260 = vsub.f32 %v2396, %v3096
        %v3261 = vsub.f32 %v2397, %v3101
        %v3262 = vsub.f32 %v2398, %v3101
        %v3263 = vsub.f32 %v2399, %v3101
        %v3264 = vsub.f32 %v2400, %v3101
        %v3265 = vsub.f32 %v2401, %v3101
        %v3266 = vsub.f32 %v2402, %v3101
        %v3267 = vsub.f32 %v2403, %v3101
        %v3268 = vsub.f32 %v2404, %v3101
        %v3269 = vsub.f32 %v2405, %v3106
        %v3270 = vsub.f32 %v2406, %v3106
        %v3271 = vsub.f32 %v2407, %v3106
        %v3272 = vsub.f32 %v2408, %v3106
        %v3273 = vsub.f32 %v2409, %v3106
        %v3274 = vsub.f32 %v2410, %v3106
        %v3275 = vsub.f32 %v2411, %v3106
        %v3276 = vsub.f32 %v2412, %v3106
        %v3277 = vsub.f32 %v2413, %v3111
        %v3278 = vsub.f32 %v2414, %v3111
        %v3279 = vsub.f32 %v2415, %v3111
        %v3280 = vsub.f32 %v2416, %v3111
        %v3281 = vsub.f32 %v2417, %v3111
        %v3282 = vsub.f32 %v2418, %v3111
        %v3283 = vsub.f32 %v2419, %v3111
        %v3284 = vsub.f32 %v2420, %v3111
        %v3285 = vsub.f32 %v2421, %v3116
        %v3286 = vsub.f32 %v2422, %v3116
        %v3287 = vsub.f32 %v2423, %v3116
        %v3288 = vsub.f32 %v2424, %v3116
        %v3289 = vsub.f32 %v2425, %v3116
        %v3290 = vsub.f32 %v2426, %v3116
        %v3291 = vsub.f32 %v2427, %v3116
        %v3292 = vsub.f32 %v2428, %v3116
        %v3293 = vsub.f32 %v2429, %v3121
        %v3294 = vsub.f32 %v2430, %v3121
        %v3295 = vsub.f32 %v2431, %v3121
        %v3296 = vsub.f32 %v2432, %v3121
        %v3297 = vsub.f32 %v2433, %v3121
        %v3298 = vsub.f32 %v2434, %v3121
        %v3299 = vsub.f32 %v2435, %v3121
        %v3300 = vsub.f32 %v2436, %v3121
        %v3301 = vsub.f32 %v2437, %v3126
        %v3302 = vsub.f32 %v2438, %v3126
        %v3303 = vsub.f32 %v2439, %v3126
        %v3304 = vsub.f32 %v2440, %v3126
        %v3305 = vsub.f32 %v2441, %v3126
        %v3306 = vsub.f32 %v2442, %v3126
        %v3307 = vsub.f32 %v2443, %v3126
        %v3308 = vsub.f32 %v2444, %v3126
        %v3309 = vsub.f32 %v2445, %v3131
        %v3310 = vsub.f32 %v2446, %v3131
        %v3311 = vsub.f32 %v2447, %v3131
        %v3312 = vsub.f32 %v2448, %v3131
        %v3313 = vsub.f32 %v2449, %v3131
        %v3314 = vsub.f32 %v2450, %v3131
        %v3315 = vsub.f32 %v2451, %v3131
        %v3316 = vsub.f32 %v2452, %v3131
        %v3317 = vsub.f32 %v2453, %v3136
        %v3318 = vsub.f32 %v2454, %v3136
        %v3319 = vsub.f32 %v2455, %v3136
        %v3320 = vsub.f32 %v2456, %v3136
        %v3321 = vsub.f32 %v2457, %v3136
        %v3322 = vsub.f32 %v2458, %v3136
        %v3323 = vsub.f32 %v2459, %v3136
        %v3324 = vsub.f32 %v2460, %v3136
        %v3325 = vsub.f32 %v2461, %v3141
        %v3326 = vsub.f32 %v2462, %v3141
        %v3327 = vsub.f32 %v2463, %v3141
        %v3328 = vsub.f32 %v2464, %v3141
        %v3329 = vsub.f32 %v2465, %v3141
        %v3330 = vsub.f32 %v2466, %v3141
        %v3331 = vsub.f32 %v2467, %v3141
        %v3332 = vsub.f32 %v2468, %v3141
        %v3333 = vsub.f32 %v2469, %v3146
        %v3334 = vsub.f32 %v2470, %v3146
        %v3335 = vsub.f32 %v2471, %v3146
        %v3336 = vsub.f32 %v2472, %v3146
        %v3337 = vsub.f32 %v2473, %v3146
        %v3338 = vsub.f32 %v2474, %v3146
        %v3339 = vsub.f32 %v2475, %v3146
        %v3340 = vsub.f32 %v2476, %v3146
        %v3341 = vsub.f32 %v2477, %v3151
        %v3342 = vsub.f32 %v2478, %v3151
        %v3343 = vsub.f32 %v2479, %v3151
        %v3344 = vsub.f32 %v2480, %v3151
        %v3345 = vsub.f32 %v2481, %v3151
        %v3346 = vsub.f32 %v2482, %v3151
        %v3347 = vsub.f32 %v2483, %v3151
        %v3348 = vsub.f32 %v2484, %v3151
        %v3349 = vsub.f32 %v2485, %v3156
        %v3350 = vsub.f32 %v2486, %v3156
        %v3351 = vsub.f32 %v2487, %v3156
        %v3352 = vsub.f32 %v2488, %v3156
        %v3353 = vsub.f32 %v2489, %v3156
        %v3354 = vsub.f32 %v2490, %v3156
        %v3355 = vsub.f32 %v2491, %v3156
        %v3356 = vsub.f32 %v2492, %v3156
        %v3357 = vsub.f32 %v2493, %v3161
        %v3358 = vsub.f32 %v2494, %v3161
        %v3359 = vsub.f32 %v2495, %v3161
        %v3360 = vsub.f32 %v2496, %v3161
        %v3361 = vsub.f32 %v2497, %v3161
        %v3362 = vsub.f32 %v2498, %v3161
        %v3363 = vsub.f32 %v2499, %v3161
        %v3364 = vsub.f32 %v2500, %v3161
        %v3365 = vsub.f32 %v2501, %v3166
        %v3366 = vsub.f32 %v2502, %v3166
        %v3367 = vsub.f32 %v2503, %v3166
        %v3368 = vsub.f32 %v2504, %v3166
        %v3369 = vsub.f32 %v2505, %v3166
        %v3370 = vsub.f32 %v2506, %v3166
        %v3371 = vsub.f32 %v2507, %v3166
        %v3372 = vsub.f32 %v2508, %v3166
        %v3373 = vsub.f32 %v2509, %v3171
        %v3374 = vsub.f32 %v2510, %v3171
        %v3375 = vsub.f32 %v2511, %v3171
        %v3376 = vsub.f32 %v2512, %v3171
        %v3377 = vsub.f32 %v2513, %v3171
        %v3378 = vsub.f32 %v2514, %v3171
        %v3379 = vsub.f32 %v2515, %v3171
        %v3380 = vsub.f32 %v2516, %v3171
        %v3381 = vsub.f32 %v2517, %v3176
        %v3382 = vsub.f32 %v2518, %v3176
        %v3383 = vsub.f32 %v2519, %v3176
        %v3384 = vsub.f32 %v2520, %v3176
        %v3385 = vsub.f32 %v2521, %v3176
        %v3386 = vsub.f32 %v2522, %v3176
        %v3387 = vsub.f32 %v2523, %v3176
        %v3388 = vsub.f32 %v2524, %v3176
        %v3389 = vsub.f32 %v2525, %v3181
        %v3390 = vsub.f32 %v2526, %v3181
        %v3391 = vsub.f32 %v2527, %v3181
        %v3392 = vsub.f32 %v2528, %v3181
        %v3393 = vsub.f32 %v2529, %v3181
        %v3394 = vsub.f32 %v2530, %v3181
        %v3395 = vsub.f32 %v2531, %v3181
        %v3396 = vsub.f32 %v2532, %v3181
        %v3397 = vsub.f32 %v2533, %v3186
        %v3398 = vsub.f32 %v2534, %v3186
        %v3399 = vsub.f32 %v2535, %v3186
        %v3400 = vsub.f32 %v2536, %v3186
        %v3401 = vsub.f32 %v2537, %v3186
        %v3402 = vsub.f32 %v2538, %v3186
        %v3403 = vsub.f32 %v2539, %v3186
        %v3404 = vsub.f32 %v2540, %v3186
        %v3405 = vsub.f32 %v2541, %v3191
        %v3406 = vsub.f32 %v2542, %v3191
        %v3407 = vsub.f32 %v2543, %v3191
        %v3408 = vsub.f32 %v2544, %v3191
        %v3409 = vsub.f32 %v2545, %v3191
        %v3410 = vsub.f32 %v2546, %v3191
        %v3411 = vsub.f32 %v2547, %v3191
        %v3412 = vsub.f32 %v2548, %v3191
        %v3413 = vsub.f32 %v2549, %v3196
        %v3414 = vsub.f32 %v2550, %v3196
        %v3415 = vsub.f32 %v2551, %v3196
        %v3416 = vsub.f32 %v2552, %v3196
        %v3417 = vsub.f32 %v2553, %v3196
        %v3418 = vsub.f32 %v2554, %v3196
        %v3419 = vsub.f32 %v2555, %v3196
        %v3420 = vsub.f32 %v2556, %v3196
        %v3421 = vsub.f32 %v2557, %v3201
        %v3422 = vsub.f32 %v2558, %v3201
        %v3423 = vsub.f32 %v2559, %v3201
        %v3424 = vsub.f32 %v2560, %v3201
        %v3425 = vsub.f32 %v2561, %v3201
        %v3426 = vsub.f32 %v2562, %v3201
        %v3427 = vsub.f32 %v2563, %v3201
        %v3428 = vsub.f32 %v2564, %v3201
        %v3429 = vsub.f32 %v2565, %v3206
        %v3430 = vsub.f32 %v2566, %v3206
        %v3431 = vsub.f32 %v2567, %v3206
        %v3432 = vsub.f32 %v2568, %v3206
        %v3433 = vsub.f32 %v2569, %v3206
        %v3434 = vsub.f32 %v2570, %v3206
        %v3435 = vsub.f32 %v2571, %v3206
        %v3436 = vsub.f32 %v2572, %v3206
        %v3437 = vsub.f32 %v2573, %v3211
        %v3438 = vsub.f32 %v2574, %v3211
        %v3439 = vsub.f32 %v2575, %v3211
        %v3440 = vsub.f32 %v2576, %v3211
        %v3441 = vsub.f32 %v2577, %v3211
        %v3442 = vsub.f32 %v2578, %v3211
        %v3443 = vsub.f32 %v2579, %v3211
        %v3444 = vsub.f32 %v2580, %v3211
        %v3445 = vsub.f32 %v2581, %v3216
        %v3446 = vsub.f32 %v2582, %v3216
        %v3447 = vsub.f32 %v2583, %v3216
        %v3448 = vsub.f32 %v2584, %v3216
        %v3449 = vsub.f32 %v2585, %v3216
        %v3450 = vsub.f32 %v2586, %v3216
        %v3451 = vsub.f32 %v2587, %v3216
        %v3452 = vsub.f32 %v2588, %v3216
        %v3453 = vsub.f32 %v2589, %v3221
        %v3454 = vsub.f32 %v2590, %v3221
        %v3455 = vsub.f32 %v2591, %v3221
        %v3456 = vsub.f32 %v2592, %v3221
        %v3457 = vsub.f32 %v2593, %v3221
        %v3458 = vsub.f32 %v2594, %v3221
        %v3459 = vsub.f32 %v2595, %v3221
        %v3460 = vsub.f32 %v2596, %v3221
        %v3461 = vsub.f32 %v2597, %v3226
        %v3462 = vsub.f32 %v2598, %v3226
        %v3463 = vsub.f32 %v2599, %v3226
        %v3464 = vsub.f32 %v2600, %v3226
        %v3465 = vsub.f32 %v2601, %v3226
        %v3466 = vsub.f32 %v2602, %v3226
        %v3467 = vsub.f32 %v2603, %v3226
        %v3468 = vsub.f32 %v2604, %v3226
        %v3469 = vsub.f32 %v2605, %v3231
        %v3470 = vsub.f32 %v2606, %v3231
        %v3471 = vsub.f32 %v2607, %v3231
        %v3472 = vsub.f32 %v2608, %v3231
        %v3473 = vsub.f32 %v2609, %v3231
        %v3474 = vsub.f32 %v2610, %v3231
        %v3475 = vsub.f32 %v2611, %v3231
        %v3476 = vsub.f32 %v2612, %v3231
        %v3477 = vsub.f32 %v2613, %v3236
        %v3478 = vsub.f32 %v2614, %v3236
        %v3479 = vsub.f32 %v2615, %v3236
        %v3480 = vsub.f32 %v2616, %v3236
        %v3481 = vsub.f32 %v2617, %v3236
        %v3482 = vsub.f32 %v2618, %v3236
        %v3483 = vsub.f32 %v2619, %v3236
        %v3484 = vsub.f32 %v2620, %v3236
        %v3485 = vsub.f32 %v2621, %v3241
        %v3486 = vsub.f32 %v2622, %v3241
        %v3487 = vsub.f32 %v2623, %v3241
        %v3488 = vsub.f32 %v2624, %v3241
        %v3489 = vsub.f32 %v2625, %v3241
        %v3490 = vsub.f32 %v2626, %v3241
        %v3491 = vsub.f32 %v2627, %v3241
        %v3492 = vsub.f32 %v2628, %v3241
        %v3493 = vsub.f32 %v2629, %v3246
        %v3494 = vsub.f32 %v2630, %v3246
        %v3495 = vsub.f32 %v2631, %v3246
        %v3496 = vsub.f32 %v2632, %v3246
        %v3497 = vsub.f32 %v2633, %v3246
        %v3498 = vsub.f32 %v2634, %v3246
        %v3499 = vsub.f32 %v2635, %v3246
        %v3500 = vsub.f32 %v2636, %v3246
        %v3501 = vsub.f32 %v2637, %v3251
        %v3502 = vsub.f32 %v2638, %v3251
        %v3503 = vsub.f32 %v2639, %v3251
        %v3504 = vsub.f32 %v2640, %v3251
        %v3505 = vsub.f32 %v2641, %v3251
        %v3506 = vsub.f32 %v2642, %v3251
        %v3507 = vsub.f32 %v2643, %v3251
        %v3508 = vsub.f32 %v2644, %v3251
        %v3509 = vmul.f32 %v3253, 1.442695
        %v3510 = vpow.pop %v3509
        %v3511 = vmul.f32 %v3254, 1.442695
        %v3512 = vpow.pop %v3511
        %v3513 = vmul.f32 %v3255, 1.442695
        %v3514 = vpow.pop %v3513
        %v3515 = vmul.f32 %v3256, 1.442695
        %v3516 = vpow.pop %v3515
        %v3517 = vmul.f32 %v3257, 1.442695
        %v3518 = vpow.pop %v3517
        %v3519 = vmul.f32 %v3258, 1.442695
        %v3520 = vpow.pop %v3519
        %v3521 = vmul.f32 %v3259, 1.442695
        %v3522 = vpow.pop %v3521
        %v3523 = vmul.f32 %v3260, 1.442695
        %v3524 = vpow.pop %v3523
        %v3525 = vmul.f32 %v3261, 1.442695
        %v3526 = vpow.pop %v3525
        %v3527 = vmul.f32 %v3262, 1.442695
        %v3528 = vpow.pop %v3527
        %v3529 = vmul.f32 %v3263, 1.442695
        %v3530 = vpow.pop %v3529
        %v3531 = vmul.f32 %v3264, 1.442695
        %v3532 = vpow.pop %v3531
        %v3533 = vmul.f32 %v3265, 1.442695
        %v3534 = vpow.pop %v3533
        %v3535 = vmul.f32 %v3266, 1.442695
        %v3536 = vpow.pop %v3535
        %v3537 = vmul.f32 %v3267, 1.442695
        %v3538 = vpow.pop %v3537
        %v3539 = vmul.f32 %v3268, 1.442695
        %v3540 = vpow.pop %v3539
        %v3541 = vmul.f32 %v3269, 1.442695
        %v3542 = vpow.pop %v3541
        %v3543 = vmul.f32 %v3270, 1.442695
        %v3544 = vpow.pop %v3543
        %v3545 = vmul.f32 %v3271, 1.442695
        %v3546 = vpow.pop %v3545
        %v3547 = vmul.f32 %v3272, 1.442695
        %v3548 = vpow.pop %v3547
        %v3549 = vmul.f32 %v3273, 1.442695
        %v3550 = vpow.pop %v3549
        %v3551 = vmul.f32 %v3274, 1.442695
        %v3552 = vpow.pop %v3551
        %v3553 = vmul.f32 %v3275, 1.442695
        %v3554 = vpow.pop %v3553
        %v3555 = vmul.f32 %v3276, 1.442695
        %v3556 = vpow.pop %v3555
        %v3557 = vmul.f32 %v3277, 1.442695
        %v3558 = vpow.pop %v3557
        %v3559 = vmul.f32 %v3278, 1.442695
        %v3560 = vpow.pop %v3559
        %v3561 = vmul.f32 %v3279, 1.442695
        %v3562 = vpow.pop %v3561
        %v3563 = vmul.f32 %v3280, 1.442695
        %v3564 = vpow.pop %v3563
        %v3565 = vmul.f32 %v3281, 1.442695
        %v3566 = vpow.pop %v3565
        %v3567 = vmul.f32 %v3282, 1.442695
        %v3568 = vpow.pop %v3567
        %v3569 = vmul.f32 %v3283, 1.442695
        %v3570 = vpow.pop %v3569
        %v3571 = vmul.f32 %v3284, 1.442695
        %v3572 = vpow.pop %v3571
        %v3573 = vmul.f32 %v3285, 1.442695
        %v3574 = vpow.pop %v3573
        %v3575 = vmul.f32 %v3286, 1.442695
        %v3576 = vpow.pop %v3575
        %v3577 = vmul.f32 %v3287, 1.442695
        %v3578 = vpow.pop %v3577
        %v3579 = vmul.f32 %v3288, 1.442695
        %v3580 = vpow.pop %v3579
        %v3581 = vmul.f32 %v3289, 1.442695
        %v3582 = vpow.pop %v3581
        %v3583 = vmul.f32 %v3290, 1.442695
        %v3584 = vpow.pop %v3583
        %v3585 = vmul.f32 %v3291, 1.442695
        %v3586 = vpow.pop %v3585
        %v3587 = vmul.f32 %v3292, 1.442695
        %v3588 = vpow.pop %v3587
        %v3589 = vmul.f32 %v3293, 1.442695
        %v3590 = vpow.pop %v3589
        %v3591 = vmul.f32 %v3294, 1.442695
        %v3592 = vpow.pop %v3591
        %v3593 = vmul.f32 %v3295, 1.442695
        %v3594 = vpow.pop %v3593
        %v3595 = vmul.f32 %v3296, 1.442695
        %v3596 = vpow.pop %v3595
        %v3597 = vmul.f32 %v3297, 1.442695
        %v3598 = vpow.pop %v3597
        %v3599 = vmul.f32 %v3298, 1.442695
        %v3600 = vpow.pop %v3599
        %v3601 = vmul.f32 %v3299, 1.442695
        %v3602 = vpow.pop %v3601
        %v3603 = vmul.f32 %v3300, 1.442695
        %v3604 = vpow.pop %v3603
        %v3605 = vmul.f32 %v3301, 1.442695
        %v3606 = vpow.pop %v3605
        %v3607 = vmul.f32 %v3302, 1.442695
        %v3608 = vpow.pop %v3607
        %v3609 = vmul.f32 %v3303, 1.442695
        %v3610 = vpow.pop %v3609
        %v3611 = vmul.f32 %v3304, 1.442695
        %v3612 = vpow.pop %v3611
        %v3613 = vmul.f32 %v3305, 1.442695
        %v3614 = vpow.pop %v3613
        %v3615 = vmul.f32 %v3306, 1.442695
        %v3616 = vpow.pop %v3615
        %v3617 = vmul.f32 %v3307, 1.442695
        %v3618 = vpow.pop %v3617
        %v3619 = vmul.f32 %v3308, 1.442695
        %v3620 = vpow.pop %v3619
        %v3621 = vmul.f32 %v3309, 1.442695
        %v3622 = vpow.pop %v3621
        %v3623 = vmul.f32 %v3310, 1.442695
        %v3624 = vpow.pop %v3623
        %v3625 = vmul.f32 %v3311, 1.442695
        %v3626 = vpow.pop %v3625
        %v3627 = vmul.f32 %v3312, 1.442695
        %v3628 = vpow.pop %v3627
        %v3629 = vmul.f32 %v3313, 1.442695
        %v3630 = vpow.pop %v3629
        %v3631 = vmul.f32 %v3314, 1.442695
        %v3632 = vpow.pop %v3631
        %v3633 = vmul.f32 %v3315, 1.442695
        %v3634 = vpow.pop %v3633
        %v3635 = vmul.f32 %v3316, 1.442695
        %v3636 = vpow.pop %v3635
        %v3637 = vmul.f32 %v3317, 1.442695
        %v3638 = vpow.pop %v3637
        %v3639 = vmul.f32 %v3318, 1.442695
        %v3640 = vpow.pop %v3639
        %v3641 = vmul.f32 %v3319, 1.442695
        %v3642 = vpow.pop %v3641
        %v3643 = vmul.f32 %v3320, 1.442695
        %v3644 = vpow.pop %v3643
        %v3645 = vmul.f32 %v3321, 1.442695
        %v3646 = vpow.pop %v3645
        %v3647 = vmul.f32 %v3322, 1.442695
        %v3648 = vpow.pop %v3647
        %v3649 = vmul.f32 %v3323, 1.442695
        %v3650 = vpow.pop %v3649
        %v3651 = vmul.f32 %v3324, 1.442695
        %v3652 = vpow.pop %v3651
        %v3653 = vmul.f32 %v3325, 1.442695
        %v3654 = vpow.pop %v3653
        %v3655 = vmul.f32 %v3326, 1.442695
        %v3656 = vpow.pop %v3655
        %v3657 = vmul.f32 %v3327, 1.442695
        %v3658 = vpow.pop %v3657
        %v3659 = vmul.f32 %v3328, 1.442695
        %v3660 = vpow.pop %v3659
        %v3661 = vmul.f32 %v3329, 1.442695
        %v3662 = vpow.pop %v3661
        %v3663 = vmul.f32 %v3330, 1.442695
        %v3664 = vpow.pop %v3663
        %v3665 = vmul.f32 %v3331, 1.442695
        %v3666 = vpow.pop %v3665
        %v3667 = vmul.f32 %v3332, 1.442695
        %v3668 = vpow.pop %v3667
        %v3669 = vmul.f32 %v3333, 1.442695
        %v3670 = vpow.pop %v3669
        %v3671 = vmul.f32 %v3334, 1.442695
        %v3672 = vpow.pop %v3671
        %v3673 = vmul.f32 %v3335, 1.442695
        %v3674 = vpow.pop %v3673
        %v3675 = vmul.f32 %v3336, 1.442695
        %v3676 = vpow.pop %v3675
        %v3677 = vmul.f32 %v3337, 1.442695
        %v3678 = vpow.pop %v3677
        %v3679 = vmul.f32 %v3338, 1.442695
        %v3680 = vpow.pop %v3679
        %v3681 = vmul.f32 %v3339, 1.442695
        %v3682 = vpow.pop %v3681
        %v3683 = vmul.f32 %v3340, 1.442695
        %v3684 = vpow.pop %v3683
        %v3685 = vmul.f32 %v3341, 1.442695
        %v3686 = vpow.pop %v3685
        %v3687 = vmul.f32 %v3342, 1.442695
        %v3688 = vpow.pop %v3687
        %v3689 = vmul.f32 %v3343, 1.442695
        %v3690 = vpow.pop %v3689
        %v3691 = vmul.f32 %v3344, 1.442695
        %v3692 = vpow.pop %v3691
        %v3693 = vmul.f32 %v3345, 1.442695
        %v3694 = vpow.pop %v3693
        %v3695 = vmul.f32 %v3346, 1.442695
        %v3696 = vpow.pop %v3695
        %v3697 = vmul.f32 %v3347, 1.442695
        %v3698 = vpow.pop %v3697
        %v3699 = vmul.f32 %v3348, 1.442695
        %v3700 = vpow.pop %v3699
        %v3701 = vmul.f32 %v3349, 1.442695
        %v3702 = vpow.pop %v3701
        %v3703 = vmul.f32 %v3350, 1.442695
        %v3704 = vpow.pop %v3703
        %v3705 = vmul.f32 %v3351, 1.442695
        %v3706 = vpow.pop %v3705
        %v3707 = vmul.f32 %v3352, 1.442695
        %v3708 = vpow.pop %v3707
        %v3709 = vmul.f32 %v3353, 1.442695
        %v3710 = vpow.pop %v3709
        %v3711 = vmul.f32 %v3354, 1.442695
        %v3712 = vpow.pop %v3711
        %v3713 = vmul.f32 %v3355, 1.442695
        %v3714 = vpow.pop %v3713
        %v3715 = vmul.f32 %v3356, 1.442695
        %v3716 = vpow.pop %v3715
        %v3717 = vmul.f32 %v3357, 1.442695
        %v3718 = vpow.pop %v3717
        %v3719 = vmul.f32 %v3358, 1.442695
        %v3720 = vpow.pop %v3719
        %v3721 = vmul.f32 %v3359, 1.442695
        %v3722 = vpow.pop %v3721
        %v3723 = vmul.f32 %v3360, 1.442695
        %v3724 = vpow.pop %v3723
        %v3725 = vmul.f32 %v3361, 1.442695
        %v3726 = vpow.pop %v3725
        %v3727 = vmul.f32 %v3362, 1.442695
        %v3728 = vpow.pop %v3727
        %v3729 = vmul.f32 %v3363, 1.442695
        %v3730 = vpow.pop %v3729
        %v3731 = vmul.f32 %v3364, 1.442695
        %v3732 = vpow.pop %v3731
        %v3733 = vmul.f32 %v3365, 1.442695
        %v3734 = vpow.pop %v3733
        %v3735 = vmul.f32 %v3366, 1.442695
        %v3736 = vpow.pop %v3735
        %v3737 = vmul.f32 %v3367, 1.442695
        %v3738 = vpow.pop %v3737
        %v3739 = vmul.f32 %v3368, 1.442695
        %v3740 = vpow.pop %v3739
        %v3741 = vmul.f32 %v3369, 1.442695
        %v3742 = vpow.pop %v3741
        %v3743 = vmul.f32 %v3370, 1.442695
        %v3744 = vpow.pop %v3743
        %v3745 = vmul.f32 %v3371, 1.442695
        %v3746 = vpow.pop %v3745
        %v3747 = vmul.f32 %v3372, 1.442695
        %v3748 = vpow.pop %v3747
        %v3749 = vmul.f32 %v3373, 1.442695
        %v3750 = vpow.pop %v3749
        %v3751 = vmul.f32 %v3374, 1.442695
        %v3752 = vpow.pop %v3751
        %v3753 = vmul.f32 %v3375, 1.442695
        %v3754 = vpow.pop %v3753
        %v3755 = vmul.f32 %v3376, 1.442695
        %v3756 = vpow.pop %v3755
        %v3757 = vmul.f32 %v3377, 1.442695
        %v3758 = vpow.pop %v3757
        %v3759 = vmul.f32 %v3378, 1.442695
        %v3760 = vpow.pop %v3759
        %v3761 = vmul.f32 %v3379, 1.442695
        %v3762 = vpow.pop %v3761
        %v3763 = vmul.f32 %v3380, 1.442695
        %v3764 = vpow.pop %v3763
        %v3765 = vmul.f32 %v3381, 1.442695
        %v3766 = vpow.pop %v3765
        %v3767 = vmul.f32 %v3382, 1.442695
        %v3768 = vpow.pop %v3767
        %v3769 = vmul.f32 %v3383, 1.442695
        %v3770 = vpow.pop %v3769
        %v3771 = vmul.f32 %v3384, 1.442695
        %v3772 = vpow.pop %v3771
        %v3773 = vmul.f32 %v3385, 1.442695
        %v3774 = vpow.pop %v3773
        %v3775 = vmul.f32 %v3386, 1.442695
        %v3776 = vpow.pop %v3775
        %v3777 = vmul.f32 %v3387, 1.442695
        %v3778 = vpow.pop %v3777
        %v3779 = vmul.f32 %v3388, 1.442695
        %v3780 = vpow.pop %v3779
        %v3781 = vmul.f32 %v3389, 1.442695
        %v3782 = vpow.pop %v3781
        %v3783 = vmul.f32 %v3390, 1.442695
        %v3784 = vpow.pop %v3783
        %v3785 = vmul.f32 %v3391, 1.442695
        %v3786 = vpow.pop %v3785
        %v3787 = vmul.f32 %v3392, 1.442695
        %v3788 = vpow.pop %v3787
        %v3789 = vmul.f32 %v3393, 1.442695
        %v3790 = vpow.pop %v3789
        %v3791 = vmul.f32 %v3394, 1.442695
        %v3792 = vpow.pop %v3791
        %v3793 = vmul.f32 %v3395, 1.442695
        %v3794 = vpow.pop %v3793
        %v3795 = vmul.f32 %v3396, 1.442695
        %v3796 = vpow.pop %v3795
        %v3797 = vmul.f32 %v3397, 1.442695
        %v3798 = vpow.pop %v3797
        %v3799 = vmul.f32 %v3398, 1.442695
        %v3800 = vpow.pop %v3799
        %v3801 = vmul.f32 %v3399, 1.442695
        %v3802 = vpow.pop %v3801
        %v3803 = vmul.f32 %v3400, 1.442695
        %v3804 = vpow.pop %v3803
        %v3805 = vmul.f32 %v3401, 1.442695
        %v3806 = vpow.pop %v3805
        %v3807 = vmul.f32 %v3402, 1.442695
        %v3808 = vpow.pop %v3807
        %v3809 = vmul.f32 %v3403, 1.442695
        %v3810 = vpow.pop %v3809
        %v3811 = vmul.f32 %v3404, 1.442695
        %v3812 = vpow.pop %v3811
        %v3813 = vmul.f32 %v3405, 1.442695
        %v3814 = vpow.pop %v3813
        %v3815 = vmul.f32 %v3406, 1.442695
        %v3816 = vpow.pop %v3815
        %v3817 = vmul.f32 %v3407, 1.442695
        %v3818 = vpow.pop %v3817
        %v3819 = vmul.f32 %v3408, 1.442695
        %v3820 = vpow.pop %v3819
        %v3821 = vmul.f32 %v3409, 1.442695
        %v3822 = vpow.pop %v3821
        %v3823 = vmul.f32 %v3410, 1.442695
        %v3824 = vpow.pop %v3823
        %v3825 = vmul.f32 %v3411, 1.442695
        %v3826 = vpow.pop %v3825
        %v3827 = vmul.f32 %v3412, 1.442695
        %v3828 = vpow.pop %v3827
        %v3829 = vmul.f32 %v3413, 1.442695
        %v3830 = vpow.pop %v3829
        %v3831 = vmul.f32 %v3414, 1.442695
        %v3832 = vpow.pop %v3831
        %v3833 = vmul.f32 %v3415, 1.442695
        %v3834 = vpow.pop %v3833
        %v3835 = vmul.f32 %v3416, 1.442695
        %v3836 = vpow.pop %v3835
        %v3837 = vmul.f32 %v3417, 1.442695
        %v3838 = vpow.pop %v3837
        %v3839 = vmul.f32 %v3418, 1.442695
        %v3840 = vpow.pop %v3839
        %v3841 = vmul.f32 %v3419, 1.442695
        %v3842 = vpow.pop %v3841
        %v3843 = vmul.f32 %v3420, 1.442695
        %v3844 = vpow.pop %v3843
        %v3845 = vmul.f32 %v3421, 1.442695
        %v3846 = vpow.pop %v3845
        %v3847 = vmul.f32 %v3422, 1.442695
        %v3848 = vpow.pop %v3847
        %v3849 = vmul.f32 %v3423, 1.442695
        %v3850 = vpow.pop %v3849
        %v3851 = vmul.f32 %v3424, 1.442695
        %v3852 = vpow.pop %v3851
        %v3853 = vmul.f32 %v3425, 1.442695
        %v3854 = vpow.pop %v3853
        %v3855 = vmul.f32 %v3426, 1.442695
        %v3856 = vpow.pop %v3855
        %v3857 = vmul.f32 %v3427, 1.442695
        %v3858 = vpow.pop %v3857
        %v3859 = vmul.f32 %v3428, 1.442695
        %v3860 = vpow.pop %v3859
        %v3861 = vmul.f32 %v3429, 1.442695
        %v3862 = vpow.pop %v3861
        %v3863 = vmul.f32 %v3430, 1.442695
        %v3864 = vpow.pop %v3863
        %v3865 = vmul.f32 %v3431, 1.442695
        %v3866 = vpow.pop %v3865
        %v3867 = vmul.f32 %v3432, 1.442695
        %v3868 = vpow.pop %v3867
        %v3869 = vmul.f32 %v3433, 1.442695
        %v3870 = vpow.pop %v3869
        %v3871 = vmul.f32 %v3434, 1.442695
        %v3872 = vpow.pop %v3871
        %v3873 = vmul.f32 %v3435, 1.442695
        %v3874 = vpow.pop %v3873
        %v3875 = vmul.f32 %v3436, 1.442695
        %v3876 = vpow.pop %v3875
        %v3877 = vmul.f32 %v3437, 1.442695
        %v3878 = vpow.pop %v3877
        %v3879 = vmul.f32 %v3438, 1.442695
        %v3880 = vpow.pop %v3879
        %v3881 = vmul.f32 %v3439, 1.442695
        %v3882 = vpow.pop %v3881
        %v3883 = vmul.f32 %v3440, 1.442695
        %v3884 = vpow.pop %v3883
        %v3885 = vmul.f32 %v3441, 1.442695
        %v3886 = vpow.pop %v3885
        %v3887 = vmul.f32 %v3442, 1.442695
        %v3888 = vpow.pop %v3887
        %v3889 = vmul.f32 %v3443, 1.442695
        %v3890 = vpow.pop %v3889
        %v3891 = vmul.f32 %v3444, 1.442695
        %v3892 = vpow.pop %v3891
        %v3893 = vmul.f32 %v3445, 1.442695
        %v3894 = vpow.pop %v3893
        %v3895 = vmul.f32 %v3446, 1.442695
        %v3896 = vpow.pop %v3895
        %v3897 = vmul.f32 %v3447, 1.442695
        %v3898 = vpow.pop %v3897
        %v3899 = vmul.f32 %v3448, 1.442695
        %v3900 = vpow.pop %v3899
        %v3901 = vmul.f32 %v3449, 1.442695
        %v3902 = vpow.pop %v3901
        %v3903 = vmul.f32 %v3450, 1.442695
        %v3904 = vpow.pop %v3903
        %v3905 = vmul.f32 %v3451, 1.442695
        %v3906 = vpow.pop %v3905
        %v3907 = vmul.f32 %v3452, 1.442695
        %v3908 = vpow.pop %v3907
        %v3909 = vmul.f32 %v3453, 1.442695
        %v3910 = vpow.pop %v3909
        %v3911 = vmul.f32 %v3454, 1.442695
        %v3912 = vpow.pop %v3911
        %v3913 = vmul.f32 %v3455, 1.442695
        %v3914 = vpow.pop %v3913
        %v3915 = vmul.f32 %v3456, 1.442695
        %v3916 = vpow.pop %v3915
        %v3917 = vmul.f32 %v3457, 1.442695
        %v3918 = vpow.pop %v3917
        %v3919 = vmul.f32 %v3458, 1.442695
        %v3920 = vpow.pop %v3919
        %v3921 = vmul.f32 %v3459, 1.442695
        %v3922 = vpow.pop %v3921
        %v3923 = vmul.f32 %v3460, 1.442695
        %v3924 = vpow.pop %v3923
        %v3925 = vmul.f32 %v3461, 1.442695
        %v3926 = vpow.pop %v3925
        %v3927 = vmul.f32 %v3462, 1.442695
        %v3928 = vpow.pop %v3927
        %v3929 = vmul.f32 %v3463, 1.442695
        %v3930 = vpow.pop %v3929
        %v3931 = vmul.f32 %v3464, 1.442695
        %v3932 = vpow.pop %v3931
        %v3933 = vmul.f32 %v3465, 1.442695
        %v3934 = vpow.pop %v3933
        %v3935 = vmul.f32 %v3466, 1.442695
        %v3936 = vpow.pop %v3935
        %v3937 = vmul.f32 %v3467, 1.442695
        %v3938 = vpow.pop %v3937
        %v3939 = vmul.f32 %v3468, 1.442695
        %v3940 = vpow.pop %v3939
        %v3941 = vmul.f32 %v3469, 1.442695
        %v3942 = vpow.pop %v3941
        %v3943 = vmul.f32 %v3470, 1.442695
        %v3944 = vpow.pop %v3943
        %v3945 = vmul.f32 %v3471, 1.442695
        %v3946 = vpow.pop %v3945
        %v3947 = vmul.f32 %v3472, 1.442695
        %v3948 = vpow.pop %v3947
        %v3949 = vmul.f32 %v3473, 1.442695
        %v3950 = vpow.pop %v3949
        %v3951 = vmul.f32 %v3474, 1.442695
        %v3952 = vpow.pop %v3951
        %v3953 = vmul.f32 %v3475, 1.442695
        %v3954 = vpow.pop %v3953
        %v3955 = vmul.f32 %v3476, 1.442695
        %v3956 = vpow.pop %v3955
        %v3957 = vmul.f32 %v3477, 1.442695
        %v3958 = vpow.pop %v3957
        %v3959 = vmul.f32 %v3478, 1.442695
        %v3960 = vpow.pop %v3959
        %v3961 = vmul.f32 %v3479, 1.442695
        %v3962 = vpow.pop %v3961
        %v3963 = vmul.f32 %v3480, 1.442695
        %v3964 = vpow.pop %v3963
        %v3965 = vmul.f32 %v3481, 1.442695
        %v3966 = vpow.pop %v3965
        %v3967 = vmul.f32 %v3482, 1.442695
        %v3968 = vpow.pop %v3967
        %v3969 = vmul.f32 %v3483, 1.442695
        %v3970 = vpow.pop %v3969
        %v3971 = vmul.f32 %v3484, 1.442695
        %v3972 = vpow.pop %v3971
        %v3973 = vmul.f32 %v3485, 1.442695
        %v3974 = vpow.pop %v3973
        %v3975 = vmul.f32 %v3486, 1.442695
        %v3976 = vpow.pop %v3975
        %v3977 = vmul.f32 %v3487, 1.442695
        %v3978 = vpow.pop %v3977
        %v3979 = vmul.f32 %v3488, 1.442695
        %v3980 = vpow.pop %v3979
        %v3981 = vmul.f32 %v3489, 1.442695
        %v3982 = vpow.pop %v3981
        %v3983 = vmul.f32 %v3490, 1.442695
        %v3984 = vpow.pop %v3983
        %v3985 = vmul.f32 %v3491, 1.442695
        %v3986 = vpow.pop %v3985
        %v3987 = vmul.f32 %v3492, 1.442695
        %v3988 = vpow.pop %v3987
        %v3989 = vmul.f32 %v3493, 1.442695
        %v3990 = vpow.pop %v3989
        %v3991 = vmul.f32 %v3494, 1.442695
        %v3992 = vpow.pop %v3991
        %v3993 = vmul.f32 %v3495, 1.442695
        %v3994 = vpow.pop %v3993
        %v3995 = vmul.f32 %v3496, 1.442695
        %v3996 = vpow.pop %v3995
        %v3997 = vmul.f32 %v3497, 1.442695
        %v3998 = vpow.pop %v3997
        %v3999 = vmul.f32 %v3498, 1.442695
        %v4000 = vpow.pop %v3999
        %v4001 = vmul.f32 %v3499, 1.442695
        %v4002 = vpow.pop %v4001
        %v4003 = vmul.f32 %v3500, 1.442695
        %v4004 = vpow.pop %v4003
        %v4005 = vmul.f32 %v3501, 1.442695
        %v4006 = vpow.pop %v4005
        %v4007 = vmul.f32 %v3502, 1.442695
        %v4008 = vpow.pop %v4007
        %v4009 = vmul.f32 %v3503, 1.442695
        %v4010 = vpow.pop %v4009
        %v4011 = vmul.f32 %v3504, 1.442695
        %v4012 = vpow.pop %v4011
        %v4013 = vmul.f32 %v3505, 1.442695
        %v4014 = vpow.pop %v4013
        %v4015 = vmul.f32 %v3506, 1.442695
        %v4016 = vpow.pop %v4015
        %v4017 = vmul.f32 %v3507, 1.442695
        %v4018 = vpow.pop %v4017
        %v4019 = vmul.f32 %v3508, 1.442695
        %v4020 = vpow.pop %v4019
        %v4021 = vsel %vm465, %v3510, 0.0
        %v4022 = vsel %vm466, %v3512, 0.0
        %v4023 = vsel %vm467, %v3514, 0.0
        %v4024 = vsel %vm468, %v3516, 0.0
        %v4025 = vsel %vm469, %v3518, 0.0
        %v4026 = vsel %vm470, %v3520, 0.0
        %v4027 = vsel %vm471, %v3522, 0.0
        %v4028 = vsel %vm472, %v3524, 0.0
        %v4029 = vsel %vm473, %v3526, 0.0
        %v4030 = vsel %vm474, %v3528, 0.0
        %v4031 = vsel %vm475, %v3530, 0.0
        %v4032 = vsel %vm476, %v3532, 0.0
        %v4033 = vsel %vm477, %v3534, 0.0
        %v4034 = vsel %vm478, %v3536, 0.0
        %v4035 = vsel %vm479, %v3538, 0.0
        %v4036 = vsel %vm480, %v3540, 0.0
        %v4037 = vsel %vm481, %v3542, 0.0
        %v4038 = vsel %vm482, %v3544, 0.0
        %v4039 = vsel %vm483, %v3546, 0.0
        %v4040 = vsel %vm484, %v3548, 0.0
        %v4041 = vsel %vm485, %v3550, 0.0
        %v4042 = vsel %vm486, %v3552, 0.0
        %v4043 = vsel %vm487, %v3554, 0.0
        %v4044 = vsel %vm488, %v3556, 0.0
        %v4045 = vsel %vm489, %v3558, 0.0
        %v4046 = vsel %vm490, %v3560, 0.0
        %v4047 = vsel %vm491, %v3562, 0.0
        %v4048 = vsel %vm492, %v3564, 0.0
        %v4049 = vsel %vm493, %v3566, 0.0
        %v4050 = vsel %vm494, %v3568, 0.0
        %v4051 = vsel %vm495, %v3570, 0.0
        %v4052 = vsel %vm496, %v3572, 0.0
        %v4053 = vsel %vm497, %v3574, 0.0
        %v4054 = vsel %vm498, %v3576, 0.0
        %v4055 = vsel %vm499, %v3578, 0.0
        %v4056 = vsel %vm500, %v3580, 0.0
        %v4057 = vsel %vm501, %v3582, 0.0
        %v4058 = vsel %vm502, %v3584, 0.0
        %v4059 = vsel %vm503, %v3586, 0.0
        %v4060 = vsel %vm504, %v3588, 0.0
        %v4061 = vsel %vm505, %v3590, 0.0
        %v4062 = vsel %vm506, %v3592, 0.0
        %v4063 = vsel %vm507, %v3594, 0.0
        %v4064 = vsel %vm508, %v3596, 0.0
        %v4065 = vsel %vm509, %v3598, 0.0
        %v4066 = vsel %vm510, %v3600, 0.0
        %v4067 = vsel %vm511, %v3602, 0.0
        %v4068 = vsel %vm512, %v3604, 0.0
        %v4069 = vsel %vm513, %v3606, 0.0
        %v4070 = vsel %vm514, %v3608, 0.0
        %v4071 = vsel %vm515, %v3610, 0.0
        %v4072 = vsel %vm516, %v3612, 0.0
        %v4073 = vsel %vm517, %v3614, 0.0
        %v4074 = vsel %vm518, %v3616, 0.0
        %v4075 = vsel %vm519, %v3618, 0.0
        %v4076 = vsel %vm520, %v3620, 0.0
        %v4077 = vsel %vm521, %v3622, 0.0
        %v4078 = vsel %vm522, %v3624, 0.0
        %v4079 = vsel %vm523, %v3626, 0.0
        %v4080 = vsel %vm524, %v3628, 0.0
        %v4081 = vsel %vm525, %v3630, 0.0
        %v4082 = vsel %vm526, %v3632, 0.0
        %v4083 = vsel %vm527, %v3634, 0.0
        %v4084 = vsel %vm528, %v3636, 0.0
        %v4085 = vsel %vm529, %v3638, 0.0
        %v4086 = vsel %vm530, %v3640, 0.0
        %v4087 = vsel %vm531, %v3642, 0.0
        %v4088 = vsel %vm532, %v3644, 0.0
        %v4089 = vsel %vm533, %v3646, 0.0
        %v4090 = vsel %vm534, %v3648, 0.0
        %v4091 = vsel %vm535, %v3650, 0.0
        %v4092 = vsel %vm536, %v3652, 0.0
        %v4093 = vsel %vm537, %v3654, 0.0
        %v4094 = vsel %vm538, %v3656, 0.0
        %v4095 = vsel %vm539, %v3658, 0.0
        %v4096 = vsel %vm540, %v3660, 0.0
        %v4097 = vsel %vm541, %v3662, 0.0
        %v4098 = vsel %vm542, %v3664, 0.0
        %v4099 = vsel %vm543, %v3666, 0.0
        %v4100 = vsel %vm544, %v3668, 0.0
        %v4101 = vsel %vm545, %v3670, 0.0
        %v4102 = vsel %vm546, %v3672, 0.0
        %v4103 = vsel %vm547, %v3674, 0.0
        %v4104 = vsel %vm548, %v3676, 0.0
        %v4105 = vsel %vm549, %v3678, 0.0
        %v4106 = vsel %vm550, %v3680, 0.0
        %v4107 = vsel %vm551, %v3682, 0.0
        %v4108 = vsel %vm552, %v3684, 0.0
        %v4109 = vsel %vm553, %v3686, 0.0
        %v4110 = vsel %vm554, %v3688, 0.0
        %v4111 = vsel %vm555, %v3690, 0.0
        %v4112 = vsel %vm556, %v3692, 0.0
        %v4113 = vsel %vm557, %v3694, 0.0
        %v4114 = vsel %vm558, %v3696, 0.0
        %v4115 = vsel %vm559, %v3698, 0.0
        %v4116 = vsel %vm560, %v3700, 0.0
        %v4117 = vsel %vm561, %v3702, 0.0
        %v4118 = vsel %vm562, %v3704, 0.0
        %v4119 = vsel %vm563, %v3706, 0.0
        %v4120 = vsel %vm564, %v3708, 0.0
        %v4121 = vsel %vm565, %v3710, 0.0
        %v4122 = vsel %vm566, %v3712, 0.0
        %v4123 = vsel %vm567, %v3714, 0.0
        %v4124 = vsel %vm568, %v3716, 0.0
        %v4125 = vsel %vm569, %v3718, 0.0
        %v4126 = vsel %vm570, %v3720, 0.0
        %v4127 = vsel %vm571, %v3722, 0.0
        %v4128 = vsel %vm572, %v3724, 0.0
        %v4129 = vsel %vm573, %v3726, 0.0
        %v4130 = vsel %vm574, %v3728, 0.0
        %v4131 = vsel %vm575, %v3730, 0.0
        %v4132 = vsel %vm576, %v3732, 0.0
        %v4133 = vsel %vm577, %v3734, 0.0
        %v4134 = vsel %vm578, %v3736, 0.0
        %v4135 = vsel %vm579, %v3738, 0.0
        %v4136 = vsel %vm580, %v3740, 0.0
        %v4137 = vsel %vm581, %v3742, 0.0
        %v4138 = vsel %vm582, %v3744, 0.0
        %v4139 = vsel %vm583, %v3746, 0.0
        %v4140 = vsel %vm584, %v3748, 0.0
        %v4141 = vsel %vm585, %v3750, 0.0
        %v4142 = vsel %vm586, %v3752, 0.0
        %v4143 = vsel %vm587, %v3754, 0.0
        %v4144 = vsel %vm588, %v3756, 0.0
        %v4145 = vsel %vm589, %v3758, 0.0
        %v4146 = vsel %vm590, %v3760, 0.0
        %v4147 = vsel %vm591, %v3762, 0.0
        %v4148 = vsel %vm592, %v3764, 0.0
        %v4149 = vsel %vm593, %v3766, 0.0
        %v4150 = vsel %vm594, %v3768, 0.0
        %v4151 = vsel %vm595, %v3770, 0.0
        %v4152 = vsel %vm596, %v3772, 0.0
        %v4153 = vsel %vm597, %v3774, 0.0
        %v4154 = vsel %vm598, %v3776, 0.0
        %v4155 = vsel %vm599, %v3778, 0.0
        %v4156 = vsel %vm600, %v3780, 0.0
        %v4157 = vsel %vm601, %v3782, 0.0
        %v4158 = vsel %vm602, %v3784, 0.0
        %v4159 = vsel %vm603, %v3786, 0.0
        %v4160 = vsel %vm604, %v3788, 0.0
        %v4161 = vsel %vm605, %v3790, 0.0
        %v4162 = vsel %vm606, %v3792, 0.0
        %v4163 = vsel %vm607, %v3794, 0.0
        %v4164 = vsel %vm608, %v3796, 0.0
        %v4165 = vsel %vm609, %v3798, 0.0
        %v4166 = vsel %vm610, %v3800, 0.0
        %v4167 = vsel %vm611, %v3802, 0.0
        %v4168 = vsel %vm612, %v3804, 0.0
        %v4169 = vsel %vm613, %v3806, 0.0
        %v4170 = vsel %vm614, %v3808, 0.0
        %v4171 = vsel %vm615, %v3810, 0.0
        %v4172 = vsel %vm616, %v3812, 0.0
        %v4173 = vsel %vm617, %v3814, 0.0
        %v4174 = vsel %vm618, %v3816, 0.0
        %v4175 = vsel %vm619, %v3818, 0.0
        %v4176 = vsel %vm620, %v3820, 0.0
        %v4177 = vsel %vm621, %v3822, 0.0
        %v4178 = vsel %vm622, %v3824, 0.0
        %v4179 = vsel %vm623, %v3826, 0.0
        %v4180 = vsel %vm624, %v3828, 0.0
        %v4181 = vsel %vm625, %v3830, 0.0
        %v4182 = vsel %vm626, %v3832, 0.0
        %v4183 = vsel %vm627, %v3834, 0.0
        %v4184 = vsel %vm628, %v3836, 0.0
        %v4185 = vsel %vm629, %v3838, 0.0
        %v4186 = vsel %vm630, %v3840, 0.0
        %v4187 = vsel %vm631, %v3842, 0.0
        %v4188 = vsel %vm632, %v3844, 0.0
        %v4189 = vsel %vm633, %v3846, 0.0
        %v4190 = vsel %vm634, %v3848, 0.0
        %v4191 = vsel %vm635, %v3850, 0.0
        %v4192 = vsel %vm636, %v3852, 0.0
        %v4193 = vsel %vm637, %v3854, 0.0
        %v4194 = vsel %vm638, %v3856, 0.0
        %v4195 = vsel %vm639, %v3858, 0.0
        %v4196 = vsel %vm640, %v3860, 0.0
        %v4197 = vsel %vm641, %v3862, 0.0
        %v4198 = vsel %vm642, %v3864, 0.0
        %v4199 = vsel %vm643, %v3866, 0.0
        %v4200 = vsel %vm644, %v3868, 0.0
        %v4201 = vsel %vm645, %v3870, 0.0
        %v4202 = vsel %vm646, %v3872, 0.0
        %v4203 = vsel %vm647, %v3874, 0.0
        %v4204 = vsel %vm648, %v3876, 0.0
        %v4205 = vsel %vm649, %v3878, 0.0
        %v4206 = vsel %vm650, %v3880, 0.0
        %v4207 = vsel %vm651, %v3882, 0.0
        %v4208 = vsel %vm652, %v3884, 0.0
        %v4209 = vsel %vm653, %v3886, 0.0
        %v4210 = vsel %vm654, %v3888, 0.0
        %v4211 = vsel %vm655, %v3890, 0.0
        %v4212 = vsel %vm656, %v3892, 0.0
        %v4213 = vsel %vm657, %v3894, 0.0
        %v4214 = vsel %vm658, %v3896, 0.0
        %v4215 = vsel %vm659, %v3898, 0.0
        %v4216 = vsel %vm660, %v3900, 0.0
        %v4217 = vsel %vm661, %v3902, 0.0
        %v4218 = vsel %vm662, %v3904, 0.0
        %v4219 = vsel %vm663, %v3906, 0.0
        %v4220 = vsel %vm664, %v3908, 0.0
        %v4221 = vsel %vm665, %v3910, 0.0
        %v4222 = vsel %vm666, %v3912, 0.0
        %v4223 = vsel %vm667, %v3914, 0.0
        %v4224 = vsel %vm668, %v3916, 0.0
        %v4225 = vsel %vm669, %v3918, 0.0
        %v4226 = vsel %vm670, %v3920, 0.0
        %v4227 = vsel %vm671, %v3922, 0.0
        %v4228 = vsel %vm672, %v3924, 0.0
        %v4229 = vsel %vm673, %v3926, 0.0
        %v4230 = vsel %vm674, %v3928, 0.0
        %v4231 = vsel %vm675, %v3930, 0.0
        %v4232 = vsel %vm676, %v3932, 0.0
        %v4233 = vsel %vm677, %v3934, 0.0
        %v4234 = vsel %vm678, %v3936, 0.0
        %v4235 = vsel %vm679, %v3938, 0.0
        %v4236 = vsel %vm680, %v3940, 0.0
        %v4237 = vsel %vm681, %v3942, 0.0
        %v4238 = vsel %vm682, %v3944, 0.0
        %v4239 = vsel %vm683, %v3946, 0.0
        %v4240 = vsel %vm684, %v3948, 0.0
        %v4241 = vsel %vm685, %v3950, 0.0
        %v4242 = vsel %vm686, %v3952, 0.0
        %v4243 = vsel %vm687, %v3954, 0.0
        %v4244 = vsel %vm688, %v3956, 0.0
        %v4245 = vsel %vm689, %v3958, 0.0
        %v4246 = vsel %vm690, %v3960, 0.0
        %v4247 = vsel %vm691, %v3962, 0.0
        %v4248 = vsel %vm692, %v3964, 0.0
        %v4249 = vsel %vm693, %v3966, 0.0
        %v4250 = vsel %vm694, %v3968, 0.0
        %v4251 = vsel %vm695, %v3970, 0.0
        %v4252 = vsel %vm696, %v3972, 0.0
        %v4253 = vsel %vm697, %v3974, 0.0
        %v4254 = vsel %vm698, %v3976, 0.0
        %v4255 = vsel %vm699, %v3978, 0.0
        %v4256 = vsel %vm700, %v3980, 0.0
        %v4257 = vsel %vm701, %v3982, 0.0
        %v4258 = vsel %vm702, %v3984, 0.0
        %v4259 = vsel %vm703, %v3986, 0.0
        %v4260 = vsel %vm704, %v3988, 0.0
        %v4261 = vsel %vm705, %v3990, 0.0
        %v4262 = vsel %vm706, %v3992, 0.0
        %v4263 = vsel %vm707, %v3994, 0.0
        %v4264 = vsel %vm708, %v3996, 0.0
        %v4265 = vsel %vm709, %v3998, 0.0
        %v4266 = vsel %vm710, %v4000, 0.0
        %v4267 = vsel %vm711, %v4002, 0.0
        %v4268 = vsel %vm712, %v4004, 0.0
        %v4269 = vsel %vm713, %v4006, 0.0
        %v4270 = vsel %vm714, %v4008, 0.0
        %v4271 = vsel %vm715, %v4010, 0.0
        %v4272 = vsel %vm716, %v4012, 0.0
        %v4273 = vsel %vm717, %v4014, 0.0
        %v4274 = vsel %vm718, %v4016, 0.0
        %v4275 = vsel %vm719, %v4018, 0.0
        %v4276 = vsel %vm720, %v4020, 0.0
        %v4277 = vld [vmem:[#allocation3] sm:$0xff]
        %v4278 = vld [vmem:[#allocation3 + $0x8] sm:$0xff]
        %v4279 = vld [vmem:[#allocation3 + $0x10] sm:$0xff]
        %v4280 = vld [vmem:[#allocation3 + $0x18] sm:$0xff]
        %v4281 = vld [vmem:[#allocation3 + $0x20] sm:$0xff]
        %v4282 = vld [vmem:[#allocation3 + $0x28] sm:$0xff]
        %v4283 = vld [vmem:[#allocation3 + $0x30] sm:$0xff]
        %v4284 = vld [vmem:[#allocation3 + $0x38] sm:$0xff]
        %v4285 = vld [vmem:[#allocation3 + $0x40] sm:$0xff]
        %v4286 = vld [vmem:[#allocation3 + $0x48] sm:$0xff]
        %v4287 = vld [vmem:[#allocation3 + $0x50] sm:$0xff]
        %v4288 = vld [vmem:[#allocation3 + $0x58] sm:$0xff]
        %v4289 = vld [vmem:[#allocation3 + $0x60] sm:$0xff]
        %v4290 = vld [vmem:[#allocation3 + $0x68] sm:$0xff]
        %v4291 = vld [vmem:[#allocation3 + $0x70] sm:$0xff]
        %v4292 = vld [vmem:[#allocation3 + $0x78] sm:$0xff]
        %v4293 = vld [vmem:[#allocation3 + $0x80] sm:$0xff]
        %v4294 = vld [vmem:[#allocation3 + $0x88] sm:$0xff]
        %v4295 = vld [vmem:[#allocation3 + $0x90] sm:$0xff]
        %v4296 = vld [vmem:[#allocation3 + $0x98] sm:$0xff]
        %v4297 = vld [vmem:[#allocation3 + $0xa0] sm:$0xff]
        %v4298 = vld [vmem:[#allocation3 + $0xa8] sm:$0xff]
        %v4299 = vld [vmem:[#allocation3 + $0xb0] sm:$0xff]
        %v4300 = vld [vmem:[#allocation3 + $0xb8] sm:$0xff]
        %v4301 = vld [vmem:[#allocation3 + $0xc0] sm:$0xff]
        %v4302 = vld [vmem:[#allocation3 + $0xc8] sm:$0xff]
        %v4303 = vld [vmem:[#allocation3 + $0xd0] sm:$0xff]
        %v4304 = vld [vmem:[#allocation3 + $0xd8] sm:$0xff]
        %v4305 = vld [vmem:[#allocation3 + $0xe0] sm:$0xff]
        %v4306 = vld [vmem:[#allocation3 + $0xe8] sm:$0xff]
        %v4307 = vld [vmem:[#allocation3 + $0xf0] sm:$0xff]
        %v4308 = vld [vmem:[#allocation3 + $0xf8] sm:$0xff]
        %v4309 = vmul.f32 %v3030, %v4277
        %v4310 = vmul.f32 %v3032, %v4278
        %v4311 = vmul.f32 %v3034, %v4279
        %v4312 = vmul.f32 %v3036, %v4280
        %v4313 = vmul.f32 %v3038, %v4281
        %v4314 = vmul.f32 %v3040, %v4282
        %v4315 = vmul.f32 %v3042, %v4283
        %v4316 = vmul.f32 %v3044, %v4284
        %v4317 = vmul.f32 %v3046, %v4285
        %v4318 = vmul.f32 %v3048, %v4286
        %v4319 = vmul.f32 %v3050, %v4287
        %v4320 = vmul.f32 %v3052, %v4288
        %v4321 = vmul.f32 %v3054, %v4289
        %v4322 = vmul.f32 %v3056, %v4290
        %v4323 = vmul.f32 %v3058, %v4291
        %v4324 = vmul.f32 %v3060, %v4292
        %v4325 = vmul.f32 %v3062, %v4293
        %v4326 = vmul.f32 %v3064, %v4294
        %v4327 = vmul.f32 %v3066, %v4295
        %v4328 = vmul.f32 %v3068, %v4296
        %v4329 = vmul.f32 %v3070, %v4297
        %v4330 = vmul.f32 %v3072, %v4298
        %v4331 = vmul.f32 %v3074, %v4299
        %v4332 = vmul.f32 %v3076, %v4300
        %v4333 = vmul.f32 %v3078, %v4301
        %v4334 = vmul.f32 %v3080, %v4302
        %v4335 = vmul.f32 %v3082, %v4303
        %v4336 = vmul.f32 %v3084, %v4304
        %v4337 = vmul.f32 %v3086, %v4305
        %v4338 = vmul.f32 %v3088, %v4306
        %v4339 = vmul.f32 %v3090, %v4307
        %v4340 = vmul.f32 %v3092, %v4308
        %v4341 = vadd.f32 %v4021, %v4022
        %v4342 = vadd.f32 %v4341, %v4023
        %v4343 = vadd.f32 %v4342, %v4024
        %v4344 = vadd.f32 %v4343, %v4025
        %v4345 = vadd.f32 %v4344, %v4026
        %v4346 = vadd.f32 %v4345, %v4027
        %v4347 = vadd.f32 %v4346, %v4028
        %4348 = vadd.xlane.f32.xlu0 %v4347
        %v4349 = vpop.xlane.xlu0 %4348
        %v4350 = vadd.f32 %v4029, %v4030
        %v4351 = vadd.f32 %v4350, %v4031
        %v4352 = vadd.f32 %v4351, %v4032
        %v4353 = vadd.f32 %v4352, %v4033
        %v4354 = vadd.f32 %v4353, %v4034
        %v4355 = vadd.f32 %v4354, %v4035
        %v4356 = vadd.f32 %v4355, %v4036
        %4357 = vadd.xlane.f32.xlu0 %v4356
        %v4358 = vpop.xlane.xlu0 %4357
        %v4359 = vadd.f32 %v4037, %v4038
        %v4360 = vadd.f32 %v4359, %v4039
        %v4361 = vadd.f32 %v4360, %v4040
        %v4362 = vadd.f32 %v4361, %v4041
        %v4363 = vadd.f32 %v4362, %v4042
        %v4364 = vadd.f32 %v4363, %v4043
        %v4365 = vadd.f32 %v4364, %v4044
        %4366 = vadd.xlane.f32.xlu0 %v4365
        %v4367 = vpop.xlane.xlu0 %4366
        %v4368 = vadd.f32 %v4045, %v4046
        %v4369 = vadd.f32 %v4368, %v4047
        %v4370 = vadd.f32 %v4369, %v4048
        %v4371 = vadd.f32 %v4370, %v4049
        %v4372 = vadd.f32 %v4371, %v4050
        %v4373 = vadd.f32 %v4372, %v4051
        %v4374 = vadd.f32 %v4373, %v4052
        %4375 = vadd.xlane.f32.xlu0 %v4374
        %v4376 = vpop.xlane.xlu0 %4375
        %v4377 = vadd.f32 %v4053, %v4054
        %v4378 = vadd.f32 %v4377, %v4055
        %v4379 = vadd.f32 %v4378, %v4056
        %v4380 = vadd.f32 %v4379, %v4057
        %v4381 = vadd.f32 %v4380, %v4058
        %v4382 = vadd.f32 %v4381, %v4059
        %v4383 = vadd.f32 %v4382, %v4060
        %4384 = vadd.xlane.f32.xlu0 %v4383
        %v4385 = vpop.xlane.xlu0 %4384
        %v4386 = vadd.f32 %v4061, %v4062
        %v4387 = vadd.f32 %v4386, %v4063
        %v4388 = vadd.f32 %v4387, %v4064
        %v4389 = vadd.f32 %v4388, %v4065
        %v4390 = vadd.f32 %v4389, %v4066
        %v4391 = vadd.f32 %v4390, %v4067
        %v4392 = vadd.f32 %v4391, %v4068
        %4393 = vadd.xlane.f32.xlu0 %v4392
        %v4394 = vpop.xlane.xlu0 %4393
        %v4395 = vadd.f32 %v4069, %v4070
        %v4396 = vadd.f32 %v4395, %v4071
        %v4397 = vadd.f32 %v4396, %v4072
        %v4398 = vadd.f32 %v4397, %v4073
        %v4399 = vadd.f32 %v4398, %v4074
        %v4400 = vadd.f32 %v4399, %v4075
        %v4401 = vadd.f32 %v4400, %v4076
        %4402 = vadd.xlane.f32.xlu0 %v4401
        %v4403 = vpop.xlane.xlu0 %4402
        %v4404 = vadd.f32 %v4077, %v4078
        %v4405 = vadd.f32 %v4404, %v4079
        %v4406 = vadd.f32 %v4405, %v4080
        %v4407 = vadd.f32 %v4406, %v4081
        %v4408 = vadd.f32 %v4407, %v4082
        %v4409 = vadd.f32 %v4408, %v4083
        %v4410 = vadd.f32 %v4409, %v4084
        %4411 = vadd.xlane.f32.xlu0 %v4410
        %v4412 = vpop.xlane.xlu0 %4411
        %v4413 = vadd.f32 %v4085, %v4086
        %v4414 = vadd.f32 %v4413, %v4087
        %v4415 = vadd.f32 %v4414, %v4088
        %v4416 = vadd.f32 %v4415, %v4089
        %v4417 = vadd.f32 %v4416, %v4090
        %v4418 = vadd.f32 %v4417, %v4091
        %v4419 = vadd.f32 %v4418, %v4092
        %4420 = vadd.xlane.f32.xlu0 %v4419
        %v4421 = vpop.xlane.xlu0 %4420
        %v4422 = vadd.f32 %v4093, %v4094
        %v4423 = vadd.f32 %v4422, %v4095
        %v4424 = vadd.f32 %v4423, %v4096
        %v4425 = vadd.f32 %v4424, %v4097
        %v4426 = vadd.f32 %v4425, %v4098
        %v4427 = vadd.f32 %v4426, %v4099
        %v4428 = vadd.f32 %v4427, %v4100
        %4429 = vadd.xlane.f32.xlu0 %v4428
        %v4430 = vpop.xlane.xlu0 %4429
        %v4431 = vadd.f32 %v4101, %v4102
        %v4432 = vadd.f32 %v4431, %v4103
        %v4433 = vadd.f32 %v4432, %v4104
        %v4434 = vadd.f32 %v4433, %v4105
        %v4435 = vadd.f32 %v4434, %v4106
        %v4436 = vadd.f32 %v4435, %v4107
        %v4437 = vadd.f32 %v4436, %v4108
        %4438 = vadd.xlane.f32.xlu0 %v4437
        %v4439 = vpop.xlane.xlu0 %4438
        %v4440 = vadd.f32 %v4109, %v4110
        %v4441 = vadd.f32 %v4440, %v4111
        %v4442 = vadd.f32 %v4441, %v4112
        %v4443 = vadd.f32 %v4442, %v4113
        %v4444 = vadd.f32 %v4443, %v4114
        %v4445 = vadd.f32 %v4444, %v4115
        %v4446 = vadd.f32 %v4445, %v4116
        %4447 = vadd.xlane.f32.xlu0 %v4446
        %v4448 = vpop.xlane.xlu0 %4447
        %v4449 = vadd.f32 %v4117, %v4118
        %v4450 = vadd.f32 %v4449, %v4119
        %v4451 = vadd.f32 %v4450, %v4120
        %v4452 = vadd.f32 %v4451, %v4121
        %v4453 = vadd.f32 %v4452, %v4122
        %v4454 = vadd.f32 %v4453, %v4123
        %v4455 = vadd.f32 %v4454, %v4124
        %4456 = vadd.xlane.f32.xlu0 %v4455
        %v4457 = vpop.xlane.xlu0 %4456
        %v4458 = vadd.f32 %v4125, %v4126
        %v4459 = vadd.f32 %v4458, %v4127
        %v4460 = vadd.f32 %v4459, %v4128
        %v4461 = vadd.f32 %v4460, %v4129
        %v4462 = vadd.f32 %v4461, %v4130
        %v4463 = vadd.f32 %v4462, %v4131
        %v4464 = vadd.f32 %v4463, %v4132
        %4465 = vadd.xlane.f32.xlu0 %v4464
        %v4466 = vpop.xlane.xlu0 %4465
        %v4467 = vadd.f32 %v4133, %v4134
        %v4468 = vadd.f32 %v4467, %v4135
        %v4469 = vadd.f32 %v4468, %v4136
        %v4470 = vadd.f32 %v4469, %v4137
        %v4471 = vadd.f32 %v4470, %v4138
        %v4472 = vadd.f32 %v4471, %v4139
        %v4473 = vadd.f32 %v4472, %v4140
        %4474 = vadd.xlane.f32.xlu0 %v4473
        %v4475 = vpop.xlane.xlu0 %4474
        %v4476 = vadd.f32 %v4141, %v4142
        %v4477 = vadd.f32 %v4476, %v4143
        %v4478 = vadd.f32 %v4477, %v4144
        %v4479 = vadd.f32 %v4478, %v4145
        %v4480 = vadd.f32 %v4479, %v4146
        %v4481 = vadd.f32 %v4480, %v4147
        %v4482 = vadd.f32 %v4481, %v4148
        %4483 = vadd.xlane.f32.xlu0 %v4482
        %v4484 = vpop.xlane.xlu0 %4483
        %v4485 = vadd.f32 %v4149, %v4150
        %v4486 = vadd.f32 %v4485, %v4151
        %v4487 = vadd.f32 %v4486, %v4152
        %v4488 = vadd.f32 %v4487, %v4153
        %v4489 = vadd.f32 %v4488, %v4154
        %v4490 = vadd.f32 %v4489, %v4155
        %v4491 = vadd.f32 %v4490, %v4156
        %4492 = vadd.xlane.f32.xlu0 %v4491
        %v4493 = vpop.xlane.xlu0 %4492
        %v4494 = vadd.f32 %v4157, %v4158
        %v4495 = vadd.f32 %v4494, %v4159
        %v4496 = vadd.f32 %v4495, %v4160
        %v4497 = vadd.f32 %v4496, %v4161
        %v4498 = vadd.f32 %v4497, %v4162
        %v4499 = vadd.f32 %v4498, %v4163
        %v4500 = vadd.f32 %v4499, %v4164
        %4501 = vadd.xlane.f32.xlu0 %v4500
        %v4502 = vpop.xlane.xlu0 %4501
        %v4503 = vadd.f32 %v4165, %v4166
        %v4504 = vadd.f32 %v4503, %v4167
        %v4505 = vadd.f32 %v4504, %v4168
        %v4506 = vadd.f32 %v4505, %v4169
        %v4507 = vadd.f32 %v4506, %v4170
        %v4508 = vadd.f32 %v4507, %v4171
        %v4509 = vadd.f32 %v4508, %v4172
        %4510 = vadd.xlane.f32.xlu0 %v4509
        %v4511 = vpop.xlane.xlu0 %4510
        %v4512 = vadd.f32 %v4173, %v4174
        %v4513 = vadd.f32 %v4512, %v4175
        %v4514 = vadd.f32 %v4513, %v4176
        %v4515 = vadd.f32 %v4514, %v4177
        %v4516 = vadd.f32 %v4515, %v4178
        %v4517 = vadd.f32 %v4516, %v4179
        %v4518 = vadd.f32 %v4517, %v4180
        %4519 = vadd.xlane.f32.xlu0 %v4518
        %v4520 = vpop.xlane.xlu0 %4519
        %v4521 = vadd.f32 %v4181, %v4182
        %v4522 = vadd.f32 %v4521, %v4183
        %v4523 = vadd.f32 %v4522, %v4184
        %v4524 = vadd.f32 %v4523, %v4185
        %v4525 = vadd.f32 %v4524, %v4186
        %v4526 = vadd.f32 %v4525, %v4187
        %v4527 = vadd.f32 %v4526, %v4188
        %4528 = vadd.xlane.f32.xlu0 %v4527
        %v4529 = vpop.xlane.xlu0 %4528
        %v4530 = vadd.f32 %v4189, %v4190
        %v4531 = vadd.f32 %v4530, %v4191
        %v4532 = vadd.f32 %v4531, %v4192
        %v4533 = vadd.f32 %v4532, %v4193
        %v4534 = vadd.f32 %v4533, %v4194
        %v4535 = vadd.f32 %v4534, %v4195
        %v4536 = vadd.f32 %v4535, %v4196
        %4537 = vadd.xlane.f32.xlu0 %v4536
        %v4538 = vpop.xlane.xlu0 %4537
        %v4539 = vadd.f32 %v4197, %v4198
        %v4540 = vadd.f32 %v4539, %v4199
        %v4541 = vadd.f32 %v4540, %v4200
        %v4542 = vadd.f32 %v4541, %v4201
        %v4543 = vadd.f32 %v4542, %v4202
        %v4544 = vadd.f32 %v4543, %v4203
        %v4545 = vadd.f32 %v4544, %v4204
        %4546 = vadd.xlane.f32.xlu0 %v4545
        %v4547 = vpop.xlane.xlu0 %4546
        %v4548 = vadd.f32 %v4205, %v4206
        %v4549 = vadd.f32 %v4548, %v4207
        %v4550 = vadd.f32 %v4549, %v4208
        %v4551 = vadd.f32 %v4550, %v4209
        %v4552 = vadd.f32 %v4551, %v4210
        %v4553 = vadd.f32 %v4552, %v4211
        %v4554 = vadd.f32 %v4553, %v4212
        %4555 = vadd.xlane.f32.xlu0 %v4554
        %v4556 = vpop.xlane.xlu0 %4555
        %v4557 = vadd.f32 %v4213, %v4214
        %v4558 = vadd.f32 %v4557, %v4215
        %v4559 = vadd.f32 %v4558, %v4216
        %v4560 = vadd.f32 %v4559, %v4217
        %v4561 = vadd.f32 %v4560, %v4218
        %v4562 = vadd.f32 %v4561, %v4219
        %v4563 = vadd.f32 %v4562, %v4220
        %4564 = vadd.xlane.f32.xlu0 %v4563
        %v4565 = vpop.xlane.xlu0 %4564
        %v4566 = vadd.f32 %v4221, %v4222
        %v4567 = vadd.f32 %v4566, %v4223
        %v4568 = vadd.f32 %v4567, %v4224
        %v4569 = vadd.f32 %v4568, %v4225
        %v4570 = vadd.f32 %v4569, %v4226
        %v4571 = vadd.f32 %v4570, %v4227
        %v4572 = vadd.f32 %v4571, %v4228
        %4573 = vadd.xlane.f32.xlu0 %v4572
        %v4574 = vpop.xlane.xlu0 %4573
        %v4575 = vadd.f32 %v4229, %v4230
        %v4576 = vadd.f32 %v4575, %v4231
        %v4577 = vadd.f32 %v4576, %v4232
        %v4578 = vadd.f32 %v4577, %v4233
        %v4579 = vadd.f32 %v4578, %v4234
        %v4580 = vadd.f32 %v4579, %v4235
        %v4581 = vadd.f32 %v4580, %v4236
        %4582 = vadd.xlane.f32.xlu0 %v4581
        %v4583 = vpop.xlane.xlu0 %4582
        %v4584 = vadd.f32 %v4237, %v4238
        %v4585 = vadd.f32 %v4584, %v4239
        %v4586 = vadd.f32 %v4585, %v4240
        %v4587 = vadd.f32 %v4586, %v4241
        %v4588 = vadd.f32 %v4587, %v4242
        %v4589 = vadd.f32 %v4588, %v4243
        %v4590 = vadd.f32 %v4589, %v4244
        %4591 = vadd.xlane.f32.xlu0 %v4590
        %v4592 = vpop.xlane.xlu0 %4591
        %v4593 = vadd.f32 %v4245, %v4246
        %v4594 = vadd.f32 %v4593, %v4247
        %v4595 = vadd.f32 %v4594, %v4248
        %v4596 = vadd.f32 %v4595, %v4249
        %v4597 = vadd.f32 %v4596, %v4250
        %v4598 = vadd.f32 %v4597, %v4251
        %v4599 = vadd.f32 %v4598, %v4252
        %4600 = vadd.xlane.f32.xlu0 %v4599
        %v4601 = vpop.xlane.xlu0 %4600
        %v4602 = vadd.f32 %v4253, %v4254
        %v4603 = vadd.f32 %v4602, %v4255
        %v4604 = vadd.f32 %v4603, %v4256
        %v4605 = vadd.f32 %v4604, %v4257
        %v4606 = vadd.f32 %v4605, %v4258
        %v4607 = vadd.f32 %v4606, %v4259
        %v4608 = vadd.f32 %v4607, %v4260
        %4609 = vadd.xlane.f32.xlu0 %v4608
        %v4610 = vpop.xlane.xlu0 %4609
        %v4611 = vadd.f32 %v4261, %v4262
        %v4612 = vadd.f32 %v4611, %v4263
        %v4613 = vadd.f32 %v4612, %v4264
        %v4614 = vadd.f32 %v4613, %v4265
        %v4615 = vadd.f32 %v4614, %v4266
        %v4616 = vadd.f32 %v4615, %v4267
        %v4617 = vadd.f32 %v4616, %v4268
        %4618 = vadd.xlane.f32.xlu0 %v4617
        %v4619 = vpop.xlane.xlu0 %4618
        %v4620 = vadd.f32 %v4269, %v4270
        %v4621 = vadd.f32 %v4620, %v4271
        %v4622 = vadd.f32 %v4621, %v4272
        %v4623 = vadd.f32 %v4622, %v4273
        %v4624 = vadd.f32 %v4623, %v4274
        %v4625 = vadd.f32 %v4624, %v4275
        %v4626 = vadd.f32 %v4625, %v4276
        %4627 = vadd.xlane.f32.xlu0 %v4626
        %v4628 = vpop.xlane.xlu0 %4627
        %v4629 = vadd.f32 %v4309, %v4349
        %v4630 = vadd.f32 %v4310, %v4358
        %v4631 = vadd.f32 %v4311, %v4367
        %v4632 = vadd.f32 %v4312, %v4376
        %v4633 = vadd.f32 %v4313, %v4385
        %v4634 = vadd.f32 %v4314, %v4394
        %v4635 = vadd.f32 %v4315, %v4403
        %v4636 = vadd.f32 %v4316, %v4412
        %v4637 = vadd.f32 %v4317, %v4421
        %v4638 = vadd.f32 %v4318, %v4430
        %v4639 = vadd.f32 %v4319, %v4439
        %v4640 = vadd.f32 %v4320, %v4448
        %v4641 = vadd.f32 %v4321, %v4457
        %v4642 = vadd.f32 %v4322, %v4466
        %v4643 = vadd.f32 %v4323, %v4475
        %v4644 = vadd.f32 %v4324, %v4484
        %v4645 = vadd.f32 %v4325, %v4493
        %v4646 = vadd.f32 %v4326, %v4502
        %v4647 = vadd.f32 %v4327, %v4511
        %v4648 = vadd.f32 %v4328, %v4520
        %v4649 = vadd.f32 %v4329, %v4529
        %v4650 = vadd.f32 %v4330, %v4538
        %v4651 = vadd.f32 %v4331, %v4547
        %v4652 = vadd.f32 %v4332, %v4556
        %v4653 = vadd.f32 %v4333, %v4565
        %v4654 = vadd.f32 %v4334, %v4574
        %v4655 = vadd.f32 %v4335, %v4583
        %v4656 = vadd.f32 %v4336, %v4592
        %v4657 = vadd.f32 %v4337, %v4601
        %v4658 = vadd.f32 %v4338, %v4610
        %v4659 = vadd.f32 %v4339, %v4619
        %v4660 = vadd.f32 %v4340, %v4628
        %vm4661 = vcmask 7168
        %4662 = vst.msk [vmem:[#allocation3] sm:$0xff] %vm4661, %v4629
        %4663 = vst.msk [vmem:[#allocation3 + $0x8] sm:$0xff] %vm4661, %v4630
        %4664 = vst.msk [vmem:[#allocation3 + $0x10] sm:$0xff] %vm4661, %v4631
        %4665 = vst.msk [vmem:[#allocation3 + $0x18] sm:$0xff] %vm4661, %v4632
        %4666 = vst.msk [vmem:[#allocation3 + $0x20] sm:$0xff] %vm4661, %v4633
        %4667 = vst.msk [vmem:[#allocation3 + $0x28] sm:$0xff] %vm4661, %v4634
        %4668 = vst.msk [vmem:[#allocation3 + $0x30] sm:$0xff] %vm4661, %v4635
        %4669 = vst.msk [vmem:[#allocation3 + $0x38] sm:$0xff] %vm4661, %v4636
        %4670 = vst.msk [vmem:[#allocation3 + $0x40] sm:$0xff] %vm4661, %v4637
        %4671 = vst.msk [vmem:[#allocation3 + $0x48] sm:$0xff] %vm4661, %v4638
        %4672 = vst.msk [vmem:[#allocation3 + $0x50] sm:$0xff] %vm4661, %v4639
        %4673 = vst.msk [vmem:[#allocation3 + $0x58] sm:$0xff] %vm4661, %v4640
        %4674 = vst.msk [vmem:[#allocation3 + $0x60] sm:$0xff] %vm4661, %v4641
        %4675 = vst.msk [vmem:[#allocation3 + $0x68] sm:$0xff] %vm4661, %v4642
        %4676 = vst.msk [vmem:[#allocation3 + $0x70] sm:$0xff] %vm4661, %v4643
        %4677 = vst.msk [vmem:[#allocation3 + $0x78] sm:$0xff] %vm4661, %v4644
        %4678 = vst.msk [vmem:[#allocation3 + $0x80] sm:$0xff] %vm4661, %v4645
        %4679 = vst.msk [vmem:[#allocation3 + $0x88] sm:$0xff] %vm4661, %v4646
        %4680 = vst.msk [vmem:[#allocation3 + $0x90] sm:$0xff] %vm4661, %v4647
        %4681 = vst.msk [vmem:[#allocation3 + $0x98] sm:$0xff] %vm4661, %v4648
        %4682 = vst.msk [vmem:[#allocation3 + $0xa0] sm:$0xff] %vm4661, %v4649
        %4683 = vst.msk [vmem:[#allocation3 + $0xa8] sm:$0xff] %vm4661, %v4650
        %4684 = vst.msk [vmem:[#allocation3 + $0xb0] sm:$0xff] %vm4661, %v4651
        %4685 = vst.msk [vmem:[#allocation3 + $0xb8] sm:$0xff] %vm4661, %v4652
        %4686 = vst.msk [vmem:[#allocation3 + $0xc0] sm:$0xff] %vm4661, %v4653
        %4687 = vst.msk [vmem:[#allocation3 + $0xc8] sm:$0xff] %vm4661, %v4654
        %4688 = vst.msk [vmem:[#allocation3 + $0xd0] sm:$0xff] %vm4661, %v4655
        %4689 = vst.msk [vmem:[#allocation3 + $0xd8] sm:$0xff] %vm4661, %v4656
        %4690 = vst.msk [vmem:[#allocation3 + $0xe0] sm:$0xff] %vm4661, %v4657
        %4691 = vst.msk [vmem:[#allocation3 + $0xe8] sm:$0xff] %vm4661, %v4658
        %4692 = vst.msk [vmem:[#allocation3 + $0xf0] sm:$0xff] %vm4661, %v4659
        %4693 = vst.msk [vmem:[#allocation3 + $0xf8] sm:$0xff] %vm4661, %v4660
        %v4694 = vld [vmem:[%s273] sm:$0xff]
        %v4695 = vld [vmem:[%s273 + $0x8] sm:$0xff]
        %v4696 = vld [vmem:[%s273 + $0x10] sm:$0xff]
        %v4697 = vld [vmem:[%s273 + $0x18] sm:$0xff]
        %v4698 = vld [vmem:[%s273 + $0x20] sm:$0xff]
        %v4699 = vld [vmem:[%s273 + $0x28] sm:$0xff]
        %v4700 = vld [vmem:[%s273 + $0x30] sm:$0xff]
        %v4701 = vld [vmem:[%s273 + $0x38] sm:$0xff]
        %v4702 = vld [vmem:[%s273 + $0x40] sm:$0xff]
        %v4703 = vld [vmem:[%s273 + $0x48] sm:$0xff]
        %v4704 = vld [vmem:[%s273 + $0x50] sm:$0xff]
        %v4705 = vld [vmem:[%s273 + $0x58] sm:$0xff]
        %v4706 = vld [vmem:[%s273 + $0x60] sm:$0xff]
        %v4707 = vld [vmem:[%s273 + $0x68] sm:$0xff]
        %v4708 = vld [vmem:[%s273 + $0x70] sm:$0xff]
        %v4709 = vld [vmem:[%s273 + $0x78] sm:$0xff]
        %v4710 = vld [vmem:[%s273 + $0x80] sm:$0xff]
        %v4711 = vld [vmem:[%s273 + $0x88] sm:$0xff]
        %v4712 = vld [vmem:[%s273 + $0x90] sm:$0xff]
        %v4713 = vld [vmem:[%s273 + $0x98] sm:$0xff]
        %v4714 = vld [vmem:[%s273 + $0xa0] sm:$0xff]
        %v4715 = vld [vmem:[%s273 + $0xa8] sm:$0xff]
        %v4716 = vld [vmem:[%s273 + $0xb0] sm:$0xff]
        %v4717 = vld [vmem:[%s273 + $0xb8] sm:$0xff]
        %v4718 = vld [vmem:[%s273 + $0xc0] sm:$0xff]
        %v4719 = vld [vmem:[%s273 + $0xc8] sm:$0xff]
        %v4720 = vld [vmem:[%s273 + $0xd0] sm:$0xff]
        %v4721 = vld [vmem:[%s273 + $0xd8] sm:$0xff]
        %v4722 = vld [vmem:[%s273 + $0xe0] sm:$0xff]
        %v4723 = vld [vmem:[%s273 + $0xe8] sm:$0xff]
        %v4724 = vld [vmem:[%s273 + $0xf0] sm:$0xff]
        %v4725 = vld [vmem:[%s273 + $0xf8] sm:$0xff]
        %4727 = vset.pattern.permute.xlu0 0
        %4728 = vperm.xlu0 %4727, %v3030
        %v4729 = vpop.permute.xlu0 %4728
        %4732 = vset.pattern.permute.xlu0 0
        %4733 = vperm.xlu0 %4732, %v3032
        %v4734 = vpop.permute.xlu0 %4733
        %4737 = vset.pattern.permute.xlu0 0
        %4738 = vperm.xlu0 %4737, %v3034
        %v4739 = vpop.permute.xlu0 %4738
        %4742 = vset.pattern.permute.xlu0 0
        %4743 = vperm.xlu0 %4742, %v3036
        %v4744 = vpop.permute.xlu0 %4743
        %4747 = vset.pattern.permute.xlu0 0
        %4748 = vperm.xlu0 %4747, %v3038
        %v4749 = vpop.permute.xlu0 %4748
        %4752 = vset.pattern.permute.xlu0 0
        %4753 = vperm.xlu0 %4752, %v3040
        %v4754 = vpop.permute.xlu0 %4753
        %4757 = vset.pattern.permute.xlu0 0
        %4758 = vperm.xlu0 %4757, %v3042
        %v4759 = vpop.permute.xlu0 %4758
        %4762 = vset.pattern.permute.xlu0 0
        %4763 = vperm.xlu0 %4762, %v3044
        %v4764 = vpop.permute.xlu0 %4763
        %4767 = vset.pattern.permute.xlu0 0
        %4768 = vperm.xlu0 %4767, %v3046
        %v4769 = vpop.permute.xlu0 %4768
        %4772 = vset.pattern.permute.xlu0 0
        %4773 = vperm.xlu0 %4772, %v3048
        %v4774 = vpop.permute.xlu0 %4773
        %4777 = vset.pattern.permute.xlu0 0
        %4778 = vperm.xlu0 %4777, %v3050
        %v4779 = vpop.permute.xlu0 %4778
        %4782 = vset.pattern.permute.xlu0 0
        %4783 = vperm.xlu0 %4782, %v3052
        %v4784 = vpop.permute.xlu0 %4783
        %4787 = vset.pattern.permute.xlu0 0
        %4788 = vperm.xlu0 %4787, %v3054
        %v4789 = vpop.permute.xlu0 %4788
        %4792 = vset.pattern.permute.xlu0 0
        %4793 = vperm.xlu0 %4792, %v3056
        %v4794 = vpop.permute.xlu0 %4793
        %4797 = vset.pattern.permute.xlu0 0
        %4798 = vperm.xlu0 %4797, %v3058
        %v4799 = vpop.permute.xlu0 %4798
        %4802 = vset.pattern.permute.xlu0 0
        %4803 = vperm.xlu0 %4802, %v3060
        %v4804 = vpop.permute.xlu0 %4803
        %4807 = vset.pattern.permute.xlu0 0
        %4808 = vperm.xlu0 %4807, %v3062
        %v4809 = vpop.permute.xlu0 %4808
        %4812 = vset.pattern.permute.xlu0 0
        %4813 = vperm.xlu0 %4812, %v3064
        %v4814 = vpop.permute.xlu0 %4813
        %4817 = vset.pattern.permute.xlu0 0
        %4818 = vperm.xlu0 %4817, %v3066
        %v4819 = vpop.permute.xlu0 %4818
        %4822 = vset.pattern.permute.xlu0 0
        %4823 = vperm.xlu0 %4822, %v3068
        %v4824 = vpop.permute.xlu0 %4823
        %4827 = vset.pattern.permute.xlu0 0
        %4828 = vperm.xlu0 %4827, %v3070
        %v4829 = vpop.permute.xlu0 %4828
        %4832 = vset.pattern.permute.xlu0 0
        %4833 = vperm.xlu0 %4832, %v3072
        %v4834 = vpop.permute.xlu0 %4833
        %4837 = vset.pattern.permute.xlu0 0
        %4838 = vperm.xlu0 %4837, %v3074
        %v4839 = vpop.permute.xlu0 %4838
        %4842 = vset.pattern.permute.xlu0 0
        %4843 = vperm.xlu0 %4842, %v3076
        %v4844 = vpop.permute.xlu0 %4843
        %4847 = vset.pattern.permute.xlu0 0
        %4848 = vperm.xlu0 %4847, %v3078
        %v4849 = vpop.permute.xlu0 %4848
        %4852 = vset.pattern.permute.xlu0 0
        %4853 = vperm.xlu0 %4852, %v3080
        %v4854 = vpop.permute.xlu0 %4853
        %4857 = vset.pattern.permute.xlu0 0
        %4858 = vperm.xlu0 %4857, %v3082
        %v4859 = vpop.permute.xlu0 %4858
        %4862 = vset.pattern.permute.xlu0 0
        %4863 = vperm.xlu0 %4862, %v3084
        %v4864 = vpop.permute.xlu0 %4863
        %4867 = vset.pattern.permute.xlu0 0
        %4868 = vperm.xlu0 %4867, %v3086
        %v4869 = vpop.permute.xlu0 %4868
        %4872 = vset.pattern.permute.xlu0 0
        %4873 = vperm.xlu0 %4872, %v3088
        %v4874 = vpop.permute.xlu0 %4873
        %4877 = vset.pattern.permute.xlu0 0
        %4878 = vperm.xlu0 %4877, %v3090
        %v4879 = vpop.permute.xlu0 %4878
        %4882 = vset.pattern.permute.xlu0 0
        %4883 = vperm.xlu0 %4882, %v3092
        %v4884 = vpop.permute.xlu0 %4883
        %v4886 = vmul.f32 %v4729, %v4694
        %v4887 = vmul.f32 %v4734, %v4695
        %v4888 = vmul.f32 %v4739, %v4696
        %v4889 = vmul.f32 %v4744, %v4697
        %v4890 = vmul.f32 %v4749, %v4698
        %v4891 = vmul.f32 %v4754, %v4699
        %v4892 = vmul.f32 %v4759, %v4700
        %v4893 = vmul.f32 %v4764, %v4701
        %v4894 = vmul.f32 %v4769, %v4702
        %v4895 = vmul.f32 %v4774, %v4703
        %v4896 = vmul.f32 %v4779, %v4704
        %v4897 = vmul.f32 %v4784, %v4705
        %v4898 = vmul.f32 %v4789, %v4706
        %v4899 = vmul.f32 %v4794, %v4707
        %v4900 = vmul.f32 %v4799, %v4708
        %v4901 = vmul.f32 %v4804, %v4709
        %v4902 = vmul.f32 %v4809, %v4710
        %v4903 = vmul.f32 %v4814, %v4711
        %v4904 = vmul.f32 %v4819, %v4712
        %v4905 = vmul.f32 %v4824, %v4713
        %v4906 = vmul.f32 %v4829, %v4714
        %v4907 = vmul.f32 %v4834, %v4715
        %v4908 = vmul.f32 %v4839, %v4716
        %v4909 = vmul.f32 %v4844, %v4717
        %v4910 = vmul.f32 %v4849, %v4718
        %v4911 = vmul.f32 %v4854, %v4719
        %v4912 = vmul.f32 %v4859, %v4720
        %v4913 = vmul.f32 %v4864, %v4721
        %v4914 = vmul.f32 %v4869, %v4722
        %v4915 = vmul.f32 %v4874, %v4723
        %v4916 = vmul.f32 %v4879, %v4724
        %v4917 = vmul.f32 %v4884, %v4725
        %v4918 = vpack.c.bf16 %v4029, %v4021
        %v4919 = vpack.c.bf16 %v4030, %v4022
        %v4920 = vpack.c.bf16 %v4031, %v4023
        %v4921 = vpack.c.bf16 %v4032, %v4024
        %v4922 = vpack.c.bf16 %v4033, %v4025
        %v4923 = vpack.c.bf16 %v4034, %v4026
        %v4924 = vpack.c.bf16 %v4035, %v4027
        %v4925 = vpack.c.bf16 %v4036, %v4028
        %v4926 = vpack.c.bf16 %v4045, %v4037
        %v4927 = vpack.c.bf16 %v4046, %v4038
        %v4928 = vpack.c.bf16 %v4047, %v4039
        %v4929 = vpack.c.bf16 %v4048, %v4040
        %v4930 = vpack.c.bf16 %v4049, %v4041
        %v4931 = vpack.c.bf16 %v4050, %v4042
        %v4932 = vpack.c.bf16 %v4051, %v4043
        %v4933 = vpack.c.bf16 %v4052, %v4044
        %v4934 = vpack.c.bf16 %v4061, %v4053
        %v4935 = vpack.c.bf16 %v4062, %v4054
        %v4936 = vpack.c.bf16 %v4063, %v4055
        %v4937 = vpack.c.bf16 %v4064, %v4056
        %v4938 = vpack.c.bf16 %v4065, %v4057
        %v4939 = vpack.c.bf16 %v4066, %v4058
        %v4940 = vpack.c.bf16 %v4067, %v4059
        %v4941 = vpack.c.bf16 %v4068, %v4060
        %v4942 = vpack.c.bf16 %v4077, %v4069
        %v4943 = vpack.c.bf16 %v4078, %v4070
        %v4944 = vpack.c.bf16 %v4079, %v4071
        %v4945 = vpack.c.bf16 %v4080, %v4072
        %v4946 = vpack.c.bf16 %v4081, %v4073
        %v4947 = vpack.c.bf16 %v4082, %v4074
        %v4948 = vpack.c.bf16 %v4083, %v4075
        %v4949 = vpack.c.bf16 %v4084, %v4076
        %v4950 = vpack.c.bf16 %v4093, %v4085
        %v4951 = vpack.c.bf16 %v4094, %v4086
        %v4952 = vpack.c.bf16 %v4095, %v4087
        %v4953 = vpack.c.bf16 %v4096, %v4088
        %v4954 = vpack.c.bf16 %v4097, %v4089
        %v4955 = vpack.c.bf16 %v4098, %v4090
        %v4956 = vpack.c.bf16 %v4099, %v4091
        %v4957 = vpack.c.bf16 %v4100, %v4092
        %v4958 = vpack.c.bf16 %v4109, %v4101
        %v4959 = vpack.c.bf16 %v4110, %v4102
        %v4960 = vpack.c.bf16 %v4111, %v4103
        %v4961 = vpack.c.bf16 %v4112, %v4104
        %v4962 = vpack.c.bf16 %v4113, %v4105
        %v4963 = vpack.c.bf16 %v4114, %v4106
        %v4964 = vpack.c.bf16 %v4115, %v4107
        %v4965 = vpack.c.bf16 %v4116, %v4108
        %v4966 = vpack.c.bf16 %v4125, %v4117
        %v4967 = vpack.c.bf16 %v4126, %v4118
        %v4968 = vpack.c.bf16 %v4127, %v4119
        %v4969 = vpack.c.bf16 %v4128, %v4120
        %v4970 = vpack.c.bf16 %v4129, %v4121
        %v4971 = vpack.c.bf16 %v4130, %v4122
        %v4972 = vpack.c.bf16 %v4131, %v4123
        %v4973 = vpack.c.bf16 %v4132, %v4124
        %v4974 = vpack.c.bf16 %v4141, %v4133
        %v4975 = vpack.c.bf16 %v4142, %v4134
        %v4976 = vpack.c.bf16 %v4143, %v4135
        %v4977 = vpack.c.bf16 %v4144, %v4136
        %v4978 = vpack.c.bf16 %v4145, %v4137
        %v4979 = vpack.c.bf16 %v4146, %v4138
        %v4980 = vpack.c.bf16 %v4147, %v4139
        %v4981 = vpack.c.bf16 %v4148, %v4140
        %v4982 = vpack.c.bf16 %v4157, %v4149
        %v4983 = vpack.c.bf16 %v4158, %v4150
        %v4984 = vpack.c.bf16 %v4159, %v4151
        %v4985 = vpack.c.bf16 %v4160, %v4152
        %v4986 = vpack.c.bf16 %v4161, %v4153
        %v4987 = vpack.c.bf16 %v4162, %v4154
        %v4988 = vpack.c.bf16 %v4163, %v4155
        %v4989 = vpack.c.bf16 %v4164, %v4156
        %v4990 = vpack.c.bf16 %v4173, %v4165
        %v4991 = vpack.c.bf16 %v4174, %v4166
        %v4992 = vpack.c.bf16 %v4175, %v4167
        %v4993 = vpack.c.bf16 %v4176, %v4168
        %v4994 = vpack.c.bf16 %v4177, %v4169
        %v4995 = vpack.c.bf16 %v4178, %v4170
        %v4996 = vpack.c.bf16 %v4179, %v4171
        %v4997 = vpack.c.bf16 %v4180, %v4172
        %v4998 = vpack.c.bf16 %v4189, %v4181
        %v4999 = vpack.c.bf16 %v4190, %v4182
        %v5000 = vpack.c.bf16 %v4191, %v4183
        %v5001 = vpack.c.bf16 %v4192, %v4184
        %v5002 = vpack.c.bf16 %v4193, %v4185
        %v5003 = vpack.c.bf16 %v4194, %v4186
        %v5004 = vpack.c.bf16 %v4195, %v4187
        %v5005 = vpack.c.bf16 %v4196, %v4188
        %v5006 = vpack.c.bf16 %v4205, %v4197
        %v5007 = vpack.c.bf16 %v4206, %v4198
        %v5008 = vpack.c.bf16 %v4207, %v4199
        %v5009 = vpack.c.bf16 %v4208, %v4200
        %v5010 = vpack.c.bf16 %v4209, %v4201
        %v5011 = vpack.c.bf16 %v4210, %v4202
        %v5012 = vpack.c.bf16 %v4211, %v4203
        %v5013 = vpack.c.bf16 %v4212, %v4204
        %v5014 = vpack.c.bf16 %v4221, %v4213
        %v5015 = vpack.c.bf16 %v4222, %v4214
        %v5016 = vpack.c.bf16 %v4223, %v4215
        %v5017 = vpack.c.bf16 %v4224, %v4216
        %v5018 = vpack.c.bf16 %v4225, %v4217
        %v5019 = vpack.c.bf16 %v4226, %v4218
        %v5020 = vpack.c.bf16 %v4227, %v4219
        %v5021 = vpack.c.bf16 %v4228, %v4220
        %v5022 = vpack.c.bf16 %v4237, %v4229
        %v5023 = vpack.c.bf16 %v4238, %v4230
        %v5024 = vpack.c.bf16 %v4239, %v4231
        %v5025 = vpack.c.bf16 %v4240, %v4232
        %v5026 = vpack.c.bf16 %v4241, %v4233
        %v5027 = vpack.c.bf16 %v4242, %v4234
        %v5028 = vpack.c.bf16 %v4243, %v4235
        %v5029 = vpack.c.bf16 %v4244, %v4236
        %v5030 = vpack.c.bf16 %v4253, %v4245
        %v5031 = vpack.c.bf16 %v4254, %v4246
        %v5032 = vpack.c.bf16 %v4255, %v4247
        %v5033 = vpack.c.bf16 %v4256, %v4248
        %v5034 = vpack.c.bf16 %v4257, %v4249
        %v5035 = vpack.c.bf16 %v4258, %v4250
        %v5036 = vpack.c.bf16 %v4259, %v4251
        %v5037 = vpack.c.bf16 %v4260, %v4252
        %v5038 = vpack.c.bf16 %v4269, %v4261
        %v5039 = vpack.c.bf16 %v4270, %v4262
        %v5040 = vpack.c.bf16 %v4271, %v4263
        %v5041 = vpack.c.bf16 %v4272, %v4264
        %v5042 = vpack.c.bf16 %v4273, %v4265
        %v5043 = vpack.c.bf16 %v4274, %v4266
        %v5044 = vpack.c.bf16 %v4275, %v4267
        %v5045 = vpack.c.bf16 %v4276, %v4268
        %v5046 = vld [vmem:[%s241] sm:$0xf]
        %v5047 = vld [vmem:[%s241 + $0x4] sm:$0xf]
        %v5048 = vld [vmem:[%s241 + $0x8] sm:$0xf]
        %v5049 = vld [vmem:[%s241 + $0xc] sm:$0xf]
        %v5050 = vld [vmem:[%s241 + $0x10] sm:$0xf]
        %v5051 = vld [vmem:[%s241 + $0x14] sm:$0xf]
        %v5052 = vld [vmem:[%s241 + $0x18] sm:$0xf]
        %v5053 = vld [vmem:[%s241 + $0x1c] sm:$0xf]
        %v5054 = vld [vmem:[%s241 + $0x20] sm:$0xf]
        %v5055 = vld [vmem:[%s241 + $0x24] sm:$0xf]
        %v5056 = vld [vmem:[%s241 + $0x28] sm:$0xf]
        %v5057 = vld [vmem:[%s241 + $0x2c] sm:$0xf]
        %v5058 = vld [vmem:[%s241 + $0x30] sm:$0xf]
        %v5059 = vld [vmem:[%s241 + $0x34] sm:$0xf]
        %v5060 = vld [vmem:[%s241 + $0x38] sm:$0xf]
        %v5061 = vld [vmem:[%s241 + $0x3c] sm:$0xf]
        %v5062 = vld [vmem:[%s241 + $0x40] sm:$0xf]
        %v5063 = vld [vmem:[%s241 + $0x44] sm:$0xf]
        %v5064 = vld [vmem:[%s241 + $0x48] sm:$0xf]
        %v5065 = vld [vmem:[%s241 + $0x4c] sm:$0xf]
        %v5066 = vld [vmem:[%s241 + $0x50] sm:$0xf]
        %v5067 = vld [vmem:[%s241 + $0x54] sm:$0xf]
        %v5068 = vld [vmem:[%s241 + $0x58] sm:$0xf]
        %v5069 = vld [vmem:[%s241 + $0x5c] sm:$0xf]
        %v5070 = vld [vmem:[%s241 + $0x60] sm:$0xf]
        %v5071 = vld [vmem:[%s241 + $0x64] sm:$0xf]
        %v5072 = vld [vmem:[%s241 + $0x68] sm:$0xf]
        %v5073 = vld [vmem:[%s241 + $0x6c] sm:$0xf]
        %v5074 = vld [vmem:[%s241 + $0x70] sm:$0xf]
        %v5075 = vld [vmem:[%s241 + $0x74] sm:$0xf]
        %v5076 = vld [vmem:[%s241 + $0x78] sm:$0xf]
        %v5077 = vld [vmem:[%s241 + $0x7c] sm:$0xf]
        %v5078 = vld [vmem:[%s241 + $0x80] sm:$0xf]
        %v5079 = vld [vmem:[%s241 + $0x84] sm:$0xf]
        %v5080 = vld [vmem:[%s241 + $0x88] sm:$0xf]
        %v5081 = vld [vmem:[%s241 + $0x8c] sm:$0xf]
        %v5082 = vld [vmem:[%s241 + $0x90] sm:$0xf]
        %v5083 = vld [vmem:[%s241 + $0x94] sm:$0xf]
        %v5084 = vld [vmem:[%s241 + $0x98] sm:$0xf]
        %v5085 = vld [vmem:[%s241 + $0x9c] sm:$0xf]
        %v5086 = vld [vmem:[%s241 + $0xa0] sm:$0xf]
        %v5087 = vld [vmem:[%s241 + $0xa4] sm:$0xf]
        %v5088 = vld [vmem:[%s241 + $0xa8] sm:$0xf]
        %v5089 = vld [vmem:[%s241 + $0xac] sm:$0xf]
        %v5090 = vld [vmem:[%s241 + $0xb0] sm:$0xf]
        %v5091 = vld [vmem:[%s241 + $0xb4] sm:$0xf]
        %v5092 = vld [vmem:[%s241 + $0xb8] sm:$0xf]
        %v5093 = vld [vmem:[%s241 + $0xbc] sm:$0xf]
        %v5094 = vld [vmem:[%s241 + $0xc0] sm:$0xf]
        %v5095 = vld [vmem:[%s241 + $0xc4] sm:$0xf]
        %v5096 = vld [vmem:[%s241 + $0xc8] sm:$0xf]
        %v5097 = vld [vmem:[%s241 + $0xcc] sm:$0xf]
        %v5098 = vld [vmem:[%s241 + $0xd0] sm:$0xf]
        %v5099 = vld [vmem:[%s241 + $0xd4] sm:$0xf]
        %v5100 = vld [vmem:[%s241 + $0xd8] sm:$0xf]
        %v5101 = vld [vmem:[%s241 + $0xdc] sm:$0xf]
        %v5102 = vld [vmem:[%s241 + $0xe0] sm:$0xf]
        %v5103 = vld [vmem:[%s241 + $0xe4] sm:$0xf]
        %v5104 = vld [vmem:[%s241 + $0xe8] sm:$0xf]
        %v5105 = vld [vmem:[%s241 + $0xec] sm:$0xf]
        %v5106 = vld [vmem:[%s241 + $0xf0] sm:$0xf]
        %v5107 = vld [vmem:[%s241 + $0xf4] sm:$0xf]
        %v5108 = vld [vmem:[%s241 + $0xf8] sm:$0xf]
        %v5109 = vld [vmem:[%s241 + $0xfc] sm:$0xf]
        %v5110 = vld [vmem:[%s241 + $0x100] sm:$0xf]
        %v5111 = vld [vmem:[%s241 + $0x104] sm:$0xf]
        %v5112 = vld [vmem:[%s241 + $0x108] sm:$0xf]
        %v5113 = vld [vmem:[%s241 + $0x10c] sm:$0xf]
        %v5114 = vld [vmem:[%s241 + $0x110] sm:$0xf]
        %v5115 = vld [vmem:[%s241 + $0x114] sm:$0xf]
        %v5116 = vld [vmem:[%s241 + $0x118] sm:$0xf]
        %v5117 = vld [vmem:[%s241 + $0x11c] sm:$0xf]
        %v5118 = vld [vmem:[%s241 + $0x120] sm:$0xf]
        %v5119 = vld [vmem:[%s241 + $0x124] sm:$0xf]
        %v5120 = vld [vmem:[%s241 + $0x128] sm:$0xf]
        %v5121 = vld [vmem:[%s241 + $0x12c] sm:$0xf]
        %v5122 = vld [vmem:[%s241 + $0x130] sm:$0xf]
        %v5123 = vld [vmem:[%s241 + $0x134] sm:$0xf]
        %v5124 = vld [vmem:[%s241 + $0x138] sm:$0xf]
        %v5125 = vld [vmem:[%s241 + $0x13c] sm:$0xf]
        %v5126 = vld [vmem:[%s241 + $0x140] sm:$0xf]
        %v5127 = vld [vmem:[%s241 + $0x144] sm:$0xf]
        %v5128 = vld [vmem:[%s241 + $0x148] sm:$0xf]
        %v5129 = vld [vmem:[%s241 + $0x14c] sm:$0xf]
        %v5130 = vld [vmem:[%s241 + $0x150] sm:$0xf]
        %v5131 = vld [vmem:[%s241 + $0x154] sm:$0xf]
        %v5132 = vld [vmem:[%s241 + $0x158] sm:$0xf]
        %v5133 = vld [vmem:[%s241 + $0x15c] sm:$0xf]
        %v5134 = vld [vmem:[%s241 + $0x160] sm:$0xf]
        %v5135 = vld [vmem:[%s241 + $0x164] sm:$0xf]
        %v5136 = vld [vmem:[%s241 + $0x168] sm:$0xf]
        %v5137 = vld [vmem:[%s241 + $0x16c] sm:$0xf]
        %v5138 = vld [vmem:[%s241 + $0x170] sm:$0xf]
        %v5139 = vld [vmem:[%s241 + $0x174] sm:$0xf]
        %v5140 = vld [vmem:[%s241 + $0x178] sm:$0xf]
        %v5141 = vld [vmem:[%s241 + $0x17c] sm:$0xf]
        %v5142 = vld [vmem:[%s241 + $0x180] sm:$0xf]
        %v5143 = vld [vmem:[%s241 + $0x184] sm:$0xf]
        %v5144 = vld [vmem:[%s241 + $0x188] sm:$0xf]
        %v5145 = vld [vmem:[%s241 + $0x18c] sm:$0xf]
        %v5146 = vld [vmem:[%s241 + $0x190] sm:$0xf]
        %v5147 = vld [vmem:[%s241 + $0x194] sm:$0xf]
        %v5148 = vld [vmem:[%s241 + $0x198] sm:$0xf]
        %v5149 = vld [vmem:[%s241 + $0x19c] sm:$0xf]
        %v5150 = vld [vmem:[%s241 + $0x1a0] sm:$0xf]
        %v5151 = vld [vmem:[%s241 + $0x1a4] sm:$0xf]
        %v5152 = vld [vmem:[%s241 + $0x1a8] sm:$0xf]
        %v5153 = vld [vmem:[%s241 + $0x1ac] sm:$0xf]
        %v5154 = vld [vmem:[%s241 + $0x1b0] sm:$0xf]
        %v5155 = vld [vmem:[%s241 + $0x1b4] sm:$0xf]
        %v5156 = vld [vmem:[%s241 + $0x1b8] sm:$0xf]
        %v5157 = vld [vmem:[%s241 + $0x1bc] sm:$0xf]
        %v5158 = vld [vmem:[%s241 + $0x1c0] sm:$0xf]
        %v5159 = vld [vmem:[%s241 + $0x1c4] sm:$0xf]
        %v5160 = vld [vmem:[%s241 + $0x1c8] sm:$0xf]
        %v5161 = vld [vmem:[%s241 + $0x1cc] sm:$0xf]
        %v5162 = vld [vmem:[%s241 + $0x1d0] sm:$0xf]
        %v5163 = vld [vmem:[%s241 + $0x1d4] sm:$0xf]
        %v5164 = vld [vmem:[%s241 + $0x1d8] sm:$0xf]
        %v5165 = vld [vmem:[%s241 + $0x1dc] sm:$0xf]
        %v5166 = vld [vmem:[%s241 + $0x1e0] sm:$0xf]
        %v5167 = vld [vmem:[%s241 + $0x1e4] sm:$0xf]
        %v5168 = vld [vmem:[%s241 + $0x1e8] sm:$0xf]
        %v5169 = vld [vmem:[%s241 + $0x1ec] sm:$0xf]
        %v5170 = vld [vmem:[%s241 + $0x1f0] sm:$0xf]
        %v5171 = vld [vmem:[%s241 + $0x1f4] sm:$0xf]
        %v5172 = vld [vmem:[%s241 + $0x1f8] sm:$0xf]
        %v5173 = vld [vmem:[%s241 + $0x1fc] sm:$0xf]
        %v5302 = vunpack.c.l.b16 %v5046
        %v5303 = vunpack.c.l.b16 %v5047
        %v5304 = vunpack.c.l.b16 %v5048
        %v5305 = vunpack.c.l.b16 %v5049
        %v5306 = vunpack.c.l.b16 %v5050
        %v5307 = vunpack.c.l.b16 %v5051
        %v5308 = vunpack.c.l.b16 %v5052
        %v5309 = vunpack.c.l.b16 %v5053
        %v5310 = vunpack.c.l.b16 %v5054
        %v5311 = vunpack.c.l.b16 %v5055
        %v5312 = vunpack.c.l.b16 %v5056
        %v5313 = vunpack.c.l.b16 %v5057
        %v5314 = vunpack.c.l.b16 %v5058
        %v5315 = vunpack.c.l.b16 %v5059
        %v5316 = vunpack.c.l.b16 %v5060
        %v5317 = vunpack.c.l.b16 %v5061
        %v5318 = vunpack.c.l.b16 %v5062
        %v5319 = vunpack.c.l.b16 %v5063
        %v5320 = vunpack.c.l.b16 %v5064
        %v5321 = vunpack.c.l.b16 %v5065
        %v5322 = vunpack.c.l.b16 %v5066
        %v5323 = vunpack.c.l.b16 %v5067
        %v5324 = vunpack.c.l.b16 %v5068
        %v5325 = vunpack.c.l.b16 %v5069
        %v5326 = vunpack.c.l.b16 %v5070
        %v5327 = vunpack.c.l.b16 %v5071
        %v5328 = vunpack.c.l.b16 %v5072
        %v5329 = vunpack.c.l.b16 %v5073
        %v5330 = vunpack.c.l.b16 %v5074
        %v5331 = vunpack.c.l.b16 %v5075
        %v5332 = vunpack.c.l.b16 %v5076
        %v5333 = vunpack.c.l.b16 %v5077
        %v5334 = vunpack.c.l.b16 %v5078
        %v5335 = vunpack.c.l.b16 %v5079
        %v5336 = vunpack.c.l.b16 %v5080
        %v5337 = vunpack.c.l.b16 %v5081
        %v5338 = vunpack.c.l.b16 %v5082
        %v5339 = vunpack.c.l.b16 %v5083
        %v5340 = vunpack.c.l.b16 %v5084
        %v5341 = vunpack.c.l.b16 %v5085
        %v5342 = vunpack.c.l.b16 %v5086
        %v5343 = vunpack.c.l.b16 %v5087
        %v5344 = vunpack.c.l.b16 %v5088
        %v5345 = vunpack.c.l.b16 %v5089
        %v5346 = vunpack.c.l.b16 %v5090
        %v5347 = vunpack.c.l.b16 %v5091
        %v5348 = vunpack.c.l.b16 %v5092
        %v5349 = vunpack.c.l.b16 %v5093
        %v5350 = vunpack.c.l.b16 %v5094
        %v5351 = vunpack.c.l.b16 %v5095
        %v5352 = vunpack.c.l.b16 %v5096
        %v5353 = vunpack.c.l.b16 %v5097
        %v5354 = vunpack.c.l.b16 %v5098
        %v5355 = vunpack.c.l.b16 %v5099
        %v5356 = vunpack.c.l.b16 %v5100
        %v5357 = vunpack.c.l.b16 %v5101
        %v5358 = vunpack.c.l.b16 %v5102
        %v5359 = vunpack.c.l.b16 %v5103
        %v5360 = vunpack.c.l.b16 %v5104
        %v5361 = vunpack.c.l.b16 %v5105
        %v5362 = vunpack.c.l.b16 %v5106
        %v5363 = vunpack.c.l.b16 %v5107
        %v5364 = vunpack.c.l.b16 %v5108
        %v5365 = vunpack.c.l.b16 %v5109
        %v5366 = vunpack.c.l.b16 %v5110
        %v5367 = vunpack.c.l.b16 %v5111
        %v5368 = vunpack.c.l.b16 %v5112
        %v5369 = vunpack.c.l.b16 %v5113
        %v5370 = vunpack.c.l.b16 %v5114
        %v5371 = vunpack.c.l.b16 %v5115
        %v5372 = vunpack.c.l.b16 %v5116
        %v5373 = vunpack.c.l.b16 %v5117
        %v5374 = vunpack.c.l.b16 %v5118
        %v5375 = vunpack.c.l.b16 %v5119
        %v5376 = vunpack.c.l.b16 %v5120
        %v5377 = vunpack.c.l.b16 %v5121
        %v5378 = vunpack.c.l.b16 %v5122
        %v5379 = vunpack.c.l.b16 %v5123
        %v5380 = vunpack.c.l.b16 %v5124
        %v5381 = vunpack.c.l.b16 %v5125
        %v5382 = vunpack.c.l.b16 %v5126
        %v5383 = vunpack.c.l.b16 %v5127
        %v5384 = vunpack.c.l.b16 %v5128
        %v5385 = vunpack.c.l.b16 %v5129
        %v5386 = vunpack.c.l.b16 %v5130
        %v5387 = vunpack.c.l.b16 %v5131
        %v5388 = vunpack.c.l.b16 %v5132
        %v5389 = vunpack.c.l.b16 %v5133
        %v5390 = vunpack.c.l.b16 %v5134
        %v5391 = vunpack.c.l.b16 %v5135
        %v5392 = vunpack.c.l.b16 %v5136
        %v5393 = vunpack.c.l.b16 %v5137
        %v5394 = vunpack.c.l.b16 %v5138
        %v5395 = vunpack.c.l.b16 %v5139
        %v5396 = vunpack.c.l.b16 %v5140
        %v5397 = vunpack.c.l.b16 %v5141
        %v5398 = vunpack.c.l.b16 %v5142
        %v5399 = vunpack.c.l.b16 %v5143
        %v5400 = vunpack.c.l.b16 %v5144
        %v5401 = vunpack.c.l.b16 %v5145
        %v5402 = vunpack.c.l.b16 %v5146
        %v5403 = vunpack.c.l.b16 %v5147
        %v5404 = vunpack.c.l.b16 %v5148
        %v5405 = vunpack.c.l.b16 %v5149
        %v5406 = vunpack.c.l.b16 %v5150
        %v5407 = vunpack.c.l.b16 %v5151
        %v5408 = vunpack.c.l.b16 %v5152
        %v5409 = vunpack.c.l.b16 %v5153
        %v5410 = vunpack.c.l.b16 %v5154
        %v5411 = vunpack.c.l.b16 %v5155
        %v5412 = vunpack.c.l.b16 %v5156
        %v5413 = vunpack.c.l.b16 %v5157
        %v5414 = vunpack.c.l.b16 %v5158
        %v5415 = vunpack.c.l.b16 %v5159
        %v5416 = vunpack.c.l.b16 %v5160
        %v5417 = vunpack.c.l.b16 %v5161
        %v5418 = vunpack.c.l.b16 %v5162
        %v5419 = vunpack.c.l.b16 %v5163
        %v5420 = vunpack.c.l.b16 %v5164
        %v5421 = vunpack.c.l.b16 %v5165
        %v5422 = vunpack.c.l.b16 %v5166
        %v5423 = vunpack.c.l.b16 %v5167
        %v5424 = vunpack.c.l.b16 %v5168
        %v5425 = vunpack.c.l.b16 %v5169
        %v5426 = vunpack.c.l.b16 %v5170
        %v5427 = vunpack.c.l.b16 %v5171
        %v5428 = vunpack.c.l.b16 %v5172
        %v5429 = vunpack.c.l.b16 %v5173
        %v5430 = vpack.c.b16 %v5303, %v5302
        %v5431 = vpack.c.b16 %v5305, %v5304
        %v5432 = vpack.c.b16 %v5307, %v5306
        %v5433 = vpack.c.b16 %v5309, %v5308
        %v5434 = vpack.c.b16 %v5311, %v5310
        %v5435 = vpack.c.b16 %v5313, %v5312
        %v5436 = vpack.c.b16 %v5315, %v5314
        %v5437 = vpack.c.b16 %v5317, %v5316
        %v5438 = vpack.c.b16 %v5319, %v5318
        %v5439 = vpack.c.b16 %v5321, %v5320
        %v5440 = vpack.c.b16 %v5323, %v5322
        %v5441 = vpack.c.b16 %v5325, %v5324
        %v5442 = vpack.c.b16 %v5327, %v5326
        %v5443 = vpack.c.b16 %v5329, %v5328
        %v5444 = vpack.c.b16 %v5331, %v5330
        %v5445 = vpack.c.b16 %v5333, %v5332
        %v5446 = vpack.c.b16 %v5335, %v5334
        %v5447 = vpack.c.b16 %v5337, %v5336
        %v5448 = vpack.c.b16 %v5339, %v5338
        %v5449 = vpack.c.b16 %v5341, %v5340
        %v5450 = vpack.c.b16 %v5343, %v5342
        %v5451 = vpack.c.b16 %v5345, %v5344
        %v5452 = vpack.c.b16 %v5347, %v5346
        %v5453 = vpack.c.b16 %v5349, %v5348
        %v5454 = vpack.c.b16 %v5351, %v5350
        %v5455 = vpack.c.b16 %v5353, %v5352
        %v5456 = vpack.c.b16 %v5355, %v5354
        %v5457 = vpack.c.b16 %v5357, %v5356
        %v5458 = vpack.c.b16 %v5359, %v5358
        %v5459 = vpack.c.b16 %v5361, %v5360
        %v5460 = vpack.c.b16 %v5363, %v5362
        %v5461 = vpack.c.b16 %v5365, %v5364
        %v5462 = vpack.c.b16 %v5367, %v5366
        %v5463 = vpack.c.b16 %v5369, %v5368
        %v5464 = vpack.c.b16 %v5371, %v5370
        %v5465 = vpack.c.b16 %v5373, %v5372
        %v5466 = vpack.c.b16 %v5375, %v5374
        %v5467 = vpack.c.b16 %v5377, %v5376
        %v5468 = vpack.c.b16 %v5379, %v5378
        %v5469 = vpack.c.b16 %v5381, %v5380
        %v5470 = vpack.c.b16 %v5383, %v5382
        %v5471 = vpack.c.b16 %v5385, %v5384
        %v5472 = vpack.c.b16 %v5387, %v5386
        %v5473 = vpack.c.b16 %v5389, %v5388
        %v5474 = vpack.c.b16 %v5391, %v5390
        %v5475 = vpack.c.b16 %v5393, %v5392
        %v5476 = vpack.c.b16 %v5395, %v5394
        %v5477 = vpack.c.b16 %v5397, %v5396
        %v5478 = vpack.c.b16 %v5399, %v5398
        %v5479 = vpack.c.b16 %v5401, %v5400
        %v5480 = vpack.c.b16 %v5403, %v5402
        %v5481 = vpack.c.b16 %v5405, %v5404
        %v5482 = vpack.c.b16 %v5407, %v5406
        %v5483 = vpack.c.b16 %v5409, %v5408
        %v5484 = vpack.c.b16 %v5411, %v5410
        %v5485 = vpack.c.b16 %v5413, %v5412
        %v5486 = vpack.c.b16 %v5415, %v5414
        %v5487 = vpack.c.b16 %v5417, %v5416
        %v5488 = vpack.c.b16 %v5419, %v5418
        %v5489 = vpack.c.b16 %v5421, %v5420
        %v5490 = vpack.c.b16 %v5423, %v5422
        %v5491 = vpack.c.b16 %v5425, %v5424
        %v5492 = vpack.c.b16 %v5427, %v5426
        %v5493 = vpack.c.b16 %v5429, %v5428
        %5558 = vmatprep.subr.bf16.mxu0 0
        %5559 = vmatpush1.bf16.msra.mxu0 %v5437
        %5560 = vmatprep.subr.bf16.mxu0 0
        %5561 = vmatpush1.bf16.msra.mxu0 %v5436
        %5562 = vmatprep.subr.bf16.mxu0 0
        %5563 = vmatpush1.bf16.msra.mxu0 %v5435
        %5564 = vmatprep.subr.bf16.mxu0 0
        %5565 = vmatpush1.bf16.msra.mxu0 %v5434
        %5566 = vmatprep.subr.bf16.mxu0 0
        %5567 = vmatpush1.bf16.msra.mxu0 %v5433
        %5568 = vmatprep.subr.bf16.mxu0 0
        %5569 = vmatpush1.bf16.msra.mxu0 %v5432
        %5570 = vmatprep.subr.bf16.mxu0 0
        %5571 = vmatpush1.bf16.msra.mxu0 %v5431
        %5572 = vmatprep.subr.bf16.mxu0 0
        %5573 = vmatpush1.bf16.msra.mxu0 %v5430
        %5574 = vmatprep.subr.bf16.mxu0 0
        %5575 = vmatpush2.bf16.msra.mxu0 %v5445
        %5576 = vmatprep.subr.bf16.mxu0 0
        %5577 = vmatpush2.bf16.msra.mxu0 %v5444
        %5578 = vmatprep.subr.bf16.mxu0 0
        %5579 = vmatpush2.bf16.msra.mxu0 %v5443
        %5580 = vmatprep.subr.bf16.mxu0 0
        %5581 = vmatpush2.bf16.msra.mxu0 %v5442
        %5582 = vmatprep.subr.bf16.mxu0 0
        %5583 = vmatpush2.bf16.msra.mxu0 %v5441
        %5584 = vmatprep.subr.bf16.mxu0 0
        %5585 = vmatpush2.bf16.msra.mxu0 %v5440
        %5586 = vmatprep.subr.bf16.mxu0 0
        %5587 = vmatpush2.bf16.msra.mxu0 %v5439
        %5588 = vmatprep.subr.bf16.mxu0 0
        %5589 = vmatpush2.bf16.msra.mxu0 %v5438
        %5590 = vmatprep.mubr.bf16.mxu0 %v4919
        %5591 = vmatmul.mubr.bf16.gmra.mxu0 %v4918
        %v5592 = vpop.f32.mrf.mxu0
        %v5593 = vadd.f32 0.0, %v5592
        %v5594 = vpop.f32.mrf.mxu0
        %v5595 = vpop.f32.mrf.mxu0
        %v5596 = vadd.f32 0.0, %v5595
        %v5597 = vpop.f32.mrf.mxu0
        %5598 = vmatprep.mubr.bf16.mxu0 %v4927
        %5599 = vmatmul.mubr.bf16.gmra.mxu0 %v4926
        %v5600 = vpop.f32.mrf.mxu0
        %v5601 = vadd.f32 0.0, %v5600
        %v5602 = vpop.f32.mrf.mxu0
        %v5603 = vpop.f32.mrf.mxu0
        %v5604 = vadd.f32 0.0, %v5603
        %v5605 = vpop.f32.mrf.mxu0
        %5606 = vmatprep.mubr.bf16.mxu0 %v4935
        %5607 = vmatmul.mubr.bf16.gmra.mxu0 %v4934
        %v5608 = vpop.f32.mrf.mxu0
        %v5609 = vadd.f32 0.0, %v5608
        %v5610 = vpop.f32.mrf.mxu0
        %v5611 = vpop.f32.mrf.mxu0
        %v5612 = vadd.f32 0.0, %v5611
        %v5613 = vpop.f32.mrf.mxu0
        %5614 = vmatprep.mubr.bf16.mxu0 %v4943
        %5615 = vmatmul.mubr.bf16.gmra.mxu0 %v4942
        %v5616 = vpop.f32.mrf.mxu0
        %v5617 = vadd.f32 0.0, %v5616
        %v5618 = vpop.f32.mrf.mxu0
        %v5619 = vpop.f32.mrf.mxu0
        %v5620 = vadd.f32 0.0, %v5619
        %v5621 = vpop.f32.mrf.mxu0
        %5622 = vmatprep.mubr.bf16.mxu0 %v4951
        %5623 = vmatmul.mubr.bf16.gmra.mxu0 %v4950
        %v5624 = vpop.f32.mrf.mxu0
        %v5625 = vadd.f32 0.0, %v5624
        %v5626 = vpop.f32.mrf.mxu0
        %v5627 = vpop.f32.mrf.mxu0
        %v5628 = vadd.f32 0.0, %v5627
        %v5629 = vpop.f32.mrf.mxu0
        %5630 = vmatprep.mubr.bf16.mxu0 %v4959
        %5631 = vmatmul.mubr.bf16.gmra.mxu0 %v4958
        %v5632 = vpop.f32.mrf.mxu0
        %v5633 = vadd.f32 0.0, %v5632
        %v5634 = vpop.f32.mrf.mxu0
        %v5635 = vpop.f32.mrf.mxu0
        %v5636 = vadd.f32 0.0, %v5635
        %v5637 = vpop.f32.mrf.mxu0
        %5638 = vmatprep.mubr.bf16.mxu0 %v4967
        %5639 = vmatmul.mubr.bf16.gmra.mxu0 %v4966
        %v5640 = vpop.f32.mrf.mxu0
        %v5641 = vadd.f32 0.0, %v5640
        %v5642 = vpop.f32.mrf.mxu0
        %v5643 = vpop.f32.mrf.mxu0
        %v5644 = vadd.f32 0.0, %v5643
        %v5645 = vpop.f32.mrf.mxu0
        %5646 = vmatprep.mubr.bf16.mxu0 %v4975
        %5647 = vmatmul.mubr.bf16.gmra.mxu0 %v4974
        %v5648 = vpop.f32.mrf.mxu0
        %v5649 = vadd.f32 0.0, %v5648
        %v5650 = vpop.f32.mrf.mxu0
        %v5651 = vpop.f32.mrf.mxu0
        %v5652 = vadd.f32 0.0, %v5651
        %v5653 = vpop.f32.mrf.mxu0
        %5654 = vmatprep.mubr.bf16.mxu0 %v4983
        %5655 = vmatmul.mubr.bf16.gmra.mxu0 %v4982
        %v5656 = vpop.f32.mrf.mxu0
        %v5657 = vadd.f32 0.0, %v5656
        %v5658 = vpop.f32.mrf.mxu0
        %v5659 = vpop.f32.mrf.mxu0
        %v5660 = vadd.f32 0.0, %v5659
        %v5661 = vpop.f32.mrf.mxu0
        %5662 = vmatprep.mubr.bf16.mxu0 %v4991
        %5663 = vmatmul.mubr.bf16.gmra.mxu0 %v4990
        %v5664 = vpop.f32.mrf.mxu0
        %v5665 = vadd.f32 0.0, %v5664
        %v5666 = vpop.f32.mrf.mxu0
        %v5667 = vpop.f32.mrf.mxu0
        %v5668 = vadd.f32 0.0, %v5667
        %v5669 = vpop.f32.mrf.mxu0
        %5670 = vmatprep.mubr.bf16.mxu0 %v4999
        %5671 = vmatmul.mubr.bf16.gmra.mxu0 %v4998
        %v5672 = vpop.f32.mrf.mxu0
        %v5673 = vadd.f32 0.0, %v5672
        %v5674 = vpop.f32.mrf.mxu0
        %v5675 = vpop.f32.mrf.mxu0
        %v5676 = vadd.f32 0.0, %v5675
        %v5677 = vpop.f32.mrf.mxu0
        %5678 = vmatprep.mubr.bf16.mxu0 %v5007
        %5679 = vmatmul.mubr.bf16.gmra.mxu0 %v5006
        %v5680 = vpop.f32.mrf.mxu0
        %v5681 = vadd.f32 0.0, %v5680
        %v5682 = vpop.f32.mrf.mxu0
        %v5683 = vpop.f32.mrf.mxu0
        %v5684 = vadd.f32 0.0, %v5683
        %v5685 = vpop.f32.mrf.mxu0
        %5686 = vmatprep.mubr.bf16.mxu0 %v5015
        %5687 = vmatmul.mubr.bf16.gmra.mxu0 %v5014
        %v5688 = vpop.f32.mrf.mxu0
        %v5689 = vadd.f32 0.0, %v5688
        %v5690 = vpop.f32.mrf.mxu0
        %v5691 = vpop.f32.mrf.mxu0
        %v5692 = vadd.f32 0.0, %v5691
        %v5693 = vpop.f32.mrf.mxu0
        %5694 = vmatprep.mubr.bf16.mxu0 %v5023
        %5695 = vmatmul.mubr.bf16.gmra.mxu0 %v5022
        %v5696 = vpop.f32.mrf.mxu0
        %v5697 = vadd.f32 0.0, %v5696
        %v5698 = vpop.f32.mrf.mxu0
        %v5699 = vpop.f32.mrf.mxu0
        %v5700 = vadd.f32 0.0, %v5699
        %v5701 = vpop.f32.mrf.mxu0
        %5702 = vmatprep.mubr.bf16.mxu0 %v5031
        %5703 = vmatmul.mubr.bf16.gmra.mxu0 %v5030
        %v5704 = vpop.f32.mrf.mxu0
        %v5705 = vadd.f32 0.0, %v5704
        %v5706 = vpop.f32.mrf.mxu0
        %v5707 = vpop.f32.mrf.mxu0
        %v5708 = vadd.f32 0.0, %v5707
        %v5709 = vpop.f32.mrf.mxu0
        %5710 = vmatprep.mubr.bf16.mxu0 %v5039
        %5711 = vmatmul.mubr.bf16.gmra.mxu0 %v5038
        %v5712 = vpop.f32.mrf.mxu0
        %v5713 = vadd.f32 0.0, %v5712
        %v5714 = vpop.f32.mrf.mxu0
        %v5715 = vpop.f32.mrf.mxu0
        %v5716 = vadd.f32 0.0, %v5715
        %v5717 = vpop.f32.mrf.mxu0
        %5718 = vdwg.mxu0
        %5719 = vmatprep.subr.bf16.mxu0 0
        %5720 = vmatpush1.bf16.msra.mxu0 %v5453
        %5721 = vmatprep.subr.bf16.mxu0 0
        %5722 = vmatpush1.bf16.msra.mxu0 %v5452
        %5723 = vmatprep.subr.bf16.mxu0 0
        %5724 = vmatpush1.bf16.msra.mxu0 %v5451
        %5725 = vmatprep.subr.bf16.mxu0 0
        %5726 = vmatpush1.bf16.msra.mxu0 %v5450
        %5727 = vmatprep.subr.bf16.mxu0 0
        %5728 = vmatpush1.bf16.msra.mxu0 %v5449
        %5729 = vmatprep.subr.bf16.mxu0 0
        %5730 = vmatpush1.bf16.msra.mxu0 %v5448
        %5731 = vmatprep.subr.bf16.mxu0 0
        %5732 = vmatpush1.bf16.msra.mxu0 %v5447
        %5733 = vmatprep.subr.bf16.mxu0 0
        %5734 = vmatpush1.bf16.msra.mxu0 %v5446
        %5735 = vmatprep.subr.bf16.mxu0 0
        %5736 = vmatpush2.bf16.msra.mxu0 %v5461
        %5737 = vmatprep.subr.bf16.mxu0 0
        %5738 = vmatpush2.bf16.msra.mxu0 %v5460
        %5739 = vmatprep.subr.bf16.mxu0 0
        %5740 = vmatpush2.bf16.msra.mxu0 %v5459
        %5741 = vmatprep.subr.bf16.mxu0 0
        %5742 = vmatpush2.bf16.msra.mxu0 %v5458
        %5743 = vmatprep.subr.bf16.mxu0 0
        %5744 = vmatpush2.bf16.msra.mxu0 %v5457
        %5745 = vmatprep.subr.bf16.mxu0 0
        %5746 = vmatpush2.bf16.msra.mxu0 %v5456
        %5747 = vmatprep.subr.bf16.mxu0 0
        %5748 = vmatpush2.bf16.msra.mxu0 %v5455
        %5749 = vmatprep.subr.bf16.mxu0 0
        %5750 = vmatpush2.bf16.msra.mxu0 %v5454
        %5751 = vmatprep.mubr.bf16.mxu0 %v4921
        %5752 = vmatmul.mubr.bf16.gmra.mxu0 %v4920
        %v5753 = vpop.f32.mrf.mxu0
        %v5754 = vadd.f32 %v5593, %v5753
        %v5755 = vpop.f32.mrf.mxu0
        %v5756 = vpop.f32.mrf.mxu0
        %v5757 = vadd.f32 %v5596, %v5756
        %v5758 = vpop.f32.mrf.mxu0
        %5759 = vmatprep.mubr.bf16.mxu0 %v4929
        %5760 = vmatmul.mubr.bf16.gmra.mxu0 %v4928
        %v5761 = vpop.f32.mrf.mxu0
        %v5762 = vadd.f32 %v5601, %v5761
        %v5763 = vpop.f32.mrf.mxu0
        %v5764 = vpop.f32.mrf.mxu0
        %v5765 = vadd.f32 %v5604, %v5764
        %v5766 = vpop.f32.mrf.mxu0
        %5767 = vmatprep.mubr.bf16.mxu0 %v4937
        %5768 = vmatmul.mubr.bf16.gmra.mxu0 %v4936
        %v5769 = vpop.f32.mrf.mxu0
        %v5770 = vadd.f32 %v5609, %v5769
        %v5771 = vpop.f32.mrf.mxu0
        %v5772 = vpop.f32.mrf.mxu0
        %v5773 = vadd.f32 %v5612, %v5772
        %v5774 = vpop.f32.mrf.mxu0
        %5775 = vmatprep.mubr.bf16.mxu0 %v4945
        %5776 = vmatmul.mubr.bf16.gmra.mxu0 %v4944
        %v5777 = vpop.f32.mrf.mxu0
        %v5778 = vadd.f32 %v5617, %v5777
        %v5779 = vpop.f32.mrf.mxu0
        %v5780 = vpop.f32.mrf.mxu0
        %v5781 = vadd.f32 %v5620, %v5780
        %v5782 = vpop.f32.mrf.mxu0
        %5783 = vmatprep.mubr.bf16.mxu0 %v4953
        %5784 = vmatmul.mubr.bf16.gmra.mxu0 %v4952
        %v5785 = vpop.f32.mrf.mxu0
        %v5786 = vadd.f32 %v5625, %v5785
        %v5787 = vpop.f32.mrf.mxu0
        %v5788 = vpop.f32.mrf.mxu0
        %v5789 = vadd.f32 %v5628, %v5788
        %v5790 = vpop.f32.mrf.mxu0
        %5791 = vmatprep.mubr.bf16.mxu0 %v4961
        %5792 = vmatmul.mubr.bf16.gmra.mxu0 %v4960
        %v5793 = vpop.f32.mrf.mxu0
        %v5794 = vadd.f32 %v5633, %v5793
        %v5795 = vpop.f32.mrf.mxu0
        %v5796 = vpop.f32.mrf.mxu0
        %v5797 = vadd.f32 %v5636, %v5796
        %v5798 = vpop.f32.mrf.mxu0
        %5799 = vmatprep.mubr.bf16.mxu0 %v4969
        %5800 = vmatmul.mubr.bf16.gmra.mxu0 %v4968
        %v5801 = vpop.f32.mrf.mxu0
        %v5802 = vadd.f32 %v5641, %v5801
        %v5803 = vpop.f32.mrf.mxu0
        %v5804 = vpop.f32.mrf.mxu0
        %v5805 = vadd.f32 %v5644, %v5804
        %v5806 = vpop.f32.mrf.mxu0
        %5807 = vmatprep.mubr.bf16.mxu0 %v4977
        %5808 = vmatmul.mubr.bf16.gmra.mxu0 %v4976
        %v5809 = vpop.f32.mrf.mxu0
        %v5810 = vadd.f32 %v5649, %v5809
        %v5811 = vpop.f32.mrf.mxu0
        %v5812 = vpop.f32.mrf.mxu0
        %v5813 = vadd.f32 %v5652, %v5812
        %v5814 = vpop.f32.mrf.mxu0
        %5815 = vmatprep.mubr.bf16.mxu0 %v4985
        %5816 = vmatmul.mubr.bf16.gmra.mxu0 %v4984
        %v5817 = vpop.f32.mrf.mxu0
        %v5818 = vadd.f32 %v5657, %v5817
        %v5819 = vpop.f32.mrf.mxu0
        %v5820 = vpop.f32.mrf.mxu0
        %v5821 = vadd.f32 %v5660, %v5820
        %v5822 = vpop.f32.mrf.mxu0
        %5823 = vmatprep.mubr.bf16.mxu0 %v4993
        %5824 = vmatmul.mubr.bf16.gmra.mxu0 %v4992
        %v5825 = vpop.f32.mrf.mxu0
        %v5826 = vadd.f32 %v5665, %v5825
        %v5827 = vpop.f32.mrf.mxu0
        %v5828 = vpop.f32.mrf.mxu0
        %v5829 = vadd.f32 %v5668, %v5828
        %v5830 = vpop.f32.mrf.mxu0
        %5831 = vmatprep.mubr.bf16.mxu0 %v5001
        %5832 = vmatmul.mubr.bf16.gmra.mxu0 %v5000
        %v5833 = vpop.f32.mrf.mxu0
        %v5834 = vadd.f32 %v5673, %v5833
        %v5835 = vpop.f32.mrf.mxu0
        %v5836 = vpop.f32.mrf.mxu0
        %v5837 = vadd.f32 %v5676, %v5836
        %v5838 = vpop.f32.mrf.mxu0
        %5839 = vmatprep.mubr.bf16.mxu0 %v5009
        %5840 = vmatmul.mubr.bf16.gmra.mxu0 %v5008
        %v5841 = vpop.f32.mrf.mxu0
        %v5842 = vadd.f32 %v5681, %v5841
        %v5843 = vpop.f32.mrf.mxu0
        %v5844 = vpop.f32.mrf.mxu0
        %v5845 = vadd.f32 %v5684, %v5844
        %v5846 = vpop.f32.mrf.mxu0
        %5847 = vmatprep.mubr.bf16.mxu0 %v5017
        %5848 = vmatmul.mubr.bf16.gmra.mxu0 %v5016
        %v5849 = vpop.f32.mrf.mxu0
        %v5850 = vadd.f32 %v5689, %v5849
        %v5851 = vpop.f32.mrf.mxu0
        %v5852 = vpop.f32.mrf.mxu0
        %v5853 = vadd.f32 %v5692, %v5852
        %v5854 = vpop.f32.mrf.mxu0
        %5855 = vmatprep.mubr.bf16.mxu0 %v5025
        %5856 = vmatmul.mubr.bf16.gmra.mxu0 %v5024
        %v5857 = vpop.f32.mrf.mxu0
        %v5858 = vadd.f32 %v5697, %v5857
        %v5859 = vpop.f32.mrf.mxu0
        %v5860 = vpop.f32.mrf.mxu0
        %v5861 = vadd.f32 %v5700, %v5860
        %v5862 = vpop.f32.mrf.mxu0
        %5863 = vmatprep.mubr.bf16.mxu0 %v5033
        %5864 = vmatmul.mubr.bf16.gmra.mxu0 %v5032
        %v5865 = vpop.f32.mrf.mxu0
        %v5866 = vadd.f32 %v5705, %v5865
        %v5867 = vpop.f32.mrf.mxu0
        %v5868 = vpop.f32.mrf.mxu0
        %v5869 = vadd.f32 %v5708, %v5868
        %v5870 = vpop.f32.mrf.mxu0
        %5871 = vmatprep.mubr.bf16.mxu0 %v5041
        %5872 = vmatmul.mubr.bf16.gmra.mxu0 %v5040
        %v5873 = vpop.f32.mrf.mxu0
        %v5874 = vadd.f32 %v5713, %v5873
        %v5875 = vpop.f32.mrf.mxu0
        %v5876 = vpop.f32.mrf.mxu0
        %v5877 = vadd.f32 %v5716, %v5876
        %v5878 = vpop.f32.mrf.mxu0
        %5879 = vdwg.mxu0
        %5880 = vmatprep.subr.bf16.mxu0 0
        %5881 = vmatpush1.bf16.msra.mxu0 %v5469
        %5882 = vmatprep.subr.bf16.mxu0 0
        %5883 = vmatpush1.bf16.msra.mxu0 %v5468
        %5884 = vmatprep.subr.bf16.mxu0 0
        %5885 = vmatpush1.bf16.msra.mxu0 %v5467
        %5886 = vmatprep.subr.bf16.mxu0 0
        %5887 = vmatpush1.bf16.msra.mxu0 %v5466
        %5888 = vmatprep.subr.bf16.mxu0 0
        %5889 = vmatpush1.bf16.msra.mxu0 %v5465
        %5890 = vmatprep.subr.bf16.mxu0 0
        %5891 = vmatpush1.bf16.msra.mxu0 %v5464
        %5892 = vmatprep.subr.bf16.mxu0 0
        %5893 = vmatpush1.bf16.msra.mxu0 %v5463
        %5894 = vmatprep.subr.bf16.mxu0 0
        %5895 = vmatpush1.bf16.msra.mxu0 %v5462
        %5896 = vmatprep.subr.bf16.mxu0 0
        %5897 = vmatpush2.bf16.msra.mxu0 %v5477
        %5898 = vmatprep.subr.bf16.mxu0 0
        %5899 = vmatpush2.bf16.msra.mxu0 %v5476
        %5900 = vmatprep.subr.bf16.mxu0 0
        %5901 = vmatpush2.bf16.msra.mxu0 %v5475
        %5902 = vmatprep.subr.bf16.mxu0 0
        %5903 = vmatpush2.bf16.msra.mxu0 %v5474
        %5904 = vmatprep.subr.bf16.mxu0 0
        %5905 = vmatpush2.bf16.msra.mxu0 %v5473
        %5906 = vmatprep.subr.bf16.mxu0 0
        %5907 = vmatpush2.bf16.msra.mxu0 %v5472
        %5908 = vmatprep.subr.bf16.mxu0 0
        %5909 = vmatpush2.bf16.msra.mxu0 %v5471
        %5910 = vmatprep.subr.bf16.mxu0 0
        %5911 = vmatpush2.bf16.msra.mxu0 %v5470
        %5912 = vmatprep.mubr.bf16.mxu0 %v4923
        %5913 = vmatmul.mubr.bf16.gmra.mxu0 %v4922
        %v5914 = vpop.f32.mrf.mxu0
        %v5915 = vadd.f32 %v5754, %v5914
        %v5916 = vpop.f32.mrf.mxu0
        %v5917 = vpop.f32.mrf.mxu0
        %v5918 = vadd.f32 %v5757, %v5917
        %v5919 = vpop.f32.mrf.mxu0
        %5920 = vmatprep.mubr.bf16.mxu0 %v4931
        %5921 = vmatmul.mubr.bf16.gmra.mxu0 %v4930
        %v5922 = vpop.f32.mrf.mxu0
        %v5923 = vadd.f32 %v5762, %v5922
        %v5924 = vpop.f32.mrf.mxu0
        %v5925 = vpop.f32.mrf.mxu0
        %v5926 = vadd.f32 %v5765, %v5925
        %v5927 = vpop.f32.mrf.mxu0
        %5928 = vmatprep.mubr.bf16.mxu0 %v4939
        %5929 = vmatmul.mubr.bf16.gmra.mxu0 %v4938
        %v5930 = vpop.f32.mrf.mxu0
        %v5931 = vadd.f32 %v5770, %v5930
        %v5932 = vpop.f32.mrf.mxu0
        %v5933 = vpop.f32.mrf.mxu0
        %v5934 = vadd.f32 %v5773, %v5933
        %v5935 = vpop.f32.mrf.mxu0
        %5936 = vmatprep.mubr.bf16.mxu0 %v4947
        %5937 = vmatmul.mubr.bf16.gmra.mxu0 %v4946
        %v5938 = vpop.f32.mrf.mxu0
        %v5939 = vadd.f32 %v5778, %v5938
        %v5940 = vpop.f32.mrf.mxu0
        %v5941 = vpop.f32.mrf.mxu0
        %v5942 = vadd.f32 %v5781, %v5941
        %v5943 = vpop.f32.mrf.mxu0
        %5944 = vmatprep.mubr.bf16.mxu0 %v4955
        %5945 = vmatmul.mubr.bf16.gmra.mxu0 %v4954
        %v5946 = vpop.f32.mrf.mxu0
        %v5947 = vadd.f32 %v5786, %v5946
        %v5948 = vpop.f32.mrf.mxu0
        %v5949 = vpop.f32.mrf.mxu0
        %v5950 = vadd.f32 %v5789, %v5949
        %v5951 = vpop.f32.mrf.mxu0
        %5952 = vmatprep.mubr.bf16.mxu0 %v4963
        %5953 = vmatmul.mubr.bf16.gmra.mxu0 %v4962
        %v5954 = vpop.f32.mrf.mxu0
        %v5955 = vadd.f32 %v5794, %v5954
        %v5956 = vpop.f32.mrf.mxu0
        %v5957 = vpop.f32.mrf.mxu0
        %v5958 = vadd.f32 %v5797, %v5957
        %v5959 = vpop.f32.mrf.mxu0
        %5960 = vmatprep.mubr.bf16.mxu0 %v4971
        %5961 = vmatmul.mubr.bf16.gmra.mxu0 %v4970
        %v5962 = vpop.f32.mrf.mxu0
        %v5963 = vadd.f32 %v5802, %v5962
        %v5964 = vpop.f32.mrf.mxu0
        %v5965 = vpop.f32.mrf.mxu0
        %v5966 = vadd.f32 %v5805, %v5965
        %v5967 = vpop.f32.mrf.mxu0
        %5968 = vmatprep.mubr.bf16.mxu0 %v4979
        %5969 = vmatmul.mubr.bf16.gmra.mxu0 %v4978
        %v5970 = vpop.f32.mrf.mxu0
        %v5971 = vadd.f32 %v5810, %v5970
        %v5972 = vpop.f32.mrf.mxu0
        %v5973 = vpop.f32.mrf.mxu0
        %v5974 = vadd.f32 %v5813, %v5973
        %v5975 = vpop.f32.mrf.mxu0
        %5976 = vmatprep.mubr.bf16.mxu0 %v4987
        %5977 = vmatmul.mubr.bf16.gmra.mxu0 %v4986
        %v5978 = vpop.f32.mrf.mxu0
        %v5979 = vadd.f32 %v5818, %v5978
        %v5980 = vpop.f32.mrf.mxu0
        %v5981 = vpop.f32.mrf.mxu0
        %v5982 = vadd.f32 %v5821, %v5981
        %v5983 = vpop.f32.mrf.mxu0
        %5984 = vmatprep.mubr.bf16.mxu0 %v4995
        %5985 = vmatmul.mubr.bf16.gmra.mxu0 %v4994
        %v5986 = vpop.f32.mrf.mxu0
        %v5987 = vadd.f32 %v5826, %v5986
        %v5988 = vpop.f32.mrf.mxu0
        %v5989 = vpop.f32.mrf.mxu0
        %v5990 = vadd.f32 %v5829, %v5989
        %v5991 = vpop.f32.mrf.mxu0
        %5992 = vmatprep.mubr.bf16.mxu0 %v5003
        %5993 = vmatmul.mubr.bf16.gmra.mxu0 %v5002
        %v5994 = vpop.f32.mrf.mxu0
        %v5995 = vadd.f32 %v5834, %v5994
        %v5996 = vpop.f32.mrf.mxu0
        %v5997 = vpop.f32.mrf.mxu0
        %v5998 = vadd.f32 %v5837, %v5997
        %v5999 = vpop.f32.mrf.mxu0
        %6000 = vmatprep.mubr.bf16.mxu0 %v5011
        %6001 = vmatmul.mubr.bf16.gmra.mxu0 %v5010
        %v6002 = vpop.f32.mrf.mxu0
        %v6003 = vadd.f32 %v5842, %v6002
        %v6004 = vpop.f32.mrf.mxu0
        %v6005 = vpop.f32.mrf.mxu0
        %v6006 = vadd.f32 %v5845, %v6005
        %v6007 = vpop.f32.mrf.mxu0
        %6008 = vmatprep.mubr.bf16.mxu0 %v5019
        %6009 = vmatmul.mubr.bf16.gmra.mxu0 %v5018
        %v6010 = vpop.f32.mrf.mxu0
        %v6011 = vadd.f32 %v5850, %v6010
        %v6012 = vpop.f32.mrf.mxu0
        %v6013 = vpop.f32.mrf.mxu0
        %v6014 = vadd.f32 %v5853, %v6013
        %v6015 = vpop.f32.mrf.mxu0
        %6016 = vmatprep.mubr.bf16.mxu0 %v5027
        %6017 = vmatmul.mubr.bf16.gmra.mxu0 %v5026
        %v6018 = vpop.f32.mrf.mxu0
        %v6019 = vadd.f32 %v5858, %v6018
        %v6020 = vpop.f32.mrf.mxu0
        %v6021 = vpop.f32.mrf.mxu0
        %v6022 = vadd.f32 %v5861, %v6021
        %v6023 = vpop.f32.mrf.mxu0
        %6024 = vmatprep.mubr.bf16.mxu0 %v5035
        %6025 = vmatmul.mubr.bf16.gmra.mxu0 %v5034
        %v6026 = vpop.f32.mrf.mxu0
        %v6027 = vadd.f32 %v5866, %v6026
        %v6028 = vpop.f32.mrf.mxu0
        %v6029 = vpop.f32.mrf.mxu0
        %v6030 = vadd.f32 %v5869, %v6029
        %v6031 = vpop.f32.mrf.mxu0
        %6032 = vmatprep.mubr.bf16.mxu0 %v5043
        %6033 = vmatmul.mubr.bf16.gmra.mxu0 %v5042
        %v6034 = vpop.f32.mrf.mxu0
        %v6035 = vadd.f32 %v5874, %v6034
        %v6036 = vpop.f32.mrf.mxu0
        %v6037 = vpop.f32.mrf.mxu0
        %v6038 = vadd.f32 %v5877, %v6037
        %v6039 = vpop.f32.mrf.mxu0
        %6040 = vdwg.mxu0
        %6041 = vmatprep.subr.bf16.mxu0 0
        %6042 = vmatpush1.bf16.msra.mxu0 %v5485
        %6043 = vmatprep.subr.bf16.mxu0 0
        %6044 = vmatpush1.bf16.msra.mxu0 %v5484
        %6045 = vmatprep.subr.bf16.mxu0 0
        %6046 = vmatpush1.bf16.msra.mxu0 %v5483
        %6047 = vmatprep.subr.bf16.mxu0 0
        %6048 = vmatpush1.bf16.msra.mxu0 %v5482
        %6049 = vmatprep.subr.bf16.mxu0 0
        %6050 = vmatpush1.bf16.msra.mxu0 %v5481
        %6051 = vmatprep.subr.bf16.mxu0 0
        %6052 = vmatpush1.bf16.msra.mxu0 %v5480
        %6053 = vmatprep.subr.bf16.mxu0 0
        %6054 = vmatpush1.bf16.msra.mxu0 %v5479
        %6055 = vmatprep.subr.bf16.mxu0 0
        %6056 = vmatpush1.bf16.msra.mxu0 %v5478
        %6057 = vmatprep.subr.bf16.mxu0 0
        %6058 = vmatpush2.bf16.msra.mxu0 %v5493
        %6059 = vmatprep.subr.bf16.mxu0 0
        %6060 = vmatpush2.bf16.msra.mxu0 %v5492
        %6061 = vmatprep.subr.bf16.mxu0 0
        %6062 = vmatpush2.bf16.msra.mxu0 %v5491
        %6063 = vmatprep.subr.bf16.mxu0 0
        %6064 = vmatpush2.bf16.msra.mxu0 %v5490
        %6065 = vmatprep.subr.bf16.mxu0 0
        %6066 = vmatpush2.bf16.msra.mxu0 %v5489
        %6067 = vmatprep.subr.bf16.mxu0 0
        %6068 = vmatpush2.bf16.msra.mxu0 %v5488
        %6069 = vmatprep.subr.bf16.mxu0 0
        %6070 = vmatpush2.bf16.msra.mxu0 %v5487
        %6071 = vmatprep.subr.bf16.mxu0 0
        %6072 = vmatpush2.bf16.msra.mxu0 %v5486
        %6073 = vmatprep.mubr.bf16.mxu0 %v4925
        %6074 = vmatmul.mubr.bf16.gmra.mxu0 %v4924
        %v6075 = vpop.f32.mrf.mxu0
        %v6076 = vadd.f32 %v5915, %v6075
        %v6077 = vpop.f32.mrf.mxu0
        %v6078 = vpop.f32.mrf.mxu0
        %v6079 = vadd.f32 %v5918, %v6078
        %v6080 = vpop.f32.mrf.mxu0
        %6081 = vmatprep.mubr.bf16.mxu0 %v4933
        %6082 = vmatmul.mubr.bf16.gmra.mxu0 %v4932
        %v6083 = vpop.f32.mrf.mxu0
        %v6084 = vadd.f32 %v5923, %v6083
        %v6085 = vpop.f32.mrf.mxu0
        %v6086 = vpop.f32.mrf.mxu0
        %v6087 = vadd.f32 %v5926, %v6086
        %v6088 = vpop.f32.mrf.mxu0
        %6089 = vmatprep.mubr.bf16.mxu0 %v4941
        %6090 = vmatmul.mubr.bf16.gmra.mxu0 %v4940
        %v6091 = vpop.f32.mrf.mxu0
        %v6092 = vadd.f32 %v5931, %v6091
        %v6093 = vpop.f32.mrf.mxu0
        %v6094 = vpop.f32.mrf.mxu0
        %v6095 = vadd.f32 %v5934, %v6094
        %v6096 = vpop.f32.mrf.mxu0
        %6097 = vmatprep.mubr.bf16.mxu0 %v4949
        %6098 = vmatmul.mubr.bf16.gmra.mxu0 %v4948
        %v6099 = vpop.f32.mrf.mxu0
        %v6100 = vadd.f32 %v5939, %v6099
        %v6101 = vpop.f32.mrf.mxu0
        %v6102 = vpop.f32.mrf.mxu0
        %v6103 = vadd.f32 %v5942, %v6102
        %v6104 = vpop.f32.mrf.mxu0
        %6105 = vmatprep.mubr.bf16.mxu0 %v4957
        %6106 = vmatmul.mubr.bf16.gmra.mxu0 %v4956
        %v6107 = vpop.f32.mrf.mxu0
        %v6108 = vadd.f32 %v5947, %v6107
        %v6109 = vpop.f32.mrf.mxu0
        %v6110 = vpop.f32.mrf.mxu0
        %v6111 = vadd.f32 %v5950, %v6110
        %v6112 = vpop.f32.mrf.mxu0
        %6113 = vmatprep.mubr.bf16.mxu0 %v4965
        %6114 = vmatmul.mubr.bf16.gmra.mxu0 %v4964
        %v6115 = vpop.f32.mrf.mxu0
        %v6116 = vadd.f32 %v5955, %v6115
        %v6117 = vpop.f32.mrf.mxu0
        %v6118 = vpop.f32.mrf.mxu0
        %v6119 = vadd.f32 %v5958, %v6118
        %v6120 = vpop.f32.mrf.mxu0
        %6121 = vmatprep.mubr.bf16.mxu0 %v4973
        %6122 = vmatmul.mubr.bf16.gmra.mxu0 %v4972
        %v6123 = vpop.f32.mrf.mxu0
        %v6124 = vadd.f32 %v5963, %v6123
        %v6125 = vpop.f32.mrf.mxu0
        %v6126 = vpop.f32.mrf.mxu0
        %v6127 = vadd.f32 %v5966, %v6126
        %v6128 = vpop.f32.mrf.mxu0
        %6129 = vmatprep.mubr.bf16.mxu0 %v4981
        %6130 = vmatmul.mubr.bf16.gmra.mxu0 %v4980
        %v6131 = vpop.f32.mrf.mxu0
        %v6132 = vadd.f32 %v5971, %v6131
        %v6133 = vpop.f32.mrf.mxu0
        %v6134 = vpop.f32.mrf.mxu0
        %v6135 = vadd.f32 %v5974, %v6134
        %v6136 = vpop.f32.mrf.mxu0
        %6137 = vmatprep.mubr.bf16.mxu0 %v4989
        %6138 = vmatmul.mubr.bf16.gmra.mxu0 %v4988
        %v6139 = vpop.f32.mrf.mxu0
        %v6140 = vadd.f32 %v5979, %v6139
        %v6141 = vpop.f32.mrf.mxu0
        %v6142 = vpop.f32.mrf.mxu0
        %v6143 = vadd.f32 %v5982, %v6142
        %v6144 = vpop.f32.mrf.mxu0
        %6145 = vmatprep.mubr.bf16.mxu0 %v4997
        %6146 = vmatmul.mubr.bf16.gmra.mxu0 %v4996
        %v6147 = vpop.f32.mrf.mxu0
        %v6148 = vadd.f32 %v5987, %v6147
        %v6149 = vpop.f32.mrf.mxu0
        %v6150 = vpop.f32.mrf.mxu0
        %v6151 = vadd.f32 %v5990, %v6150
        %v6152 = vpop.f32.mrf.mxu0
        %6153 = vmatprep.mubr.bf16.mxu0 %v5005
        %6154 = vmatmul.mubr.bf16.gmra.mxu0 %v5004
        %v6155 = vpop.f32.mrf.mxu0
        %v6156 = vadd.f32 %v5995, %v6155
        %v6157 = vpop.f32.mrf.mxu0
        %v6158 = vpop.f32.mrf.mxu0
        %v6159 = vadd.f32 %v5998, %v6158
        %v6160 = vpop.f32.mrf.mxu0
        %6161 = vmatprep.mubr.bf16.mxu0 %v5013
        %6162 = vmatmul.mubr.bf16.gmra.mxu0 %v5012
        %v6163 = vpop.f32.mrf.mxu0
        %v6164 = vadd.f32 %v6003, %v6163
        %v6165 = vpop.f32.mrf.mxu0
        %v6166 = vpop.f32.mrf.mxu0
        %v6167 = vadd.f32 %v6006, %v6166
        %v6168 = vpop.f32.mrf.mxu0
        %6169 = vmatprep.mubr.bf16.mxu0 %v5021
        %6170 = vmatmul.mubr.bf16.gmra.mxu0 %v5020
        %v6171 = vpop.f32.mrf.mxu0
        %v6172 = vadd.f32 %v6011, %v6171
        %v6173 = vpop.f32.mrf.mxu0
        %v6174 = vpop.f32.mrf.mxu0
        %v6175 = vadd.f32 %v6014, %v6174
        %v6176 = vpop.f32.mrf.mxu0
        %6177 = vmatprep.mubr.bf16.mxu0 %v5029
        %6178 = vmatmul.mubr.bf16.gmra.mxu0 %v5028
        %v6179 = vpop.f32.mrf.mxu0
        %v6180 = vadd.f32 %v6019, %v6179
        %v6181 = vpop.f32.mrf.mxu0
        %v6182 = vpop.f32.mrf.mxu0
        %v6183 = vadd.f32 %v6022, %v6182
        %v6184 = vpop.f32.mrf.mxu0
        %6185 = vmatprep.mubr.bf16.mxu0 %v5037
        %6186 = vmatmul.mubr.bf16.gmra.mxu0 %v5036
        %v6187 = vpop.f32.mrf.mxu0
        %v6188 = vadd.f32 %v6027, %v6187
        %v6189 = vpop.f32.mrf.mxu0
        %v6190 = vpop.f32.mrf.mxu0
        %v6191 = vadd.f32 %v6030, %v6190
        %v6192 = vpop.f32.mrf.mxu0
        %6193 = vmatprep.mubr.bf16.mxu0 %v5045
        %6194 = vmatmul.mubr.bf16.gmra.mxu0 %v5044
        %v6195 = vpop.f32.mrf.mxu0
        %v6196 = vadd.f32 %v6035, %v6195
        %v6197 = vpop.f32.mrf.mxu0
        %v6198 = vpop.f32.mrf.mxu0
        %v6199 = vadd.f32 %v6038, %v6198
        %v6200 = vpop.f32.mrf.mxu0
        %6201 = vdwg.mxu0
        %v6202 = vadd.f32 %v4886, %v6076
        %v6203 = vadd.f32 %v4887, %v6079
        %v6204 = vadd.f32 %v4888, %v6084
        %v6205 = vadd.f32 %v4889, %v6087
        %v6206 = vadd.f32 %v4890, %v6092
        %v6207 = vadd.f32 %v4891, %v6095
        %v6208 = vadd.f32 %v4892, %v6100
        %v6209 = vadd.f32 %v4893, %v6103
        %v6210 = vadd.f32 %v4894, %v6108
        %v6211 = vadd.f32 %v4895, %v6111
        %v6212 = vadd.f32 %v4896, %v6116
        %v6213 = vadd.f32 %v4897, %v6119
        %v6214 = vadd.f32 %v4898, %v6124
        %v6215 = vadd.f32 %v4899, %v6127
        %v6216 = vadd.f32 %v4900, %v6132
        %v6217 = vadd.f32 %v4901, %v6135
        %v6218 = vadd.f32 %v4902, %v6140
        %v6219 = vadd.f32 %v4903, %v6143
        %v6220 = vadd.f32 %v4904, %v6148
        %v6221 = vadd.f32 %v4905, %v6151
        %v6222 = vadd.f32 %v4906, %v6156
        %v6223 = vadd.f32 %v4907, %v6159
        %v6224 = vadd.f32 %v4908, %v6164
        %v6225 = vadd.f32 %v4909, %v6167
        %v6226 = vadd.f32 %v4910, %v6172
        %v6227 = vadd.f32 %v4911, %v6175
        %v6228 = vadd.f32 %v4912, %v6180
        %v6229 = vadd.f32 %v4913, %v6183
        %v6230 = vadd.f32 %v4914, %v6188
        %v6231 = vadd.f32 %v4915, %v6191
        %v6232 = vadd.f32 %v4916, %v6196
        %v6233 = vadd.f32 %v4917, %v6199
        %6234 = vst [vmem:[%s273] sm:$0xff] %v6202
        %6235 = vst [vmem:[%s273 + $0x8] sm:$0xff] %v6203
        %6236 = vst [vmem:[%s273 + $0x10] sm:$0xff] %v6204
        %6237 = vst [vmem:[%s273 + $0x18] sm:$0xff] %v6205
        %6238 = vst [vmem:[%s273 + $0x20] sm:$0xff] %v6206
        %6239 = vst [vmem:[%s273 + $0x28] sm:$0xff] %v6207
        %6240 = vst [vmem:[%s273 + $0x30] sm:$0xff] %v6208
        %6241 = vst [vmem:[%s273 + $0x38] sm:$0xff] %v6209
        %6242 = vst [vmem:[%s273 + $0x40] sm:$0xff] %v6210
        %6243 = vst [vmem:[%s273 + $0x48] sm:$0xff] %v6211
        %6244 = vst [vmem:[%s273 + $0x50] sm:$0xff] %v6212
        %6245 = vst [vmem:[%s273 + $0x58] sm:$0xff] %v6213
        %6246 = vst [vmem:[%s273 + $0x60] sm:$0xff] %v6214
        %6247 = vst [vmem:[%s273 + $0x68] sm:$0xff] %v6215
        %6248 = vst [vmem:[%s273 + $0x70] sm:$0xff] %v6216
        %6249 = vst [vmem:[%s273 + $0x78] sm:$0xff] %v6217
        %6250 = vst [vmem:[%s273 + $0x80] sm:$0xff] %v6218
        %6251 = vst [vmem:[%s273 + $0x88] sm:$0xff] %v6219
        %6252 = vst [vmem:[%s273 + $0x90] sm:$0xff] %v6220
        %6253 = vst [vmem:[%s273 + $0x98] sm:$0xff] %v6221
        %6254 = vst [vmem:[%s273 + $0xa0] sm:$0xff] %v6222
        %6255 = vst [vmem:[%s273 + $0xa8] sm:$0xff] %v6223
        %6256 = vst [vmem:[%s273 + $0xb0] sm:$0xff] %v6224
        %6257 = vst [vmem:[%s273 + $0xb8] sm:$0xff] %v6225
        %6258 = vst [vmem:[%s273 + $0xc0] sm:$0xff] %v6226
        %6259 = vst [vmem:[%s273 + $0xc8] sm:$0xff] %v6227
        %6260 = vst [vmem:[%s273 + $0xd0] sm:$0xff] %v6228
        %6261 = vst [vmem:[%s273 + $0xd8] sm:$0xff] %v6229
        %6262 = vst [vmem:[%s273 + $0xe0] sm:$0xff] %v6230
        %6263 = vst [vmem:[%s273 + $0xe8] sm:$0xff] %v6231
        %6264 = vst [vmem:[%s273 + $0xf0] sm:$0xff] %v6232
        %6265 = vst [vmem:[%s273 + $0xf8] sm:$0xff] %v6233
        %6266 = vst.msk [vmem:[#allocation2] sm:$0xff] %vm4661, %v2965
        %6267 = vst.msk [vmem:[#allocation2 + $0x8] sm:$0xff] %vm4661, %v2966
        %6268 = vst.msk [vmem:[#allocation2 + $0x10] sm:$0xff] %vm4661, %v2967
        %6269 = vst.msk [vmem:[#allocation2 + $0x18] sm:$0xff] %vm4661, %v2968
        %6270 = vst.msk [vmem:[#allocation2 + $0x20] sm:$0xff] %vm4661, %v2969
        %6271 = vst.msk [vmem:[#allocation2 + $0x28] sm:$0xff] %vm4661, %v2970
        %6272 = vst.msk [vmem:[#allocation2 + $0x30] sm:$0xff] %vm4661, %v2971
        %6273 = vst.msk [vmem:[#allocation2 + $0x38] sm:$0xff] %vm4661, %v2972
        %6274 = vst.msk [vmem:[#allocation2 + $0x40] sm:$0xff] %vm4661, %v2973
        %6275 = vst.msk [vmem:[#allocation2 + $0x48] sm:$0xff] %vm4661, %v2974
        %6276 = vst.msk [vmem:[#allocation2 + $0x50] sm:$0xff] %vm4661, %v2975
        %6277 = vst.msk [vmem:[#allocation2 + $0x58] sm:$0xff] %vm4661, %v2976
        %6278 = vst.msk [vmem:[#allocation2 + $0x60] sm:$0xff] %vm4661, %v2977
        %6279 = vst.msk [vmem:[#allocation2 + $0x68] sm:$0xff] %vm4661, %v2978
        %6280 = vst.msk [vmem:[#allocation2 + $0x70] sm:$0xff] %vm4661, %v2979
        %6281 = vst.msk [vmem:[#allocation2 + $0x78] sm:$0xff] %vm4661, %v2980
        %6282 = vst.msk [vmem:[#allocation2 + $0x80] sm:$0xff] %vm4661, %v2981
        %6283 = vst.msk [vmem:[#allocation2 + $0x88] sm:$0xff] %vm4661, %v2982
        %6284 = vst.msk [vmem:[#allocation2 + $0x90] sm:$0xff] %vm4661, %v2983
        %6285 = vst.msk [vmem:[#allocation2 + $0x98] sm:$0xff] %vm4661, %v2984
        %6286 = vst.msk [vmem:[#allocation2 + $0xa0] sm:$0xff] %vm4661, %v2985
        %6287 = vst.msk [vmem:[#allocation2 + $0xa8] sm:$0xff] %vm4661, %v2986
        %6288 = vst.msk [vmem:[#allocation2 + $0xb0] sm:$0xff] %vm4661, %v2987
        %6289 = vst.msk [vmem:[#allocation2 + $0xb8] sm:$0xff] %vm4661, %v2988
        %6290 = vst.msk [vmem:[#allocation2 + $0xc0] sm:$0xff] %vm4661, %v2989
        %6291 = vst.msk [vmem:[#allocation2 + $0xc8] sm:$0xff] %vm4661, %v2990
        %6292 = vst.msk [vmem:[#allocation2 + $0xd0] sm:$0xff] %vm4661, %v2991
        %6293 = vst.msk [vmem:[#allocation2 + $0xd8] sm:$0xff] %vm4661, %v2992
        %6294 = vst.msk [vmem:[#allocation2 + $0xe0] sm:$0xff] %vm4661, %v2993
        %6295 = vst.msk [vmem:[#allocation2 + $0xe8] sm:$0xff] %vm4661, %v2994
        %6296 = vst.msk [vmem:[#allocation2 + $0xf0] sm:$0xff] %vm4661, %v2995
        %6297 = vst.msk [vmem:[#allocation2 + $0xf8] sm:$0xff] %vm4661, %v2996
        // Predicated region
        $region49: #{tpu_custom_call.1} parent=31 // pred_check
          %p6298 = pneg %p295
        $region50: #{tpu_custom_call.1} parent=31 // pred_check_branch
          %6300 = sbr.rel (%p6298) target = $region52
        $region51: #{tpu_custom_call.1} parent=31 // pred_region
          %v6301 = vld [vmem:[%s273] sm:$0xff]
          %v6302 = vld [vmem:[%s273 + $0x8] sm:$0xff]
          %v6303 = vld [vmem:[%s273 + $0x10] sm:$0xff]
          %v6304 = vld [vmem:[%s273 + $0x18] sm:$0xff]
          %v6305 = vld [vmem:[%s273 + $0x20] sm:$0xff]
          %v6306 = vld [vmem:[%s273 + $0x28] sm:$0xff]
          %v6307 = vld [vmem:[%s273 + $0x30] sm:$0xff]
          %v6308 = vld [vmem:[%s273 + $0x38] sm:$0xff]
          %v6309 = vld [vmem:[%s273 + $0x40] sm:$0xff]
          %v6310 = vld [vmem:[%s273 + $0x48] sm:$0xff]
          %v6311 = vld [vmem:[%s273 + $0x50] sm:$0xff]
          %v6312 = vld [vmem:[%s273 + $0x58] sm:$0xff]
          %v6313 = vld [vmem:[%s273 + $0x60] sm:$0xff]
          %v6314 = vld [vmem:[%s273 + $0x68] sm:$0xff]
          %v6315 = vld [vmem:[%s273 + $0x70] sm:$0xff]
          %v6316 = vld [vmem:[%s273 + $0x78] sm:$0xff]
          %v6317 = vld [vmem:[%s273 + $0x80] sm:$0xff]
          %v6318 = vld [vmem:[%s273 + $0x88] sm:$0xff]
          %v6319 = vld [vmem:[%s273 + $0x90] sm:$0xff]
          %v6320 = vld [vmem:[%s273 + $0x98] sm:$0xff]
          %v6321 = vld [vmem:[%s273 + $0xa0] sm:$0xff]
          %v6322 = vld [vmem:[%s273 + $0xa8] sm:$0xff]
          %v6323 = vld [vmem:[%s273 + $0xb0] sm:$0xff]
          %v6324 = vld [vmem:[%s273 + $0xb8] sm:$0xff]
          %v6325 = vld [vmem:[%s273 + $0xc0] sm:$0xff]
          %v6326 = vld [vmem:[%s273 + $0xc8] sm:$0xff]
          %v6327 = vld [vmem:[%s273 + $0xd0] sm:$0xff]
          %v6328 = vld [vmem:[%s273 + $0xd8] sm:$0xff]
          %v6329 = vld [vmem:[%s273 + $0xe0] sm:$0xff]
          %v6330 = vld [vmem:[%s273 + $0xe8] sm:$0xff]
          %v6331 = vld [vmem:[%s273 + $0xf0] sm:$0xff]
          %v6332 = vld [vmem:[%s273 + $0xf8] sm:$0xff]
          %v6333 = vld [vmem:[#allocation3] sm:$0xff]
          %v6334 = vld [vmem:[#allocation3 + $0x8] sm:$0xff]
          %v6335 = vld [vmem:[#allocation3 + $0x10] sm:$0xff]
          %v6336 = vld [vmem:[#allocation3 + $0x18] sm:$0xff]
          %v6337 = vld [vmem:[#allocation3 + $0x20] sm:$0xff]
          %v6338 = vld [vmem:[#allocation3 + $0x28] sm:$0xff]
          %v6339 = vld [vmem:[#allocation3 + $0x30] sm:$0xff]
          %v6340 = vld [vmem:[#allocation3 + $0x38] sm:$0xff]
          %v6341 = vld [vmem:[#allocation3 + $0x40] sm:$0xff]
          %v6342 = vld [vmem:[#allocation3 + $0x48] sm:$0xff]
          %v6343 = vld [vmem:[#allocation3 + $0x50] sm:$0xff]
          %v6344 = vld [vmem:[#allocation3 + $0x58] sm:$0xff]
          %v6345 = vld [vmem:[#allocation3 + $0x60] sm:$0xff]
          %v6346 = vld [vmem:[#allocation3 + $0x68] sm:$0xff]
          %v6347 = vld [vmem:[#allocation3 + $0x70] sm:$0xff]
          %v6348 = vld [vmem:[#allocation3 + $0x78] sm:$0xff]
          %v6349 = vld [vmem:[#allocation3 + $0x80] sm:$0xff]
          %v6350 = vld [vmem:[#allocation3 + $0x88] sm:$0xff]
          %v6351 = vld [vmem:[#allocation3 + $0x90] sm:$0xff]
          %v6352 = vld [vmem:[#allocation3 + $0x98] sm:$0xff]
          %v6353 = vld [vmem:[#allocation3 + $0xa0] sm:$0xff]
          %v6354 = vld [vmem:[#allocation3 + $0xa8] sm:$0xff]
          %v6355 = vld [vmem:[#allocation3 + $0xb0] sm:$0xff]
          %v6356 = vld [vmem:[#allocation3 + $0xb8] sm:$0xff]
          %v6357 = vld [vmem:[#allocation3 + $0xc0] sm:$0xff]
          %v6358 = vld [vmem:[#allocation3 + $0xc8] sm:$0xff]
          %v6359 = vld [vmem:[#allocation3 + $0xd0] sm:$0xff]
          %v6360 = vld [vmem:[#allocation3 + $0xd8] sm:$0xff]
          %v6361 = vld [vmem:[#allocation3 + $0xe0] sm:$0xff]
          %v6362 = vld [vmem:[#allocation3 + $0xe8] sm:$0xff]
          %v6363 = vld [vmem:[#allocation3 + $0xf0] sm:$0xff]
          %v6364 = vld [vmem:[#allocation3 + $0xf8] sm:$0xff]
          %v6365 = vmax.f32 %v6333, 1e-30
          %v6366 = vmax.f32 %v6334, 1e-30
          %v6367 = vmax.f32 %v6335, 1e-30
          %v6368 = vmax.f32 %v6336, 1e-30
          %v6369 = vmax.f32 %v6337, 1e-30
          %v6370 = vmax.f32 %v6338, 1e-30
          %v6371 = vmax.f32 %v6339, 1e-30
          %v6372 = vmax.f32 %v6340, 1e-30
          %v6373 = vmax.f32 %v6341, 1e-30
          %v6374 = vmax.f32 %v6342, 1e-30
          %v6375 = vmax.f32 %v6343, 1e-30
          %v6376 = vmax.f32 %v6344, 1e-30
          %v6377 = vmax.f32 %v6345, 1e-30
          %v6378 = vmax.f32 %v6346, 1e-30
          %v6379 = vmax.f32 %v6347, 1e-30
          %v6380 = vmax.f32 %v6348, 1e-30
          %v6381 = vmax.f32 %v6349, 1e-30
          %v6382 = vmax.f32 %v6350, 1e-30
          %v6383 = vmax.f32 %v6351, 1e-30
          %v6384 = vmax.f32 %v6352, 1e-30
          %v6385 = vmax.f32 %v6353, 1e-30
          %v6386 = vmax.f32 %v6354, 1e-30
          %v6387 = vmax.f32 %v6355, 1e-30
          %v6388 = vmax.f32 %v6356, 1e-30
          %v6389 = vmax.f32 %v6357, 1e-30
          %v6390 = vmax.f32 %v6358, 1e-30
          %v6391 = vmax.f32 %v6359, 1e-30
          %v6392 = vmax.f32 %v6360, 1e-30
          %v6393 = vmax.f32 %v6361, 1e-30
          %v6394 = vmax.f32 %v6362, 1e-30
          %v6395 = vmax.f32 %v6363, 1e-30
          %v6396 = vmax.f32 %v6364, 1e-30
          %6398 = vset.pattern.permute.xlu0 0
          %6399 = vperm.xlu0 %6398, %v6365
          %v6400 = vpop.permute.xlu0 %6399
          %6403 = vset.pattern.permute.xlu0 0
          %6404 = vperm.xlu0 %6403, %v6366
          %v6405 = vpop.permute.xlu0 %6404
          %6408 = vset.pattern.permute.xlu0 0
          %6409 = vperm.xlu0 %6408, %v6367
          %v6410 = vpop.permute.xlu0 %6409
          %6413 = vset.pattern.permute.xlu0 0
          %6414 = vperm.xlu0 %6413, %v6368
          %v6415 = vpop.permute.xlu0 %6414
          %6418 = vset.pattern.permute.xlu0 0
          %6419 = vperm.xlu0 %6418, %v6369
          %v6420 = vpop.permute.xlu0 %6419
          %6423 = vset.pattern.permute.xlu0 0
          %6424 = vperm.xlu0 %6423, %v6370
          %v6425 = vpop.permute.xlu0 %6424
          %6428 = vset.pattern.permute.xlu0 0
          %6429 = vperm.xlu0 %6428, %v6371
          %v6430 = vpop.permute.xlu0 %6429
          %6433 = vset.pattern.permute.xlu0 0
          %6434 = vperm.xlu0 %6433, %v6372
          %v6435 = vpop.permute.xlu0 %6434
          %6438 = vset.pattern.permute.xlu0 0
          %6439 = vperm.xlu0 %6438, %v6373
          %v6440 = vpop.permute.xlu0 %6439
          %6443 = vset.pattern.permute.xlu0 0
          %6444 = vperm.xlu0 %6443, %v6374
          %v6445 = vpop.permute.xlu0 %6444
          %6448 = vset.pattern.permute.xlu0 0
          %6449 = vperm.xlu0 %6448, %v6375
          %v6450 = vpop.permute.xlu0 %6449
          %6453 = vset.pattern.permute.xlu0 0
          %6454 = vperm.xlu0 %6453, %v6376
          %v6455 = vpop.permute.xlu0 %6454
          %6458 = vset.pattern.permute.xlu0 0
          %6459 = vperm.xlu0 %6458, %v6377
          %v6460 = vpop.permute.xlu0 %6459
          %6463 = vset.pattern.permute.xlu0 0
          %6464 = vperm.xlu0 %6463, %v6378
          %v6465 = vpop.permute.xlu0 %6464
          %6468 = vset.pattern.permute.xlu0 0
          %6469 = vperm.xlu0 %6468, %v6379
          %v6470 = vpop.permute.xlu0 %6469
          %6473 = vset.pattern.permute.xlu0 0
          %6474 = vperm.xlu0 %6473, %v6380
          %v6475 = vpop.permute.xlu0 %6474
          %6478 = vset.pattern.permute.xlu0 0
          %6479 = vperm.xlu0 %6478, %v6381
          %v6480 = vpop.permute.xlu0 %6479
          %6483 = vset.pattern.permute.xlu0 0
          %6484 = vperm.xlu0 %6483, %v6382
          %v6485 = vpop.permute.xlu0 %6484
          %6488 = vset.pattern.permute.xlu0 0
          %6489 = vperm.xlu0 %6488, %v6383
          %v6490 = vpop.permute.xlu0 %6489
          %6493 = vset.pattern.permute.xlu0 0
          %6494 = vperm.xlu0 %6493, %v6384
          %v6495 = vpop.permute.xlu0 %6494
          %6498 = vset.pattern.permute.xlu0 0
          %6499 = vperm.xlu0 %6498, %v6385
          %v6500 = vpop.permute.xlu0 %6499
          %6503 = vset.pattern.permute.xlu0 0
          %6504 = vperm.xlu0 %6503, %v6386
          %v6505 = vpop.permute.xlu0 %6504
          %6508 = vset.pattern.permute.xlu0 0
          %6509 = vperm.xlu0 %6508, %v6387
          %v6510 = vpop.permute.xlu0 %6509
          %6513 = vset.pattern.permute.xlu0 0
          %6514 = vperm.xlu0 %6513, %v6388
          %v6515 = vpop.permute.xlu0 %6514
          %6518 = vset.pattern.permute.xlu0 0
          %6519 = vperm.xlu0 %6518, %v6389
          %v6520 = vpop.permute.xlu0 %6519
          %6523 = vset.pattern.permute.xlu0 0
          %6524 = vperm.xlu0 %6523, %v6390
          %v6525 = vpop.permute.xlu0 %6524
          %6528 = vset.pattern.permute.xlu0 0
          %6529 = vperm.xlu0 %6528, %v6391
          %v6530 = vpop.permute.xlu0 %6529
          %6533 = vset.pattern.permute.xlu0 0
          %6534 = vperm.xlu0 %6533, %v6392
          %v6535 = vpop.permute.xlu0 %6534
          %6538 = vset.pattern.permute.xlu0 0
          %6539 = vperm.xlu0 %6538, %v6393
          %v6540 = vpop.permute.xlu0 %6539
          %6543 = vset.pattern.permute.xlu0 0
          %6544 = vperm.xlu0 %6543, %v6394
          %v6545 = vpop.permute.xlu0 %6544
          %6548 = vset.pattern.permute.xlu0 0
          %6549 = vperm.xlu0 %6548, %v6395
          %v6550 = vpop.permute.xlu0 %6549
          %6553 = vset.pattern.permute.xlu0 0
          %6554 = vperm.xlu0 %6553, %v6396
          %v6555 = vpop.permute.xlu0 %6554
          %v6557 = vrcp.pop %v6400
          %v6558 = vmul.f32 %v6301, %v6557
          %v6559 = vrcp.pop %v6405
          %v6560 = vmul.f32 %v6302, %v6559
          %v6561 = vrcp.pop %v6410
          %v6562 = vmul.f32 %v6303, %v6561
          %v6563 = vrcp.pop %v6415
          %v6564 = vmul.f32 %v6304, %v6563
          %v6565 = vrcp.pop %v6420
          %v6566 = vmul.f32 %v6305, %v6565
          %v6567 = vrcp.pop %v6425
          %v6568 = vmul.f32 %v6306, %v6567
          %v6569 = vrcp.pop %v6430
          %v6570 = vmul.f32 %v6307, %v6569
          %v6571 = vrcp.pop %v6435
          %v6572 = vmul.f32 %v6308, %v6571
          %v6573 = vrcp.pop %v6440
          %v6574 = vmul.f32 %v6309, %v6573
          %v6575 = vrcp.pop %v6445
          %v6576 = vmul.f32 %v6310, %v6575
          %v6577 = vrcp.pop %v6450
          %v6578 = vmul.f32 %v6311, %v6577
          %v6579 = vrcp.pop %v6455
          %v6580 = vmul.f32 %v6312, %v6579
          %v6581 = vrcp.pop %v6460
          %v6582 = vmul.f32 %v6313, %v6581
          %v6583 = vrcp.pop %v6465
          %v6584 = vmul.f32 %v6314, %v6583
          %v6585 = vrcp.pop %v6470
          %v6586 = vmul.f32 %v6315, %v6585
          %v6587 = vrcp.pop %v6475
          %v6588 = vmul.f32 %v6316, %v6587
          %v6589 = vrcp.pop %v6480
          %v6590 = vmul.f32 %v6317, %v6589
          %v6591 = vrcp.pop %v6485
          %v6592 = vmul.f32 %v6318, %v6591
          %v6593 = vrcp.pop %v6490
          %v6594 = vmul.f32 %v6319, %v6593
          %v6595 = vrcp.pop %v6495
          %v6596 = vmul.f32 %v6320, %v6595
          %v6597 = vrcp.pop %v6500
          %v6598 = vmul.f32 %v6321, %v6597
          %v6599 = vrcp.pop %v6505
          %v6600 = vmul.f32 %v6322, %v6599
          %v6601 = vrcp.pop %v6510
          %v6602 = vmul.f32 %v6323, %v6601
          %v6603 = vrcp.pop %v6515
          %v6604 = vmul.f32 %v6324, %v6603
          %v6605 = vrcp.pop %v6520
          %v6606 = vmul.f32 %v6325, %v6605
          %v6607 = vrcp.pop %v6525
          %v6608 = vmul.f32 %v6326, %v6607
          %v6609 = vrcp.pop %v6530
          %v6610 = vmul.f32 %v6327, %v6609
          %v6611 = vrcp.pop %v6535
          %v6612 = vmul.f32 %v6328, %v6611
          %v6613 = vrcp.pop %v6540
          %v6614 = vmul.f32 %v6329, %v6613
          %v6615 = vrcp.pop %v6545
          %v6616 = vmul.f32 %v6330, %v6615
          %v6617 = vrcp.pop %v6550
          %v6618 = vmul.f32 %v6331, %v6617
          %v6619 = vrcp.pop %v6555
          %v6620 = vmul.f32 %v6332, %v6619
          %6621 = vst [vmem:[%s273] sm:$0xff] %v6558
          %6622 = vst [vmem:[%s273 + $0x8] sm:$0xff] %v6560
          %6623 = vst [vmem:[%s273 + $0x10] sm:$0xff] %v6562
          %6624 = vst [vmem:[%s273 + $0x18] sm:$0xff] %v6564
          %6625 = vst [vmem:[%s273 + $0x20] sm:$0xff] %v6566
          %6626 = vst [vmem:[%s273 + $0x28] sm:$0xff] %v6568
          %6627 = vst [vmem:[%s273 + $0x30] sm:$0xff] %v6570
          %6628 = vst [vmem:[%s273 + $0x38] sm:$0xff] %v6572
          %6629 = vst [vmem:[%s273 + $0x40] sm:$0xff] %v6574
          %6630 = vst [vmem:[%s273 + $0x48] sm:$0xff] %v6576
          %6631 = vst [vmem:[%s273 + $0x50] sm:$0xff] %v6578
          %6632 = vst [vmem:[%s273 + $0x58] sm:$0xff] %v6580
          %6633 = vst [vmem:[%s273 + $0x60] sm:$0xff] %v6582
          %6634 = vst [vmem:[%s273 + $0x68] sm:$0xff] %v6584
          %6635 = vst [vmem:[%s273 + $0x70] sm:$0xff] %v6586
          %6636 = vst [vmem:[%s273 + $0x78] sm:$0xff] %v6588
          %6637 = vst [vmem:[%s273 + $0x80] sm:$0xff] %v6590
          %6638 = vst [vmem:[%s273 + $0x88] sm:$0xff] %v6592
          %6639 = vst [vmem:[%s273 + $0x90] sm:$0xff] %v6594
          %6640 = vst [vmem:[%s273 + $0x98] sm:$0xff] %v6596
          %6641 = vst [vmem:[%s273 + $0xa0] sm:$0xff] %v6598
          %6642 = vst [vmem:[%s273 + $0xa8] sm:$0xff] %v6600
          %6643 = vst [vmem:[%s273 + $0xb0] sm:$0xff] %v6602
          %6644 = vst [vmem:[%s273 + $0xb8] sm:$0xff] %v6604
          %6645 = vst [vmem:[%s273 + $0xc0] sm:$0xff] %v6606
          %6646 = vst [vmem:[%s273 + $0xc8] sm:$0xff] %v6608
          %6647 = vst [vmem:[%s273 + $0xd0] sm:$0xff] %v6610
          %6648 = vst [vmem:[%s273 + $0xd8] sm:$0xff] %v6612
          %6649 = vst [vmem:[%s273 + $0xe0] sm:$0xff] %v6614
          %6650 = vst [vmem:[%s273 + $0xe8] sm:$0xff] %v6616
          %6651 = vst [vmem:[%s273 + $0xf0] sm:$0xff] %v6618
          %6652 = vst [vmem:[%s273 + $0xf8] sm:$0xff] %v6620
        $region52: #{tpu_custom_call.1} parent=31 // pred_fallthru
          _
        %s6653 = sand.u32 %s118, 1
        %s6654 = scalar_lea.sflag [#allocation8], %s6653
        %s6655 = sand.u32 %s118, 1
        %s6656 = smul.addr %s6655, 256
        %s6657 = scalar_lea.vmem [#allocation12], %s6656
        // Predicated region
        $region53: #{tpu_custom_call.1} parent=31 // pred_check
          %p6658 = pneg %p128
        $region54: #{tpu_custom_call.1} parent=31 // pred_check_branch
          %6660 = sbr.rel (%p6658) target = $region56
        $region55: #{tpu_custom_call.1} parent=31 // pred_region
          %s6661 = sld [smem:[#allocation5 + %s28]]
          %s6662 = smul.u32 32, %s6661
          %s6664 = ssub.s32 4096, 4096
          %6665 = vsyncadd %s6654, %s6664
          %s6666 = smul.addr %s6662, 128
          %s6667 = scalar_lea.hbm %s4, %s6666
          %s6668 = sshll.u32 %s6657, 4
          %s6669 = int_to_ptr.vmem [resolvable:$true] %s6668
          %6674 = dma.vmem_to_hbm [thread:$0]  %s6669, 4096, %s6667, %s6654, 128, 128, 8
        $region56: #{tpu_custom_call.1} parent=31 // pred_fallthru
          _
      $region32: #{tpu_custom_call.1} parent=5 // pred_fallthru
        _
      %p6675 = scmp.le.s32.totalorder 2, %s23
      // Predicated region
      $region57: #{tpu_custom_call.1} parent=5 // pred_check
        %p6676 = pneg %p6675
      $region58: #{tpu_custom_call.1} parent=5 // pred_check_branch
        %6678 = sbr.rel (%p6676) target = $region60
      $region59: #{tpu_custom_call.1} parent=5 // pred_region
        %s6679 = ssub.s32 %s23, 2
        // Predicated region
        $region61: #{tpu_custom_call.1} parent=59 // pred_check
          %p6680 = pneg %p134
        $region62: #{tpu_custom_call.1} parent=59 // pred_check_branch
          %6682 = sbr.rel (%p6680) target = $region64
        $region63: #{tpu_custom_call.1} parent=59 // pred_region
          %s6683 = sand.u32 %s119, 1
          %s6684 = scalar_lea.sflag [#allocation8], %s6683
          %s6685 = sand.u32 %s119, 1
          %s6686 = smul.addr %s6685, 256
          %s6687 = scalar_lea.vmem [#allocation12], %s6686
          %6688 = dma.done %s6684, 4096
        $region64: #{tpu_custom_call.1} parent=59 // pred_fallthru
          _
      $region60: #{tpu_custom_call.1} parent=5 // pred_fallthru
        _
    $region6: #{tpu_custom_call.1} parent=1 // loop_footer
      %s27 = sadd.s32 1, %s23
    $region7: #{tpu_custom_call.1} parent=1 // loop_footer_branch
      %22 = sbr.rel target = $region3
    $region8: #{tpu_custom_call.1} parent=1 // loop_exit
      _
    %6689 = vsyncpa [#allocation7], 1
    %s6690 = scalar_lea.sflag [#allocation7], 1
    %6691 = vsyncpa %s6690, 1
    %6692 = vsyncpa [#allocation10], 1
    %s6693 = scalar_lea.sflag [#allocation10], 1
    %6694 = vsyncpa %s6693, 1
    %6695 = vsyncpa [#allocation8], 1
    %s6696 = scalar_lea.sflag [#allocation8], 1
    %6697 = vsyncpa %s6696, 1

</llo_original>
